<compile_context>
chip_gen: v6e
topology: v6e:2x2x1
jax: 0.10.0
libtpu: 0.0.40
codegen_flags: <defaults>
</compile_context>

<pallas_src>
import functools
import math

import numpy as np
import jax
import jax.numpy as jnp
from jax.experimental import pallas as pl
from jax.experimental.pallas import tpu as pltpu


# --------------------- init-time permutation folding -----------------------
#
# Activation convention at every layer boundary: the flat feature vector of
# width l_prev*s_prev is stored as l_prev blocks of shape (B, s_prev); block j
# holds flat features {f : f % l_prev == j}, column c <-> feature f = c*l_prev+j.
# (The network input is a single block, l_prev = 1.)  This is exactly the
# natural per-block output layout of the Monarch second matmul, so each layer
# produces the convention for free and only the *consumption* side needs
# folding (into the next layer's first-matmul weight row order).

# Storage dtype of the butterfly weights per layer.  fc2/fc3 carry ~94% of the
# weight bytes -> bf16 halves the (bandwidth-bound) HBM stream; fc1/fc4 are
# tiny and stay f32 to protect accuracy (short K reductions).
_WEIGHT_STORE_DTYPES = {"fc1": jnp.float32, "fc2": jnp.bfloat16,
                        "fc3": jnp.bfloat16, "fc4": jnp.float32}


def _monarch_layer_plan(w1, w2, bias, in_ext, out_features, l_prev, s_prev,
                        store_dtype):
    """Fold all permutations of one MonarchLinear into weights + static plans."""
    w1 = np.asarray(w1, np.float32)     # (k, q, p)
    w2 = np.asarray(w2, np.float32)     # (l, s, r)
    bias = np.asarray(bias, np.float32)
    k, q, p = w1.shape
    l, s, r = w2.shape
    assert k * p == in_ext
    assert l * r == k * q
    assert l_prev * s_prev == in_ext, "layer widths must chain without pad/trunc"
    assert out_features == l * s, "folded path assumes no output truncation"

    w1t = np.swapaxes(w1, 1, 2)         # (k, p, q)
    w2t = np.swapaxes(w2, 1, 2)         # (l, r, s)

    W1 = np.empty((k, p, q), np.float32)
    in_plan = []                        # per ki: tuple of (prev_block j, c_lo, c_len)
    for ki in range(k):
        m = ki * p + np.arange(p)       # flat input features of x-block ki
        row_order, slices = [], []
        for j in range(l_prev):
            idx = np.nonzero(m % l_prev == j)[0]   # positions within block, ascending
            if idx.size == 0:
                continue
            c = m[idx] // l_prev
            assert np.all(np.diff(c) == 1)         # contiguous slice of prev block j
            slices.append((int(j), int(c[0]), int(idx.size)))
            row_order.append(idx)
        row_order = np.concatenate(row_order)
        # group output columns by destination butterfly block li = (ki*q+qj) % l
        dest = (ki * q + np.arange(q)) % l
        col_order = np.argsort(dest, kind="stable")
        W1[ki] = w1t[ki][row_order][:, col_order]  # exact re-ordering
        in_plan.append(tuple(slices))

    mid_plan = []                       # per li: tuple over ki of (col_off, col_len)
    for li in range(l):
        chunks = []
        for ki in range(k):
            dest = (ki * q + np.arange(q)) % l
            chunks.append((int(np.sum(dest < li)), int(np.sum(dest == li))))
        mid_plan.append(tuple(chunks))

    # bias into block layout: o_blk[li][:, sj] <-> flat feature f = sj*l + li
    bias_blk = bias.reshape(s, l).T.reshape(l, 1, s).copy()

    plan = dict(k=k, l=l, in_plan=tuple(in_plan), mid_plan=tuple(mid_plan),
                compute_dtype=store_dtype)
    arrays = dict(W1=jnp.asarray(W1, dtype=store_dtype),
                  W2=jnp.asarray(w2t, dtype=store_dtype),
                  bias=jnp.asarray(bias_blk))          # bias stays f32
    return plan, arrays, l, s


def prepare_monarch_mlp(params):
    """One-time host-side preprocessing of all weights (runs once, not per call)."""
    layer_arrays, plans = [], []
    l_prev, s_prev = 1, params["fc1"]["in_ext"]
    for name in ("fc1", "fc2", "fc3", "fc4"):
        p = params[name]
        plan, arrays, l_prev, s_prev = _monarch_layer_plan(
            p["w1"], p["w2"], p["bias"], p["in_ext"], p["out_features"],
            l_prev, s_prev, _WEIGHT_STORE_DTYPES[name])
        plans.append(plan)
        layer_arrays.append(arrays)

    # fc5: fold the block->flat interleave into the row order of W5 = fc5_w.T
    w5 = np.asarray(params["fc5_w"], np.float32).T          # (100, out)
    assert l_prev * s_prev == w5.shape[0]
    perm = np.concatenate([np.arange(s_prev) * l_prev + j for j in range(l_prev)])
    W5 = jnp.asarray(w5[perm])
    b5 = jnp.asarray(np.asarray(params["fc5_b"], np.float32).reshape(1, -1))

    return dict(layers=layer_arrays, plans=tuple(plans),
                in_ext=params["fc1"]["in_ext"],
                out_features=int(np.asarray(params["fc5_b"]).shape[0]),
                W5=W5, b5=b5)


# ------------------------------ Pallas kernel -------------------------------


def _fused_mlp_kernel(
        x_ref,
        w1_l1, w2_l1, b_l1,
        w1_l2_hbm, w2_l2_hbm, b_l2,
        w1_l3_hbm, w2_l3_hbm, b_l3,
        w1_l4, w2_l4, b_l4,
        w5_ref, b5_ref,
        out_ref,
        w1_l2_vm, w2_l2_vm, w1_l3_vm, w2_l3_vm, dma_sem,
        *, plans):
    """Fused forward: 4 MonarchLinear(+ReLU) layers + final dense layer."""
    # Kick off the streaming of the big fc2/fc3 weight slabs from HBM so they
    # overlap with the earlier layers' compute; wait right before each use.
    copies = (
        pltpu.make_async_copy(w1_l2_hbm, w1_l2_vm, dma_sem.at[0]),
        pltpu.make_async_copy(w2_l2_hbm, w2_l2_vm, dma_sem.at[1]),
        pltpu.make_async_copy(w1_l3_hbm, w1_l3_vm, dma_sem.at[2]),
        pltpu.make_async_copy(w2_l3_hbm, w2_l3_vm, dma_sem.at[3]),
    )
    for c in copies:
        c.start()

    layer_refs = ((w1_l1, w2_l1, b_l1),
                  (w1_l2_vm, w2_l2_vm, b_l2),
                  (w1_l3_vm, w2_l3_vm, b_l3),
                  (w1_l4, w2_l4, b_l4))
    layer_waits = ((), (copies[0], copies[1]), (copies[2], copies[3]), ())

    blocks = [x_ref[...]]                       # input convention: l_prev = 1
    for (w1_ref, w2_ref, b_ref), plan, waits in zip(layer_refs, plans,
                                                    layer_waits):
        for c in waits:
            c.wait()
        k, l = plan["k"], plan["l"]
        cdt = plan["compute_dtype"]
        xb = [blk.astype(cdt) for blk in blocks]   # bf16 operands on fc2/fc3
        # Stage 1: block-diagonal matmul.  Inter-layer re-blocking is folded
        # into the weight row order; here we only take static lane slices.
        y1 = []
        for ki in range(k):
            xg = jnp.concatenate(
                [xb[j][:, c0:c0 + cn] for (j, c0, cn) in plan["in_plan"][ki]],
                axis=-1)
            y1.append(jnp.dot(xg, w1_ref[ki], preferred_element_type=jnp.float32))
        # Stage 2: butterfly permutation realized as static column regrouping of
        # the stage-1 outputs, then the second block-diagonal matmul + bias + relu
        # (bias add / ReLU stay f32).
        new_blocks = []
        for li in range(l):
            z = jnp.concatenate(
                [y1[ki][:, off:off + cnt]
                 for ki, (off, cnt) in enumerate(plan["mid_plan"][li])],
                axis=-1).astype(cdt)
            o = jnp.dot(z, w2_ref[li], preferred_element_type=jnp.float32) + b_ref[li]
            new_blocks.append(jnp.maximum(o, 0.0))
        blocks = new_blocks

    # Final dense layer: W5 rows are already ordered to match the block concat.
    xf = jnp.concatenate(blocks, axis=-1)
    out_ref[...] = (jnp.dot(xf, w5_ref[...], preferred_element_type=jnp.float32)
                    + b5_ref[...]).astype(out_ref.dtype)


def _vmem_spec(shape):
    nd = len(shape)
    return pl.BlockSpec(tuple(shape), lambda i, _nd=nd: (0,) * _nd)


def monarch_mlp_forward(x, prep):
    B, n = x.shape
    if n < prep["in_ext"]:
        x = jnp.pad(x, ((0, 0), (0, prep["in_ext"] - n)))
    x = x.astype(jnp.float32)

    L = prep["layers"]
    operands, in_specs, scratch = [x], [_vmem_spec(x.shape)], []

    # fc1: small, resident via auto-pipelined VMEM BlockSpec.
    for a in (L[0]["W1"], L[0]["W2"], L[0]["bias"]):
        operands.append(a)
        in_specs.append(_vmem_spec(a.shape))

    # fc2/fc3: big bf16 slabs left in HBM (memory_space=pl.ANY) and streamed
    # manually into VMEM scratch inside the kernel (overlaps earlier compute).
    for i in (1, 2):
        operands += [L[i]["W1"], L[i]["W2"], L[i]["bias"]]
        in_specs += [pl.BlockSpec(memory_space=pl.ANY),
                     pl.BlockSpec(memory_space=pl.ANY),
                     _vmem_spec(L[i]["bias"].shape)]
        scratch += [pltpu.VMEM(tuple(L[i]["W1"].shape), L[i]["W1"].dtype),
                    pltpu.VMEM(tuple(L[i]["W2"].shape), L[i]["W2"].dtype)]

    # fc4 + fc5: small, resident via VMEM BlockSpec.
    for a in (L[3]["W1"], L[3]["W2"], L[3]["bias"], prep["W5"], prep["b5"]):
        operands.append(a)
        in_specs.append(_vmem_spec(a.shape))

    scratch.append(pltpu.SemaphoreType.DMA((4,)))

    kern = functools.partial(_fused_mlp_kernel, plans=prep["plans"])
    return pl.pallas_call(
        kern,
        out_shape=jax.ShapeDtypeStruct((B, prep["out_features"]), jnp.float32),
        grid=(1,),
        in_specs=in_specs,
        out_specs=_vmem_spec((B, prep["out_features"])),
        scratch_shapes=scratch,
        compiler_params=pltpu.CompilerParams(
            dimension_semantics=("arbitrary",),
            # footprint is ~4-5 MB; keep well under v7x's 64 MiB physical VMEM
            vmem_limit_bytes=24 * 1024 * 1024),
    )(*operands)


# ----------------------- parameter init (deterministic) --------------------


def init_monarch_params(key, in_features, out_features, nblocks=4):
    in_blksz = int(math.ceil(in_features / nblocks))
    out_blksz = int(math.ceil(out_features / nblocks))
    in_ext = in_blksz * nblocks
    out_ext = out_blksz * nblocks
    if in_ext < out_ext:
        s1 = (nblocks, in_blksz, in_blksz)     # (k, q, p)
        s2 = (nblocks, out_blksz, in_blksz)    # (l, s, r)
    else:
        s1 = (nblocks, out_blksz, in_blksz)
        s2 = (nblocks, out_blksz, out_blksz)
    k1, k2, k3 = jax.random.split(key, 3)
    b1 = 1.0 / math.sqrt(s1[-1])               # kaiming-uniform(a=sqrt(5)) bound
    b2 = 1.0 / math.sqrt(s2[-1])
    w1 = jax.random.uniform(k1, s1, jnp.float32, -b1, b1)
    w2 = jax.random.uniform(k2, s2, jnp.float32, -b2, b2)
    bb = 1.0 / math.sqrt(out_features)
    bias = jax.random.uniform(k3, (out_features,), jnp.float32, -bb, bb)
    return dict(w1=w1, w2=w2, bias=bias, in_ext=in_ext, out_features=out_features)


def init_mlp_params(key, in_features, out_features):
    keys = jax.random.split(key, 6)
    fc1 = init_monarch_params(keys[0], in_features, 3000)
    fc2 = init_monarch_params(keys[1], 3000, 1000)
    fc3 = init_monarch_params(keys[2], 1000, 1000)
    fc4 = init_monarch_params(keys[3], 1000, 100)
    bw = 1.0 / math.sqrt(100)
    fc5_w = jax.random.uniform(keys[4], (out_features, 100), jnp.float32, -bw, bw)
    fc5_b = jax.random.uniform(keys[5], (out_features,), jnp.float32, -bw, bw)
    return dict(fc1=fc1, fc2=fc2, fc3=fc3, fc4=fc4, fc5_w=fc5_w, fc5_b=fc5_b)


# --------------------------- pure-JAX reference -----------------------------


def _blockdiag_butterfly_ref(x, w1, w2):
    B, n = x.shape
    k, q, p = w1.shape
    l, s, r = w2.shape
    hi = jax.lax.Precision.HIGHEST
    out1 = jnp.einsum("bkp,kqp->bkq", x.reshape(B, k, p), w1, precision=hi)
    out1 = jnp.swapaxes(out1.reshape(B, r, l), 1, 2)        # (B, l, r)
    out2 = jnp.einsum("blr,lsr->bls", out1, w2, precision=hi)
    return jnp.swapaxes(out2, 1, 2).reshape(B, s * l)       # (B, s*l)


def _monarch_linear_ref(x, p):
    n = x.shape[-1]
    if n < p["in_ext"]:
        x = jnp.pad(x, ((0, 0), (0, p["in_ext"] - n)))
    out = _blockdiag_butterfly_ref(x, p["w1"], p["w2"])[:, :p["out_features"]]
    return out + p["bias"]


def monarch_mlp_ref(x, params):
    x = jax.nn.relu(_monarch_linear_ref(x, params["fc1"]))
    x = jax.nn.relu(_monarch_linear_ref(x, params["fc2"]))
    x = jax.nn.relu(_monarch_linear_ref(x, params["fc3"]))
    x = jax.nn.relu(_monarch_linear_ref(x, params["fc4"]))
    x = jnp.dot(x, params["fc5_w"].T,
                precision=jax.lax.Precision.HIGHEST) + params["fc5_b"]
    return x


# --------------------------------- main -------------------------------------


if __name__ == "__main__":
    key = jax.random.PRNGKey(0)
    kx, kp = jax.random.split(key)
    batch, in_features, out_features = 2, 64, 12

    x = jax.random.normal(kx, (batch, in_features), jnp.float32)
    params = init_mlp_params(kp, in_features, out_features)

    prep = prepare_monarch_mlp(params)          # one-time host-side folding

    out = monarch_mlp_forward(x, prep)
    out = jax.block_until_ready(out)
    assert out.shape == (batch, out_features)
    assert bool(jnp.all(jnp.isfinite(out)))

    ref = monarch_mlp_ref(x, params)
    # Error budget: the permutation folding is an exact re-ordering; residual
    # error comes from (a) intentionally storing fc2/fc3 weights in bf16 and
    # casting their matmul operands to bf16 (f32 accumulation) ~= 1e-2 and
    # (b) non-HIGHEST f32 MXU dots on the remaining layers.  Per-element
    # relative checks are ill-conditioned for near-zero outputs of this
    # random-init net, so we normalize by max|ref|; 3e-2 leaves ~3x headroom.
    rel_err = float(jnp.max(jnp.abs(out - ref)) / (jnp.max(jnp.abs(ref)) + 1e-6))
    assert rel_err < 3e-2, f"mismatch vs reference: rel_err={rel_err}"

    print("KERNEL_OK")
</pallas_src>

<mosaic_0001>
module attributes {stable_mosaic.version = 11 : i64} {
  func.func @_fused_mlp_kernel(%arg0: i32, %arg1: memref<2x64xf32, #tpu.memory_space<vmem>>, %arg2: memref<4x16x16xf32, #tpu.memory_space<vmem>>, %arg3: memref<4x16x750xf32, #tpu.memory_space<vmem>>, %arg4: memref<4x1x750xf32, #tpu.memory_space<vmem>>, %arg5: memref<4x750x250xbf16, #tpu.memory_space<any>>, %arg6: memref<4x250x250xbf16, #tpu.memory_space<any>>, %arg7: memref<4x1x250xf32, #tpu.memory_space<vmem>>, %arg8: memref<4x250x250xbf16, #tpu.memory_space<any>>, %arg9: memref<4x250x250xbf16, #tpu.memory_space<any>>, %arg10: memref<4x1x250xf32, #tpu.memory_space<vmem>>, %arg11: memref<4x250x25xf32, #tpu.memory_space<vmem>>, %arg12: memref<4x25x25xf32, #tpu.memory_space<vmem>>, %arg13: memref<4x1x25xf32, #tpu.memory_space<vmem>>, %arg14: memref<100x12xf32, #tpu.memory_space<vmem>>, %arg15: memref<1x12xf32, #tpu.memory_space<vmem>>, %arg16: memref<2x12xf32, #tpu.memory_space<vmem>>, %arg17: memref<4x750x250xbf16, #tpu.memory_space<vmem>>, %arg18: memref<4x250x250xbf16, #tpu.memory_space<vmem>>, %arg19: memref<4x250x250xbf16, #tpu.memory_space<vmem>>, %arg20: memref<4x250x250xbf16, #tpu.memory_space<vmem>>, %arg21: memref<4x!tpu.dma_semaphore, #tpu.memory_space<semaphore_mem>>) attributes {dimension_semantics = [#tpu.dimension_semantics<arbitrary>], iteration_bounds = array<i64: 1>, scalar_prefetch = 0 : i64, scratch_operands = 5 : i64, tpu.core_type = #tpu.core_type<tc>, window_params = [{pipeline_mode = #tpu.pipeline_mode<synchronous>, transform_indices = @transform_0, window_bounds = array<i64: 2, 64>}, {pipeline_mode = #tpu.pipeline_mode<synchronous>, transform_indices = @transform_1, window_bounds = array<i64: 4, 16, 16>}, {pipeline_mode = #tpu.pipeline_mode<synchronous>, transform_indices = @transform_2, window_bounds = array<i64: 4, 16, 750>}, {pipeline_mode = #tpu.pipeline_mode<synchronous>, transform_indices = @transform_3, window_bounds = array<i64: 4, 1, 750>}, {}, {}, {pipeline_mode = #tpu.pipeline_mode<synchronous>, transform_indices = @transform_6, window_bounds = array<i64: 4, 1, 250>}, {}, {}, {pipeline_mode = #tpu.pipeline_mode<synchronous>, transform_indices = @transform_9, window_bounds = array<i64: 4, 1, 250>}, {pipeline_mode = #tpu.pipeline_mode<synchronous>, transform_indices = @transform_10, window_bounds = array<i64: 4, 250, 25>}, {pipeline_mode = #tpu.pipeline_mode<synchronous>, transform_indices = @transform_11, window_bounds = array<i64: 4, 25, 25>}, {pipeline_mode = #tpu.pipeline_mode<synchronous>, transform_indices = @transform_12, window_bounds = array<i64: 4, 1, 25>}, {pipeline_mode = #tpu.pipeline_mode<synchronous>, transform_indices = @transform_13, window_bounds = array<i64: 100, 12>}, {pipeline_mode = #tpu.pipeline_mode<synchronous>, transform_indices = @transform_14, window_bounds = array<i64: 1, 12>}, {pipeline_mode = #tpu.pipeline_mode<synchronous>, transform_indices = @transform_15, window_bounds = array<i64: 2, 12>}]} {
    %c0_i32 = arith.constant 0 : i32
    %0 = tpu.memref_slice %arg21[%c0_i32] : memref<4x!tpu.dma_semaphore, #tpu.memory_space<semaphore_mem>> -> memref<1x!tpu.dma_semaphore, #tpu.memory_space<semaphore_mem>>
    %1 = tpu.memref_squeeze %0 : memref<1x!tpu.dma_semaphore, #tpu.memory_space<semaphore_mem>> -> memref<!tpu.dma_semaphore, #tpu.memory_space<semaphore_mem>>
    tpu.enqueue_dma source(%arg5 : memref<4x750x250xbf16, #tpu.memory_space<any>>) target(%arg17 : memref<4x750x250xbf16, #tpu.memory_space<vmem>>) target_semaphore(%1 : memref<!tpu.dma_semaphore, #tpu.memory_space<semaphore_mem>>)
    %c1_i32 = arith.constant 1 : i32
    %2 = tpu.memref_slice %arg21[%c1_i32] : memref<4x!tpu.dma_semaphore, #tpu.memory_space<semaphore_mem>> -> memref<1x!tpu.dma_semaphore, #tpu.memory_space<semaphore_mem>>
    %3 = tpu.memref_squeeze %2 : memref<1x!tpu.dma_semaphore, #tpu.memory_space<semaphore_mem>> -> memref<!tpu.dma_semaphore, #tpu.memory_space<semaphore_mem>>
    tpu.enqueue_dma source(%arg6 : memref<4x250x250xbf16, #tpu.memory_space<any>>) target(%arg18 : memref<4x250x250xbf16, #tpu.memory_space<vmem>>) target_semaphore(%3 : memref<!tpu.dma_semaphore, #tpu.memory_space<semaphore_mem>>)
    %c2_i32 = arith.constant 2 : i32
    %4 = tpu.memref_slice %arg21[%c2_i32] : memref<4x!tpu.dma_semaphore, #tpu.memory_space<semaphore_mem>> -> memref<1x!tpu.dma_semaphore, #tpu.memory_space<semaphore_mem>>
    %5 = tpu.memref_squeeze %4 : memref<1x!tpu.dma_semaphore, #tpu.memory_space<semaphore_mem>> -> memref<!tpu.dma_semaphore, #tpu.memory_space<semaphore_mem>>
    tpu.enqueue_dma source(%arg8 : memref<4x250x250xbf16, #tpu.memory_space<any>>) target(%arg19 : memref<4x250x250xbf16, #tpu.memory_space<vmem>>) target_semaphore(%5 : memref<!tpu.dma_semaphore, #tpu.memory_space<semaphore_mem>>)
    %c3_i32 = arith.constant 3 : i32
    %6 = tpu.memref_slice %arg21[%c3_i32] : memref<4x!tpu.dma_semaphore, #tpu.memory_space<semaphore_mem>> -> memref<1x!tpu.dma_semaphore, #tpu.memory_space<semaphore_mem>>
    %7 = tpu.memref_squeeze %6 : memref<1x!tpu.dma_semaphore, #tpu.memory_space<semaphore_mem>> -> memref<!tpu.dma_semaphore, #tpu.memory_space<semaphore_mem>>
    tpu.enqueue_dma source(%arg9 : memref<4x250x250xbf16, #tpu.memory_space<any>>) target(%arg20 : memref<4x250x250xbf16, #tpu.memory_space<vmem>>) target_semaphore(%7 : memref<!tpu.dma_semaphore, #tpu.memory_space<semaphore_mem>>)
    %c0 = arith.constant 0 : index
    %c0_0 = arith.constant 0 : index
    %8 = vector.load %arg1[%c0, %c0_0] : memref<2x64xf32, #tpu.memory_space<vmem>>, vector<2x64xf32>
    %9 = vector.extract_strided_slice %8 {offsets = [0, 0], sizes = [2, 16], strides = [1, 1]} : vector<2x64xf32> to vector<2x16xf32>
    %c0_1 = arith.constant 0 : index
    %c0_2 = arith.constant 0 : index
    %c0_3 = arith.constant 0 : index
    %10 = vector.load %arg2[%c0_1, %c0_2, %c0_3] : memref<4x16x16xf32, #tpu.memory_space<vmem>>, vector<1x16x16xf32>
    %11 = vector.shape_cast %10 : vector<1x16x16xf32> to vector<16x16xf32>
    %cst = arith.constant dense<0.000000e+00> : vector<2x16xf32>
    %12 = tpu.matmul %9, %11, %cst {dimension_numbers = #tpu.dot_dimension_numbers<[1], [0], [0], [1], [0, 0, 1, 1], [], []>} : vector<2x16xf32>, vector<16x16xf32>, vector<2x16xf32> -> vector<2x16xf32>
    %13 = vector.extract_strided_slice %8 {offsets = [0, 16], sizes = [2, 16], strides = [1, 1]} : vector<2x64xf32> to vector<2x16xf32>
    %c1 = arith.constant 1 : index
    %c0_4 = arith.constant 0 : index
    %c0_5 = arith.constant 0 : index
    %14 = vector.load %arg2[%c1, %c0_4, %c0_5] : memref<4x16x16xf32, #tpu.memory_space<vmem>>, vector<1x16x16xf32>
    %15 = vector.shape_cast %14 : vector<1x16x16xf32> to vector<16x16xf32>
    %cst_6 = arith.constant dense<0.000000e+00> : vector<2x16xf32>
    %16 = tpu.matmul %13, %15, %cst_6 {dimension_numbers = #tpu.dot_dimension_numbers<[1], [0], [0], [1], [0, 0, 1, 1], [], []>} : vector<2x16xf32>, vector<16x16xf32>, vector<2x16xf32> -> vector<2x16xf32>
    %17 = vector.extract_strided_slice %8 {offsets = [0, 32], sizes = [2, 16], strides = [1, 1]} : vector<2x64xf32> to vector<2x16xf32>
    %c2 = arith.constant 2 : index
    %c0_7 = arith.constant 0 : index
    %c0_8 = arith.constant 0 : index
    %18 = vector.load %arg2[%c2, %c0_7, %c0_8] : memref<4x16x16xf32, #tpu.memory_space<vmem>>, vector<1x16x16xf32>
    %19 = vector.shape_cast %18 : vector<1x16x16xf32> to vector<16x16xf32>
    %cst_9 = arith.constant dense<0.000000e+00> : vector<2x16xf32>
    %20 = tpu.matmul %17, %19, %cst_9 {dimension_numbers = #tpu.dot_dimension_numbers<[1], [0], [0], [1], [0, 0, 1, 1], [], []>} : vector<2x16xf32>, vector<16x16xf32>, vector<2x16xf32> -> vector<2x16xf32>
    %21 = vector.extract_strided_slice %8 {offsets = [0, 48], sizes = [2, 16], strides = [1, 1]} : vector<2x64xf32> to vector<2x16xf32>
    %c3 = arith.constant 3 : index
    %c0_10 = arith.constant 0 : index
    %c0_11 = arith.constant 0 : index
    %22 = vector.load %arg2[%c3, %c0_10, %c0_11] : memref<4x16x16xf32, #tpu.memory_space<vmem>>, vector<1x16x16xf32>
    %23 = vector.shape_cast %22 : vector<1x16x16xf32> to vector<16x16xf32>
    %cst_12 = arith.constant dense<0.000000e+00> : vector<2x16xf32>
    %24 = tpu.matmul %21, %23, %cst_12 {dimension_numbers = #tpu.dot_dimension_numbers<[1], [0], [0], [1], [0, 0, 1, 1], [], []>} : vector<2x16xf32>, vector<16x16xf32>, vector<2x16xf32> -> vector<2x16xf32>
    %25 = vector.extract_strided_slice %12 {offsets = [0, 0], sizes = [2, 4], strides = [1, 1]} : vector<2x16xf32> to vector<2x4xf32>
    %26 = vector.extract_strided_slice %16 {offsets = [0, 0], sizes = [2, 4], strides = [1, 1]} : vector<2x16xf32> to vector<2x4xf32>
    %27 = vector.extract_strided_slice %20 {offsets = [0, 0], sizes = [2, 4], strides = [1, 1]} : vector<2x16xf32> to vector<2x4xf32>
    %28 = vector.extract_strided_slice %24 {offsets = [0, 0], sizes = [2, 4], strides = [1, 1]} : vector<2x16xf32> to vector<2x4xf32>
    %29 = tpu.concatenate %25, %26, %27, %28 in 1 : vector<2x4xf32>, vector<2x4xf32>, vector<2x4xf32>, vector<2x4xf32> -> vector<2x16xf32>
    %c0_13 = arith.constant 0 : index
    %c0_14 = arith.constant 0 : index
    %c0_15 = arith.constant 0 : index
    %30 = vector.load %arg3[%c0_13, %c0_14, %c0_15] : memref<4x16x750xf32, #tpu.memory_space<vmem>>, vector<1x16x750xf32>
    %31 = vector.shape_cast %30 : vector<1x16x750xf32> to vector<16x750xf32>
    %cst_16 = arith.constant dense<0.000000e+00> : vector<2x750xf32>
    %32 = tpu.matmul %29, %31, %cst_16 {dimension_numbers = #tpu.dot_dimension_numbers<[1], [0], [0], [1], [0, 0, 1, 1], [], []>} : vector<2x16xf32>, vector<16x750xf32>, vector<2x750xf32> -> vector<2x750xf32>
    %c0_17 = arith.constant 0 : index
    %c0_18 = arith.constant 0 : index
    %c0_19 = arith.constant 0 : index
    %33 = vector.load %arg4[%c0_17, %c0_18, %c0_19] : memref<4x1x750xf32, #tpu.memory_space<vmem>>, vector<1x1x750xf32>
    %34 = vector.shape_cast %33 : vector<1x1x750xf32> to vector<1x750xf32>
    %35 = vector.broadcast %34 : vector<1x750xf32> to vector<2x750xf32>
    %36 = arith.addf %32, %35 : vector<2x750xf32>
    %cst_20 = arith.constant 0.000000e+00 : f32
    %37 = vector.broadcast %cst_20 : f32 to vector<2x750xf32>
    %38 = arith.maximumf %36, %37 : vector<2x750xf32>
    %39 = vector.extract_strided_slice %12 {offsets = [0, 4], sizes = [2, 4], strides = [1, 1]} : vector<2x16xf32> to vector<2x4xf32>
    %40 = vector.extract_strided_slice %16 {offsets = [0, 4], sizes = [2, 4], strides = [1, 1]} : vector<2x16xf32> to vector<2x4xf32>
    %41 = vector.extract_strided_slice %20 {offsets = [0, 4], sizes = [2, 4], strides = [1, 1]} : vector<2x16xf32> to vector<2x4xf32>
    %42 = vector.extract_strided_slice %24 {offsets = [0, 4], sizes = [2, 4], strides = [1, 1]} : vector<2x16xf32> to vector<2x4xf32>
    %43 = tpu.concatenate %39, %40, %41, %42 in 1 : vector<2x4xf32>, vector<2x4xf32>, vector<2x4xf32>, vector<2x4xf32> -> vector<2x16xf32>
    %c1_21 = arith.constant 1 : index
    %c0_22 = arith.constant 0 : index
    %c0_23 = arith.constant 0 : index
    %44 = vector.load %arg3[%c1_21, %c0_22, %c0_23] : memref<4x16x750xf32, #tpu.memory_space<vmem>>, vector<1x16x750xf32>
    %45 = vector.shape_cast %44 : vector<1x16x750xf32> to vector<16x750xf32>
    %cst_24 = arith.constant dense<0.000000e+00> : vector<2x750xf32>
    %46 = tpu.matmul %43, %45, %cst_24 {dimension_numbers = #tpu.dot_dimension_numbers<[1], [0], [0], [1], [0, 0, 1, 1], [], []>} : vector<2x16xf32>, vector<16x750xf32>, vector<2x750xf32> -> vector<2x750xf32>
    %c1_25 = arith.constant 1 : index
    %c0_26 = arith.constant 0 : index
    %c0_27 = arith.constant 0 : index
    %47 = vector.load %arg4[%c1_25, %c0_26, %c0_27] : memref<4x1x750xf32, #tpu.memory_space<vmem>>, vector<1x1x750xf32>
    %48 = vector.shape_cast %47 : vector<1x1x750xf32> to vector<1x750xf32>
    %49 = vector.broadcast %48 : vector<1x750xf32> to vector<2x750xf32>
    %50 = arith.addf %46, %49 : vector<2x750xf32>
    %cst_28 = arith.constant 0.000000e+00 : f32
    %51 = vector.broadcast %cst_28 : f32 to vector<2x750xf32>
    %52 = arith.maximumf %50, %51 : vector<2x750xf32>
    %53 = vector.extract_strided_slice %12 {offsets = [0, 8], sizes = [2, 4], strides = [1, 1]} : vector<2x16xf32> to vector<2x4xf32>
    %54 = vector.extract_strided_slice %16 {offsets = [0, 8], sizes = [2, 4], strides = [1, 1]} : vector<2x16xf32> to vector<2x4xf32>
    %55 = vector.extract_strided_slice %20 {offsets = [0, 8], sizes = [2, 4], strides = [1, 1]} : vector<2x16xf32> to vector<2x4xf32>
    %56 = vector.extract_strided_slice %24 {offsets = [0, 8], sizes = [2, 4], strides = [1, 1]} : vector<2x16xf32> to vector<2x4xf32>
    %57 = tpu.concatenate %53, %54, %55, %56 in 1 : vector<2x4xf32>, vector<2x4xf32>, vector<2x4xf32>, vector<2x4xf32> -> vector<2x16xf32>
    %c2_29 = arith.constant 2 : index
    %c0_30 = arith.constant 0 : index
    %c0_31 = arith.constant 0 : index
    %58 = vector.load %arg3[%c2_29, %c0_30, %c0_31] : memref<4x16x750xf32, #tpu.memory_space<vmem>>, vector<1x16x750xf32>
    %59 = vector.shape_cast %58 : vector<1x16x750xf32> to vector<16x750xf32>
    %cst_32 = arith.constant dense<0.000000e+00> : vector<2x750xf32>
    %60 = tpu.matmul %57, %59, %cst_32 {dimension_numbers = #tpu.dot_dimension_numbers<[1], [0], [0], [1], [0, 0, 1, 1], [], []>} : vector<2x16xf32>, vector<16x750xf32>, vector<2x750xf32> -> vector<2x750xf32>
    %c2_33 = arith.constant 2 : index
    %c0_34 = arith.constant 0 : index
    %c0_35 = arith.constant 0 : index
    %61 = vector.load %arg4[%c2_33, %c0_34, %c0_35] : memref<4x1x750xf32, #tpu.memory_space<vmem>>, vector<1x1x750xf32>
    %62 = vector.shape_cast %61 : vector<1x1x750xf32> to vector<1x750xf32>
    %63 = vector.broadcast %62 : vector<1x750xf32> to vector<2x750xf32>
    %64 = arith.addf %60, %63 : vector<2x750xf32>
    %cst_36 = arith.constant 0.000000e+00 : f32
    %65 = vector.broadcast %cst_36 : f32 to vector<2x750xf32>
    %66 = arith.maximumf %64, %65 : vector<2x750xf32>
    %67 = vector.extract_strided_slice %12 {offsets = [0, 12], sizes = [2, 4], strides = [1, 1]} : vector<2x16xf32> to vector<2x4xf32>
    %68 = vector.extract_strided_slice %16 {offsets = [0, 12], sizes = [2, 4], strides = [1, 1]} : vector<2x16xf32> to vector<2x4xf32>
    %69 = vector.extract_strided_slice %20 {offsets = [0, 12], sizes = [2, 4], strides = [1, 1]} : vector<2x16xf32> to vector<2x4xf32>
    %70 = vector.extract_strided_slice %24 {offsets = [0, 12], sizes = [2, 4], strides = [1, 1]} : vector<2x16xf32> to vector<2x4xf32>
    %71 = tpu.concatenate %67, %68, %69, %70 in 1 : vector<2x4xf32>, vector<2x4xf32>, vector<2x4xf32>, vector<2x4xf32> -> vector<2x16xf32>
    %c3_37 = arith.constant 3 : index
    %c0_38 = arith.constant 0 : index
    %c0_39 = arith.constant 0 : index
    %72 = vector.load %arg3[%c3_37, %c0_38, %c0_39] : memref<4x16x750xf32, #tpu.memory_space<vmem>>, vector<1x16x750xf32>
    %73 = vector.shape_cast %72 : vector<1x16x750xf32> to vector<16x750xf32>
    %cst_40 = arith.constant dense<0.000000e+00> : vector<2x750xf32>
    %74 = tpu.matmul %71, %73, %cst_40 {dimension_numbers = #tpu.dot_dimension_numbers<[1], [0], [0], [1], [0, 0, 1, 1], [], []>} : vector<2x16xf32>, vector<16x750xf32>, vector<2x750xf32> -> vector<2x750xf32>
    %c3_41 = arith.constant 3 : index
    %c0_42 = arith.constant 0 : index
    %c0_43 = arith.constant 0 : index
    %75 = vector.load %arg4[%c3_41, %c0_42, %c0_43] : memref<4x1x750xf32, #tpu.memory_space<vmem>>, vector<1x1x750xf32>
    %76 = vector.shape_cast %75 : vector<1x1x750xf32> to vector<1x750xf32>
    %77 = vector.broadcast %76 : vector<1x750xf32> to vector<2x750xf32>
    %78 = arith.addf %74, %77 : vector<2x750xf32>
    %cst_44 = arith.constant 0.000000e+00 : f32
    %79 = vector.broadcast %cst_44 : f32 to vector<2x750xf32>
    %80 = arith.maximumf %78, %79 : vector<2x750xf32>
    %c0_i32_45 = arith.constant 0 : i32
    %81 = tpu.memref_slice %arg21[%c0_i32_45] : memref<4x!tpu.dma_semaphore, #tpu.memory_space<semaphore_mem>> -> memref<1x!tpu.dma_semaphore, #tpu.memory_space<semaphore_mem>>
    %82 = tpu.memref_squeeze %81 : memref<1x!tpu.dma_semaphore, #tpu.memory_space<semaphore_mem>> -> memref<!tpu.dma_semaphore, #tpu.memory_space<semaphore_mem>>
    tpu.wait_dma2 semaphore(%82 : memref<!tpu.dma_semaphore, #tpu.memory_space<semaphore_mem>>) src(%arg5 : memref<4x750x250xbf16, #tpu.memory_space<any>>) dst(%arg17 : memref<4x750x250xbf16, #tpu.memory_space<vmem>>)
    %c1_i32_46 = arith.constant 1 : i32
    %83 = tpu.memref_slice %arg21[%c1_i32_46] : memref<4x!tpu.dma_semaphore, #tpu.memory_space<semaphore_mem>> -> memref<1x!tpu.dma_semaphore, #tpu.memory_space<semaphore_mem>>
    %84 = tpu.memref_squeeze %83 : memref<1x!tpu.dma_semaphore, #tpu.memory_space<semaphore_mem>> -> memref<!tpu.dma_semaphore, #tpu.memory_space<semaphore_mem>>
    tpu.wait_dma2 semaphore(%84 : memref<!tpu.dma_semaphore, #tpu.memory_space<semaphore_mem>>) src(%arg6 : memref<4x250x250xbf16, #tpu.memory_space<any>>) dst(%arg18 : memref<4x250x250xbf16, #tpu.memory_space<vmem>>)
    %85 = arith.truncf %38 : vector<2x750xf32> to vector<2x750xbf16>
    %86 = arith.truncf %52 : vector<2x750xf32> to vector<2x750xbf16>
    %87 = arith.truncf %66 : vector<2x750xf32> to vector<2x750xbf16>
    %88 = arith.truncf %80 : vector<2x750xf32> to vector<2x750xbf16>
    %89 = vector.extract_strided_slice %85 {offsets = [0, 0], sizes = [2, 188], strides = [1, 1]} : vector<2x750xbf16> to vector<2x188xbf16>
    %90 = vector.extract_strided_slice %86 {offsets = [0, 0], sizes = [2, 188], strides = [1, 1]} : vector<2x750xbf16> to vector<2x188xbf16>
    %91 = vector.extract_strided_slice %87 {offsets = [0, 0], sizes = [2, 187], strides = [1, 1]} : vector<2x750xbf16> to vector<2x187xbf16>
    %92 = vector.extract_strided_slice %88 {offsets = [0, 0], sizes = [2, 187], strides = [1, 1]} : vector<2x750xbf16> to vector<2x187xbf16>
    %93 = tpu.concatenate %89, %90, %91, %92 in 1 : vector<2x188xbf16>, vector<2x188xbf16>, vector<2x187xbf16>, vector<2x187xbf16> -> vector<2x750xbf16>
    %c0_47 = arith.constant 0 : index
    %c0_48 = arith.constant 0 : index
    %c0_49 = arith.constant 0 : index
    %94 = vector.load %arg17[%c0_47, %c0_48, %c0_49] : memref<4x750x250xbf16, #tpu.memory_space<vmem>>, vector<1x750x250xbf16>
    %95 = vector.shape_cast %94 : vector<1x750x250xbf16> to vector<750x250xbf16>
    %cst_50 = arith.constant dense<0.000000e+00> : vector<2x250xf32>
    %96 = tpu.matmul %93, %95, %cst_50 {dimension_numbers = #tpu.dot_dimension_numbers<[1], [0], [0], [1], [0, 0, 1, 1], [], []>} : vector<2x750xbf16>, vector<750x250xbf16>, vector<2x250xf32> -> vector<2x250xf32>
    %97 = vector.extract_strided_slice %85 {offsets = [0, 188], sizes = [2, 187], strides = [1, 1]} : vector<2x750xbf16> to vector<2x187xbf16>
    %98 = vector.extract_strided_slice %86 {offsets = [0, 188], sizes = [2, 187], strides = [1, 1]} : vector<2x750xbf16> to vector<2x187xbf16>
    %99 = vector.extract_strided_slice %87 {offsets = [0, 187], sizes = [2, 188], strides = [1, 1]} : vector<2x750xbf16> to vector<2x188xbf16>
    %100 = vector.extract_strided_slice %88 {offsets = [0, 187], sizes = [2, 188], strides = [1, 1]} : vector<2x750xbf16> to vector<2x188xbf16>
    %101 = tpu.concatenate %97, %98, %99, %100 in 1 : vector<2x187xbf16>, vector<2x187xbf16>, vector<2x188xbf16>, vector<2x188xbf16> -> vector<2x750xbf16>
    %c1_51 = arith.constant 1 : index
    %c0_52 = arith.constant 0 : index
    %c0_53 = arith.constant 0 : index
    %102 = vector.load %arg17[%c1_51, %c0_52, %c0_53] : memref<4x750x250xbf16, #tpu.memory_space<vmem>>, vector<1x750x250xbf16>
    %103 = vector.shape_cast %102 : vector<1x750x250xbf16> to vector<750x250xbf16>
    %cst_54 = arith.constant dense<0.000000e+00> : vector<2x250xf32>
    %104 = tpu.matmul %101, %103, %cst_54 {dimension_numbers = #tpu.dot_dimension_numbers<[1], [0], [0], [1], [0, 0, 1, 1], [], []>} : vector<2x750xbf16>, vector<750x250xbf16>, vector<2x250xf32> -> vector<2x250xf32>
    %105 = vector.extract_strided_slice %85 {offsets = [0, 375], sizes = [2, 188], strides = [1, 1]} : vector<2x750xbf16> to vector<2x188xbf16>
    %106 = vector.extract_strided_slice %86 {offsets = [0, 375], sizes = [2, 188], strides = [1, 1]} : vector<2x750xbf16> to vector<2x188xbf16>
    %107 = vector.extract_strided_slice %87 {offsets = [0, 375], sizes = [2, 187], strides = [1, 1]} : vector<2x750xbf16> to vector<2x187xbf16>
    %108 = vector.extract_strided_slice %88 {offsets = [0, 375], sizes = [2, 187], strides = [1, 1]} : vector<2x750xbf16> to vector<2x187xbf16>
    %109 = tpu.concatenate %105, %106, %107, %108 in 1 : vector<2x188xbf16>, vector<2x188xbf16>, vector<2x187xbf16>, vector<2x187xbf16> -> vector<2x750xbf16>
    %c2_55 = arith.constant 2 : index
    %c0_56 = arith.constant 0 : index
    %c0_57 = arith.constant 0 : index
    %110 = vector.load %arg17[%c2_55, %c0_56, %c0_57] : memref<4x750x250xbf16, #tpu.memory_space<vmem>>, vector<1x750x250xbf16>
    %111 = vector.shape_cast %110 : vector<1x750x250xbf16> to vector<750x250xbf16>
    %cst_58 = arith.constant dense<0.000000e+00> : vector<2x250xf32>
    %112 = tpu.matmul %109, %111, %cst_58 {dimension_numbers = #tpu.dot_dimension_numbers<[1], [0], [0], [1], [0, 0, 1, 1], [], []>} : vector<2x750xbf16>, vector<750x250xbf16>, vector<2x250xf32> -> vector<2x250xf32>
    %113 = vector.extract_strided_slice %85 {offsets = [0, 563], sizes = [2, 187], strides = [1, 1]} : vector<2x750xbf16> to vector<2x187xbf16>
    %114 = vector.extract_strided_slice %86 {offsets = [0, 563], sizes = [2, 187], strides = [1, 1]} : vector<2x750xbf16> to vector<2x187xbf16>
    %115 = vector.extract_strided_slice %87 {offsets = [0, 562], sizes = [2, 188], strides = [1, 1]} : vector<2x750xbf16> to vector<2x188xbf16>
    %116 = vector.extract_strided_slice %88 {offsets = [0, 562], sizes = [2, 188], strides = [1, 1]} : vector<2x750xbf16> to vector<2x188xbf16>
    %117 = tpu.concatenate %113, %114, %115, %116 in 1 : vector<2x187xbf16>, vector<2x187xbf16>, vector<2x188xbf16>, vector<2x188xbf16> -> vector<2x750xbf16>
    %c3_59 = arith.constant 3 : index
    %c0_60 = arith.constant 0 : index
    %c0_61 = arith.constant 0 : index
    %118 = vector.load %arg17[%c3_59, %c0_60, %c0_61] : memref<4x750x250xbf16, #tpu.memory_space<vmem>>, vector<1x750x250xbf16>
    %119 = vector.shape_cast %118 : vector<1x750x250xbf16> to vector<750x250xbf16>
    %cst_62 = arith.constant dense<0.000000e+00> : vector<2x250xf32>
    %120 = tpu.matmul %117, %119, %cst_62 {dimension_numbers = #tpu.dot_dimension_numbers<[1], [0], [0], [1], [0, 0, 1, 1], [], []>} : vector<2x750xbf16>, vector<750x250xbf16>, vector<2x250xf32> -> vector<2x250xf32>
    %121 = vector.extract_strided_slice %96 {offsets = [0, 0], sizes = [2, 63], strides = [1, 1]} : vector<2x250xf32> to vector<2x63xf32>
    %122 = vector.extract_strided_slice %104 {offsets = [0, 0], sizes = [2, 62], strides = [1, 1]} : vector<2x250xf32> to vector<2x62xf32>
    %123 = vector.extract_strided_slice %112 {offsets = [0, 0], sizes = [2, 63], strides = [1, 1]} : vector<2x250xf32> to vector<2x63xf32>
    %124 = vector.extract_strided_slice %120 {offsets = [0, 0], sizes = [2, 62], strides = [1, 1]} : vector<2x250xf32> to vector<2x62xf32>
    %125 = tpu.concatenate %121, %122, %123, %124 in 1 : vector<2x63xf32>, vector<2x62xf32>, vector<2x63xf32>, vector<2x62xf32> -> vector<2x250xf32>
    %126 = arith.truncf %125 : vector<2x250xf32> to vector<2x250xbf16>
    %c0_63 = arith.constant 0 : index
    %c0_64 = arith.constant 0 : index
    %c0_65 = arith.constant 0 : index
    %127 = vector.load %arg18[%c0_63, %c0_64, %c0_65] : memref<4x250x250xbf16, #tpu.memory_space<vmem>>, vector<1x250x250xbf16>
    %128 = vector.shape_cast %127 : vector<1x250x250xbf16> to vector<250x250xbf16>
    %cst_66 = arith.constant dense<0.000000e+00> : vector<2x250xf32>
    %129 = tpu.matmul %126, %128, %cst_66 {dimension_numbers = #tpu.dot_dimension_numbers<[1], [0], [0], [1], [0, 0, 1, 1], [], []>} : vector<2x250xbf16>, vector<250x250xbf16>, vector<2x250xf32> -> vector<2x250xf32>
    %c0_67 = arith.constant 0 : index
    %c0_68 = arith.constant 0 : index
    %c0_69 = arith.constant 0 : index
    %130 = vector.load %arg7[%c0_67, %c0_68, %c0_69] : memref<4x1x250xf32, #tpu.memory_space<vmem>>, vector<1x1x250xf32>
    %131 = vector.shape_cast %130 : vector<1x1x250xf32> to vector<1x250xf32>
    %132 = vector.broadcast %131 : vector<1x250xf32> to vector<2x250xf32>
    %133 = arith.addf %129, %132 : vector<2x250xf32>
    %cst_70 = arith.constant 0.000000e+00 : f32
    %134 = vector.broadcast %cst_70 : f32 to vector<2x250xf32>
    %135 = arith.maximumf %133, %134 : vector<2x250xf32>
    %136 = vector.extract_strided_slice %96 {offsets = [0, 63], sizes = [2, 63], strides = [1, 1]} : vector<2x250xf32> to vector<2x63xf32>
    %137 = vector.extract_strided_slice %104 {offsets = [0, 62], sizes = [2, 62], strides = [1, 1]} : vector<2x250xf32> to vector<2x62xf32>
    %138 = vector.extract_strided_slice %112 {offsets = [0, 63], sizes = [2, 63], strides = [1, 1]} : vector<2x250xf32> to vector<2x63xf32>
    %139 = vector.extract_strided_slice %120 {offsets = [0, 62], sizes = [2, 62], strides = [1, 1]} : vector<2x250xf32> to vector<2x62xf32>
    %140 = tpu.concatenate %136, %137, %138, %139 in 1 : vector<2x63xf32>, vector<2x62xf32>, vector<2x63xf32>, vector<2x62xf32> -> vector<2x250xf32>
    %141 = arith.truncf %140 : vector<2x250xf32> to vector<2x250xbf16>
    %c1_71 = arith.constant 1 : index
    %c0_72 = arith.constant 0 : index
    %c0_73 = arith.constant 0 : index
    %142 = vector.load %arg18[%c1_71, %c0_72, %c0_73] : memref<4x250x250xbf16, #tpu.memory_space<vmem>>, vector<1x250x250xbf16>
    %143 = vector.shape_cast %142 : vector<1x250x250xbf16> to vector<250x250xbf16>
    %cst_74 = arith.constant dense<0.000000e+00> : vector<2x250xf32>
    %144 = tpu.matmul %141, %143, %cst_74 {dimension_numbers = #tpu.dot_dimension_numbers<[1], [0], [0], [1], [0, 0, 1, 1], [], []>} : vector<2x250xbf16>, vector<250x250xbf16>, vector<2x250xf32> -> vector<2x250xf32>
    %c1_75 = arith.constant 1 : index
    %c0_76 = arith.constant 0 : index
    %c0_77 = arith.constant 0 : index
    %145 = vector.load %arg7[%c1_75, %c0_76, %c0_77] : memref<4x1x250xf32, #tpu.memory_space<vmem>>, vector<1x1x250xf32>
    %146 = vector.shape_cast %145 : vector<1x1x250xf32> to vector<1x250xf32>
    %147 = vector.broadcast %146 : vector<1x250xf32> to vector<2x250xf32>
    %148 = arith.addf %144, %147 : vector<2x250xf32>
    %cst_78 = arith.constant 0.000000e+00 : f32
    %149 = vector.broadcast %cst_78 : f32 to vector<2x250xf32>
    %150 = arith.maximumf %148, %149 : vector<2x250xf32>
    %151 = vector.extract_strided_slice %96 {offsets = [0, 126], sizes = [2, 62], strides = [1, 1]} : vector<2x250xf32> to vector<2x62xf32>
    %152 = vector.extract_strided_slice %104 {offsets = [0, 124], sizes = [2, 63], strides = [1, 1]} : vector<2x250xf32> to vector<2x63xf32>
    %153 = vector.extract_strided_slice %112 {offsets = [0, 126], sizes = [2, 62], strides = [1, 1]} : vector<2x250xf32> to vector<2x62xf32>
    %154 = vector.extract_strided_slice %120 {offsets = [0, 124], sizes = [2, 63], strides = [1, 1]} : vector<2x250xf32> to vector<2x63xf32>
    %155 = tpu.concatenate %151, %152, %153, %154 in 1 : vector<2x62xf32>, vector<2x63xf32>, vector<2x62xf32>, vector<2x63xf32> -> vector<2x250xf32>
    %156 = arith.truncf %155 : vector<2x250xf32> to vector<2x250xbf16>
    %c2_79 = arith.constant 2 : index
    %c0_80 = arith.constant 0 : index
    %c0_81 = arith.constant 0 : index
    %157 = vector.load %arg18[%c2_79, %c0_80, %c0_81] : memref<4x250x250xbf16, #tpu.memory_space<vmem>>, vector<1x250x250xbf16>
    %158 = vector.shape_cast %157 : vector<1x250x250xbf16> to vector<250x250xbf16>
    %cst_82 = arith.constant dense<0.000000e+00> : vector<2x250xf32>
    %159 = tpu.matmul %156, %158, %cst_82 {dimension_numbers = #tpu.dot_dimension_numbers<[1], [0], [0], [1], [0, 0, 1, 1], [], []>} : vector<2x250xbf16>, vector<250x250xbf16>, vector<2x250xf32> -> vector<2x250xf32>
    %c2_83 = arith.constant 2 : index
    %c0_84 = arith.constant 0 : index
    %c0_85 = arith.constant 0 : index
    %160 = vector.load %arg7[%c2_83, %c0_84, %c0_85] : memref<4x1x250xf32, #tpu.memory_space<vmem>>, vector<1x1x250xf32>
    %161 = vector.shape_cast %160 : vector<1x1x250xf32> to vector<1x250xf32>
    %162 = vector.broadcast %161 : vector<1x250xf32> to vector<2x250xf32>
    %163 = arith.addf %159, %162 : vector<2x250xf32>
    %cst_86 = arith.constant 0.000000e+00 : f32
    %164 = vector.broadcast %cst_86 : f32 to vector<2x250xf32>
    %165 = arith.maximumf %163, %164 : vector<2x250xf32>
    %166 = vector.extract_strided_slice %96 {offsets = [0, 188], sizes = [2, 62], strides = [1, 1]} : vector<2x250xf32> to vector<2x62xf32>
    %167 = vector.extract_strided_slice %104 {offsets = [0, 187], sizes = [2, 63], strides = [1, 1]} : vector<2x250xf32> to vector<2x63xf32>
    %168 = vector.extract_strided_slice %112 {offsets = [0, 188], sizes = [2, 62], strides = [1, 1]} : vector<2x250xf32> to vector<2x62xf32>
    %169 = vector.extract_strided_slice %120 {offsets = [0, 187], sizes = [2, 63], strides = [1, 1]} : vector<2x250xf32> to vector<2x63xf32>
    %170 = tpu.concatenate %166, %167, %168, %169 in 1 : vector<2x62xf32>, vector<2x63xf32>, vector<2x62xf32>, vector<2x63xf32> -> vector<2x250xf32>
    %171 = arith.truncf %170 : vector<2x250xf32> to vector<2x250xbf16>
    %c3_87 = arith.constant 3 : index
    %c0_88 = arith.constant 0 : index
    %c0_89 = arith.constant 0 : index
    %172 = vector.load %arg18[%c3_87, %c0_88, %c0_89] : memref<4x250x250xbf16, #tpu.memory_space<vmem>>, vector<1x250x250xbf16>
    %173 = vector.shape_cast %172 : vector<1x250x250xbf16> to vector<250x250xbf16>
    %cst_90 = arith.constant dense<0.000000e+00> : vector<2x250xf32>
    %174 = tpu.matmul %171, %173, %cst_90 {dimension_numbers = #tpu.dot_dimension_numbers<[1], [0], [0], [1], [0, 0, 1, 1], [], []>} : vector<2x250xbf16>, vector<250x250xbf16>, vector<2x250xf32> -> vector<2x250xf32>
    %c3_91 = arith.constant 3 : index
    %c0_92 = arith.constant 0 : index
    %c0_93 = arith.constant 0 : index
    %175 = vector.load %arg7[%c3_91, %c0_92, %c0_93] : memref<4x1x250xf32, #tpu.memory_space<vmem>>, vector<1x1x250xf32>
    %176 = vector.shape_cast %175 : vector<1x1x250xf32> to vector<1x250xf32>
    %177 = vector.broadcast %176 : vector<1x250xf32> to vector<2x250xf32>
    %178 = arith.addf %174, %177 : vector<2x250xf32>
    %cst_94 = arith.constant 0.000000e+00 : f32
    %179 = vector.broadcast %cst_94 : f32 to vector<2x250xf32>
    %180 = arith.maximumf %178, %179 : vector<2x250xf32>
    %c2_i32_95 = arith.constant 2 : i32
    %181 = tpu.memref_slice %arg21[%c2_i32_95] : memref<4x!tpu.dma_semaphore, #tpu.memory_space<semaphore_mem>> -> memref<1x!tpu.dma_semaphore, #tpu.memory_space<semaphore_mem>>
    %182 = tpu.memref_squeeze %181 : memref<1x!tpu.dma_semaphore, #tpu.memory_space<semaphore_mem>> -> memref<!tpu.dma_semaphore, #tpu.memory_space<semaphore_mem>>
    tpu.wait_dma2 semaphore(%182 : memref<!tpu.dma_semaphore, #tpu.memory_space<semaphore_mem>>) src(%arg8 : memref<4x250x250xbf16, #tpu.memory_space<any>>) dst(%arg19 : memref<4x250x250xbf16, #tpu.memory_space<vmem>>)
    %c3_i32_96 = arith.constant 3 : i32
    %183 = tpu.memref_slice %arg21[%c3_i32_96] : memref<4x!tpu.dma_semaphore, #tpu.memory_space<semaphore_mem>> -> memref<1x!tpu.dma_semaphore, #tpu.memory_space<semaphore_mem>>
    %184 = tpu.memref_squeeze %183 : memref<1x!tpu.dma_semaphore, #tpu.memory_space<semaphore_mem>> -> memref<!tpu.dma_semaphore, #tpu.memory_space<semaphore_mem>>
    tpu.wait_dma2 semaphore(%184 : memref<!tpu.dma_semaphore, #tpu.memory_space<semaphore_mem>>) src(%arg9 : memref<4x250x250xbf16, #tpu.memory_space<any>>) dst(%arg20 : memref<4x250x250xbf16, #tpu.memory_space<vmem>>)
    %185 = arith.truncf %135 : vector<2x250xf32> to vector<2x250xbf16>
    %186 = arith.truncf %150 : vector<2x250xf32> to vector<2x250xbf16>
    %187 = arith.truncf %165 : vector<2x250xf32> to vector<2x250xbf16>
    %188 = arith.truncf %180 : vector<2x250xf32> to vector<2x250xbf16>
    %189 = vector.extract_strided_slice %185 {offsets = [0, 0], sizes = [2, 63], strides = [1, 1]} : vector<2x250xbf16> to vector<2x63xbf16>
    %190 = vector.extract_strided_slice %186 {offsets = [0, 0], sizes = [2, 63], strides = [1, 1]} : vector<2x250xbf16> to vector<2x63xbf16>
    %191 = vector.extract_strided_slice %187 {offsets = [0, 0], sizes = [2, 62], strides = [1, 1]} : vector<2x250xbf16> to vector<2x62xbf16>
    %192 = vector.extract_strided_slice %188 {offsets = [0, 0], sizes = [2, 62], strides = [1, 1]} : vector<2x250xbf16> to vector<2x62xbf16>
    %193 = tpu.concatenate %189, %190, %191, %192 in 1 : vector<2x63xbf16>, vector<2x63xbf16>, vector<2x62xbf16>, vector<2x62xbf16> -> vector<2x250xbf16>
    %c0_97 = arith.constant 0 : index
    %c0_98 = arith.constant 0 : index
    %c0_99 = arith.constant 0 : index
    %194 = vector.load %arg19[%c0_97, %c0_98, %c0_99] : memref<4x250x250xbf16, #tpu.memory_space<vmem>>, vector<1x250x250xbf16>
    %195 = vector.shape_cast %194 : vector<1x250x250xbf16> to vector<250x250xbf16>
    %cst_100 = arith.constant dense<0.000000e+00> : vector<2x250xf32>
    %196 = tpu.matmul %193, %195, %cst_100 {dimension_numbers = #tpu.dot_dimension_numbers<[1], [0], [0], [1], [0, 0, 1, 1], [], []>} : vector<2x250xbf16>, vector<250x250xbf16>, vector<2x250xf32> -> vector<2x250xf32>
    %197 = vector.extract_strided_slice %185 {offsets = [0, 63], sizes = [2, 62], strides = [1, 1]} : vector<2x250xbf16> to vector<2x62xbf16>
    %198 = vector.extract_strided_slice %186 {offsets = [0, 63], sizes = [2, 62], strides = [1, 1]} : vector<2x250xbf16> to vector<2x62xbf16>
    %199 = vector.extract_strided_slice %187 {offsets = [0, 62], sizes = [2, 63], strides = [1, 1]} : vector<2x250xbf16> to vector<2x63xbf16>
    %200 = vector.extract_strided_slice %188 {offsets = [0, 62], sizes = [2, 63], strides = [1, 1]} : vector<2x250xbf16> to vector<2x63xbf16>
    %201 = tpu.concatenate %197, %198, %199, %200 in 1 : vector<2x62xbf16>, vector<2x62xbf16>, vector<2x63xbf16>, vector<2x63xbf16> -> vector<2x250xbf16>
    %c1_101 = arith.constant 1 : index
    %c0_102 = arith.constant 0 : index
    %c0_103 = arith.constant 0 : index
    %202 = vector.load %arg19[%c1_101, %c0_102, %c0_103] : memref<4x250x250xbf16, #tpu.memory_space<vmem>>, vector<1x250x250xbf16>
    %203 = vector.shape_cast %202 : vector<1x250x250xbf16> to vector<250x250xbf16>
    %cst_104 = arith.constant dense<0.000000e+00> : vector<2x250xf32>
    %204 = tpu.matmul %201, %203, %cst_104 {dimension_numbers = #tpu.dot_dimension_numbers<[1], [0], [0], [1], [0, 0, 1, 1], [], []>} : vector<2x250xbf16>, vector<250x250xbf16>, vector<2x250xf32> -> vector<2x250xf32>
    %205 = vector.extract_strided_slice %185 {offsets = [0, 125], sizes = [2, 63], strides = [1, 1]} : vector<2x250xbf16> to vector<2x63xbf16>
    %206 = vector.extract_strided_slice %186 {offsets = [0, 125], sizes = [2, 63], strides = [1, 1]} : vector<2x250xbf16> to vector<2x63xbf16>
    %207 = vector.extract_strided_slice %187 {offsets = [0, 125], sizes = [2, 62], strides = [1, 1]} : vector<2x250xbf16> to vector<2x62xbf16>
    %208 = vector.extract_strided_slice %188 {offsets = [0, 125], sizes = [2, 62], strides = [1, 1]} : vector<2x250xbf16> to vector<2x62xbf16>
    %209 = tpu.concatenate %205, %206, %207, %208 in 1 : vector<2x63xbf16>, vector<2x63xbf16>, vector<2x62xbf16>, vector<2x62xbf16> -> vector<2x250xbf16>
    %c2_105 = arith.constant 2 : index
    %c0_106 = arith.constant 0 : index
    %c0_107 = arith.constant 0 : index
    %210 = vector.load %arg19[%c2_105, %c0_106, %c0_107] : memref<4x250x250xbf16, #tpu.memory_space<vmem>>, vector<1x250x250xbf16>
    %211 = vector.shape_cast %210 : vector<1x250x250xbf16> to vector<250x250xbf16>
    %cst_108 = arith.constant dense<0.000000e+00> : vector<2x250xf32>
    %212 = tpu.matmul %209, %211, %cst_108 {dimension_numbers = #tpu.dot_dimension_numbers<[1], [0], [0], [1], [0, 0, 1, 1], [], []>} : vector<2x250xbf16>, vector<250x250xbf16>, vector<2x250xf32> -> vector<2x250xf32>
    %213 = vector.extract_strided_slice %185 {offsets = [0, 188], sizes = [2, 62], strides = [1, 1]} : vector<2x250xbf16> to vector<2x62xbf16>
    %214 = vector.extract_strided_slice %186 {offsets = [0, 188], sizes = [2, 62], strides = [1, 1]} : vector<2x250xbf16> to vector<2x62xbf16>
    %215 = vector.extract_strided_slice %187 {offsets = [0, 187], sizes = [2, 63], strides = [1, 1]} : vector<2x250xbf16> to vector<2x63xbf16>
    %216 = vector.extract_strided_slice %188 {offsets = [0, 187], sizes = [2, 63], strides = [1, 1]} : vector<2x250xbf16> to vector<2x63xbf16>
    %217 = tpu.concatenate %213, %214, %215, %216 in 1 : vector<2x62xbf16>, vector<2x62xbf16>, vector<2x63xbf16>, vector<2x63xbf16> -> vector<2x250xbf16>
    %c3_109 = arith.constant 3 : index
    %c0_110 = arith.constant 0 : index
    %c0_111 = arith.constant 0 : index
    %218 = vector.load %arg19[%c3_109, %c0_110, %c0_111] : memref<4x250x250xbf16, #tpu.memory_space<vmem>>, vector<1x250x250xbf16>
    %219 = vector.shape_cast %218 : vector<1x250x250xbf16> to vector<250x250xbf16>
    %cst_112 = arith.constant dense<0.000000e+00> : vector<2x250xf32>
    %220 = tpu.matmul %217, %219, %cst_112 {dimension_numbers = #tpu.dot_dimension_numbers<[1], [0], [0], [1], [0, 0, 1, 1], [], []>} : vector<2x250xbf16>, vector<250x250xbf16>, vector<2x250xf32> -> vector<2x250xf32>
    %221 = vector.extract_strided_slice %196 {offsets = [0, 0], sizes = [2, 63], strides = [1, 1]} : vector<2x250xf32> to vector<2x63xf32>
    %222 = vector.extract_strided_slice %204 {offsets = [0, 0], sizes = [2, 62], strides = [1, 1]} : vector<2x250xf32> to vector<2x62xf32>
    %223 = vector.extract_strided_slice %212 {offsets = [0, 0], sizes = [2, 63], strides = [1, 1]} : vector<2x250xf32> to vector<2x63xf32>
    %224 = vector.extract_strided_slice %220 {offsets = [0, 0], sizes = [2, 62], strides = [1, 1]} : vector<2x250xf32> to vector<2x62xf32>
    %225 = tpu.concatenate %221, %222, %223, %224 in 1 : vector<2x63xf32>, vector<2x62xf32>, vector<2x63xf32>, vector<2x62xf32> -> vector<2x250xf32>
    %226 = arith.truncf %225 : vector<2x250xf32> to vector<2x250xbf16>
    %c0_113 = arith.constant 0 : index
    %c0_114 = arith.constant 0 : index
    %c0_115 = arith.constant 0 : index
    %227 = vector.load %arg20[%c0_113, %c0_114, %c0_115] : memref<4x250x250xbf16, #tpu.memory_space<vmem>>, vector<1x250x250xbf16>
    %228 = vector.shape_cast %227 : vector<1x250x250xbf16> to vector<250x250xbf16>
    %cst_116 = arith.constant dense<0.000000e+00> : vector<2x250xf32>
    %229 = tpu.matmul %226, %228, %cst_116 {dimension_numbers = #tpu.dot_dimension_numbers<[1], [0], [0], [1], [0, 0, 1, 1], [], []>} : vector<2x250xbf16>, vector<250x250xbf16>, vector<2x250xf32> -> vector<2x250xf32>
    %c0_117 = arith.constant 0 : index
    %c0_118 = arith.constant 0 : index
    %c0_119 = arith.constant 0 : index
    %230 = vector.load %arg10[%c0_117, %c0_118, %c0_119] : memref<4x1x250xf32, #tpu.memory_space<vmem>>, vector<1x1x250xf32>
    %231 = vector.shape_cast %230 : vector<1x1x250xf32> to vector<1x250xf32>
    %232 = vector.broadcast %231 : vector<1x250xf32> to vector<2x250xf32>
    %233 = arith.addf %229, %232 : vector<2x250xf32>
    %cst_120 = arith.constant 0.000000e+00 : f32
    %234 = vector.broadcast %cst_120 : f32 to vector<2x250xf32>
    %235 = arith.maximumf %233, %234 : vector<2x250xf32>
    %236 = vector.extract_strided_slice %196 {offsets = [0, 63], sizes = [2, 63], strides = [1, 1]} : vector<2x250xf32> to vector<2x63xf32>
    %237 = vector.extract_strided_slice %204 {offsets = [0, 62], sizes = [2, 62], strides = [1, 1]} : vector<2x250xf32> to vector<2x62xf32>
    %238 = vector.extract_strided_slice %212 {offsets = [0, 63], sizes = [2, 63], strides = [1, 1]} : vector<2x250xf32> to vector<2x63xf32>
    %239 = vector.extract_strided_slice %220 {offsets = [0, 62], sizes = [2, 62], strides = [1, 1]} : vector<2x250xf32> to vector<2x62xf32>
    %240 = tpu.concatenate %236, %237, %238, %239 in 1 : vector<2x63xf32>, vector<2x62xf32>, vector<2x63xf32>, vector<2x62xf32> -> vector<2x250xf32>
    %241 = arith.truncf %240 : vector<2x250xf32> to vector<2x250xbf16>
    %c1_121 = arith.constant 1 : index
    %c0_122 = arith.constant 0 : index
    %c0_123 = arith.constant 0 : index
    %242 = vector.load %arg20[%c1_121, %c0_122, %c0_123] : memref<4x250x250xbf16, #tpu.memory_space<vmem>>, vector<1x250x250xbf16>
    %243 = vector.shape_cast %242 : vector<1x250x250xbf16> to vector<250x250xbf16>
    %cst_124 = arith.constant dense<0.000000e+00> : vector<2x250xf32>
    %244 = tpu.matmul %241, %243, %cst_124 {dimension_numbers = #tpu.dot_dimension_numbers<[1], [0], [0], [1], [0, 0, 1, 1], [], []>} : vector<2x250xbf16>, vector<250x250xbf16>, vector<2x250xf32> -> vector<2x250xf32>
    %c1_125 = arith.constant 1 : index
    %c0_126 = arith.constant 0 : index
    %c0_127 = arith.constant 0 : index
    %245 = vector.load %arg10[%c1_125, %c0_126, %c0_127] : memref<4x1x250xf32, #tpu.memory_space<vmem>>, vector<1x1x250xf32>
    %246 = vector.shape_cast %245 : vector<1x1x250xf32> to vector<1x250xf32>
    %247 = vector.broadcast %246 : vector<1x250xf32> to vector<2x250xf32>
    %248 = arith.addf %244, %247 : vector<2x250xf32>
    %cst_128 = arith.constant 0.000000e+00 : f32
    %249 = vector.broadcast %cst_128 : f32 to vector<2x250xf32>
    %250 = arith.maximumf %248, %249 : vector<2x250xf32>
    %251 = vector.extract_strided_slice %196 {offsets = [0, 126], sizes = [2, 62], strides = [1, 1]} : vector<2x250xf32> to vector<2x62xf32>
    %252 = vector.extract_strided_slice %204 {offsets = [0, 124], sizes = [2, 63], strides = [1, 1]} : vector<2x250xf32> to vector<2x63xf32>
    %253 = vector.extract_strided_slice %212 {offsets = [0, 126], sizes = [2, 62], strides = [1, 1]} : vector<2x250xf32> to vector<2x62xf32>
    %254 = vector.extract_strided_slice %220 {offsets = [0, 124], sizes = [2, 63], strides = [1, 1]} : vector<2x250xf32> to vector<2x63xf32>
    %255 = tpu.concatenate %251, %252, %253, %254 in 1 : vector<2x62xf32>, vector<2x63xf32>, vector<2x62xf32>, vector<2x63xf32> -> vector<2x250xf32>
    %256 = arith.truncf %255 : vector<2x250xf32> to vector<2x250xbf16>
    %c2_129 = arith.constant 2 : index
    %c0_130 = arith.constant 0 : index
    %c0_131 = arith.constant 0 : index
    %257 = vector.load %arg20[%c2_129, %c0_130, %c0_131] : memref<4x250x250xbf16, #tpu.memory_space<vmem>>, vector<1x250x250xbf16>
    %258 = vector.shape_cast %257 : vector<1x250x250xbf16> to vector<250x250xbf16>
    %cst_132 = arith.constant dense<0.000000e+00> : vector<2x250xf32>
    %259 = tpu.matmul %256, %258, %cst_132 {dimension_numbers = #tpu.dot_dimension_numbers<[1], [0], [0], [1], [0, 0, 1, 1], [], []>} : vector<2x250xbf16>, vector<250x250xbf16>, vector<2x250xf32> -> vector<2x250xf32>
    %c2_133 = arith.constant 2 : index
    %c0_134 = arith.constant 0 : index
    %c0_135 = arith.constant 0 : index
    %260 = vector.load %arg10[%c2_133, %c0_134, %c0_135] : memref<4x1x250xf32, #tpu.memory_space<vmem>>, vector<1x1x250xf32>
    %261 = vector.shape_cast %260 : vector<1x1x250xf32> to vector<1x250xf32>
    %262 = vector.broadcast %261 : vector<1x250xf32> to vector<2x250xf32>
    %263 = arith.addf %259, %262 : vector<2x250xf32>
    %cst_136 = arith.constant 0.000000e+00 : f32
    %264 = vector.broadcast %cst_136 : f32 to vector<2x250xf32>
    %265 = arith.maximumf %263, %264 : vector<2x250xf32>
    %266 = vector.extract_strided_slice %196 {offsets = [0, 188], sizes = [2, 62], strides = [1, 1]} : vector<2x250xf32> to vector<2x62xf32>
    %267 = vector.extract_strided_slice %204 {offsets = [0, 187], sizes = [2, 63], strides = [1, 1]} : vector<2x250xf32> to vector<2x63xf32>
    %268 = vector.extract_strided_slice %212 {offsets = [0, 188], sizes = [2, 62], strides = [1, 1]} : vector<2x250xf32> to vector<2x62xf32>
    %269 = vector.extract_strided_slice %220 {offsets = [0, 187], sizes = [2, 63], strides = [1, 1]} : vector<2x250xf32> to vector<2x63xf32>
    %270 = tpu.concatenate %266, %267, %268, %269 in 1 : vector<2x62xf32>, vector<2x63xf32>, vector<2x62xf32>, vector<2x63xf32> -> vector<2x250xf32>
    %271 = arith.truncf %270 : vector<2x250xf32> to vector<2x250xbf16>
    %c3_137 = arith.constant 3 : index
    %c0_138 = arith.constant 0 : index
    %c0_139 = arith.constant 0 : index
    %272 = vector.load %arg20[%c3_137, %c0_138, %c0_139] : memref<4x250x250xbf16, #tpu.memory_space<vmem>>, vector<1x250x250xbf16>
    %273 = vector.shape_cast %272 : vector<1x250x250xbf16> to vector<250x250xbf16>
    %cst_140 = arith.constant dense<0.000000e+00> : vector<2x250xf32>
    %274 = tpu.matmul %271, %273, %cst_140 {dimension_numbers = #tpu.dot_dimension_numbers<[1], [0], [0], [1], [0, 0, 1, 1], [], []>} : vector<2x250xbf16>, vector<250x250xbf16>, vector<2x250xf32> -> vector<2x250xf32>
    %c3_141 = arith.constant 3 : index
    %c0_142 = arith.constant 0 : index
    %c0_143 = arith.constant 0 : index
    %275 = vector.load %arg10[%c3_141, %c0_142, %c0_143] : memref<4x1x250xf32, #tpu.memory_space<vmem>>, vector<1x1x250xf32>
    %276 = vector.shape_cast %275 : vector<1x1x250xf32> to vector<1x250xf32>
    %277 = vector.broadcast %276 : vector<1x250xf32> to vector<2x250xf32>
    %278 = arith.addf %274, %277 : vector<2x250xf32>
    %cst_144 = arith.constant 0.000000e+00 : f32
    %279 = vector.broadcast %cst_144 : f32 to vector<2x250xf32>
    %280 = arith.maximumf %278, %279 : vector<2x250xf32>
    %281 = vector.extract_strided_slice %235 {offsets = [0, 0], sizes = [2, 63], strides = [1, 1]} : vector<2x250xf32> to vector<2x63xf32>
    %282 = vector.extract_strided_slice %250 {offsets = [0, 0], sizes = [2, 63], strides = [1, 1]} : vector<2x250xf32> to vector<2x63xf32>
    %283 = vector.extract_strided_slice %265 {offsets = [0, 0], sizes = [2, 62], strides = [1, 1]} : vector<2x250xf32> to vector<2x62xf32>
    %284 = vector.extract_strided_slice %280 {offsets = [0, 0], sizes = [2, 62], strides = [1, 1]} : vector<2x250xf32> to vector<2x62xf32>
    %285 = tpu.concatenate %281, %282, %283, %284 in 1 : vector<2x63xf32>, vector<2x63xf32>, vector<2x62xf32>, vector<2x62xf32> -> vector<2x250xf32>
    %c0_145 = arith.constant 0 : index
    %c0_146 = arith.constant 0 : index
    %c0_147 = arith.constant 0 : index
    %286 = vector.load %arg11[%c0_145, %c0_146, %c0_147] : memref<4x250x25xf32, #tpu.memory_space<vmem>>, vector<1x250x25xf32>
    %287 = vector.shape_cast %286 : vector<1x250x25xf32> to vector<250x25xf32>
    %cst_148 = arith.constant dense<0.000000e+00> : vector<2x25xf32>
    %288 = tpu.matmul %285, %287, %cst_148 {dimension_numbers = #tpu.dot_dimension_numbers<[1], [0], [0], [1], [0, 0, 1, 1], [], []>} : vector<2x250xf32>, vector<250x25xf32>, vector<2x25xf32> -> vector<2x25xf32>
    %289 = vector.extract_strided_slice %235 {offsets = [0, 63], sizes = [2, 62], strides = [1, 1]} : vector<2x250xf32> to vector<2x62xf32>
    %290 = vector.extract_strided_slice %250 {offsets = [0, 63], sizes = [2, 62], strides = [1, 1]} : vector<2x250xf32> to vector<2x62xf32>
    %291 = vector.extract_strided_slice %265 {offsets = [0, 62], sizes = [2, 63], strides = [1, 1]} : vector<2x250xf32> to vector<2x63xf32>
    %292 = vector.extract_strided_slice %280 {offsets = [0, 62], sizes = [2, 63], strides = [1, 1]} : vector<2x250xf32> to vector<2x63xf32>
    %293 = tpu.concatenate %289, %290, %291, %292 in 1 : vector<2x62xf32>, vector<2x62xf32>, vector<2x63xf32>, vector<2x63xf32> -> vector<2x250xf32>
    %c1_149 = arith.constant 1 : index
    %c0_150 = arith.constant 0 : index
    %c0_151 = arith.constant 0 : index
    %294 = vector.load %arg11[%c1_149, %c0_150, %c0_151] : memref<4x250x25xf32, #tpu.memory_space<vmem>>, vector<1x250x25xf32>
    %295 = vector.shape_cast %294 : vector<1x250x25xf32> to vector<250x25xf32>
    %cst_152 = arith.constant dense<0.000000e+00> : vector<2x25xf32>
    %296 = tpu.matmul %293, %295, %cst_152 {dimension_numbers = #tpu.dot_dimension_numbers<[1], [0], [0], [1], [0, 0, 1, 1], [], []>} : vector<2x250xf32>, vector<250x25xf32>, vector<2x25xf32> -> vector<2x25xf32>
    %297 = vector.extract_strided_slice %235 {offsets = [0, 125], sizes = [2, 63], strides = [1, 1]} : vector<2x250xf32> to vector<2x63xf32>
    %298 = vector.extract_strided_slice %250 {offsets = [0, 125], sizes = [2, 63], strides = [1, 1]} : vector<2x250xf32> to vector<2x63xf32>
    %299 = vector.extract_strided_slice %265 {offsets = [0, 125], sizes = [2, 62], strides = [1, 1]} : vector<2x250xf32> to vector<2x62xf32>
    %300 = vector.extract_strided_slice %280 {offsets = [0, 125], sizes = [2, 62], strides = [1, 1]} : vector<2x250xf32> to vector<2x62xf32>
    %301 = tpu.concatenate %297, %298, %299, %300 in 1 : vector<2x63xf32>, vector<2x63xf32>, vector<2x62xf32>, vector<2x62xf32> -> vector<2x250xf32>
    %c2_153 = arith.constant 2 : index
    %c0_154 = arith.constant 0 : index
    %c0_155 = arith.constant 0 : index
    %302 = vector.load %arg11[%c2_153, %c0_154, %c0_155] : memref<4x250x25xf32, #tpu.memory_space<vmem>>, vector<1x250x25xf32>
    %303 = vector.shape_cast %302 : vector<1x250x25xf32> to vector<250x25xf32>
    %cst_156 = arith.constant dense<0.000000e+00> : vector<2x25xf32>
    %304 = tpu.matmul %301, %303, %cst_156 {dimension_numbers = #tpu.dot_dimension_numbers<[1], [0], [0], [1], [0, 0, 1, 1], [], []>} : vector<2x250xf32>, vector<250x25xf32>, vector<2x25xf32> -> vector<2x25xf32>
    %305 = vector.extract_strided_slice %235 {offsets = [0, 188], sizes = [2, 62], strides = [1, 1]} : vector<2x250xf32> to vector<2x62xf32>
    %306 = vector.extract_strided_slice %250 {offsets = [0, 188], sizes = [2, 62], strides = [1, 1]} : vector<2x250xf32> to vector<2x62xf32>
    %307 = vector.extract_strided_slice %265 {offsets = [0, 187], sizes = [2, 63], strides = [1, 1]} : vector<2x250xf32> to vector<2x63xf32>
    %308 = vector.extract_strided_slice %280 {offsets = [0, 187], sizes = [2, 63], strides = [1, 1]} : vector<2x250xf32> to vector<2x63xf32>
    %309 = tpu.concatenate %305, %306, %307, %308 in 1 : vector<2x62xf32>, vector<2x62xf32>, vector<2x63xf32>, vector<2x63xf32> -> vector<2x250xf32>
    %c3_157 = arith.constant 3 : index
    %c0_158 = arith.constant 0 : index
    %c0_159 = arith.constant 0 : index
    %310 = vector.load %arg11[%c3_157, %c0_158, %c0_159] : memref<4x250x25xf32, #tpu.memory_space<vmem>>, vector<1x250x25xf32>
    %311 = vector.shape_cast %310 : vector<1x250x25xf32> to vector<250x25xf32>
    %cst_160 = arith.constant dense<0.000000e+00> : vector<2x25xf32>
    %312 = tpu.matmul %309, %311, %cst_160 {dimension_numbers = #tpu.dot_dimension_numbers<[1], [0], [0], [1], [0, 0, 1, 1], [], []>} : vector<2x250xf32>, vector<250x25xf32>, vector<2x25xf32> -> vector<2x25xf32>
    %313 = vector.extract_strided_slice %288 {offsets = [0, 0], sizes = [2, 7], strides = [1, 1]} : vector<2x25xf32> to vector<2x7xf32>
    %314 = vector.extract_strided_slice %296 {offsets = [0, 0], sizes = [2, 6], strides = [1, 1]} : vector<2x25xf32> to vector<2x6xf32>
    %315 = vector.extract_strided_slice %304 {offsets = [0, 0], sizes = [2, 6], strides = [1, 1]} : vector<2x25xf32> to vector<2x6xf32>
    %316 = vector.extract_strided_slice %312 {offsets = [0, 0], sizes = [2, 6], strides = [1, 1]} : vector<2x25xf32> to vector<2x6xf32>
    %317 = tpu.concatenate %313, %314, %315, %316 in 1 : vector<2x7xf32>, vector<2x6xf32>, vector<2x6xf32>, vector<2x6xf32> -> vector<2x25xf32>
    %c0_161 = arith.constant 0 : index
    %c0_162 = arith.constant 0 : index
    %c0_163 = arith.constant 0 : index
    %318 = vector.load %arg12[%c0_161, %c0_162, %c0_163] : memref<4x25x25xf32, #tpu.memory_space<vmem>>, vector<1x25x25xf32>
    %319 = vector.shape_cast %318 : vector<1x25x25xf32> to vector<25x25xf32>
    %cst_164 = arith.constant dense<0.000000e+00> : vector<2x25xf32>
    %320 = tpu.matmul %317, %319, %cst_164 {dimension_numbers = #tpu.dot_dimension_numbers<[1], [0], [0], [1], [0, 0, 1, 1], [], []>} : vector<2x25xf32>, vector<25x25xf32>, vector<2x25xf32> -> vector<2x25xf32>
    %c0_165 = arith.constant 0 : index
    %c0_166 = arith.constant 0 : index
    %c0_167 = arith.constant 0 : index
    %321 = vector.load %arg13[%c0_165, %c0_166, %c0_167] : memref<4x1x25xf32, #tpu.memory_space<vmem>>, vector<1x1x25xf32>
    %322 = vector.shape_cast %321 : vector<1x1x25xf32> to vector<1x25xf32>
    %323 = vector.broadcast %322 : vector<1x25xf32> to vector<2x25xf32>
    %324 = arith.addf %320, %323 : vector<2x25xf32>
    %cst_168 = arith.constant 0.000000e+00 : f32
    %325 = vector.broadcast %cst_168 : f32 to vector<2x25xf32>
    %326 = arith.maximumf %324, %325 : vector<2x25xf32>
    %327 = vector.extract_strided_slice %288 {offsets = [0, 7], sizes = [2, 6], strides = [1, 1]} : vector<2x25xf32> to vector<2x6xf32>
    %328 = vector.extract_strided_slice %296 {offsets = [0, 6], sizes = [2, 7], strides = [1, 1]} : vector<2x25xf32> to vector<2x7xf32>
    %329 = vector.extract_strided_slice %304 {offsets = [0, 6], sizes = [2, 6], strides = [1, 1]} : vector<2x25xf32> to vector<2x6xf32>
    %330 = vector.extract_strided_slice %312 {offsets = [0, 6], sizes = [2, 6], strides = [1, 1]} : vector<2x25xf32> to vector<2x6xf32>
    %331 = tpu.concatenate %327, %328, %329, %330 in 1 : vector<2x6xf32>, vector<2x7xf32>, vector<2x6xf32>, vector<2x6xf32> -> vector<2x25xf32>
    %c1_169 = arith.constant 1 : index
    %c0_170 = arith.constant 0 : index
    %c0_171 = arith.constant 0 : index
    %332 = vector.load %arg12[%c1_169, %c0_170, %c0_171] : memref<4x25x25xf32, #tpu.memory_space<vmem>>, vector<1x25x25xf32>
    %333 = vector.shape_cast %332 : vector<1x25x25xf32> to vector<25x25xf32>
    %cst_172 = arith.constant dense<0.000000e+00> : vector<2x25xf32>
    %334 = tpu.matmul %331, %333, %cst_172 {dimension_numbers = #tpu.dot_dimension_numbers<[1], [0], [0], [1], [0, 0, 1, 1], [], []>} : vector<2x25xf32>, vector<25x25xf32>, vector<2x25xf32> -> vector<2x25xf32>
    %c1_173 = arith.constant 1 : index
    %c0_174 = arith.constant 0 : index
    %c0_175 = arith.constant 0 : index
    %335 = vector.load %arg13[%c1_173, %c0_174, %c0_175] : memref<4x1x25xf32, #tpu.memory_space<vmem>>, vector<1x1x25xf32>
    %336 = vector.shape_cast %335 : vector<1x1x25xf32> to vector<1x25xf32>
    %337 = vector.broadcast %336 : vector<1x25xf32> to vector<2x25xf32>
    %338 = arith.addf %334, %337 : vector<2x25xf32>
    %cst_176 = arith.constant 0.000000e+00 : f32
    %339 = vector.broadcast %cst_176 : f32 to vector<2x25xf32>
    %340 = arith.maximumf %338, %339 : vector<2x25xf32>
    %341 = vector.extract_strided_slice %288 {offsets = [0, 13], sizes = [2, 6], strides = [1, 1]} : vector<2x25xf32> to vector<2x6xf32>
    %342 = vector.extract_strided_slice %296 {offsets = [0, 13], sizes = [2, 6], strides = [1, 1]} : vector<2x25xf32> to vector<2x6xf32>
    %343 = vector.extract_strided_slice %304 {offsets = [0, 12], sizes = [2, 7], strides = [1, 1]} : vector<2x25xf32> to vector<2x7xf32>
    %344 = vector.extract_strided_slice %312 {offsets = [0, 12], sizes = [2, 6], strides = [1, 1]} : vector<2x25xf32> to vector<2x6xf32>
    %345 = tpu.concatenate %341, %342, %343, %344 in 1 : vector<2x6xf32>, vector<2x6xf32>, vector<2x7xf32>, vector<2x6xf32> -> vector<2x25xf32>
    %c2_177 = arith.constant 2 : index
    %c0_178 = arith.constant 0 : index
    %c0_179 = arith.constant 0 : index
    %346 = vector.load %arg12[%c2_177, %c0_178, %c0_179] : memref<4x25x25xf32, #tpu.memory_space<vmem>>, vector<1x25x25xf32>
    %347 = vector.shape_cast %346 : vector<1x25x25xf32> to vector<25x25xf32>
    %cst_180 = arith.constant dense<0.000000e+00> : vector<2x25xf32>
    %348 = tpu.matmul %345, %347, %cst_180 {dimension_numbers = #tpu.dot_dimension_numbers<[1], [0], [0], [1], [0, 0, 1, 1], [], []>} : vector<2x25xf32>, vector<25x25xf32>, vector<2x25xf32> -> vector<2x25xf32>
    %c2_181 = arith.constant 2 : index
    %c0_182 = arith.constant 0 : index
    %c0_183 = arith.constant 0 : index
    %349 = vector.load %arg13[%c2_181, %c0_182, %c0_183] : memref<4x1x25xf32, #tpu.memory_space<vmem>>, vector<1x1x25xf32>
    %350 = vector.shape_cast %349 : vector<1x1x25xf32> to vector<1x25xf32>
    %351 = vector.broadcast %350 : vector<1x25xf32> to vector<2x25xf32>
    %352 = arith.addf %348, %351 : vector<2x25xf32>
    %cst_184 = arith.constant 0.000000e+00 : f32
    %353 = vector.broadcast %cst_184 : f32 to vector<2x25xf32>
    %354 = arith.maximumf %352, %353 : vector<2x25xf32>
    %355 = vector.extract_strided_slice %288 {offsets = [0, 19], sizes = [2, 6], strides = [1, 1]} : vector<2x25xf32> to vector<2x6xf32>
    %356 = vector.extract_strided_slice %296 {offsets = [0, 19], sizes = [2, 6], strides = [1, 1]} : vector<2x25xf32> to vector<2x6xf32>
    %357 = vector.extract_strided_slice %304 {offsets = [0, 19], sizes = [2, 6], strides = [1, 1]} : vector<2x25xf32> to vector<2x6xf32>
    %358 = vector.extract_strided_slice %312 {offsets = [0, 18], sizes = [2, 7], strides = [1, 1]} : vector<2x25xf32> to vector<2x7xf32>
    %359 = tpu.concatenate %355, %356, %357, %358 in 1 : vector<2x6xf32>, vector<2x6xf32>, vector<2x6xf32>, vector<2x7xf32> -> vector<2x25xf32>
    %c3_185 = arith.constant 3 : index
    %c0_186 = arith.constant 0 : index
    %c0_187 = arith.constant 0 : index
    %360 = vector.load %arg12[%c3_185, %c0_186, %c0_187] : memref<4x25x25xf32, #tpu.memory_space<vmem>>, vector<1x25x25xf32>
    %361 = vector.shape_cast %360 : vector<1x25x25xf32> to vector<25x25xf32>
    %cst_188 = arith.constant dense<0.000000e+00> : vector<2x25xf32>
    %362 = tpu.matmul %359, %361, %cst_188 {dimension_numbers = #tpu.dot_dimension_numbers<[1], [0], [0], [1], [0, 0, 1, 1], [], []>} : vector<2x25xf32>, vector<25x25xf32>, vector<2x25xf32> -> vector<2x25xf32>
    %c3_189 = arith.constant 3 : index
    %c0_190 = arith.constant 0 : index
    %c0_191 = arith.constant 0 : index
    %363 = vector.load %arg13[%c3_189, %c0_190, %c0_191] : memref<4x1x25xf32, #tpu.memory_space<vmem>>, vector<1x1x25xf32>
    %364 = vector.shape_cast %363 : vector<1x1x25xf32> to vector<1x25xf32>
    %365 = vector.broadcast %364 : vector<1x25xf32> to vector<2x25xf32>
    %366 = arith.addf %362, %365 : vector<2x25xf32>
    %cst_192 = arith.constant 0.000000e+00 : f32
    %367 = vector.broadcast %cst_192 : f32 to vector<2x25xf32>
    %368 = arith.maximumf %366, %367 : vector<2x25xf32>
    %369 = tpu.concatenate %326, %340, %354, %368 in 1 : vector<2x25xf32>, vector<2x25xf32>, vector<2x25xf32>, vector<2x25xf32> -> vector<2x100xf32>
    %c0_193 = arith.constant 0 : index
    %c0_194 = arith.constant 0 : index
    %370 = vector.load %arg14[%c0_193, %c0_194] : memref<100x12xf32, #tpu.memory_space<vmem>>, vector<100x12xf32>
    %cst_195 = arith.constant dense<0.000000e+00> : vector<2x12xf32>
    %371 = tpu.matmul %369, %370, %cst_195 {dimension_numbers = #tpu.dot_dimension_numbers<[1], [0], [0], [1], [0, 0, 1, 1], [], []>} : vector<2x100xf32>, vector<100x12xf32>, vector<2x12xf32> -> vector<2x12xf32>
    %c0_196 = arith.constant 0 : index
    %c0_197 = arith.constant 0 : index
    %372 = vector.load %arg15[%c0_196, %c0_197] : memref<1x12xf32, #tpu.memory_space<vmem>>, vector<1x12xf32>
    %373 = vector.broadcast %372 : vector<1x12xf32> to vector<2x12xf32>
    %374 = arith.addf %371, %373 : vector<2x12xf32>
    %c0_198 = arith.constant 0 : index
    %c0_199 = arith.constant 0 : index
    %375 = vector.load %arg16[%c0_198, %c0_199] : memref<2x12xf32, #tpu.memory_space<vmem>>, vector<2x12xf32>
    tpu.vector_store %arg16[%c0_198, %c0_199], %374 {strides = array<i32>} : memref<2x12xf32, #tpu.memory_space<vmem>>, vector<2x12xf32>,
    return
  }
  func.func @transform_0(%arg0: i32) -> (i32, i32) {
    %c0_i32 = arith.constant 0 : i32
    %c0_i32_0 = arith.constant 0 : i32
    %c0_i32_1 = arith.constant 0 : i32
    return %c0_i32, %c0_i32_0 : i32, i32
  }
  func.func @transform_1(%arg0: i32) -> (i32, i32, i32) {
    %c0_i32 = arith.constant 0 : i32
    %c0_i32_0 = arith.constant 0 : i32
    %c0_i32_1 = arith.constant 0 : i32
    %c0_i32_2 = arith.constant 0 : i32
    return %c0_i32, %c0_i32_0, %c0_i32_1 : i32, i32, i32
  }
  func.func @transform_2(%arg0: i32) -> (i32, i32, i32) {
    %c0_i32 = arith.constant 0 : i32
    %c0_i32_0 = arith.constant 0 : i32
    %c0_i32_1 = arith.constant 0 : i32
    %c0_i32_2 = arith.constant 0 : i32
    return %c0_i32, %c0_i32_0, %c0_i32_1 : i32, i32, i32
  }
  func.func @transform_3(%arg0: i32) -> (i32, i32, i32) {
    %c0_i32 = arith.constant 0 : i32
    %c0_i32_0 = arith.constant 0 : i32
    %c0_i32_1 = arith.constant 0 : i32
    %c0_i32_2 = arith.constant 0 : i32
    return %c0_i32, %c0_i32_0, %c0_i32_1 : i32, i32, i32
  }
  func.func @transform_6(%arg0: i32) -> (i32, i32, i32) {
    %c0_i32 = arith.constant 0 : i32
    %c0_i32_0 = arith.constant 0 : i32
    %c0_i32_1 = arith.constant 0 : i32
    %c0_i32_2 = arith.constant 0 : i32
    return %c0_i32, %c0_i32_0, %c0_i32_1 : i32, i32, i32
  }
  func.func @transform_9(%arg0: i32) -> (i32, i32, i32) {
    %c0_i32 = arith.constant 0 : i32
    %c0_i32_0 = arith.constant 0 : i32
    %c0_i32_1 = arith.constant 0 : i32
    %c0_i32_2 = arith.constant 0 : i32
    return %c0_i32, %c0_i32_0, %c0_i32_1 : i32, i32, i32
  }
  func.func @transform_10(%arg0: i32) -> (i32, i32, i32) {
    %c0_i32 = arith.constant 0 : i32
    %c0_i32_0 = arith.constant 0 : i32
    %c0_i32_1 = arith.constant 0 : i32
    %c0_i32_2 = arith.constant 0 : i32
    return %c0_i32, %c0_i32_0, %c0_i32_1 : i32, i32, i32
  }
  func.func @transform_11(%arg0: i32) -> (i32, i32, i32) {
    %c0_i32 = arith.constant 0 : i32
    %c0_i32_0 = arith.constant 0 : i32
    %c0_i32_1 = arith.constant 0 : i32
    %c0_i32_2 = arith.constant 0 : i32
    return %c0_i32, %c0_i32_0, %c0_i32_1 : i32, i32, i32
  }
  func.func @transform_12(%arg0: i32) -> (i32, i32, i32) {
    %c0_i32 = arith.constant 0 : i32
    %c0_i32_0 = arith.constant 0 : i32
    %c0_i32_1 = arith.constant 0 : i32
    %c0_i32_2 = arith.constant 0 : i32
    return %c0_i32, %c0_i32_0, %c0_i32_1 : i32, i32, i32
  }
  func.func @transform_13(%arg0: i32) -> (i32, i32) {
    %c0_i32 = arith.constant 0 : i32
    %c0_i32_0 = arith.constant 0 : i32
    %c0_i32_1 = arith.constant 0 : i32
    return %c0_i32, %c0_i32_0 : i32, i32
  }
  func.func @transform_14(%arg0: i32) -> (i32, i32) {
    %c0_i32 = arith.constant 0 : i32
    %c0_i32_0 = arith.constant 0 : i32
    %c0_i32_1 = arith.constant 0 : i32
    return %c0_i32, %c0_i32_0 : i32, i32
  }
  func.func @transform_15(%arg0: i32) -> (i32, i32) {
    %c0_i32 = arith.constant 0 : i32
    %c0_i32_0 = arith.constant 0 : i32
    %c0_i32_1 = arith.constant 0 : i32
    return %c0_i32, %c0_i32_0 : i32, i32
  }
}

</mosaic_0001>

<llo_original>
// kernel: tpu_custom_call.1
$region0: #{tpu_custom_call.1}
  #allocation0 [shape = 'u32[]', space=smem, size = 0x4, offset = 0x4, fixed_abs, tag = 'smem constant byte address 0x4 - core index']
  #allocation1 [shape = 'u32[144,128]{1,0:T(1,128)}', space=vmem, size = 0x12000, scoped, tag = 'internal scratch']
  #allocation2 [shape = 'bf16[4,750,250]{2,1,0:T(8,128)(2,1)}', space=vmem, size = 0x178000, scoped, tag = 'scratch operand']
  #allocation3 [shape = 'bf16[4,250,250]{2,1,0:T(8,128)(2,1)}', space=vmem, size = 0x80000, scoped, tag = 'scratch operand']
  #allocation4 [shape = 'bf16[4,250,250]{2,1,0:T(8,128)(2,1)}', space=vmem, size = 0x80000, scoped, tag = 'scratch operand']
  #allocation5 [shape = 'bf16[4,250,250]{2,1,0:T(8,128)(2,1)}', space=vmem, size = 0x80000, scoped, tag = 'scratch operand']
  #allocation6 [shape = 's32[4]{0}', space=sflag, size = 0x10, scoped, tag = 'scratch operand']
  #allocation9 [shape = 's32[]', space=sflag, size = 0x4, offset = 0, fixed_abs, tag = 'sflag constant byte address 0x0 - dummy sync flag']
  #allocation10 [shape = 's32[]', space=sflag, size = 0x4, offset = 0, fixed_abs, tag = 'sflag constant byte address 0x0 - dummy sync flag']
  #allocation11 [shape = 's32[]', space=sflag, size = 0x4, offset = 0, fixed_abs, tag = 'sflag constant byte address 0x0 - dummy sync flag']
  #allocation12 [shape = 's32[]', space=sflag, size = 0x4, offset = 0, fixed_abs, tag = 'sflag constant byte address 0x0 - dummy sync flag']
  %s0 = inlined_call_operand.vmem [shape: f32[2,64], index: 0, kind: input, shape index: {}]
  %s1 = inlined_call_operand.vmem [shape: f32[4,16,16], index: 1, kind: input, shape index: {}]
  %s2 = inlined_call_operand.vmem [shape: f32[4,16,750], index: 2, kind: input, shape index: {}]
  %s3 = inlined_call_operand.vmem [shape: f32[4,1,750], index: 3, kind: input, shape index: {}]
  %s4 = inlined_call_operand.vmem [shape: bf16[4,750,250], index: 4, kind: input, shape index: {}]
  %s5 = inlined_call_operand.vmem [shape: bf16[4,250,250], index: 5, kind: input, shape index: {}]
  %s6 = inlined_call_operand.vmem [shape: f32[4,1,250], index: 6, kind: input, shape index: {}]
  %s7 = inlined_call_operand.vmem [shape: bf16[4,250,250], index: 7, kind: input, shape index: {}]
  %s8 = inlined_call_operand.vmem [shape: bf16[4,250,250], index: 8, kind: input, shape index: {}]
  %s9 = inlined_call_operand.vmem [shape: f32[4,1,250], index: 9, kind: input, shape index: {}]
  %s10 = inlined_call_operand.vmem [shape: f32[4,250,25], index: 10, kind: input, shape index: {}]
  %s11 = inlined_call_operand.vmem [shape: f32[4,25,25], index: 11, kind: input, shape index: {}]
  %s12 = inlined_call_operand.vmem [shape: f32[4,1,25], index: 12, kind: input, shape index: {}]
  %s13 = inlined_call_operand.vmem [shape: f32[100,12], index: 13, kind: input, shape index: {}]
  %s14 = inlined_call_operand.vmem [shape: f32[1,12], index: 14, kind: input, shape index: {}]
  %s15 = inlined_call_operand.hbm [shape: f32[2,12], index: 15, kind: output, shape index: {}]
  %s16 = sld [smem:[#allocation0]]
  $region190: #{tpu_custom_call.1} parent=0
    _
  %s18 = ssub.s32 1, %s16
  %s19 = scalar_select 0, %s18, %s16
  $region1: #{tpu_custom_call.1} parent=0
    #allocation7 [shape = 'u8[1024]{0}', space=vmem, size = 0x400, scoped, tag = 'output window, operand 0, single buffered']
    #allocation8 [shape = 's32[1]{0}', space=sflag, size = 0x4, scoped, tag = 'scoped memory for tpu_custom_call.1']
    %20 = vsyncpa [#allocation8], 0
    // Predicated region
    $region2: #{tpu_custom_call.1} parent=1 // pred_check
      _
    $region3: #{tpu_custom_call.1} parent=1 // pred_check_branch
      %22 = sbr.rel (0) target = $region5
    $region4: #{tpu_custom_call.1} parent=1 // pred_region
      _
    $region5: #{tpu_custom_call.1} parent=1 // pred_fallthru
      _
    // Predicated region
    $region6: #{tpu_custom_call.1} parent=1 // pred_check
      _
    $region7: #{tpu_custom_call.1} parent=1 // pred_check_branch
      %24 = sbr.rel (0) target = $region9
    $region8: #{tpu_custom_call.1} parent=1 // pred_region
      _
    $region9: #{tpu_custom_call.1} parent=1 // pred_fallthru
      _
    // Predicated region
    $region10: #{tpu_custom_call.1} parent=1 // pred_check
      _
    $region11: #{tpu_custom_call.1} parent=1 // pred_check_branch
      %26 = sbr.rel (0) target = $region13
    $region12: #{tpu_custom_call.1} parent=1 // pred_region
      _
    $region13: #{tpu_custom_call.1} parent=1 // pred_fallthru
      _
    // Predicated region
    $region14: #{tpu_custom_call.1} parent=1 // pred_check
      _
    $region15: #{tpu_custom_call.1} parent=1 // pred_check_branch
      %28 = sbr.rel (0) target = $region17
    $region16: #{tpu_custom_call.1} parent=1 // pred_region
      _
    $region17: #{tpu_custom_call.1} parent=1 // pred_fallthru
      _
    // Predicated region
    $region18: #{tpu_custom_call.1} parent=1 // pred_check
      _
    $region19: #{tpu_custom_call.1} parent=1 // pred_check_branch
      %30 = sbr.rel (0) target = $region21
    $region20: #{tpu_custom_call.1} parent=1 // pred_region
      _
    $region21: #{tpu_custom_call.1} parent=1 // pred_fallthru
      _
    // Predicated region
    $region22: #{tpu_custom_call.1} parent=1 // pred_check
      _
    $region23: #{tpu_custom_call.1} parent=1 // pred_check_branch
      %32 = sbr.rel (0) target = $region25
    $region24: #{tpu_custom_call.1} parent=1 // pred_region
      _
    $region25: #{tpu_custom_call.1} parent=1 // pred_fallthru
      _
    // Predicated region
    $region26: #{tpu_custom_call.1} parent=1 // pred_check
      _
    $region27: #{tpu_custom_call.1} parent=1 // pred_check_branch
      %34 = sbr.rel (0) target = $region29
    $region28: #{tpu_custom_call.1} parent=1 // pred_region
      _
    $region29: #{tpu_custom_call.1} parent=1 // pred_fallthru
      _
    // Predicated region
    $region30: #{tpu_custom_call.1} parent=1 // pred_check
      _
    $region31: #{tpu_custom_call.1} parent=1 // pred_check_branch
      %36 = sbr.rel (0) target = $region33
    $region32: #{tpu_custom_call.1} parent=1 // pred_region
      _
    $region33: #{tpu_custom_call.1} parent=1 // pred_fallthru
      _
    // Predicated region
    $region34: #{tpu_custom_call.1} parent=1 // pred_check
      _
    $region35: #{tpu_custom_call.1} parent=1 // pred_check_branch
      %38 = sbr.rel (0) target = $region37
    $region36: #{tpu_custom_call.1} parent=1 // pred_region
      _
    $region37: #{tpu_custom_call.1} parent=1 // pred_fallthru
      _
    // Predicated region
    $region38: #{tpu_custom_call.1} parent=1 // pred_check
      _
    $region39: #{tpu_custom_call.1} parent=1 // pred_check_branch
      %40 = sbr.rel (0) target = $region41
    $region40: #{tpu_custom_call.1} parent=1 // pred_region
      _
    $region41: #{tpu_custom_call.1} parent=1 // pred_fallthru
      _
    // Predicated region
    $region42: #{tpu_custom_call.1} parent=1 // pred_check
      _
    $region43: #{tpu_custom_call.1} parent=1 // pred_check_branch
      %42 = sbr.rel (0) target = $region45
    $region44: #{tpu_custom_call.1} parent=1 // pred_region
      _
    $region45: #{tpu_custom_call.1} parent=1 // pred_fallthru
      _
    %p45 = scmp.lt.u32.totalorder 3008, 8
    %p46 = pneg %p45
    // Predicated region
    $region46: #{tpu_custom_call.1} parent=1 // pred_check
      _
    $region47: #{tpu_custom_call.1} parent=1 // pred_check_branch
      %48 = sbr.rel (%p45) target = $region49
    $region48: #{tpu_custom_call.1} parent=1 // pred_region
      %s64 = sand.u32 3008, 7
      %p65 = scmp.eq.s32.totalorder %s64, 0
      // Predicated region
      $region61: #{tpu_custom_call.1} parent=48 // pred_check
        %p66 = pneg %p65
      $region62: #{tpu_custom_call.1} parent=48 // pred_check_branch
        %68 = sbr.rel (%p66) target = $region64
      $region63: #{tpu_custom_call.1} parent=48 // pred_region
        loop: start=0, step=1, limit=1
        $region65: #{tpu_custom_call.1} parent=63 // loop_pre_header
          _
        $region66: #{tpu_custom_call.1} parent=63 // loop_header
          %s70 = sphi 0, %s74
          %p71 = scmp.ge.s32.totalorder %s70, 1
          %s75 = sphi %s4, %s4
          %s76 = sphi [#allocation2], [#allocation2]
        $region67: #{tpu_custom_call.1} parent=63 // loop_header_branch
          %73 = sbr.rel (%p71) target = $region71
        $region68: #{tpu_custom_call.1} parent=63 // loop_body
          %v77 = vld [vmem:[%s75] sm:$0xff]
          %78 = vst [vmem:[%s76] sm:$0xff] %v77
          %v79 = vld [vmem:[%s75 + $0x8] sm:$0xff]
          %80 = vst [vmem:[%s76 + $0x8] sm:$0xff] %v79
          %v81 = vld [vmem:[%s75 + $0x10] sm:$0xff]
          %82 = vst [vmem:[%s76 + $0x10] sm:$0xff] %v81
          %v83 = vld [vmem:[%s75 + $0x18] sm:$0xff]
          %84 = vst [vmem:[%s76 + $0x18] sm:$0xff] %v83
          %v85 = vld [vmem:[%s75 + $0x20] sm:$0xff]
          %86 = vst [vmem:[%s76 + $0x20] sm:$0xff] %v85
          %v87 = vld [vmem:[%s75 + $0x28] sm:$0xff]
          %88 = vst [vmem:[%s76 + $0x28] sm:$0xff] %v87
          %v89 = vld [vmem:[%s75 + $0x30] sm:$0xff]
          %90 = vst [vmem:[%s76 + $0x30] sm:$0xff] %v89
          %v91 = vld [vmem:[%s75 + $0x38] sm:$0xff]
          %92 = vst [vmem:[%s76 + $0x38] sm:$0xff] %v91
          %v93 = vld [vmem:[%s75 + $0x40] sm:$0xff]
          %94 = vst [vmem:[%s76 + $0x40] sm:$0xff] %v93
          %v95 = vld [vmem:[%s75 + $0x48] sm:$0xff]
          %96 = vst [vmem:[%s76 + $0x48] sm:$0xff] %v95
          %v97 = vld [vmem:[%s75 + $0x50] sm:$0xff]
          %98 = vst [vmem:[%s76 + $0x50] sm:$0xff] %v97
          %v99 = vld [vmem:[%s75 + $0x58] sm:$0xff]
          %100 = vst [vmem:[%s76 + $0x58] sm:$0xff] %v99
          %v101 = vld [vmem:[%s75 + $0x60] sm:$0xff]
          %102 = vst [vmem:[%s76 + $0x60] sm:$0xff] %v101
          %v103 = vld [vmem:[%s75 + $0x68] sm:$0xff]
          %104 = vst [vmem:[%s76 + $0x68] sm:$0xff] %v103
          %v105 = vld [vmem:[%s75 + $0x70] sm:$0xff]
          %106 = vst [vmem:[%s76 + $0x70] sm:$0xff] %v105
          %v107 = vld [vmem:[%s75 + $0x78] sm:$0xff]
          %108 = vst [vmem:[%s76 + $0x78] sm:$0xff] %v107
          %v109 = vld [vmem:[%s75 + $0x80] sm:$0xff]
          %110 = vst [vmem:[%s76 + $0x80] sm:$0xff] %v109
          %v111 = vld [vmem:[%s75 + $0x88] sm:$0xff]
          %112 = vst [vmem:[%s76 + $0x88] sm:$0xff] %v111
          %v113 = vld [vmem:[%s75 + $0x90] sm:$0xff]
          %114 = vst [vmem:[%s76 + $0x90] sm:$0xff] %v113
          %v115 = vld [vmem:[%s75 + $0x98] sm:$0xff]
          %116 = vst [vmem:[%s76 + $0x98] sm:$0xff] %v115
          %v117 = vld [vmem:[%s75 + $0xa0] sm:$0xff]
          %118 = vst [vmem:[%s76 + $0xa0] sm:$0xff] %v117
          %v119 = vld [vmem:[%s75 + $0xa8] sm:$0xff]
          %120 = vst [vmem:[%s76 + $0xa8] sm:$0xff] %v119
          %v121 = vld [vmem:[%s75 + $0xb0] sm:$0xff]
          %122 = vst [vmem:[%s76 + $0xb0] sm:$0xff] %v121
          %v123 = vld [vmem:[%s75 + $0xb8] sm:$0xff]
          %124 = vst [vmem:[%s76 + $0xb8] sm:$0xff] %v123
          %v125 = vld [vmem:[%s75 + $0xc0] sm:$0xff]
          %126 = vst [vmem:[%s76 + $0xc0] sm:$0xff] %v125
          %v127 = vld [vmem:[%s75 + $0xc8] sm:$0xff]
          %128 = vst [vmem:[%s76 + $0xc8] sm:$0xff] %v127
          %v129 = vld [vmem:[%s75 + $0xd0] sm:$0xff]
          %130 = vst [vmem:[%s76 + $0xd0] sm:$0xff] %v129
          %v131 = vld [vmem:[%s75 + $0xd8] sm:$0xff]
          %132 = vst [vmem:[%s76 + $0xd8] sm:$0xff] %v131
          %v133 = vld [vmem:[%s75 + $0xe0] sm:$0xff]
          %134 = vst [vmem:[%s76 + $0xe0] sm:$0xff] %v133
          %v135 = vld [vmem:[%s75 + $0xe8] sm:$0xff]
          %136 = vst [vmem:[%s76 + $0xe8] sm:$0xff] %v135
          %v137 = vld [vmem:[%s75 + $0xf0] sm:$0xff]
          %138 = vst [vmem:[%s76 + $0xf0] sm:$0xff] %v137
          %v139 = vld [vmem:[%s75 + $0xf8] sm:$0xff]
          %140 = vst [vmem:[%s76 + $0xf8] sm:$0xff] %v139
          %v141 = vld [vmem:[%s75 + $0x100] sm:$0xff]
          %142 = vst [vmem:[%s76 + $0x100] sm:$0xff] %v141
          %v143 = vld [vmem:[%s75 + $0x108] sm:$0xff]
          %144 = vst [vmem:[%s76 + $0x108] sm:$0xff] %v143
          %v145 = vld [vmem:[%s75 + $0x110] sm:$0xff]
          %146 = vst [vmem:[%s76 + $0x110] sm:$0xff] %v145
          %v147 = vld [vmem:[%s75 + $0x118] sm:$0xff]
          %148 = vst [vmem:[%s76 + $0x118] sm:$0xff] %v147
          %v149 = vld [vmem:[%s75 + $0x120] sm:$0xff]
          %150 = vst [vmem:[%s76 + $0x120] sm:$0xff] %v149
          %v151 = vld [vmem:[%s75 + $0x128] sm:$0xff]
          %152 = vst [vmem:[%s76 + $0x128] sm:$0xff] %v151
          %v153 = vld [vmem:[%s75 + $0x130] sm:$0xff]
          %154 = vst [vmem:[%s76 + $0x130] sm:$0xff] %v153
          %v155 = vld [vmem:[%s75 + $0x138] sm:$0xff]
          %156 = vst [vmem:[%s76 + $0x138] sm:$0xff] %v155
          %v157 = vld [vmem:[%s75 + $0x140] sm:$0xff]
          %158 = vst [vmem:[%s76 + $0x140] sm:$0xff] %v157
          %v159 = vld [vmem:[%s75 + $0x148] sm:$0xff]
          %160 = vst [vmem:[%s76 + $0x148] sm:$0xff] %v159
          %v161 = vld [vmem:[%s75 + $0x150] sm:$0xff]
          %162 = vst [vmem:[%s76 + $0x150] sm:$0xff] %v161
          %v163 = vld [vmem:[%s75 + $0x158] sm:$0xff]
          %164 = vst [vmem:[%s76 + $0x158] sm:$0xff] %v163
          %v165 = vld [vmem:[%s75 + $0x160] sm:$0xff]
          %166 = vst [vmem:[%s76 + $0x160] sm:$0xff] %v165
          %v167 = vld [vmem:[%s75 + $0x168] sm:$0xff]
          %168 = vst [vmem:[%s76 + $0x168] sm:$0xff] %v167
          %v169 = vld [vmem:[%s75 + $0x170] sm:$0xff]
          %170 = vst [vmem:[%s76 + $0x170] sm:$0xff] %v169
          %v171 = vld [vmem:[%s75 + $0x178] sm:$0xff]
          %172 = vst [vmem:[%s76 + $0x178] sm:$0xff] %v171
          %v173 = vld [vmem:[%s75 + $0x180] sm:$0xff]
          %174 = vst [vmem:[%s76 + $0x180] sm:$0xff] %v173
          %v175 = vld [vmem:[%s75 + $0x188] sm:$0xff]
          %176 = vst [vmem:[%s76 + $0x188] sm:$0xff] %v175
          %v177 = vld [vmem:[%s75 + $0x190] sm:$0xff]
          %178 = vst [vmem:[%s76 + $0x190] sm:$0xff] %v177
          %v179 = vld [vmem:[%s75 + $0x198] sm:$0xff]
          %180 = vst [vmem:[%s76 + $0x198] sm:$0xff] %v179
          %v181 = vld [vmem:[%s75 + $0x1a0] sm:$0xff]
          %182 = vst [vmem:[%s76 + $0x1a0] sm:$0xff] %v181
          %v183 = vld [vmem:[%s75 + $0x1a8] sm:$0xff]
          %184 = vst [vmem:[%s76 + $0x1a8] sm:$0xff] %v183
          %v185 = vld [vmem:[%s75 + $0x1b0] sm:$0xff]
          %186 = vst [vmem:[%s76 + $0x1b0] sm:$0xff] %v185
          %v187 = vld [vmem:[%s75 + $0x1b8] sm:$0xff]
          %188 = vst [vmem:[%s76 + $0x1b8] sm:$0xff] %v187
          %v189 = vld [vmem:[%s75 + $0x1c0] sm:$0xff]
          %190 = vst [vmem:[%s76 + $0x1c0] sm:$0xff] %v189
          %v191 = vld [vmem:[%s75 + $0x1c8] sm:$0xff]
          %192 = vst [vmem:[%s76 + $0x1c8] sm:$0xff] %v191
          %v193 = vld [vmem:[%s75 + $0x1d0] sm:$0xff]
          %194 = vst [vmem:[%s76 + $0x1d0] sm:$0xff] %v193
          %v195 = vld [vmem:[%s75 + $0x1d8] sm:$0xff]
          %196 = vst [vmem:[%s76 + $0x1d8] sm:$0xff] %v195
          %v197 = vld [vmem:[%s75 + $0x1e0] sm:$0xff]
          %198 = vst [vmem:[%s76 + $0x1e0] sm:$0xff] %v197
          %v199 = vld [vmem:[%s75 + $0x1e8] sm:$0xff]
          %200 = vst [vmem:[%s76 + $0x1e8] sm:$0xff] %v199
          %v201 = vld [vmem:[%s75 + $0x1f0] sm:$0xff]
          %202 = vst [vmem:[%s76 + $0x1f0] sm:$0xff] %v201
          %v203 = vld [vmem:[%s75 + $0x1f8] sm:$0xff]
          %204 = vst [vmem:[%s76 + $0x1f8] sm:$0xff] %v203
          %v205 = vld [vmem:[%s75 + $0x200] sm:$0xff]
          %206 = vst [vmem:[%s76 + $0x200] sm:$0xff] %v205
          %v207 = vld [vmem:[%s75 + $0x208] sm:$0xff]
          %208 = vst [vmem:[%s76 + $0x208] sm:$0xff] %v207
          %v209 = vld [vmem:[%s75 + $0x210] sm:$0xff]
          %210 = vst [vmem:[%s76 + $0x210] sm:$0xff] %v209
          %v211 = vld [vmem:[%s75 + $0x218] sm:$0xff]
          %212 = vst [vmem:[%s76 + $0x218] sm:$0xff] %v211
          %v213 = vld [vmem:[%s75 + $0x220] sm:$0xff]
          %214 = vst [vmem:[%s76 + $0x220] sm:$0xff] %v213
          %v215 = vld [vmem:[%s75 + $0x228] sm:$0xff]
          %216 = vst [vmem:[%s76 + $0x228] sm:$0xff] %v215
          %v217 = vld [vmem:[%s75 + $0x230] sm:$0xff]
          %218 = vst [vmem:[%s76 + $0x230] sm:$0xff] %v217
          %v219 = vld [vmem:[%s75 + $0x238] sm:$0xff]
          %220 = vst [vmem:[%s76 + $0x238] sm:$0xff] %v219
          %v221 = vld [vmem:[%s75 + $0x240] sm:$0xff]
          %222 = vst [vmem:[%s76 + $0x240] sm:$0xff] %v221
          %v223 = vld [vmem:[%s75 + $0x248] sm:$0xff]
          %224 = vst [vmem:[%s76 + $0x248] sm:$0xff] %v223
          %v225 = vld [vmem:[%s75 + $0x250] sm:$0xff]
          %226 = vst [vmem:[%s76 + $0x250] sm:$0xff] %v225
          %v227 = vld [vmem:[%s75 + $0x258] sm:$0xff]
          %228 = vst [vmem:[%s76 + $0x258] sm:$0xff] %v227
          %v229 = vld [vmem:[%s75 + $0x260] sm:$0xff]
          %230 = vst [vmem:[%s76 + $0x260] sm:$0xff] %v229
          %v231 = vld [vmem:[%s75 + $0x268] sm:$0xff]
          %232 = vst [vmem:[%s76 + $0x268] sm:$0xff] %v231
          %v233 = vld [vmem:[%s75 + $0x270] sm:$0xff]
          %234 = vst [vmem:[%s76 + $0x270] sm:$0xff] %v233
          %v235 = vld [vmem:[%s75 + $0x278] sm:$0xff]
          %236 = vst [vmem:[%s76 + $0x278] sm:$0xff] %v235
          %v237 = vld [vmem:[%s75 + $0x280] sm:$0xff]
          %238 = vst [vmem:[%s76 + $0x280] sm:$0xff] %v237
          %v239 = vld [vmem:[%s75 + $0x288] sm:$0xff]
          %240 = vst [vmem:[%s76 + $0x288] sm:$0xff] %v239
          %v241 = vld [vmem:[%s75 + $0x290] sm:$0xff]
          %242 = vst [vmem:[%s76 + $0x290] sm:$0xff] %v241
          %v243 = vld [vmem:[%s75 + $0x298] sm:$0xff]
          %244 = vst [vmem:[%s76 + $0x298] sm:$0xff] %v243
          %v245 = vld [vmem:[%s75 + $0x2a0] sm:$0xff]
          %246 = vst [vmem:[%s76 + $0x2a0] sm:$0xff] %v245
          %v247 = vld [vmem:[%s75 + $0x2a8] sm:$0xff]
          %248 = vst [vmem:[%s76 + $0x2a8] sm:$0xff] %v247
          %v249 = vld [vmem:[%s75 + $0x2b0] sm:$0xff]
          %250 = vst [vmem:[%s76 + $0x2b0] sm:$0xff] %v249
          %v251 = vld [vmem:[%s75 + $0x2b8] sm:$0xff]
          %252 = vst [vmem:[%s76 + $0x2b8] sm:$0xff] %v251
          %v253 = vld [vmem:[%s75 + $0x2c0] sm:$0xff]
          %254 = vst [vmem:[%s76 + $0x2c0] sm:$0xff] %v253
          %v255 = vld [vmem:[%s75 + $0x2c8] sm:$0xff]
          %256 = vst [vmem:[%s76 + $0x2c8] sm:$0xff] %v255
          %v257 = vld [vmem:[%s75 + $0x2d0] sm:$0xff]
          %258 = vst [vmem:[%s76 + $0x2d0] sm:$0xff] %v257
          %v259 = vld [vmem:[%s75 + $0x2d8] sm:$0xff]
          %260 = vst [vmem:[%s76 + $0x2d8] sm:$0xff] %v259
          %v261 = vld [vmem:[%s75 + $0x2e0] sm:$0xff]
          %262 = vst [vmem:[%s76 + $0x2e0] sm:$0xff] %v261
          %v263 = vld [vmem:[%s75 + $0x2e8] sm:$0xff]
          %264 = vst [vmem:[%s76 + $0x2e8] sm:$0xff] %v263
          %v265 = vld [vmem:[%s75 + $0x2f0] sm:$0xff]
          %266 = vst [vmem:[%s76 + $0x2f0] sm:$0xff] %v265
          %v267 = vld [vmem:[%s75 + $0x2f8] sm:$0xff]
          %268 = vst [vmem:[%s76 + $0x2f8] sm:$0xff] %v267
          %v269 = vld [vmem:[%s75 + $0x300] sm:$0xff]
          %270 = vst [vmem:[%s76 + $0x300] sm:$0xff] %v269
          %v271 = vld [vmem:[%s75 + $0x308] sm:$0xff]
          %272 = vst [vmem:[%s76 + $0x308] sm:$0xff] %v271
          %v273 = vld [vmem:[%s75 + $0x310] sm:$0xff]
          %274 = vst [vmem:[%s76 + $0x310] sm:$0xff] %v273
          %v275 = vld [vmem:[%s75 + $0x318] sm:$0xff]
          %276 = vst [vmem:[%s76 + $0x318] sm:$0xff] %v275
          %v277 = vld [vmem:[%s75 + $0x320] sm:$0xff]
          %278 = vst [vmem:[%s76 + $0x320] sm:$0xff] %v277
          %v279 = vld [vmem:[%s75 + $0x328] sm:$0xff]
          %280 = vst [vmem:[%s76 + $0x328] sm:$0xff] %v279
          %v281 = vld [vmem:[%s75 + $0x330] sm:$0xff]
          %282 = vst [vmem:[%s76 + $0x330] sm:$0xff] %v281
          %v283 = vld [vmem:[%s75 + $0x338] sm:$0xff]
          %284 = vst [vmem:[%s76 + $0x338] sm:$0xff] %v283
          %v285 = vld [vmem:[%s75 + $0x340] sm:$0xff]
          %286 = vst [vmem:[%s76 + $0x340] sm:$0xff] %v285
          %v287 = vld [vmem:[%s75 + $0x348] sm:$0xff]
          %288 = vst [vmem:[%s76 + $0x348] sm:$0xff] %v287
          %v289 = vld [vmem:[%s75 + $0x350] sm:$0xff]
          %290 = vst [vmem:[%s76 + $0x350] sm:$0xff] %v289
          %v291 = vld [vmem:[%s75 + $0x358] sm:$0xff]
          %292 = vst [vmem:[%s76 + $0x358] sm:$0xff] %v291
          %v293 = vld [vmem:[%s75 + $0x360] sm:$0xff]
          %294 = vst [vmem:[%s76 + $0x360] sm:$0xff] %v293
          %v295 = vld [vmem:[%s75 + $0x368] sm:$0xff]
          %296 = vst [vmem:[%s76 + $0x368] sm:$0xff] %v295
          %v297 = vld [vmem:[%s75 + $0x370] sm:$0xff]
          %298 = vst [vmem:[%s76 + $0x370] sm:$0xff] %v297
          %v299 = vld [vmem:[%s75 + $0x378] sm:$0xff]
          %300 = vst [vmem:[%s76 + $0x378] sm:$0xff] %v299
          %v301 = vld [vmem:[%s75 + $0x380] sm:$0xff]
          %302 = vst [vmem:[%s76 + $0x380] sm:$0xff] %v301
          %v303 = vld [vmem:[%s75 + $0x388] sm:$0xff]
          %304 = vst [vmem:[%s76 + $0x388] sm:$0xff] %v303
          %v305 = vld [vmem:[%s75 + $0x390] sm:$0xff]
          %306 = vst [vmem:[%s76 + $0x390] sm:$0xff] %v305
          %v307 = vld [vmem:[%s75 + $0x398] sm:$0xff]
          %308 = vst [vmem:[%s76 + $0x398] sm:$0xff] %v307
          %v309 = vld [vmem:[%s75 + $0x3a0] sm:$0xff]
          %310 = vst [vmem:[%s76 + $0x3a0] sm:$0xff] %v309
          %v311 = vld [vmem:[%s75 + $0x3a8] sm:$0xff]
          %312 = vst [vmem:[%s76 + $0x3a8] sm:$0xff] %v311
          %v313 = vld [vmem:[%s75 + $0x3b0] sm:$0xff]
          %314 = vst [vmem:[%s76 + $0x3b0] sm:$0xff] %v313
          %v315 = vld [vmem:[%s75 + $0x3b8] sm:$0xff]
          %316 = vst [vmem:[%s76 + $0x3b8] sm:$0xff] %v315
          %v317 = vld [vmem:[%s75 + $0x3c0] sm:$0xff]
          %318 = vst [vmem:[%s76 + $0x3c0] sm:$0xff] %v317
          %v319 = vld [vmem:[%s75 + $0x3c8] sm:$0xff]
          %320 = vst [vmem:[%s76 + $0x3c8] sm:$0xff] %v319
          %v321 = vld [vmem:[%s75 + $0x3d0] sm:$0xff]
          %322 = vst [vmem:[%s76 + $0x3d0] sm:$0xff] %v321
          %v323 = vld [vmem:[%s75 + $0x3d8] sm:$0xff]
          %324 = vst [vmem:[%s76 + $0x3d8] sm:$0xff] %v323
          %v325 = vld [vmem:[%s75 + $0x3e0] sm:$0xff]
          %326 = vst [vmem:[%s76 + $0x3e0] sm:$0xff] %v325
          %v327 = vld [vmem:[%s75 + $0x3e8] sm:$0xff]
          %328 = vst [vmem:[%s76 + $0x3e8] sm:$0xff] %v327
          %v329 = vld [vmem:[%s75 + $0x3f0] sm:$0xff]
          %330 = vst [vmem:[%s76 + $0x3f0] sm:$0xff] %v329
          %v331 = vld [vmem:[%s75 + $0x3f8] sm:$0xff]
          %332 = vst [vmem:[%s76 + $0x3f8] sm:$0xff] %v331
          %v333 = vld [vmem:[%s75 + $0x400] sm:$0xff]
          %334 = vst [vmem:[%s76 + $0x400] sm:$0xff] %v333
          %v335 = vld [vmem:[%s75 + $0x408] sm:$0xff]
          %336 = vst [vmem:[%s76 + $0x408] sm:$0xff] %v335
          %v337 = vld [vmem:[%s75 + $0x410] sm:$0xff]
          %338 = vst [vmem:[%s76 + $0x410] sm:$0xff] %v337
          %v339 = vld [vmem:[%s75 + $0x418] sm:$0xff]
          %340 = vst [vmem:[%s76 + $0x418] sm:$0xff] %v339
          %v341 = vld [vmem:[%s75 + $0x420] sm:$0xff]
          %342 = vst [vmem:[%s76 + $0x420] sm:$0xff] %v341
          %v343 = vld [vmem:[%s75 + $0x428] sm:$0xff]
          %344 = vst [vmem:[%s76 + $0x428] sm:$0xff] %v343
          %v345 = vld [vmem:[%s75 + $0x430] sm:$0xff]
          %346 = vst [vmem:[%s76 + $0x430] sm:$0xff] %v345
          %v347 = vld [vmem:[%s75 + $0x438] sm:$0xff]
          %348 = vst [vmem:[%s76 + $0x438] sm:$0xff] %v347
          %v349 = vld [vmem:[%s75 + $0x440] sm:$0xff]
          %350 = vst [vmem:[%s76 + $0x440] sm:$0xff] %v349
          %v351 = vld [vmem:[%s75 + $0x448] sm:$0xff]
          %352 = vst [vmem:[%s76 + $0x448] sm:$0xff] %v351
          %v353 = vld [vmem:[%s75 + $0x450] sm:$0xff]
          %354 = vst [vmem:[%s76 + $0x450] sm:$0xff] %v353
          %v355 = vld [vmem:[%s75 + $0x458] sm:$0xff]
          %356 = vst [vmem:[%s76 + $0x458] sm:$0xff] %v355
          %v357 = vld [vmem:[%s75 + $0x460] sm:$0xff]
          %358 = vst [vmem:[%s76 + $0x460] sm:$0xff] %v357
          %v359 = vld [vmem:[%s75 + $0x468] sm:$0xff]
          %360 = vst [vmem:[%s76 + $0x468] sm:$0xff] %v359
          %v361 = vld [vmem:[%s75 + $0x470] sm:$0xff]
          %362 = vst [vmem:[%s76 + $0x470] sm:$0xff] %v361
          %v363 = vld [vmem:[%s75 + $0x478] sm:$0xff]
          %364 = vst [vmem:[%s76 + $0x478] sm:$0xff] %v363
          %v365 = vld [vmem:[%s75 + $0x480] sm:$0xff]
          %366 = vst [vmem:[%s76 + $0x480] sm:$0xff] %v365
          %v367 = vld [vmem:[%s75 + $0x488] sm:$0xff]
          %368 = vst [vmem:[%s76 + $0x488] sm:$0xff] %v367
          %v369 = vld [vmem:[%s75 + $0x490] sm:$0xff]
          %370 = vst [vmem:[%s76 + $0x490] sm:$0xff] %v369
          %v371 = vld [vmem:[%s75 + $0x498] sm:$0xff]
          %372 = vst [vmem:[%s76 + $0x498] sm:$0xff] %v371
          %v373 = vld [vmem:[%s75 + $0x4a0] sm:$0xff]
          %374 = vst [vmem:[%s76 + $0x4a0] sm:$0xff] %v373
          %v375 = vld [vmem:[%s75 + $0x4a8] sm:$0xff]
          %376 = vst [vmem:[%s76 + $0x4a8] sm:$0xff] %v375
          %v377 = vld [vmem:[%s75 + $0x4b0] sm:$0xff]
          %378 = vst [vmem:[%s76 + $0x4b0] sm:$0xff] %v377
          %v379 = vld [vmem:[%s75 + $0x4b8] sm:$0xff]
          %380 = vst [vmem:[%s76 + $0x4b8] sm:$0xff] %v379
          %v381 = vld [vmem:[%s75 + $0x4c0] sm:$0xff]
          %382 = vst [vmem:[%s76 + $0x4c0] sm:$0xff] %v381
          %v383 = vld [vmem:[%s75 + $0x4c8] sm:$0xff]
          %384 = vst [vmem:[%s76 + $0x4c8] sm:$0xff] %v383
          %v385 = vld [vmem:[%s75 + $0x4d0] sm:$0xff]
          %386 = vst [vmem:[%s76 + $0x4d0] sm:$0xff] %v385
          %v387 = vld [vmem:[%s75 + $0x4d8] sm:$0xff]
          %388 = vst [vmem:[%s76 + $0x4d8] sm:$0xff] %v387
          %v389 = vld [vmem:[%s75 + $0x4e0] sm:$0xff]
          %390 = vst [vmem:[%s76 + $0x4e0] sm:$0xff] %v389
          %v391 = vld [vmem:[%s75 + $0x4e8] sm:$0xff]
          %392 = vst [vmem:[%s76 + $0x4e8] sm:$0xff] %v391
          %v393 = vld [vmem:[%s75 + $0x4f0] sm:$0xff]
          %394 = vst [vmem:[%s76 + $0x4f0] sm:$0xff] %v393
          %v395 = vld [vmem:[%s75 + $0x4f8] sm:$0xff]
          %396 = vst [vmem:[%s76 + $0x4f8] sm:$0xff] %v395
          %v397 = vld [vmem:[%s75 + $0x500] sm:$0xff]
          %398 = vst [vmem:[%s76 + $0x500] sm:$0xff] %v397
          %v399 = vld [vmem:[%s75 + $0x508] sm:$0xff]
          %400 = vst [vmem:[%s76 + $0x508] sm:$0xff] %v399
          %v401 = vld [vmem:[%s75 + $0x510] sm:$0xff]
          %402 = vst [vmem:[%s76 + $0x510] sm:$0xff] %v401
          %v403 = vld [vmem:[%s75 + $0x518] sm:$0xff]
          %404 = vst [vmem:[%s76 + $0x518] sm:$0xff] %v403
          %v405 = vld [vmem:[%s75 + $0x520] sm:$0xff]
          %406 = vst [vmem:[%s76 + $0x520] sm:$0xff] %v405
          %v407 = vld [vmem:[%s75 + $0x528] sm:$0xff]
          %408 = vst [vmem:[%s76 + $0x528] sm:$0xff] %v407
          %v409 = vld [vmem:[%s75 + $0x530] sm:$0xff]
          %410 = vst [vmem:[%s76 + $0x530] sm:$0xff] %v409
          %v411 = vld [vmem:[%s75 + $0x538] sm:$0xff]
          %412 = vst [vmem:[%s76 + $0x538] sm:$0xff] %v411
          %v413 = vld [vmem:[%s75 + $0x540] sm:$0xff]
          %414 = vst [vmem:[%s76 + $0x540] sm:$0xff] %v413
          %v415 = vld [vmem:[%s75 + $0x548] sm:$0xff]
          %416 = vst [vmem:[%s76 + $0x548] sm:$0xff] %v415
          %v417 = vld [vmem:[%s75 + $0x550] sm:$0xff]
          %418 = vst [vmem:[%s76 + $0x550] sm:$0xff] %v417
          %v419 = vld [vmem:[%s75 + $0x558] sm:$0xff]
          %420 = vst [vmem:[%s76 + $0x558] sm:$0xff] %v419
          %v421 = vld [vmem:[%s75 + $0x560] sm:$0xff]
          %422 = vst [vmem:[%s76 + $0x560] sm:$0xff] %v421
          %v423 = vld [vmem:[%s75 + $0x568] sm:$0xff]
          %424 = vst [vmem:[%s76 + $0x568] sm:$0xff] %v423
          %v425 = vld [vmem:[%s75 + $0x570] sm:$0xff]
          %426 = vst [vmem:[%s76 + $0x570] sm:$0xff] %v425
          %v427 = vld [vmem:[%s75 + $0x578] sm:$0xff]
          %428 = vst [vmem:[%s76 + $0x578] sm:$0xff] %v427
          %v429 = vld [vmem:[%s75 + $0x580] sm:$0xff]
          %430 = vst [vmem:[%s76 + $0x580] sm:$0xff] %v429
          %v431 = vld [vmem:[%s75 + $0x588] sm:$0xff]
          %432 = vst [vmem:[%s76 + $0x588] sm:$0xff] %v431
          %v433 = vld [vmem:[%s75 + $0x590] sm:$0xff]
          %434 = vst [vmem:[%s76 + $0x590] sm:$0xff] %v433
          %v435 = vld [vmem:[%s75 + $0x598] sm:$0xff]
          %436 = vst [vmem:[%s76 + $0x598] sm:$0xff] %v435
          %v437 = vld [vmem:[%s75 + $0x5a0] sm:$0xff]
          %438 = vst [vmem:[%s76 + $0x5a0] sm:$0xff] %v437
          %v439 = vld [vmem:[%s75 + $0x5a8] sm:$0xff]
          %440 = vst [vmem:[%s76 + $0x5a8] sm:$0xff] %v439
          %v441 = vld [vmem:[%s75 + $0x5b0] sm:$0xff]
          %442 = vst [vmem:[%s76 + $0x5b0] sm:$0xff] %v441
          %v443 = vld [vmem:[%s75 + $0x5b8] sm:$0xff]
          %444 = vst [vmem:[%s76 + $0x5b8] sm:$0xff] %v443
          %v445 = vld [vmem:[%s75 + $0x5c0] sm:$0xff]
          %446 = vst [vmem:[%s76 + $0x5c0] sm:$0xff] %v445
          %v447 = vld [vmem:[%s75 + $0x5c8] sm:$0xff]
          %448 = vst [vmem:[%s76 + $0x5c8] sm:$0xff] %v447
          %v449 = vld [vmem:[%s75 + $0x5d0] sm:$0xff]
          %450 = vst [vmem:[%s76 + $0x5d0] sm:$0xff] %v449
          %v451 = vld [vmem:[%s75 + $0x5d8] sm:$0xff]
          %452 = vst [vmem:[%s76 + $0x5d8] sm:$0xff] %v451
          %v453 = vld [vmem:[%s75 + $0x5e0] sm:$0xff]
          %454 = vst [vmem:[%s76 + $0x5e0] sm:$0xff] %v453
          %v455 = vld [vmem:[%s75 + $0x5e8] sm:$0xff]
          %456 = vst [vmem:[%s76 + $0x5e8] sm:$0xff] %v455
          %v457 = vld [vmem:[%s75 + $0x5f0] sm:$0xff]
          %458 = vst [vmem:[%s76 + $0x5f0] sm:$0xff] %v457
          %v459 = vld [vmem:[%s75 + $0x5f8] sm:$0xff]
          %460 = vst [vmem:[%s76 + $0x5f8] sm:$0xff] %v459
          %v461 = vld [vmem:[%s75 + $0x600] sm:$0xff]
          %462 = vst [vmem:[%s76 + $0x600] sm:$0xff] %v461
          %v463 = vld [vmem:[%s75 + $0x608] sm:$0xff]
          %464 = vst [vmem:[%s76 + $0x608] sm:$0xff] %v463
          %v465 = vld [vmem:[%s75 + $0x610] sm:$0xff]
          %466 = vst [vmem:[%s76 + $0x610] sm:$0xff] %v465
          %v467 = vld [vmem:[%s75 + $0x618] sm:$0xff]
          %468 = vst [vmem:[%s76 + $0x618] sm:$0xff] %v467
          %v469 = vld [vmem:[%s75 + $0x620] sm:$0xff]
          %470 = vst [vmem:[%s76 + $0x620] sm:$0xff] %v469
          %v471 = vld [vmem:[%s75 + $0x628] sm:$0xff]
          %472 = vst [vmem:[%s76 + $0x628] sm:$0xff] %v471
          %v473 = vld [vmem:[%s75 + $0x630] sm:$0xff]
          %474 = vst [vmem:[%s76 + $0x630] sm:$0xff] %v473
          %v475 = vld [vmem:[%s75 + $0x638] sm:$0xff]
          %476 = vst [vmem:[%s76 + $0x638] sm:$0xff] %v475
          %v477 = vld [vmem:[%s75 + $0x640] sm:$0xff]
          %478 = vst [vmem:[%s76 + $0x640] sm:$0xff] %v477
          %v479 = vld [vmem:[%s75 + $0x648] sm:$0xff]
          %480 = vst [vmem:[%s76 + $0x648] sm:$0xff] %v479
          %v481 = vld [vmem:[%s75 + $0x650] sm:$0xff]
          %482 = vst [vmem:[%s76 + $0x650] sm:$0xff] %v481
          %v483 = vld [vmem:[%s75 + $0x658] sm:$0xff]
          %484 = vst [vmem:[%s76 + $0x658] sm:$0xff] %v483
          %v485 = vld [vmem:[%s75 + $0x660] sm:$0xff]
          %486 = vst [vmem:[%s76 + $0x660] sm:$0xff] %v485
          %v487 = vld [vmem:[%s75 + $0x668] sm:$0xff]
          %488 = vst [vmem:[%s76 + $0x668] sm:$0xff] %v487
          %v489 = vld [vmem:[%s75 + $0x670] sm:$0xff]
          %490 = vst [vmem:[%s76 + $0x670] sm:$0xff] %v489
          %v491 = vld [vmem:[%s75 + $0x678] sm:$0xff]
          %492 = vst [vmem:[%s76 + $0x678] sm:$0xff] %v491
          %v493 = vld [vmem:[%s75 + $0x680] sm:$0xff]
          %494 = vst [vmem:[%s76 + $0x680] sm:$0xff] %v493
          %v495 = vld [vmem:[%s75 + $0x688] sm:$0xff]
          %496 = vst [vmem:[%s76 + $0x688] sm:$0xff] %v495
          %v497 = vld [vmem:[%s75 + $0x690] sm:$0xff]
          %498 = vst [vmem:[%s76 + $0x690] sm:$0xff] %v497
          %v499 = vld [vmem:[%s75 + $0x698] sm:$0xff]
          %500 = vst [vmem:[%s76 + $0x698] sm:$0xff] %v499
          %v501 = vld [vmem:[%s75 + $0x6a0] sm:$0xff]
          %502 = vst [vmem:[%s76 + $0x6a0] sm:$0xff] %v501
          %v503 = vld [vmem:[%s75 + $0x6a8] sm:$0xff]
          %504 = vst [vmem:[%s76 + $0x6a8] sm:$0xff] %v503
          %v505 = vld [vmem:[%s75 + $0x6b0] sm:$0xff]
          %506 = vst [vmem:[%s76 + $0x6b0] sm:$0xff] %v505
          %v507 = vld [vmem:[%s75 + $0x6b8] sm:$0xff]
          %508 = vst [vmem:[%s76 + $0x6b8] sm:$0xff] %v507
          %v509 = vld [vmem:[%s75 + $0x6c0] sm:$0xff]
          %510 = vst [vmem:[%s76 + $0x6c0] sm:$0xff] %v509
          %v511 = vld [vmem:[%s75 + $0x6c8] sm:$0xff]
          %512 = vst [vmem:[%s76 + $0x6c8] sm:$0xff] %v511
          %v513 = vld [vmem:[%s75 + $0x6d0] sm:$0xff]
          %514 = vst [vmem:[%s76 + $0x6d0] sm:$0xff] %v513
          %v515 = vld [vmem:[%s75 + $0x6d8] sm:$0xff]
          %516 = vst [vmem:[%s76 + $0x6d8] sm:$0xff] %v515
          %v517 = vld [vmem:[%s75 + $0x6e0] sm:$0xff]
          %518 = vst [vmem:[%s76 + $0x6e0] sm:$0xff] %v517
          %v519 = vld [vmem:[%s75 + $0x6e8] sm:$0xff]
          %520 = vst [vmem:[%s76 + $0x6e8] sm:$0xff] %v519
          %v521 = vld [vmem:[%s75 + $0x6f0] sm:$0xff]
          %522 = vst [vmem:[%s76 + $0x6f0] sm:$0xff] %v521
          %v523 = vld [vmem:[%s75 + $0x6f8] sm:$0xff]
          %524 = vst [vmem:[%s76 + $0x6f8] sm:$0xff] %v523
          %v525 = vld [vmem:[%s75 + $0x700] sm:$0xff]
          %526 = vst [vmem:[%s76 + $0x700] sm:$0xff] %v525
          %v527 = vld [vmem:[%s75 + $0x708] sm:$0xff]
          %528 = vst [vmem:[%s76 + $0x708] sm:$0xff] %v527
          %v529 = vld [vmem:[%s75 + $0x710] sm:$0xff]
          %530 = vst [vmem:[%s76 + $0x710] sm:$0xff] %v529
          %v531 = vld [vmem:[%s75 + $0x718] sm:$0xff]
          %532 = vst [vmem:[%s76 + $0x718] sm:$0xff] %v531
          %v533 = vld [vmem:[%s75 + $0x720] sm:$0xff]
          %534 = vst [vmem:[%s76 + $0x720] sm:$0xff] %v533
          %v535 = vld [vmem:[%s75 + $0x728] sm:$0xff]
          %536 = vst [vmem:[%s76 + $0x728] sm:$0xff] %v535
          %v537 = vld [vmem:[%s75 + $0x730] sm:$0xff]
          %538 = vst [vmem:[%s76 + $0x730] sm:$0xff] %v537
          %v539 = vld [vmem:[%s75 + $0x738] sm:$0xff]
          %540 = vst [vmem:[%s76 + $0x738] sm:$0xff] %v539
          %v541 = vld [vmem:[%s75 + $0x740] sm:$0xff]
          %542 = vst [vmem:[%s76 + $0x740] sm:$0xff] %v541
          %v543 = vld [vmem:[%s75 + $0x748] sm:$0xff]
          %544 = vst [vmem:[%s76 + $0x748] sm:$0xff] %v543
          %v545 = vld [vmem:[%s75 + $0x750] sm:$0xff]
          %546 = vst [vmem:[%s76 + $0x750] sm:$0xff] %v545
          %v547 = vld [vmem:[%s75 + $0x758] sm:$0xff]
          %548 = vst [vmem:[%s76 + $0x758] sm:$0xff] %v547
          %v549 = vld [vmem:[%s75 + $0x760] sm:$0xff]
          %550 = vst [vmem:[%s76 + $0x760] sm:$0xff] %v549
          %v551 = vld [vmem:[%s75 + $0x768] sm:$0xff]
          %552 = vst [vmem:[%s76 + $0x768] sm:$0xff] %v551
          %v553 = vld [vmem:[%s75 + $0x770] sm:$0xff]
          %554 = vst [vmem:[%s76 + $0x770] sm:$0xff] %v553
          %v555 = vld [vmem:[%s75 + $0x778] sm:$0xff]
          %556 = vst [vmem:[%s76 + $0x778] sm:$0xff] %v555
          %v557 = vld [vmem:[%s75 + $0x780] sm:$0xff]
          %558 = vst [vmem:[%s76 + $0x780] sm:$0xff] %v557
          %v559 = vld [vmem:[%s75 + $0x788] sm:$0xff]
          %560 = vst [vmem:[%s76 + $0x788] sm:$0xff] %v559
          %v561 = vld [vmem:[%s75 + $0x790] sm:$0xff]
          %562 = vst [vmem:[%s76 + $0x790] sm:$0xff] %v561
          %v563 = vld [vmem:[%s75 + $0x798] sm:$0xff]
          %564 = vst [vmem:[%s76 + $0x798] sm:$0xff] %v563
          %v565 = vld [vmem:[%s75 + $0x7a0] sm:$0xff]
          %566 = vst [vmem:[%s76 + $0x7a0] sm:$0xff] %v565
          %v567 = vld [vmem:[%s75 + $0x7a8] sm:$0xff]
          %568 = vst [vmem:[%s76 + $0x7a8] sm:$0xff] %v567
          %v569 = vld [vmem:[%s75 + $0x7b0] sm:$0xff]
          %570 = vst [vmem:[%s76 + $0x7b0] sm:$0xff] %v569
          %v571 = vld [vmem:[%s75 + $0x7b8] sm:$0xff]
          %572 = vst [vmem:[%s76 + $0x7b8] sm:$0xff] %v571
          %v573 = vld [vmem:[%s75 + $0x7c0] sm:$0xff]
          %574 = vst [vmem:[%s76 + $0x7c0] sm:$0xff] %v573
          %v575 = vld [vmem:[%s75 + $0x7c8] sm:$0xff]
          %576 = vst [vmem:[%s76 + $0x7c8] sm:$0xff] %v575
          %v577 = vld [vmem:[%s75 + $0x7d0] sm:$0xff]
          %578 = vst [vmem:[%s76 + $0x7d0] sm:$0xff] %v577
          %v579 = vld [vmem:[%s75 + $0x7d8] sm:$0xff]
          %580 = vst [vmem:[%s76 + $0x7d8] sm:$0xff] %v579
          %v581 = vld [vmem:[%s75 + $0x7e0] sm:$0xff]
          %582 = vst [vmem:[%s76 + $0x7e0] sm:$0xff] %v581
          %v583 = vld [vmem:[%s75 + $0x7e8] sm:$0xff]
          %584 = vst [vmem:[%s76 + $0x7e8] sm:$0xff] %v583
          %v585 = vld [vmem:[%s75 + $0x7f0] sm:$0xff]
          %586 = vst [vmem:[%s76 + $0x7f0] sm:$0xff] %v585
          %v587 = vld [vmem:[%s75 + $0x7f8] sm:$0xff]
          %588 = vst [vmem:[%s76 + $0x7f8] sm:$0xff] %v587
          %v589 = vld [vmem:[%s75 + $0x800] sm:$0xff]
          %590 = vst [vmem:[%s76 + $0x800] sm:$0xff] %v589
          %v591 = vld [vmem:[%s75 + $0x808] sm:$0xff]
          %592 = vst [vmem:[%s76 + $0x808] sm:$0xff] %v591
          %v593 = vld [vmem:[%s75 + $0x810] sm:$0xff]
          %594 = vst [vmem:[%s76 + $0x810] sm:$0xff] %v593
          %v595 = vld [vmem:[%s75 + $0x818] sm:$0xff]
          %596 = vst [vmem:[%s76 + $0x818] sm:$0xff] %v595
          %v597 = vld [vmem:[%s75 + $0x820] sm:$0xff]
          %598 = vst [vmem:[%s76 + $0x820] sm:$0xff] %v597
          %v599 = vld [vmem:[%s75 + $0x828] sm:$0xff]
          %600 = vst [vmem:[%s76 + $0x828] sm:$0xff] %v599
          %v601 = vld [vmem:[%s75 + $0x830] sm:$0xff]
          %602 = vst [vmem:[%s76 + $0x830] sm:$0xff] %v601
          %v603 = vld [vmem:[%s75 + $0x838] sm:$0xff]
          %604 = vst [vmem:[%s76 + $0x838] sm:$0xff] %v603
          %v605 = vld [vmem:[%s75 + $0x840] sm:$0xff]
          %606 = vst [vmem:[%s76 + $0x840] sm:$0xff] %v605
          %v607 = vld [vmem:[%s75 + $0x848] sm:$0xff]
          %608 = vst [vmem:[%s76 + $0x848] sm:$0xff] %v607
          %v609 = vld [vmem:[%s75 + $0x850] sm:$0xff]
          %610 = vst [vmem:[%s76 + $0x850] sm:$0xff] %v609
          %v611 = vld [vmem:[%s75 + $0x858] sm:$0xff]
          %612 = vst [vmem:[%s76 + $0x858] sm:$0xff] %v611
          %v613 = vld [vmem:[%s75 + $0x860] sm:$0xff]
          %614 = vst [vmem:[%s76 + $0x860] sm:$0xff] %v613
          %v615 = vld [vmem:[%s75 + $0x868] sm:$0xff]
          %616 = vst [vmem:[%s76 + $0x868] sm:$0xff] %v615
          %v617 = vld [vmem:[%s75 + $0x870] sm:$0xff]
          %618 = vst [vmem:[%s76 + $0x870] sm:$0xff] %v617
          %v619 = vld [vmem:[%s75 + $0x878] sm:$0xff]
          %620 = vst [vmem:[%s76 + $0x878] sm:$0xff] %v619
          %v621 = vld [vmem:[%s75 + $0x880] sm:$0xff]
          %622 = vst [vmem:[%s76 + $0x880] sm:$0xff] %v621
          %v623 = vld [vmem:[%s75 + $0x888] sm:$0xff]
          %624 = vst [vmem:[%s76 + $0x888] sm:$0xff] %v623
          %v625 = vld [vmem:[%s75 + $0x890] sm:$0xff]
          %626 = vst [vmem:[%s76 + $0x890] sm:$0xff] %v625
          %v627 = vld [vmem:[%s75 + $0x898] sm:$0xff]
          %628 = vst [vmem:[%s76 + $0x898] sm:$0xff] %v627
          %v629 = vld [vmem:[%s75 + $0x8a0] sm:$0xff]
          %630 = vst [vmem:[%s76 + $0x8a0] sm:$0xff] %v629
          %v631 = vld [vmem:[%s75 + $0x8a8] sm:$0xff]
          %632 = vst [vmem:[%s76 + $0x8a8] sm:$0xff] %v631
          %v633 = vld [vmem:[%s75 + $0x8b0] sm:$0xff]
          %634 = vst [vmem:[%s76 + $0x8b0] sm:$0xff] %v633
          %v635 = vld [vmem:[%s75 + $0x8b8] sm:$0xff]
          %636 = vst [vmem:[%s76 + $0x8b8] sm:$0xff] %v635
          %v637 = vld [vmem:[%s75 + $0x8c0] sm:$0xff]
          %638 = vst [vmem:[%s76 + $0x8c0] sm:$0xff] %v637
          %v639 = vld [vmem:[%s75 + $0x8c8] sm:$0xff]
          %640 = vst [vmem:[%s76 + $0x8c8] sm:$0xff] %v639
          %v641 = vld [vmem:[%s75 + $0x8d0] sm:$0xff]
          %642 = vst [vmem:[%s76 + $0x8d0] sm:$0xff] %v641
          %v643 = vld [vmem:[%s75 + $0x8d8] sm:$0xff]
          %644 = vst [vmem:[%s76 + $0x8d8] sm:$0xff] %v643
          %v645 = vld [vmem:[%s75 + $0x8e0] sm:$0xff]
          %646 = vst [vmem:[%s76 + $0x8e0] sm:$0xff] %v645
          %v647 = vld [vmem:[%s75 + $0x8e8] sm:$0xff]
          %648 = vst [vmem:[%s76 + $0x8e8] sm:$0xff] %v647
          %v649 = vld [vmem:[%s75 + $0x8f0] sm:$0xff]
          %650 = vst [vmem:[%s76 + $0x8f0] sm:$0xff] %v649
          %v651 = vld [vmem:[%s75 + $0x8f8] sm:$0xff]
          %652 = vst [vmem:[%s76 + $0x8f8] sm:$0xff] %v651
          %v653 = vld [vmem:[%s75 + $0x900] sm:$0xff]
          %654 = vst [vmem:[%s76 + $0x900] sm:$0xff] %v653
          %v655 = vld [vmem:[%s75 + $0x908] sm:$0xff]
          %656 = vst [vmem:[%s76 + $0x908] sm:$0xff] %v655
          %v657 = vld [vmem:[%s75 + $0x910] sm:$0xff]
          %658 = vst [vmem:[%s76 + $0x910] sm:$0xff] %v657
          %v659 = vld [vmem:[%s75 + $0x918] sm:$0xff]
          %660 = vst [vmem:[%s76 + $0x918] sm:$0xff] %v659
          %v661 = vld [vmem:[%s75 + $0x920] sm:$0xff]
          %662 = vst [vmem:[%s76 + $0x920] sm:$0xff] %v661
          %v663 = vld [vmem:[%s75 + $0x928] sm:$0xff]
          %664 = vst [vmem:[%s76 + $0x928] sm:$0xff] %v663
          %v665 = vld [vmem:[%s75 + $0x930] sm:$0xff]
          %666 = vst [vmem:[%s76 + $0x930] sm:$0xff] %v665
          %v667 = vld [vmem:[%s75 + $0x938] sm:$0xff]
          %668 = vst [vmem:[%s76 + $0x938] sm:$0xff] %v667
          %v669 = vld [vmem:[%s75 + $0x940] sm:$0xff]
          %670 = vst [vmem:[%s76 + $0x940] sm:$0xff] %v669
          %v671 = vld [vmem:[%s75 + $0x948] sm:$0xff]
          %672 = vst [vmem:[%s76 + $0x948] sm:$0xff] %v671
          %v673 = vld [vmem:[%s75 + $0x950] sm:$0xff]
          %674 = vst [vmem:[%s76 + $0x950] sm:$0xff] %v673
          %v675 = vld [vmem:[%s75 + $0x958] sm:$0xff]
          %676 = vst [vmem:[%s76 + $0x958] sm:$0xff] %v675
          %v677 = vld [vmem:[%s75 + $0x960] sm:$0xff]
          %678 = vst [vmem:[%s76 + $0x960] sm:$0xff] %v677
          %v679 = vld [vmem:[%s75 + $0x968] sm:$0xff]
          %680 = vst [vmem:[%s76 + $0x968] sm:$0xff] %v679
          %v681 = vld [vmem:[%s75 + $0x970] sm:$0xff]
          %682 = vst [vmem:[%s76 + $0x970] sm:$0xff] %v681
          %v683 = vld [vmem:[%s75 + $0x978] sm:$0xff]
          %684 = vst [vmem:[%s76 + $0x978] sm:$0xff] %v683
          %v685 = vld [vmem:[%s75 + $0x980] sm:$0xff]
          %686 = vst [vmem:[%s76 + $0x980] sm:$0xff] %v685
          %v687 = vld [vmem:[%s75 + $0x988] sm:$0xff]
          %688 = vst [vmem:[%s76 + $0x988] sm:$0xff] %v687
          %v689 = vld [vmem:[%s75 + $0x990] sm:$0xff]
          %690 = vst [vmem:[%s76 + $0x990] sm:$0xff] %v689
          %v691 = vld [vmem:[%s75 + $0x998] sm:$0xff]
          %692 = vst [vmem:[%s76 + $0x998] sm:$0xff] %v691
          %v693 = vld [vmem:[%s75 + $0x9a0] sm:$0xff]
          %694 = vst [vmem:[%s76 + $0x9a0] sm:$0xff] %v693
          %v695 = vld [vmem:[%s75 + $0x9a8] sm:$0xff]
          %696 = vst [vmem:[%s76 + $0x9a8] sm:$0xff] %v695
          %v697 = vld [vmem:[%s75 + $0x9b0] sm:$0xff]
          %698 = vst [vmem:[%s76 + $0x9b0] sm:$0xff] %v697
          %v699 = vld [vmem:[%s75 + $0x9b8] sm:$0xff]
          %700 = vst [vmem:[%s76 + $0x9b8] sm:$0xff] %v699
          %v701 = vld [vmem:[%s75 + $0x9c0] sm:$0xff]
          %702 = vst [vmem:[%s76 + $0x9c0] sm:$0xff] %v701
          %v703 = vld [vmem:[%s75 + $0x9c8] sm:$0xff]
          %704 = vst [vmem:[%s76 + $0x9c8] sm:$0xff] %v703
          %v705 = vld [vmem:[%s75 + $0x9d0] sm:$0xff]
          %706 = vst [vmem:[%s76 + $0x9d0] sm:$0xff] %v705
          %v707 = vld [vmem:[%s75 + $0x9d8] sm:$0xff]
          %708 = vst [vmem:[%s76 + $0x9d8] sm:$0xff] %v707
          %v709 = vld [vmem:[%s75 + $0x9e0] sm:$0xff]
          %710 = vst [vmem:[%s76 + $0x9e0] sm:$0xff] %v709
          %v711 = vld [vmem:[%s75 + $0x9e8] sm:$0xff]
          %712 = vst [vmem:[%s76 + $0x9e8] sm:$0xff] %v711
          %v713 = vld [vmem:[%s75 + $0x9f0] sm:$0xff]
          %714 = vst [vmem:[%s76 + $0x9f0] sm:$0xff] %v713
          %v715 = vld [vmem:[%s75 + $0x9f8] sm:$0xff]
          %716 = vst [vmem:[%s76 + $0x9f8] sm:$0xff] %v715
          %v717 = vld [vmem:[%s75 + $0xa00] sm:$0xff]
          %718 = vst [vmem:[%s76 + $0xa00] sm:$0xff] %v717
          %v719 = vld [vmem:[%s75 + $0xa08] sm:$0xff]
          %720 = vst [vmem:[%s76 + $0xa08] sm:$0xff] %v719
          %v721 = vld [vmem:[%s75 + $0xa10] sm:$0xff]
          %722 = vst [vmem:[%s76 + $0xa10] sm:$0xff] %v721
          %v723 = vld [vmem:[%s75 + $0xa18] sm:$0xff]
          %724 = vst [vmem:[%s76 + $0xa18] sm:$0xff] %v723
          %v725 = vld [vmem:[%s75 + $0xa20] sm:$0xff]
          %726 = vst [vmem:[%s76 + $0xa20] sm:$0xff] %v725
          %v727 = vld [vmem:[%s75 + $0xa28] sm:$0xff]
          %728 = vst [vmem:[%s76 + $0xa28] sm:$0xff] %v727
          %v729 = vld [vmem:[%s75 + $0xa30] sm:$0xff]
          %730 = vst [vmem:[%s76 + $0xa30] sm:$0xff] %v729
          %v731 = vld [vmem:[%s75 + $0xa38] sm:$0xff]
          %732 = vst [vmem:[%s76 + $0xa38] sm:$0xff] %v731
          %v733 = vld [vmem:[%s75 + $0xa40] sm:$0xff]
          %734 = vst [vmem:[%s76 + $0xa40] sm:$0xff] %v733
          %v735 = vld [vmem:[%s75 + $0xa48] sm:$0xff]
          %736 = vst [vmem:[%s76 + $0xa48] sm:$0xff] %v735
          %v737 = vld [vmem:[%s75 + $0xa50] sm:$0xff]
          %738 = vst [vmem:[%s76 + $0xa50] sm:$0xff] %v737
          %v739 = vld [vmem:[%s75 + $0xa58] sm:$0xff]
          %740 = vst [vmem:[%s76 + $0xa58] sm:$0xff] %v739
          %v741 = vld [vmem:[%s75 + $0xa60] sm:$0xff]
          %742 = vst [vmem:[%s76 + $0xa60] sm:$0xff] %v741
          %v743 = vld [vmem:[%s75 + $0xa68] sm:$0xff]
          %744 = vst [vmem:[%s76 + $0xa68] sm:$0xff] %v743
          %v745 = vld [vmem:[%s75 + $0xa70] sm:$0xff]
          %746 = vst [vmem:[%s76 + $0xa70] sm:$0xff] %v745
          %v747 = vld [vmem:[%s75 + $0xa78] sm:$0xff]
          %748 = vst [vmem:[%s76 + $0xa78] sm:$0xff] %v747
          %v749 = vld [vmem:[%s75 + $0xa80] sm:$0xff]
          %750 = vst [vmem:[%s76 + $0xa80] sm:$0xff] %v749
          %v751 = vld [vmem:[%s75 + $0xa88] sm:$0xff]
          %752 = vst [vmem:[%s76 + $0xa88] sm:$0xff] %v751
          %v753 = vld [vmem:[%s75 + $0xa90] sm:$0xff]
          %754 = vst [vmem:[%s76 + $0xa90] sm:$0xff] %v753
          %v755 = vld [vmem:[%s75 + $0xa98] sm:$0xff]
          %756 = vst [vmem:[%s76 + $0xa98] sm:$0xff] %v755
          %v757 = vld [vmem:[%s75 + $0xaa0] sm:$0xff]
          %758 = vst [vmem:[%s76 + $0xaa0] sm:$0xff] %v757
          %v759 = vld [vmem:[%s75 + $0xaa8] sm:$0xff]
          %760 = vst [vmem:[%s76 + $0xaa8] sm:$0xff] %v759
          %v761 = vld [vmem:[%s75 + $0xab0] sm:$0xff]
          %762 = vst [vmem:[%s76 + $0xab0] sm:$0xff] %v761
          %v763 = vld [vmem:[%s75 + $0xab8] sm:$0xff]
          %764 = vst [vmem:[%s76 + $0xab8] sm:$0xff] %v763
          %v765 = vld [vmem:[%s75 + $0xac0] sm:$0xff]
          %766 = vst [vmem:[%s76 + $0xac0] sm:$0xff] %v765
          %v767 = vld [vmem:[%s75 + $0xac8] sm:$0xff]
          %768 = vst [vmem:[%s76 + $0xac8] sm:$0xff] %v767
          %v769 = vld [vmem:[%s75 + $0xad0] sm:$0xff]
          %770 = vst [vmem:[%s76 + $0xad0] sm:$0xff] %v769
          %v771 = vld [vmem:[%s75 + $0xad8] sm:$0xff]
          %772 = vst [vmem:[%s76 + $0xad8] sm:$0xff] %v771
          %v773 = vld [vmem:[%s75 + $0xae0] sm:$0xff]
          %774 = vst [vmem:[%s76 + $0xae0] sm:$0xff] %v773
          %v775 = vld [vmem:[%s75 + $0xae8] sm:$0xff]
          %776 = vst [vmem:[%s76 + $0xae8] sm:$0xff] %v775
          %v777 = vld [vmem:[%s75 + $0xaf0] sm:$0xff]
          %778 = vst [vmem:[%s76 + $0xaf0] sm:$0xff] %v777
          %v779 = vld [vmem:[%s75 + $0xaf8] sm:$0xff]
          %780 = vst [vmem:[%s76 + $0xaf8] sm:$0xff] %v779
          %v781 = vld [vmem:[%s75 + $0xb00] sm:$0xff]
          %782 = vst [vmem:[%s76 + $0xb00] sm:$0xff] %v781
          %v783 = vld [vmem:[%s75 + $0xb08] sm:$0xff]
          %784 = vst [vmem:[%s76 + $0xb08] sm:$0xff] %v783
          %v785 = vld [vmem:[%s75 + $0xb10] sm:$0xff]
          %786 = vst [vmem:[%s76 + $0xb10] sm:$0xff] %v785
          %v787 = vld [vmem:[%s75 + $0xb18] sm:$0xff]
          %788 = vst [vmem:[%s76 + $0xb18] sm:$0xff] %v787
          %v789 = vld [vmem:[%s75 + $0xb20] sm:$0xff]
          %790 = vst [vmem:[%s76 + $0xb20] sm:$0xff] %v789
          %v791 = vld [vmem:[%s75 + $0xb28] sm:$0xff]
          %792 = vst [vmem:[%s76 + $0xb28] sm:$0xff] %v791
          %v793 = vld [vmem:[%s75 + $0xb30] sm:$0xff]
          %794 = vst [vmem:[%s76 + $0xb30] sm:$0xff] %v793
          %v795 = vld [vmem:[%s75 + $0xb38] sm:$0xff]
          %796 = vst [vmem:[%s76 + $0xb38] sm:$0xff] %v795
          %v797 = vld [vmem:[%s75 + $0xb40] sm:$0xff]
          %798 = vst [vmem:[%s76 + $0xb40] sm:$0xff] %v797
          %v799 = vld [vmem:[%s75 + $0xb48] sm:$0xff]
          %800 = vst [vmem:[%s76 + $0xb48] sm:$0xff] %v799
          %v801 = vld [vmem:[%s75 + $0xb50] sm:$0xff]
          %802 = vst [vmem:[%s76 + $0xb50] sm:$0xff] %v801
          %v803 = vld [vmem:[%s75 + $0xb58] sm:$0xff]
          %804 = vst [vmem:[%s76 + $0xb58] sm:$0xff] %v803
          %v805 = vld [vmem:[%s75 + $0xb60] sm:$0xff]
          %806 = vst [vmem:[%s76 + $0xb60] sm:$0xff] %v805
          %v807 = vld [vmem:[%s75 + $0xb68] sm:$0xff]
          %808 = vst [vmem:[%s76 + $0xb68] sm:$0xff] %v807
          %v809 = vld [vmem:[%s75 + $0xb70] sm:$0xff]
          %810 = vst [vmem:[%s76 + $0xb70] sm:$0xff] %v809
          %v811 = vld [vmem:[%s75 + $0xb78] sm:$0xff]
          %812 = vst [vmem:[%s76 + $0xb78] sm:$0xff] %v811
          %v813 = vld [vmem:[%s75 + $0xb80] sm:$0xff]
          %814 = vst [vmem:[%s76 + $0xb80] sm:$0xff] %v813
          %v815 = vld [vmem:[%s75 + $0xb88] sm:$0xff]
          %816 = vst [vmem:[%s76 + $0xb88] sm:$0xff] %v815
          %v817 = vld [vmem:[%s75 + $0xb90] sm:$0xff]
          %818 = vst [vmem:[%s76 + $0xb90] sm:$0xff] %v817
          %v819 = vld [vmem:[%s75 + $0xb98] sm:$0xff]
          %820 = vst [vmem:[%s76 + $0xb98] sm:$0xff] %v819
          %v821 = vld [vmem:[%s75 + $0xba0] sm:$0xff]
          %822 = vst [vmem:[%s76 + $0xba0] sm:$0xff] %v821
          %v823 = vld [vmem:[%s75 + $0xba8] sm:$0xff]
          %824 = vst [vmem:[%s76 + $0xba8] sm:$0xff] %v823
          %v825 = vld [vmem:[%s75 + $0xbb0] sm:$0xff]
          %826 = vst [vmem:[%s76 + $0xbb0] sm:$0xff] %v825
          %v827 = vld [vmem:[%s75 + $0xbb8] sm:$0xff]
          %828 = vst [vmem:[%s76 + $0xbb8] sm:$0xff] %v827
        $region69: #{tpu_custom_call.1} parent=63 // loop_footer
          %s74 = sadd.s32 1, %s70
        $region70: #{tpu_custom_call.1} parent=63 // loop_footer_branch
          %69 = sbr.rel target = $region66
        $region71: #{tpu_custom_call.1} parent=63 // loop_exit
          _
      $region64: #{tpu_custom_call.1} parent=48 // pred_fallthru
        _
      %p829 = pneg %p65
      // Predicated region
      $region72: #{tpu_custom_call.1} parent=48 // pred_check
        _
      $region73: #{tpu_custom_call.1} parent=48 // pred_check_branch
        %831 = sbr.rel (%p65) target = $region75
      $region74: #{tpu_custom_call.1} parent=48 // pred_region
        %s832 = sand.u32 3008, 7
      $region75: #{tpu_custom_call.1} parent=48 // pred_fallthru
        _
    $region49: #{tpu_custom_call.1} parent=1 // pred_fallthru
      _
    // Predicated region
    $region50: #{tpu_custom_call.1} parent=1 // pred_check
      %p49 = pneg %p45
    $region51: #{tpu_custom_call.1} parent=1 // pred_check_branch
      %51 = sbr.rel (%p49) target = $region53
    $region52: #{tpu_custom_call.1} parent=1 // pred_region
      %s52 = sshll.u32 1, 3008
      %s53 = ssub.s32 %s52, 1
      loop: start=0, step=1, limit=1
      $region54: #{tpu_custom_call.1} parent=52 // loop_pre_header
        _
      $region55: #{tpu_custom_call.1} parent=52 // loop_header
        %s55 = sphi 0, %s59
        %p56 = scmp.ge.s32.totalorder %s55, 1
        %s60 = sphi %s4, %s4
        %s61 = sphi [#allocation2], [#allocation2]
      $region56: #{tpu_custom_call.1} parent=52 // loop_header_branch
        %58 = sbr.rel (%p56) target = $region60
      $region57: #{tpu_custom_call.1} parent=52 // loop_body
        %v62 = vld [vmem:[%s60] sm:%s53]
        %63 = vst [vmem:[%s61] sm:%s53] %v62
      $region58: #{tpu_custom_call.1} parent=52 // loop_footer
        %s59 = sadd.s32 1, %s55
      $region59: #{tpu_custom_call.1} parent=52 // loop_footer_branch
        %54 = sbr.rel target = $region55
      $region60: #{tpu_custom_call.1} parent=52 // loop_exit
        _
    $region53: #{tpu_custom_call.1} parent=1 // pred_fallthru
      _
    // Predicated region
    $region76: #{tpu_custom_call.1} parent=1 // pred_check
      _
    $region77: #{tpu_custom_call.1} parent=1 // pred_check_branch
      %835 = sbr.rel (0) target = $region79
    $region78: #{tpu_custom_call.1} parent=1 // pred_region
      %836 = vsyncadd [#allocation6], 48128
    $region79: #{tpu_custom_call.1} parent=1 // pred_fallthru
      _
    %s837 = scalar_lea.sflag [#allocation6], 1
    %p839 = scmp.lt.u32.totalorder 1024, 8
    %p840 = pneg %p839
    // Predicated region
    $region80: #{tpu_custom_call.1} parent=1 // pred_check
      _
    $region81: #{tpu_custom_call.1} parent=1 // pred_check_branch
      %842 = sbr.rel (%p839) target = $region83
    $region82: #{tpu_custom_call.1} parent=1 // pred_region
      %s858 = sand.u32 1024, 7
      %p859 = scmp.eq.s32.totalorder %s858, 0
      // Predicated region
      $region95: #{tpu_custom_call.1} parent=82 // pred_check
        %p860 = pneg %p859
      $region96: #{tpu_custom_call.1} parent=82 // pred_check_branch
        %862 = sbr.rel (%p860) target = $region98
      $region97: #{tpu_custom_call.1} parent=82 // pred_region
        loop: start=0, step=1, limit=1
        $region99: #{tpu_custom_call.1} parent=97 // loop_pre_header
          _
        $region100: #{tpu_custom_call.1} parent=97 // loop_header
          %s864 = sphi 0, %s868
          %p865 = scmp.ge.s32.totalorder %s864, 1
          %s869 = sphi %s5, %s5
          %s870 = sphi [#allocation3], [#allocation3]
        $region101: #{tpu_custom_call.1} parent=97 // loop_header_branch
          %867 = sbr.rel (%p865) target = $region105
        $region102: #{tpu_custom_call.1} parent=97 // loop_body
          %v871 = vld [vmem:[%s869] sm:$0xff]
          %872 = vst [vmem:[%s870] sm:$0xff] %v871
          %v873 = vld [vmem:[%s869 + $0x8] sm:$0xff]
          %874 = vst [vmem:[%s870 + $0x8] sm:$0xff] %v873
          %v875 = vld [vmem:[%s869 + $0x10] sm:$0xff]
          %876 = vst [vmem:[%s870 + $0x10] sm:$0xff] %v875
          %v877 = vld [vmem:[%s869 + $0x18] sm:$0xff]
          %878 = vst [vmem:[%s870 + $0x18] sm:$0xff] %v877
          %v879 = vld [vmem:[%s869 + $0x20] sm:$0xff]
          %880 = vst [vmem:[%s870 + $0x20] sm:$0xff] %v879
          %v881 = vld [vmem:[%s869 + $0x28] sm:$0xff]
          %882 = vst [vmem:[%s870 + $0x28] sm:$0xff] %v881
          %v883 = vld [vmem:[%s869 + $0x30] sm:$0xff]
          %884 = vst [vmem:[%s870 + $0x30] sm:$0xff] %v883
          %v885 = vld [vmem:[%s869 + $0x38] sm:$0xff]
          %886 = vst [vmem:[%s870 + $0x38] sm:$0xff] %v885
          %v887 = vld [vmem:[%s869 + $0x40] sm:$0xff]
          %888 = vst [vmem:[%s870 + $0x40] sm:$0xff] %v887
          %v889 = vld [vmem:[%s869 + $0x48] sm:$0xff]
          %890 = vst [vmem:[%s870 + $0x48] sm:$0xff] %v889
          %v891 = vld [vmem:[%s869 + $0x50] sm:$0xff]
          %892 = vst [vmem:[%s870 + $0x50] sm:$0xff] %v891
          %v893 = vld [vmem:[%s869 + $0x58] sm:$0xff]
          %894 = vst [vmem:[%s870 + $0x58] sm:$0xff] %v893
          %v895 = vld [vmem:[%s869 + $0x60] sm:$0xff]
          %896 = vst [vmem:[%s870 + $0x60] sm:$0xff] %v895
          %v897 = vld [vmem:[%s869 + $0x68] sm:$0xff]
          %898 = vst [vmem:[%s870 + $0x68] sm:$0xff] %v897
          %v899 = vld [vmem:[%s869 + $0x70] sm:$0xff]
          %900 = vst [vmem:[%s870 + $0x70] sm:$0xff] %v899
          %v901 = vld [vmem:[%s869 + $0x78] sm:$0xff]
          %902 = vst [vmem:[%s870 + $0x78] sm:$0xff] %v901
          %v903 = vld [vmem:[%s869 + $0x80] sm:$0xff]
          %904 = vst [vmem:[%s870 + $0x80] sm:$0xff] %v903
          %v905 = vld [vmem:[%s869 + $0x88] sm:$0xff]
          %906 = vst [vmem:[%s870 + $0x88] sm:$0xff] %v905
          %v907 = vld [vmem:[%s869 + $0x90] sm:$0xff]
          %908 = vst [vmem:[%s870 + $0x90] sm:$0xff] %v907
          %v909 = vld [vmem:[%s869 + $0x98] sm:$0xff]
          %910 = vst [vmem:[%s870 + $0x98] sm:$0xff] %v909
          %v911 = vld [vmem:[%s869 + $0xa0] sm:$0xff]
          %912 = vst [vmem:[%s870 + $0xa0] sm:$0xff] %v911
          %v913 = vld [vmem:[%s869 + $0xa8] sm:$0xff]
          %914 = vst [vmem:[%s870 + $0xa8] sm:$0xff] %v913
          %v915 = vld [vmem:[%s869 + $0xb0] sm:$0xff]
          %916 = vst [vmem:[%s870 + $0xb0] sm:$0xff] %v915
          %v917 = vld [vmem:[%s869 + $0xb8] sm:$0xff]
          %918 = vst [vmem:[%s870 + $0xb8] sm:$0xff] %v917
          %v919 = vld [vmem:[%s869 + $0xc0] sm:$0xff]
          %920 = vst [vmem:[%s870 + $0xc0] sm:$0xff] %v919
          %v921 = vld [vmem:[%s869 + $0xc8] sm:$0xff]
          %922 = vst [vmem:[%s870 + $0xc8] sm:$0xff] %v921
          %v923 = vld [vmem:[%s869 + $0xd0] sm:$0xff]
          %924 = vst [vmem:[%s870 + $0xd0] sm:$0xff] %v923
          %v925 = vld [vmem:[%s869 + $0xd8] sm:$0xff]
          %926 = vst [vmem:[%s870 + $0xd8] sm:$0xff] %v925
          %v927 = vld [vmem:[%s869 + $0xe0] sm:$0xff]
          %928 = vst [vmem:[%s870 + $0xe0] sm:$0xff] %v927
          %v929 = vld [vmem:[%s869 + $0xe8] sm:$0xff]
          %930 = vst [vmem:[%s870 + $0xe8] sm:$0xff] %v929
          %v931 = vld [vmem:[%s869 + $0xf0] sm:$0xff]
          %932 = vst [vmem:[%s870 + $0xf0] sm:$0xff] %v931
          %v933 = vld [vmem:[%s869 + $0xf8] sm:$0xff]
          %934 = vst [vmem:[%s870 + $0xf8] sm:$0xff] %v933
          %v935 = vld [vmem:[%s869 + $0x100] sm:$0xff]
          %936 = vst [vmem:[%s870 + $0x100] sm:$0xff] %v935
          %v937 = vld [vmem:[%s869 + $0x108] sm:$0xff]
          %938 = vst [vmem:[%s870 + $0x108] sm:$0xff] %v937
          %v939 = vld [vmem:[%s869 + $0x110] sm:$0xff]
          %940 = vst [vmem:[%s870 + $0x110] sm:$0xff] %v939
          %v941 = vld [vmem:[%s869 + $0x118] sm:$0xff]
          %942 = vst [vmem:[%s870 + $0x118] sm:$0xff] %v941
          %v943 = vld [vmem:[%s869 + $0x120] sm:$0xff]
          %944 = vst [vmem:[%s870 + $0x120] sm:$0xff] %v943
          %v945 = vld [vmem:[%s869 + $0x128] sm:$0xff]
          %946 = vst [vmem:[%s870 + $0x128] sm:$0xff] %v945
          %v947 = vld [vmem:[%s869 + $0x130] sm:$0xff]
          %948 = vst [vmem:[%s870 + $0x130] sm:$0xff] %v947
          %v949 = vld [vmem:[%s869 + $0x138] sm:$0xff]
          %950 = vst [vmem:[%s870 + $0x138] sm:$0xff] %v949
          %v951 = vld [vmem:[%s869 + $0x140] sm:$0xff]
          %952 = vst [vmem:[%s870 + $0x140] sm:$0xff] %v951
          %v953 = vld [vmem:[%s869 + $0x148] sm:$0xff]
          %954 = vst [vmem:[%s870 + $0x148] sm:$0xff] %v953
          %v955 = vld [vmem:[%s869 + $0x150] sm:$0xff]
          %956 = vst [vmem:[%s870 + $0x150] sm:$0xff] %v955
          %v957 = vld [vmem:[%s869 + $0x158] sm:$0xff]
          %958 = vst [vmem:[%s870 + $0x158] sm:$0xff] %v957
          %v959 = vld [vmem:[%s869 + $0x160] sm:$0xff]
          %960 = vst [vmem:[%s870 + $0x160] sm:$0xff] %v959
          %v961 = vld [vmem:[%s869 + $0x168] sm:$0xff]
          %962 = vst [vmem:[%s870 + $0x168] sm:$0xff] %v961
          %v963 = vld [vmem:[%s869 + $0x170] sm:$0xff]
          %964 = vst [vmem:[%s870 + $0x170] sm:$0xff] %v963
          %v965 = vld [vmem:[%s869 + $0x178] sm:$0xff]
          %966 = vst [vmem:[%s870 + $0x178] sm:$0xff] %v965
          %v967 = vld [vmem:[%s869 + $0x180] sm:$0xff]
          %968 = vst [vmem:[%s870 + $0x180] sm:$0xff] %v967
          %v969 = vld [vmem:[%s869 + $0x188] sm:$0xff]
          %970 = vst [vmem:[%s870 + $0x188] sm:$0xff] %v969
          %v971 = vld [vmem:[%s869 + $0x190] sm:$0xff]
          %972 = vst [vmem:[%s870 + $0x190] sm:$0xff] %v971
          %v973 = vld [vmem:[%s869 + $0x198] sm:$0xff]
          %974 = vst [vmem:[%s870 + $0x198] sm:$0xff] %v973
          %v975 = vld [vmem:[%s869 + $0x1a0] sm:$0xff]
          %976 = vst [vmem:[%s870 + $0x1a0] sm:$0xff] %v975
          %v977 = vld [vmem:[%s869 + $0x1a8] sm:$0xff]
          %978 = vst [vmem:[%s870 + $0x1a8] sm:$0xff] %v977
          %v979 = vld [vmem:[%s869 + $0x1b0] sm:$0xff]
          %980 = vst [vmem:[%s870 + $0x1b0] sm:$0xff] %v979
          %v981 = vld [vmem:[%s869 + $0x1b8] sm:$0xff]
          %982 = vst [vmem:[%s870 + $0x1b8] sm:$0xff] %v981
          %v983 = vld [vmem:[%s869 + $0x1c0] sm:$0xff]
          %984 = vst [vmem:[%s870 + $0x1c0] sm:$0xff] %v983
          %v985 = vld [vmem:[%s869 + $0x1c8] sm:$0xff]
          %986 = vst [vmem:[%s870 + $0x1c8] sm:$0xff] %v985
          %v987 = vld [vmem:[%s869 + $0x1d0] sm:$0xff]
          %988 = vst [vmem:[%s870 + $0x1d0] sm:$0xff] %v987
          %v989 = vld [vmem:[%s869 + $0x1d8] sm:$0xff]
          %990 = vst [vmem:[%s870 + $0x1d8] sm:$0xff] %v989
          %v991 = vld [vmem:[%s869 + $0x1e0] sm:$0xff]
          %992 = vst [vmem:[%s870 + $0x1e0] sm:$0xff] %v991
          %v993 = vld [vmem:[%s869 + $0x1e8] sm:$0xff]
          %994 = vst [vmem:[%s870 + $0x1e8] sm:$0xff] %v993
          %v995 = vld [vmem:[%s869 + $0x1f0] sm:$0xff]
          %996 = vst [vmem:[%s870 + $0x1f0] sm:$0xff] %v995
          %v997 = vld [vmem:[%s869 + $0x1f8] sm:$0xff]
          %998 = vst [vmem:[%s870 + $0x1f8] sm:$0xff] %v997
          %v999 = vld [vmem:[%s869 + $0x200] sm:$0xff]
          %1000 = vst [vmem:[%s870 + $0x200] sm:$0xff] %v999
          %v1001 = vld [vmem:[%s869 + $0x208] sm:$0xff]
          %1002 = vst [vmem:[%s870 + $0x208] sm:$0xff] %v1001
          %v1003 = vld [vmem:[%s869 + $0x210] sm:$0xff]
          %1004 = vst [vmem:[%s870 + $0x210] sm:$0xff] %v1003
          %v1005 = vld [vmem:[%s869 + $0x218] sm:$0xff]
          %1006 = vst [vmem:[%s870 + $0x218] sm:$0xff] %v1005
          %v1007 = vld [vmem:[%s869 + $0x220] sm:$0xff]
          %1008 = vst [vmem:[%s870 + $0x220] sm:$0xff] %v1007
          %v1009 = vld [vmem:[%s869 + $0x228] sm:$0xff]
          %1010 = vst [vmem:[%s870 + $0x228] sm:$0xff] %v1009
          %v1011 = vld [vmem:[%s869 + $0x230] sm:$0xff]
          %1012 = vst [vmem:[%s870 + $0x230] sm:$0xff] %v1011
          %v1013 = vld [vmem:[%s869 + $0x238] sm:$0xff]
          %1014 = vst [vmem:[%s870 + $0x238] sm:$0xff] %v1013
          %v1015 = vld [vmem:[%s869 + $0x240] sm:$0xff]
          %1016 = vst [vmem:[%s870 + $0x240] sm:$0xff] %v1015
          %v1017 = vld [vmem:[%s869 + $0x248] sm:$0xff]
          %1018 = vst [vmem:[%s870 + $0x248] sm:$0xff] %v1017
          %v1019 = vld [vmem:[%s869 + $0x250] sm:$0xff]
          %1020 = vst [vmem:[%s870 + $0x250] sm:$0xff] %v1019
          %v1021 = vld [vmem:[%s869 + $0x258] sm:$0xff]
          %1022 = vst [vmem:[%s870 + $0x258] sm:$0xff] %v1021
          %v1023 = vld [vmem:[%s869 + $0x260] sm:$0xff]
          %1024 = vst [vmem:[%s870 + $0x260] sm:$0xff] %v1023
          %v1025 = vld [vmem:[%s869 + $0x268] sm:$0xff]
          %1026 = vst [vmem:[%s870 + $0x268] sm:$0xff] %v1025
          %v1027 = vld [vmem:[%s869 + $0x270] sm:$0xff]
          %1028 = vst [vmem:[%s870 + $0x270] sm:$0xff] %v1027
          %v1029 = vld [vmem:[%s869 + $0x278] sm:$0xff]
          %1030 = vst [vmem:[%s870 + $0x278] sm:$0xff] %v1029
          %v1031 = vld [vmem:[%s869 + $0x280] sm:$0xff]
          %1032 = vst [vmem:[%s870 + $0x280] sm:$0xff] %v1031
          %v1033 = vld [vmem:[%s869 + $0x288] sm:$0xff]
          %1034 = vst [vmem:[%s870 + $0x288] sm:$0xff] %v1033
          %v1035 = vld [vmem:[%s869 + $0x290] sm:$0xff]
          %1036 = vst [vmem:[%s870 + $0x290] sm:$0xff] %v1035
          %v1037 = vld [vmem:[%s869 + $0x298] sm:$0xff]
          %1038 = vst [vmem:[%s870 + $0x298] sm:$0xff] %v1037
          %v1039 = vld [vmem:[%s869 + $0x2a0] sm:$0xff]
          %1040 = vst [vmem:[%s870 + $0x2a0] sm:$0xff] %v1039
          %v1041 = vld [vmem:[%s869 + $0x2a8] sm:$0xff]
          %1042 = vst [vmem:[%s870 + $0x2a8] sm:$0xff] %v1041
          %v1043 = vld [vmem:[%s869 + $0x2b0] sm:$0xff]
          %1044 = vst [vmem:[%s870 + $0x2b0] sm:$0xff] %v1043
          %v1045 = vld [vmem:[%s869 + $0x2b8] sm:$0xff]
          %1046 = vst [vmem:[%s870 + $0x2b8] sm:$0xff] %v1045
          %v1047 = vld [vmem:[%s869 + $0x2c0] sm:$0xff]
          %1048 = vst [vmem:[%s870 + $0x2c0] sm:$0xff] %v1047
          %v1049 = vld [vmem:[%s869 + $0x2c8] sm:$0xff]
          %1050 = vst [vmem:[%s870 + $0x2c8] sm:$0xff] %v1049
          %v1051 = vld [vmem:[%s869 + $0x2d0] sm:$0xff]
          %1052 = vst [vmem:[%s870 + $0x2d0] sm:$0xff] %v1051
          %v1053 = vld [vmem:[%s869 + $0x2d8] sm:$0xff]
          %1054 = vst [vmem:[%s870 + $0x2d8] sm:$0xff] %v1053
          %v1055 = vld [vmem:[%s869 + $0x2e0] sm:$0xff]
          %1056 = vst [vmem:[%s870 + $0x2e0] sm:$0xff] %v1055
          %v1057 = vld [vmem:[%s869 + $0x2e8] sm:$0xff]
          %1058 = vst [vmem:[%s870 + $0x2e8] sm:$0xff] %v1057
          %v1059 = vld [vmem:[%s869 + $0x2f0] sm:$0xff]
          %1060 = vst [vmem:[%s870 + $0x2f0] sm:$0xff] %v1059
          %v1061 = vld [vmem:[%s869 + $0x2f8] sm:$0xff]
          %1062 = vst [vmem:[%s870 + $0x2f8] sm:$0xff] %v1061
          %v1063 = vld [vmem:[%s869 + $0x300] sm:$0xff]
          %1064 = vst [vmem:[%s870 + $0x300] sm:$0xff] %v1063
          %v1065 = vld [vmem:[%s869 + $0x308] sm:$0xff]
          %1066 = vst [vmem:[%s870 + $0x308] sm:$0xff] %v1065
          %v1067 = vld [vmem:[%s869 + $0x310] sm:$0xff]
          %1068 = vst [vmem:[%s870 + $0x310] sm:$0xff] %v1067
          %v1069 = vld [vmem:[%s869 + $0x318] sm:$0xff]
          %1070 = vst [vmem:[%s870 + $0x318] sm:$0xff] %v1069
          %v1071 = vld [vmem:[%s869 + $0x320] sm:$0xff]
          %1072 = vst [vmem:[%s870 + $0x320] sm:$0xff] %v1071
          %v1073 = vld [vmem:[%s869 + $0x328] sm:$0xff]
          %1074 = vst [vmem:[%s870 + $0x328] sm:$0xff] %v1073
          %v1075 = vld [vmem:[%s869 + $0x330] sm:$0xff]
          %1076 = vst [vmem:[%s870 + $0x330] sm:$0xff] %v1075
          %v1077 = vld [vmem:[%s869 + $0x338] sm:$0xff]
          %1078 = vst [vmem:[%s870 + $0x338] sm:$0xff] %v1077
          %v1079 = vld [vmem:[%s869 + $0x340] sm:$0xff]
          %1080 = vst [vmem:[%s870 + $0x340] sm:$0xff] %v1079
          %v1081 = vld [vmem:[%s869 + $0x348] sm:$0xff]
          %1082 = vst [vmem:[%s870 + $0x348] sm:$0xff] %v1081
          %v1083 = vld [vmem:[%s869 + $0x350] sm:$0xff]
          %1084 = vst [vmem:[%s870 + $0x350] sm:$0xff] %v1083
          %v1085 = vld [vmem:[%s869 + $0x358] sm:$0xff]
          %1086 = vst [vmem:[%s870 + $0x358] sm:$0xff] %v1085
          %v1087 = vld [vmem:[%s869 + $0x360] sm:$0xff]
          %1088 = vst [vmem:[%s870 + $0x360] sm:$0xff] %v1087
          %v1089 = vld [vmem:[%s869 + $0x368] sm:$0xff]
          %1090 = vst [vmem:[%s870 + $0x368] sm:$0xff] %v1089
          %v1091 = vld [vmem:[%s869 + $0x370] sm:$0xff]
          %1092 = vst [vmem:[%s870 + $0x370] sm:$0xff] %v1091
          %v1093 = vld [vmem:[%s869 + $0x378] sm:$0xff]
          %1094 = vst [vmem:[%s870 + $0x378] sm:$0xff] %v1093
          %v1095 = vld [vmem:[%s869 + $0x380] sm:$0xff]
          %1096 = vst [vmem:[%s870 + $0x380] sm:$0xff] %v1095
          %v1097 = vld [vmem:[%s869 + $0x388] sm:$0xff]
          %1098 = vst [vmem:[%s870 + $0x388] sm:$0xff] %v1097
          %v1099 = vld [vmem:[%s869 + $0x390] sm:$0xff]
          %1100 = vst [vmem:[%s870 + $0x390] sm:$0xff] %v1099
          %v1101 = vld [vmem:[%s869 + $0x398] sm:$0xff]
          %1102 = vst [vmem:[%s870 + $0x398] sm:$0xff] %v1101
          %v1103 = vld [vmem:[%s869 + $0x3a0] sm:$0xff]
          %1104 = vst [vmem:[%s870 + $0x3a0] sm:$0xff] %v1103
          %v1105 = vld [vmem:[%s869 + $0x3a8] sm:$0xff]
          %1106 = vst [vmem:[%s870 + $0x3a8] sm:$0xff] %v1105
          %v1107 = vld [vmem:[%s869 + $0x3b0] sm:$0xff]
          %1108 = vst [vmem:[%s870 + $0x3b0] sm:$0xff] %v1107
          %v1109 = vld [vmem:[%s869 + $0x3b8] sm:$0xff]
          %1110 = vst [vmem:[%s870 + $0x3b8] sm:$0xff] %v1109
          %v1111 = vld [vmem:[%s869 + $0x3c0] sm:$0xff]
          %1112 = vst [vmem:[%s870 + $0x3c0] sm:$0xff] %v1111
          %v1113 = vld [vmem:[%s869 + $0x3c8] sm:$0xff]
          %1114 = vst [vmem:[%s870 + $0x3c8] sm:$0xff] %v1113
          %v1115 = vld [vmem:[%s869 + $0x3d0] sm:$0xff]
          %1116 = vst [vmem:[%s870 + $0x3d0] sm:$0xff] %v1115
          %v1117 = vld [vmem:[%s869 + $0x3d8] sm:$0xff]
          %1118 = vst [vmem:[%s870 + $0x3d8] sm:$0xff] %v1117
          %v1119 = vld [vmem:[%s869 + $0x3e0] sm:$0xff]
          %1120 = vst [vmem:[%s870 + $0x3e0] sm:$0xff] %v1119
          %v1121 = vld [vmem:[%s869 + $0x3e8] sm:$0xff]
          %1122 = vst [vmem:[%s870 + $0x3e8] sm:$0xff] %v1121
          %v1123 = vld [vmem:[%s869 + $0x3f0] sm:$0xff]
          %1124 = vst [vmem:[%s870 + $0x3f0] sm:$0xff] %v1123
          %v1125 = vld [vmem:[%s869 + $0x3f8] sm:$0xff]
          %1126 = vst [vmem:[%s870 + $0x3f8] sm:$0xff] %v1125
        $region103: #{tpu_custom_call.1} parent=97 // loop_footer
          %s868 = sadd.s32 1, %s864
        $region104: #{tpu_custom_call.1} parent=97 // loop_footer_branch
          %863 = sbr.rel target = $region100
        $region105: #{tpu_custom_call.1} parent=97 // loop_exit
          _
      $region98: #{tpu_custom_call.1} parent=82 // pred_fallthru
        _
      %p1127 = pneg %p859
      // Predicated region
      $region106: #{tpu_custom_call.1} parent=82 // pred_check
        _
      $region107: #{tpu_custom_call.1} parent=82 // pred_check_branch
        %1129 = sbr.rel (%p859) target = $region109
      $region108: #{tpu_custom_call.1} parent=82 // pred_region
        %s1130 = sand.u32 1024, 7
      $region109: #{tpu_custom_call.1} parent=82 // pred_fallthru
        _
    $region83: #{tpu_custom_call.1} parent=1 // pred_fallthru
      _
    // Predicated region
    $region84: #{tpu_custom_call.1} parent=1 // pred_check
      %p843 = pneg %p839
    $region85: #{tpu_custom_call.1} parent=1 // pred_check_branch
      %845 = sbr.rel (%p843) target = $region87
    $region86: #{tpu_custom_call.1} parent=1 // pred_region
      %s846 = sshll.u32 1, 1024
      %s847 = ssub.s32 %s846, 1
      loop: start=0, step=1, limit=1
      $region88: #{tpu_custom_call.1} parent=86 // loop_pre_header
        _
      $region89: #{tpu_custom_call.1} parent=86 // loop_header
        %s849 = sphi 0, %s853
        %p850 = scmp.ge.s32.totalorder %s849, 1
        %s854 = sphi %s5, %s5
        %s855 = sphi [#allocation3], [#allocation3]
      $region90: #{tpu_custom_call.1} parent=86 // loop_header_branch
        %852 = sbr.rel (%p850) target = $region94
      $region91: #{tpu_custom_call.1} parent=86 // loop_body
        %v856 = vld [vmem:[%s854] sm:%s847]
        %857 = vst [vmem:[%s855] sm:%s847] %v856
      $region92: #{tpu_custom_call.1} parent=86 // loop_footer
        %s853 = sadd.s32 1, %s849
      $region93: #{tpu_custom_call.1} parent=86 // loop_footer_branch
        %848 = sbr.rel target = $region89
      $region94: #{tpu_custom_call.1} parent=86 // loop_exit
        _
    $region87: #{tpu_custom_call.1} parent=1 // pred_fallthru
      _
    // Predicated region
    $region110: #{tpu_custom_call.1} parent=1 // pred_check
      _
    $region111: #{tpu_custom_call.1} parent=1 // pred_check_branch
      %1133 = sbr.rel (0) target = $region113
    $region112: #{tpu_custom_call.1} parent=1 // pred_region
      %1134 = vsyncadd %s837, 16384
    $region113: #{tpu_custom_call.1} parent=1 // pred_fallthru
      _
    %s1135 = scalar_lea.sflag [#allocation6], 2
    %p1137 = scmp.lt.u32.totalorder 1024, 8
    %p1138 = pneg %p1137
    // Predicated region
    $region114: #{tpu_custom_call.1} parent=1 // pred_check
      _
    $region115: #{tpu_custom_call.1} parent=1 // pred_check_branch
      %1140 = sbr.rel (%p1137) target = $region117
    $region116: #{tpu_custom_call.1} parent=1 // pred_region
      %s1156 = sand.u32 1024, 7
      %p1157 = scmp.eq.s32.totalorder %s1156, 0
      // Predicated region
      $region129: #{tpu_custom_call.1} parent=116 // pred_check
        %p1158 = pneg %p1157
      $region130: #{tpu_custom_call.1} parent=116 // pred_check_branch
        %1160 = sbr.rel (%p1158) target = $region132
      $region131: #{tpu_custom_call.1} parent=116 // pred_region
        loop: start=0, step=1, limit=1
        $region133: #{tpu_custom_call.1} parent=131 // loop_pre_header
          _
        $region134: #{tpu_custom_call.1} parent=131 // loop_header
          %s1162 = sphi 0, %s1166
          %p1163 = scmp.ge.s32.totalorder %s1162, 1
          %s1167 = sphi %s7, %s7
          %s1168 = sphi [#allocation4], [#allocation4]
        $region135: #{tpu_custom_call.1} parent=131 // loop_header_branch
          %1165 = sbr.rel (%p1163) target = $region139
        $region136: #{tpu_custom_call.1} parent=131 // loop_body
          %v1169 = vld [vmem:[%s1167] sm:$0xff]
          %1170 = vst [vmem:[%s1168] sm:$0xff] %v1169
          %v1171 = vld [vmem:[%s1167 + $0x8] sm:$0xff]
          %1172 = vst [vmem:[%s1168 + $0x8] sm:$0xff] %v1171
          %v1173 = vld [vmem:[%s1167 + $0x10] sm:$0xff]
          %1174 = vst [vmem:[%s1168 + $0x10] sm:$0xff] %v1173
          %v1175 = vld [vmem:[%s1167 + $0x18] sm:$0xff]
          %1176 = vst [vmem:[%s1168 + $0x18] sm:$0xff] %v1175
          %v1177 = vld [vmem:[%s1167 + $0x20] sm:$0xff]
          %1178 = vst [vmem:[%s1168 + $0x20] sm:$0xff] %v1177
          %v1179 = vld [vmem:[%s1167 + $0x28] sm:$0xff]
          %1180 = vst [vmem:[%s1168 + $0x28] sm:$0xff] %v1179
          %v1181 = vld [vmem:[%s1167 + $0x30] sm:$0xff]
          %1182 = vst [vmem:[%s1168 + $0x30] sm:$0xff] %v1181
          %v1183 = vld [vmem:[%s1167 + $0x38] sm:$0xff]
          %1184 = vst [vmem:[%s1168 + $0x38] sm:$0xff] %v1183
          %v1185 = vld [vmem:[%s1167 + $0x40] sm:$0xff]
          %1186 = vst [vmem:[%s1168 + $0x40] sm:$0xff] %v1185
          %v1187 = vld [vmem:[%s1167 + $0x48] sm:$0xff]
          %1188 = vst [vmem:[%s1168 + $0x48] sm:$0xff] %v1187
          %v1189 = vld [vmem:[%s1167 + $0x50] sm:$0xff]
          %1190 = vst [vmem:[%s1168 + $0x50] sm:$0xff] %v1189
          %v1191 = vld [vmem:[%s1167 + $0x58] sm:$0xff]
          %1192 = vst [vmem:[%s1168 + $0x58] sm:$0xff] %v1191
          %v1193 = vld [vmem:[%s1167 + $0x60] sm:$0xff]
          %1194 = vst [vmem:[%s1168 + $0x60] sm:$0xff] %v1193
          %v1195 = vld [vmem:[%s1167 + $0x68] sm:$0xff]
          %1196 = vst [vmem:[%s1168 + $0x68] sm:$0xff] %v1195
          %v1197 = vld [vmem:[%s1167 + $0x70] sm:$0xff]
          %1198 = vst [vmem:[%s1168 + $0x70] sm:$0xff] %v1197
          %v1199 = vld [vmem:[%s1167 + $0x78] sm:$0xff]
          %1200 = vst [vmem:[%s1168 + $0x78] sm:$0xff] %v1199
          %v1201 = vld [vmem:[%s1167 + $0x80] sm:$0xff]
          %1202 = vst [vmem:[%s1168 + $0x80] sm:$0xff] %v1201
          %v1203 = vld [vmem:[%s1167 + $0x88] sm:$0xff]
          %1204 = vst [vmem:[%s1168 + $0x88] sm:$0xff] %v1203
          %v1205 = vld [vmem:[%s1167 + $0x90] sm:$0xff]
          %1206 = vst [vmem:[%s1168 + $0x90] sm:$0xff] %v1205
          %v1207 = vld [vmem:[%s1167 + $0x98] sm:$0xff]
          %1208 = vst [vmem:[%s1168 + $0x98] sm:$0xff] %v1207
          %v1209 = vld [vmem:[%s1167 + $0xa0] sm:$0xff]
          %1210 = vst [vmem:[%s1168 + $0xa0] sm:$0xff] %v1209
          %v1211 = vld [vmem:[%s1167 + $0xa8] sm:$0xff]
          %1212 = vst [vmem:[%s1168 + $0xa8] sm:$0xff] %v1211
          %v1213 = vld [vmem:[%s1167 + $0xb0] sm:$0xff]
          %1214 = vst [vmem:[%s1168 + $0xb0] sm:$0xff] %v1213
          %v1215 = vld [vmem:[%s1167 + $0xb8] sm:$0xff]
          %1216 = vst [vmem:[%s1168 + $0xb8] sm:$0xff] %v1215
          %v1217 = vld [vmem:[%s1167 + $0xc0] sm:$0xff]
          %1218 = vst [vmem:[%s1168 + $0xc0] sm:$0xff] %v1217
          %v1219 = vld [vmem:[%s1167 + $0xc8] sm:$0xff]
          %1220 = vst [vmem:[%s1168 + $0xc8] sm:$0xff] %v1219
          %v1221 = vld [vmem:[%s1167 + $0xd0] sm:$0xff]
          %1222 = vst [vmem:[%s1168 + $0xd0] sm:$0xff] %v1221
          %v1223 = vld [vmem:[%s1167 + $0xd8] sm:$0xff]
          %1224 = vst [vmem:[%s1168 + $0xd8] sm:$0xff] %v1223
          %v1225 = vld [vmem:[%s1167 + $0xe0] sm:$0xff]
          %1226 = vst [vmem:[%s1168 + $0xe0] sm:$0xff] %v1225
          %v1227 = vld [vmem:[%s1167 + $0xe8] sm:$0xff]
          %1228 = vst [vmem:[%s1168 + $0xe8] sm:$0xff] %v1227
          %v1229 = vld [vmem:[%s1167 + $0xf0] sm:$0xff]
          %1230 = vst [vmem:[%s1168 + $0xf0] sm:$0xff] %v1229
          %v1231 = vld [vmem:[%s1167 + $0xf8] sm:$0xff]
          %1232 = vst [vmem:[%s1168 + $0xf8] sm:$0xff] %v1231
          %v1233 = vld [vmem:[%s1167 + $0x100] sm:$0xff]
          %1234 = vst [vmem:[%s1168 + $0x100] sm:$0xff] %v1233
          %v1235 = vld [vmem:[%s1167 + $0x108] sm:$0xff]
          %1236 = vst [vmem:[%s1168 + $0x108] sm:$0xff] %v1235
          %v1237 = vld [vmem:[%s1167 + $0x110] sm:$0xff]
          %1238 = vst [vmem:[%s1168 + $0x110] sm:$0xff] %v1237
          %v1239 = vld [vmem:[%s1167 + $0x118] sm:$0xff]
          %1240 = vst [vmem:[%s1168 + $0x118] sm:$0xff] %v1239
          %v1241 = vld [vmem:[%s1167 + $0x120] sm:$0xff]
          %1242 = vst [vmem:[%s1168 + $0x120] sm:$0xff] %v1241
          %v1243 = vld [vmem:[%s1167 + $0x128] sm:$0xff]
          %1244 = vst [vmem:[%s1168 + $0x128] sm:$0xff] %v1243
          %v1245 = vld [vmem:[%s1167 + $0x130] sm:$0xff]
          %1246 = vst [vmem:[%s1168 + $0x130] sm:$0xff] %v1245
          %v1247 = vld [vmem:[%s1167 + $0x138] sm:$0xff]
          %1248 = vst [vmem:[%s1168 + $0x138] sm:$0xff] %v1247
          %v1249 = vld [vmem:[%s1167 + $0x140] sm:$0xff]
          %1250 = vst [vmem:[%s1168 + $0x140] sm:$0xff] %v1249
          %v1251 = vld [vmem:[%s1167 + $0x148] sm:$0xff]
          %1252 = vst [vmem:[%s1168 + $0x148] sm:$0xff] %v1251
          %v1253 = vld [vmem:[%s1167 + $0x150] sm:$0xff]
          %1254 = vst [vmem:[%s1168 + $0x150] sm:$0xff] %v1253
          %v1255 = vld [vmem:[%s1167 + $0x158] sm:$0xff]
          %1256 = vst [vmem:[%s1168 + $0x158] sm:$0xff] %v1255
          %v1257 = vld [vmem:[%s1167 + $0x160] sm:$0xff]
          %1258 = vst [vmem:[%s1168 + $0x160] sm:$0xff] %v1257
          %v1259 = vld [vmem:[%s1167 + $0x168] sm:$0xff]
          %1260 = vst [vmem:[%s1168 + $0x168] sm:$0xff] %v1259
          %v1261 = vld [vmem:[%s1167 + $0x170] sm:$0xff]
          %1262 = vst [vmem:[%s1168 + $0x170] sm:$0xff] %v1261
          %v1263 = vld [vmem:[%s1167 + $0x178] sm:$0xff]
          %1264 = vst [vmem:[%s1168 + $0x178] sm:$0xff] %v1263
          %v1265 = vld [vmem:[%s1167 + $0x180] sm:$0xff]
          %1266 = vst [vmem:[%s1168 + $0x180] sm:$0xff] %v1265
          %v1267 = vld [vmem:[%s1167 + $0x188] sm:$0xff]
          %1268 = vst [vmem:[%s1168 + $0x188] sm:$0xff] %v1267
          %v1269 = vld [vmem:[%s1167 + $0x190] sm:$0xff]
          %1270 = vst [vmem:[%s1168 + $0x190] sm:$0xff] %v1269
          %v1271 = vld [vmem:[%s1167 + $0x198] sm:$0xff]
          %1272 = vst [vmem:[%s1168 + $0x198] sm:$0xff] %v1271
          %v1273 = vld [vmem:[%s1167 + $0x1a0] sm:$0xff]
          %1274 = vst [vmem:[%s1168 + $0x1a0] sm:$0xff] %v1273
          %v1275 = vld [vmem:[%s1167 + $0x1a8] sm:$0xff]
          %1276 = vst [vmem:[%s1168 + $0x1a8] sm:$0xff] %v1275
          %v1277 = vld [vmem:[%s1167 + $0x1b0] sm:$0xff]
          %1278 = vst [vmem:[%s1168 + $0x1b0] sm:$0xff] %v1277
          %v1279 = vld [vmem:[%s1167 + $0x1b8] sm:$0xff]
          %1280 = vst [vmem:[%s1168 + $0x1b8] sm:$0xff] %v1279
          %v1281 = vld [vmem:[%s1167 + $0x1c0] sm:$0xff]
          %1282 = vst [vmem:[%s1168 + $0x1c0] sm:$0xff] %v1281
          %v1283 = vld [vmem:[%s1167 + $0x1c8] sm:$0xff]
          %1284 = vst [vmem:[%s1168 + $0x1c8] sm:$0xff] %v1283
          %v1285 = vld [vmem:[%s1167 + $0x1d0] sm:$0xff]
          %1286 = vst [vmem:[%s1168 + $0x1d0] sm:$0xff] %v1285
          %v1287 = vld [vmem:[%s1167 + $0x1d8] sm:$0xff]
          %1288 = vst [vmem:[%s1168 + $0x1d8] sm:$0xff] %v1287
          %v1289 = vld [vmem:[%s1167 + $0x1e0] sm:$0xff]
          %1290 = vst [vmem:[%s1168 + $0x1e0] sm:$0xff] %v1289
          %v1291 = vld [vmem:[%s1167 + $0x1e8] sm:$0xff]
          %1292 = vst [vmem:[%s1168 + $0x1e8] sm:$0xff] %v1291
          %v1293 = vld [vmem:[%s1167 + $0x1f0] sm:$0xff]
          %1294 = vst [vmem:[%s1168 + $0x1f0] sm:$0xff] %v1293
          %v1295 = vld [vmem:[%s1167 + $0x1f8] sm:$0xff]
          %1296 = vst [vmem:[%s1168 + $0x1f8] sm:$0xff] %v1295
          %v1297 = vld [vmem:[%s1167 + $0x200] sm:$0xff]
          %1298 = vst [vmem:[%s1168 + $0x200] sm:$0xff] %v1297
          %v1299 = vld [vmem:[%s1167 + $0x208] sm:$0xff]
          %1300 = vst [vmem:[%s1168 + $0x208] sm:$0xff] %v1299
          %v1301 = vld [vmem:[%s1167 + $0x210] sm:$0xff]
          %1302 = vst [vmem:[%s1168 + $0x210] sm:$0xff] %v1301
          %v1303 = vld [vmem:[%s1167 + $0x218] sm:$0xff]
          %1304 = vst [vmem:[%s1168 + $0x218] sm:$0xff] %v1303
          %v1305 = vld [vmem:[%s1167 + $0x220] sm:$0xff]
          %1306 = vst [vmem:[%s1168 + $0x220] sm:$0xff] %v1305
          %v1307 = vld [vmem:[%s1167 + $0x228] sm:$0xff]
          %1308 = vst [vmem:[%s1168 + $0x228] sm:$0xff] %v1307
          %v1309 = vld [vmem:[%s1167 + $0x230] sm:$0xff]
          %1310 = vst [vmem:[%s1168 + $0x230] sm:$0xff] %v1309
          %v1311 = vld [vmem:[%s1167 + $0x238] sm:$0xff]
          %1312 = vst [vmem:[%s1168 + $0x238] sm:$0xff] %v1311
          %v1313 = vld [vmem:[%s1167 + $0x240] sm:$0xff]
          %1314 = vst [vmem:[%s1168 + $0x240] sm:$0xff] %v1313
          %v1315 = vld [vmem:[%s1167 + $0x248] sm:$0xff]
          %1316 = vst [vmem:[%s1168 + $0x248] sm:$0xff] %v1315
          %v1317 = vld [vmem:[%s1167 + $0x250] sm:$0xff]
          %1318 = vst [vmem:[%s1168 + $0x250] sm:$0xff] %v1317
          %v1319 = vld [vmem:[%s1167 + $0x258] sm:$0xff]
          %1320 = vst [vmem:[%s1168 + $0x258] sm:$0xff] %v1319
          %v1321 = vld [vmem:[%s1167 + $0x260] sm:$0xff]
          %1322 = vst [vmem:[%s1168 + $0x260] sm:$0xff] %v1321
          %v1323 = vld [vmem:[%s1167 + $0x268] sm:$0xff]
          %1324 = vst [vmem:[%s1168 + $0x268] sm:$0xff] %v1323
          %v1325 = vld [vmem:[%s1167 + $0x270] sm:$0xff]
          %1326 = vst [vmem:[%s1168 + $0x270] sm:$0xff] %v1325
          %v1327 = vld [vmem:[%s1167 + $0x278] sm:$0xff]
          %1328 = vst [vmem:[%s1168 + $0x278] sm:$0xff] %v1327
          %v1329 = vld [vmem:[%s1167 + $0x280] sm:$0xff]
          %1330 = vst [vmem:[%s1168 + $0x280] sm:$0xff] %v1329
          %v1331 = vld [vmem:[%s1167 + $0x288] sm:$0xff]
          %1332 = vst [vmem:[%s1168 + $0x288] sm:$0xff] %v1331
          %v1333 = vld [vmem:[%s1167 + $0x290] sm:$0xff]
          %1334 = vst [vmem:[%s1168 + $0x290] sm:$0xff] %v1333
          %v1335 = vld [vmem:[%s1167 + $0x298] sm:$0xff]
          %1336 = vst [vmem:[%s1168 + $0x298] sm:$0xff] %v1335
          %v1337 = vld [vmem:[%s1167 + $0x2a0] sm:$0xff]
          %1338 = vst [vmem:[%s1168 + $0x2a0] sm:$0xff] %v1337
          %v1339 = vld [vmem:[%s1167 + $0x2a8] sm:$0xff]
          %1340 = vst [vmem:[%s1168 + $0x2a8] sm:$0xff] %v1339
          %v1341 = vld [vmem:[%s1167 + $0x2b0] sm:$0xff]
          %1342 = vst [vmem:[%s1168 + $0x2b0] sm:$0xff] %v1341
          %v1343 = vld [vmem:[%s1167 + $0x2b8] sm:$0xff]
          %1344 = vst [vmem:[%s1168 + $0x2b8] sm:$0xff] %v1343
          %v1345 = vld [vmem:[%s1167 + $0x2c0] sm:$0xff]
          %1346 = vst [vmem:[%s1168 + $0x2c0] sm:$0xff] %v1345
          %v1347 = vld [vmem:[%s1167 + $0x2c8] sm:$0xff]
          %1348 = vst [vmem:[%s1168 + $0x2c8] sm:$0xff] %v1347
          %v1349 = vld [vmem:[%s1167 + $0x2d0] sm:$0xff]
          %1350 = vst [vmem:[%s1168 + $0x2d0] sm:$0xff] %v1349
          %v1351 = vld [vmem:[%s1167 + $0x2d8] sm:$0xff]
          %1352 = vst [vmem:[%s1168 + $0x2d8] sm:$0xff] %v1351
          %v1353 = vld [vmem:[%s1167 + $0x2e0] sm:$0xff]
          %1354 = vst [vmem:[%s1168 + $0x2e0] sm:$0xff] %v1353
          %v1355 = vld [vmem:[%s1167 + $0x2e8] sm:$0xff]
          %1356 = vst [vmem:[%s1168 + $0x2e8] sm:$0xff] %v1355
          %v1357 = vld [vmem:[%s1167 + $0x2f0] sm:$0xff]
          %1358 = vst [vmem:[%s1168 + $0x2f0] sm:$0xff] %v1357
          %v1359 = vld [vmem:[%s1167 + $0x2f8] sm:$0xff]
          %1360 = vst [vmem:[%s1168 + $0x2f8] sm:$0xff] %v1359
          %v1361 = vld [vmem:[%s1167 + $0x300] sm:$0xff]
          %1362 = vst [vmem:[%s1168 + $0x300] sm:$0xff] %v1361
          %v1363 = vld [vmem:[%s1167 + $0x308] sm:$0xff]
          %1364 = vst [vmem:[%s1168 + $0x308] sm:$0xff] %v1363
          %v1365 = vld [vmem:[%s1167 + $0x310] sm:$0xff]
          %1366 = vst [vmem:[%s1168 + $0x310] sm:$0xff] %v1365
          %v1367 = vld [vmem:[%s1167 + $0x318] sm:$0xff]
          %1368 = vst [vmem:[%s1168 + $0x318] sm:$0xff] %v1367
          %v1369 = vld [vmem:[%s1167 + $0x320] sm:$0xff]
          %1370 = vst [vmem:[%s1168 + $0x320] sm:$0xff] %v1369
          %v1371 = vld [vmem:[%s1167 + $0x328] sm:$0xff]
          %1372 = vst [vmem:[%s1168 + $0x328] sm:$0xff] %v1371
          %v1373 = vld [vmem:[%s1167 + $0x330] sm:$0xff]
          %1374 = vst [vmem:[%s1168 + $0x330] sm:$0xff] %v1373
          %v1375 = vld [vmem:[%s1167 + $0x338] sm:$0xff]
          %1376 = vst [vmem:[%s1168 + $0x338] sm:$0xff] %v1375
          %v1377 = vld [vmem:[%s1167 + $0x340] sm:$0xff]
          %1378 = vst [vmem:[%s1168 + $0x340] sm:$0xff] %v1377
          %v1379 = vld [vmem:[%s1167 + $0x348] sm:$0xff]
          %1380 = vst [vmem:[%s1168 + $0x348] sm:$0xff] %v1379
          %v1381 = vld [vmem:[%s1167 + $0x350] sm:$0xff]
          %1382 = vst [vmem:[%s1168 + $0x350] sm:$0xff] %v1381
          %v1383 = vld [vmem:[%s1167 + $0x358] sm:$0xff]
          %1384 = vst [vmem:[%s1168 + $0x358] sm:$0xff] %v1383
          %v1385 = vld [vmem:[%s1167 + $0x360] sm:$0xff]
          %1386 = vst [vmem:[%s1168 + $0x360] sm:$0xff] %v1385
          %v1387 = vld [vmem:[%s1167 + $0x368] sm:$0xff]
          %1388 = vst [vmem:[%s1168 + $0x368] sm:$0xff] %v1387
          %v1389 = vld [vmem:[%s1167 + $0x370] sm:$0xff]
          %1390 = vst [vmem:[%s1168 + $0x370] sm:$0xff] %v1389
          %v1391 = vld [vmem:[%s1167 + $0x378] sm:$0xff]
          %1392 = vst [vmem:[%s1168 + $0x378] sm:$0xff] %v1391
          %v1393 = vld [vmem:[%s1167 + $0x380] sm:$0xff]
          %1394 = vst [vmem:[%s1168 + $0x380] sm:$0xff] %v1393
          %v1395 = vld [vmem:[%s1167 + $0x388] sm:$0xff]
          %1396 = vst [vmem:[%s1168 + $0x388] sm:$0xff] %v1395
          %v1397 = vld [vmem:[%s1167 + $0x390] sm:$0xff]
          %1398 = vst [vmem:[%s1168 + $0x390] sm:$0xff] %v1397
          %v1399 = vld [vmem:[%s1167 + $0x398] sm:$0xff]
          %1400 = vst [vmem:[%s1168 + $0x398] sm:$0xff] %v1399
          %v1401 = vld [vmem:[%s1167 + $0x3a0] sm:$0xff]
          %1402 = vst [vmem:[%s1168 + $0x3a0] sm:$0xff] %v1401
          %v1403 = vld [vmem:[%s1167 + $0x3a8] sm:$0xff]
          %1404 = vst [vmem:[%s1168 + $0x3a8] sm:$0xff] %v1403
          %v1405 = vld [vmem:[%s1167 + $0x3b0] sm:$0xff]
          %1406 = vst [vmem:[%s1168 + $0x3b0] sm:$0xff] %v1405
          %v1407 = vld [vmem:[%s1167 + $0x3b8] sm:$0xff]
          %1408 = vst [vmem:[%s1168 + $0x3b8] sm:$0xff] %v1407
          %v1409 = vld [vmem:[%s1167 + $0x3c0] sm:$0xff]
          %1410 = vst [vmem:[%s1168 + $0x3c0] sm:$0xff] %v1409
          %v1411 = vld [vmem:[%s1167 + $0x3c8] sm:$0xff]
          %1412 = vst [vmem:[%s1168 + $0x3c8] sm:$0xff] %v1411
          %v1413 = vld [vmem:[%s1167 + $0x3d0] sm:$0xff]
          %1414 = vst [vmem:[%s1168 + $0x3d0] sm:$0xff] %v1413
          %v1415 = vld [vmem:[%s1167 + $0x3d8] sm:$0xff]
          %1416 = vst [vmem:[%s1168 + $0x3d8] sm:$0xff] %v1415
          %v1417 = vld [vmem:[%s1167 + $0x3e0] sm:$0xff]
          %1418 = vst [vmem:[%s1168 + $0x3e0] sm:$0xff] %v1417
          %v1419 = vld [vmem:[%s1167 + $0x3e8] sm:$0xff]
          %1420 = vst [vmem:[%s1168 + $0x3e8] sm:$0xff] %v1419
          %v1421 = vld [vmem:[%s1167 + $0x3f0] sm:$0xff]
          %1422 = vst [vmem:[%s1168 + $0x3f0] sm:$0xff] %v1421
          %v1423 = vld [vmem:[%s1167 + $0x3f8] sm:$0xff]
          %1424 = vst [vmem:[%s1168 + $0x3f8] sm:$0xff] %v1423
        $region137: #{tpu_custom_call.1} parent=131 // loop_footer
          %s1166 = sadd.s32 1, %s1162
        $region138: #{tpu_custom_call.1} parent=131 // loop_footer_branch
          %1161 = sbr.rel target = $region134
        $region139: #{tpu_custom_call.1} parent=131 // loop_exit
          _
      $region132: #{tpu_custom_call.1} parent=116 // pred_fallthru
        _
      %p1425 = pneg %p1157
      // Predicated region
      $region140: #{tpu_custom_call.1} parent=116 // pred_check
        _
      $region141: #{tpu_custom_call.1} parent=116 // pred_check_branch
        %1427 = sbr.rel (%p1157) target = $region143
      $region142: #{tpu_custom_call.1} parent=116 // pred_region
        %s1428 = sand.u32 1024, 7
      $region143: #{tpu_custom_call.1} parent=116 // pred_fallthru
        _
    $region117: #{tpu_custom_call.1} parent=1 // pred_fallthru
      _
    // Predicated region
    $region118: #{tpu_custom_call.1} parent=1 // pred_check
      %p1141 = pneg %p1137
    $region119: #{tpu_custom_call.1} parent=1 // pred_check_branch
      %1143 = sbr.rel (%p1141) target = $region121
    $region120: #{tpu_custom_call.1} parent=1 // pred_region
      %s1144 = sshll.u32 1, 1024
      %s1145 = ssub.s32 %s1144, 1
      loop: start=0, step=1, limit=1
      $region122: #{tpu_custom_call.1} parent=120 // loop_pre_header
        _
      $region123: #{tpu_custom_call.1} parent=120 // loop_header
        %s1147 = sphi 0, %s1151
        %p1148 = scmp.ge.s32.totalorder %s1147, 1
        %s1152 = sphi %s7, %s7
        %s1153 = sphi [#allocation4], [#allocation4]
      $region124: #{tpu_custom_call.1} parent=120 // loop_header_branch
        %1150 = sbr.rel (%p1148) target = $region128
      $region125: #{tpu_custom_call.1} parent=120 // loop_body
        %v1154 = vld [vmem:[%s1152] sm:%s1145]
        %1155 = vst [vmem:[%s1153] sm:%s1145] %v1154
      $region126: #{tpu_custom_call.1} parent=120 // loop_footer
        %s1151 = sadd.s32 1, %s1147
      $region127: #{tpu_custom_call.1} parent=120 // loop_footer_branch
        %1146 = sbr.rel target = $region123
      $region128: #{tpu_custom_call.1} parent=120 // loop_exit
        _
    $region121: #{tpu_custom_call.1} parent=1 // pred_fallthru
      _
    // Predicated region
    $region144: #{tpu_custom_call.1} parent=1 // pred_check
      _
    $region145: #{tpu_custom_call.1} parent=1 // pred_check_branch
      %1431 = sbr.rel (0) target = $region147
    $region146: #{tpu_custom_call.1} parent=1 // pred_region
      %1432 = vsyncadd %s1135, 16384
    $region147: #{tpu_custom_call.1} parent=1 // pred_fallthru
      _
    %s1433 = scalar_lea.sflag [#allocation6], 3
    %p1435 = scmp.lt.u32.totalorder 1024, 8
    %p1436 = pneg %p1435
    // Predicated region
    $region148: #{tpu_custom_call.1} parent=1 // pred_check
      _
    $region149: #{tpu_custom_call.1} parent=1 // pred_check_branch
      %1438 = sbr.rel (%p1435) target = $region151
    $region150: #{tpu_custom_call.1} parent=1 // pred_region
      %s1454 = sand.u32 1024, 7
      %p1455 = scmp.eq.s32.totalorder %s1454, 0
      // Predicated region
      $region163: #{tpu_custom_call.1} parent=150 // pred_check
        %p1456 = pneg %p1455
      $region164: #{tpu_custom_call.1} parent=150 // pred_check_branch
        %1458 = sbr.rel (%p1456) target = $region166
      $region165: #{tpu_custom_call.1} parent=150 // pred_region
        loop: start=0, step=1, limit=1
        $region167: #{tpu_custom_call.1} parent=165 // loop_pre_header
          _
        $region168: #{tpu_custom_call.1} parent=165 // loop_header
          %s1460 = sphi 0, %s1464
          %p1461 = scmp.ge.s32.totalorder %s1460, 1
          %s1465 = sphi %s8, %s8
          %s1466 = sphi [#allocation5], [#allocation5]
        $region169: #{tpu_custom_call.1} parent=165 // loop_header_branch
          %1463 = sbr.rel (%p1461) target = $region173
        $region170: #{tpu_custom_call.1} parent=165 // loop_body
          %v1467 = vld [vmem:[%s1465] sm:$0xff]
          %1468 = vst [vmem:[%s1466] sm:$0xff] %v1467
          %v1469 = vld [vmem:[%s1465 + $0x8] sm:$0xff]
          %1470 = vst [vmem:[%s1466 + $0x8] sm:$0xff] %v1469
          %v1471 = vld [vmem:[%s1465 + $0x10] sm:$0xff]
          %1472 = vst [vmem:[%s1466 + $0x10] sm:$0xff] %v1471
          %v1473 = vld [vmem:[%s1465 + $0x18] sm:$0xff]
          %1474 = vst [vmem:[%s1466 + $0x18] sm:$0xff] %v1473
          %v1475 = vld [vmem:[%s1465 + $0x20] sm:$0xff]
          %1476 = vst [vmem:[%s1466 + $0x20] sm:$0xff] %v1475
          %v1477 = vld [vmem:[%s1465 + $0x28] sm:$0xff]
          %1478 = vst [vmem:[%s1466 + $0x28] sm:$0xff] %v1477
          %v1479 = vld [vmem:[%s1465 + $0x30] sm:$0xff]
          %1480 = vst [vmem:[%s1466 + $0x30] sm:$0xff] %v1479
          %v1481 = vld [vmem:[%s1465 + $0x38] sm:$0xff]
          %1482 = vst [vmem:[%s1466 + $0x38] sm:$0xff] %v1481
          %v1483 = vld [vmem:[%s1465 + $0x40] sm:$0xff]
          %1484 = vst [vmem:[%s1466 + $0x40] sm:$0xff] %v1483
          %v1485 = vld [vmem:[%s1465 + $0x48] sm:$0xff]
          %1486 = vst [vmem:[%s1466 + $0x48] sm:$0xff] %v1485
          %v1487 = vld [vmem:[%s1465 + $0x50] sm:$0xff]
          %1488 = vst [vmem:[%s1466 + $0x50] sm:$0xff] %v1487
          %v1489 = vld [vmem:[%s1465 + $0x58] sm:$0xff]
          %1490 = vst [vmem:[%s1466 + $0x58] sm:$0xff] %v1489
          %v1491 = vld [vmem:[%s1465 + $0x60] sm:$0xff]
          %1492 = vst [vmem:[%s1466 + $0x60] sm:$0xff] %v1491
          %v1493 = vld [vmem:[%s1465 + $0x68] sm:$0xff]
          %1494 = vst [vmem:[%s1466 + $0x68] sm:$0xff] %v1493
          %v1495 = vld [vmem:[%s1465 + $0x70] sm:$0xff]
          %1496 = vst [vmem:[%s1466 + $0x70] sm:$0xff] %v1495
          %v1497 = vld [vmem:[%s1465 + $0x78] sm:$0xff]
          %1498 = vst [vmem:[%s1466 + $0x78] sm:$0xff] %v1497
          %v1499 = vld [vmem:[%s1465 + $0x80] sm:$0xff]
          %1500 = vst [vmem:[%s1466 + $0x80] sm:$0xff] %v1499
          %v1501 = vld [vmem:[%s1465 + $0x88] sm:$0xff]
          %1502 = vst [vmem:[%s1466 + $0x88] sm:$0xff] %v1501
          %v1503 = vld [vmem:[%s1465 + $0x90] sm:$0xff]
          %1504 = vst [vmem:[%s1466 + $0x90] sm:$0xff] %v1503
          %v1505 = vld [vmem:[%s1465 + $0x98] sm:$0xff]
          %1506 = vst [vmem:[%s1466 + $0x98] sm:$0xff] %v1505
          %v1507 = vld [vmem:[%s1465 + $0xa0] sm:$0xff]
          %1508 = vst [vmem:[%s1466 + $0xa0] sm:$0xff] %v1507
          %v1509 = vld [vmem:[%s1465 + $0xa8] sm:$0xff]
          %1510 = vst [vmem:[%s1466 + $0xa8] sm:$0xff] %v1509
          %v1511 = vld [vmem:[%s1465 + $0xb0] sm:$0xff]
          %1512 = vst [vmem:[%s1466 + $0xb0] sm:$0xff] %v1511
          %v1513 = vld [vmem:[%s1465 + $0xb8] sm:$0xff]
          %1514 = vst [vmem:[%s1466 + $0xb8] sm:$0xff] %v1513
          %v1515 = vld [vmem:[%s1465 + $0xc0] sm:$0xff]
          %1516 = vst [vmem:[%s1466 + $0xc0] sm:$0xff] %v1515
          %v1517 = vld [vmem:[%s1465 + $0xc8] sm:$0xff]
          %1518 = vst [vmem:[%s1466 + $0xc8] sm:$0xff] %v1517
          %v1519 = vld [vmem:[%s1465 + $0xd0] sm:$0xff]
          %1520 = vst [vmem:[%s1466 + $0xd0] sm:$0xff] %v1519
          %v1521 = vld [vmem:[%s1465 + $0xd8] sm:$0xff]
          %1522 = vst [vmem:[%s1466 + $0xd8] sm:$0xff] %v1521
          %v1523 = vld [vmem:[%s1465 + $0xe0] sm:$0xff]
          %1524 = vst [vmem:[%s1466 + $0xe0] sm:$0xff] %v1523
          %v1525 = vld [vmem:[%s1465 + $0xe8] sm:$0xff]
          %1526 = vst [vmem:[%s1466 + $0xe8] sm:$0xff] %v1525
          %v1527 = vld [vmem:[%s1465 + $0xf0] sm:$0xff]
          %1528 = vst [vmem:[%s1466 + $0xf0] sm:$0xff] %v1527
          %v1529 = vld [vmem:[%s1465 + $0xf8] sm:$0xff]
          %1530 = vst [vmem:[%s1466 + $0xf8] sm:$0xff] %v1529
          %v1531 = vld [vmem:[%s1465 + $0x100] sm:$0xff]
          %1532 = vst [vmem:[%s1466 + $0x100] sm:$0xff] %v1531
          %v1533 = vld [vmem:[%s1465 + $0x108] sm:$0xff]
          %1534 = vst [vmem:[%s1466 + $0x108] sm:$0xff] %v1533
          %v1535 = vld [vmem:[%s1465 + $0x110] sm:$0xff]
          %1536 = vst [vmem:[%s1466 + $0x110] sm:$0xff] %v1535
          %v1537 = vld [vmem:[%s1465 + $0x118] sm:$0xff]
          %1538 = vst [vmem:[%s1466 + $0x118] sm:$0xff] %v1537
          %v1539 = vld [vmem:[%s1465 + $0x120] sm:$0xff]
          %1540 = vst [vmem:[%s1466 + $0x120] sm:$0xff] %v1539
          %v1541 = vld [vmem:[%s1465 + $0x128] sm:$0xff]
          %1542 = vst [vmem:[%s1466 + $0x128] sm:$0xff] %v1541
          %v1543 = vld [vmem:[%s1465 + $0x130] sm:$0xff]
          %1544 = vst [vmem:[%s1466 + $0x130] sm:$0xff] %v1543
          %v1545 = vld [vmem:[%s1465 + $0x138] sm:$0xff]
          %1546 = vst [vmem:[%s1466 + $0x138] sm:$0xff] %v1545
          %v1547 = vld [vmem:[%s1465 + $0x140] sm:$0xff]
          %1548 = vst [vmem:[%s1466 + $0x140] sm:$0xff] %v1547
          %v1549 = vld [vmem:[%s1465 + $0x148] sm:$0xff]
          %1550 = vst [vmem:[%s1466 + $0x148] sm:$0xff] %v1549
          %v1551 = vld [vmem:[%s1465 + $0x150] sm:$0xff]
          %1552 = vst [vmem:[%s1466 + $0x150] sm:$0xff] %v1551
          %v1553 = vld [vmem:[%s1465 + $0x158] sm:$0xff]
          %1554 = vst [vmem:[%s1466 + $0x158] sm:$0xff] %v1553
          %v1555 = vld [vmem:[%s1465 + $0x160] sm:$0xff]
          %1556 = vst [vmem:[%s1466 + $0x160] sm:$0xff] %v1555
          %v1557 = vld [vmem:[%s1465 + $0x168] sm:$0xff]
          %1558 = vst [vmem:[%s1466 + $0x168] sm:$0xff] %v1557
          %v1559 = vld [vmem:[%s1465 + $0x170] sm:$0xff]
          %1560 = vst [vmem:[%s1466 + $0x170] sm:$0xff] %v1559
          %v1561 = vld [vmem:[%s1465 + $0x178] sm:$0xff]
          %1562 = vst [vmem:[%s1466 + $0x178] sm:$0xff] %v1561
          %v1563 = vld [vmem:[%s1465 + $0x180] sm:$0xff]
          %1564 = vst [vmem:[%s1466 + $0x180] sm:$0xff] %v1563
          %v1565 = vld [vmem:[%s1465 + $0x188] sm:$0xff]
          %1566 = vst [vmem:[%s1466 + $0x188] sm:$0xff] %v1565
          %v1567 = vld [vmem:[%s1465 + $0x190] sm:$0xff]
          %1568 = vst [vmem:[%s1466 + $0x190] sm:$0xff] %v1567
          %v1569 = vld [vmem:[%s1465 + $0x198] sm:$0xff]
          %1570 = vst [vmem:[%s1466 + $0x198] sm:$0xff] %v1569
          %v1571 = vld [vmem:[%s1465 + $0x1a0] sm:$0xff]
          %1572 = vst [vmem:[%s1466 + $0x1a0] sm:$0xff] %v1571
          %v1573 = vld [vmem:[%s1465 + $0x1a8] sm:$0xff]
          %1574 = vst [vmem:[%s1466 + $0x1a8] sm:$0xff] %v1573
          %v1575 = vld [vmem:[%s1465 + $0x1b0] sm:$0xff]
          %1576 = vst [vmem:[%s1466 + $0x1b0] sm:$0xff] %v1575
          %v1577 = vld [vmem:[%s1465 + $0x1b8] sm:$0xff]
          %1578 = vst [vmem:[%s1466 + $0x1b8] sm:$0xff] %v1577
          %v1579 = vld [vmem:[%s1465 + $0x1c0] sm:$0xff]
          %1580 = vst [vmem:[%s1466 + $0x1c0] sm:$0xff] %v1579
          %v1581 = vld [vmem:[%s1465 + $0x1c8] sm:$0xff]
          %1582 = vst [vmem:[%s1466 + $0x1c8] sm:$0xff] %v1581
          %v1583 = vld [vmem:[%s1465 + $0x1d0] sm:$0xff]
          %1584 = vst [vmem:[%s1466 + $0x1d0] sm:$0xff] %v1583
          %v1585 = vld [vmem:[%s1465 + $0x1d8] sm:$0xff]
          %1586 = vst [vmem:[%s1466 + $0x1d8] sm:$0xff] %v1585
          %v1587 = vld [vmem:[%s1465 + $0x1e0] sm:$0xff]
          %1588 = vst [vmem:[%s1466 + $0x1e0] sm:$0xff] %v1587
          %v1589 = vld [vmem:[%s1465 + $0x1e8] sm:$0xff]
          %1590 = vst [vmem:[%s1466 + $0x1e8] sm:$0xff] %v1589
          %v1591 = vld [vmem:[%s1465 + $0x1f0] sm:$0xff]
          %1592 = vst [vmem:[%s1466 + $0x1f0] sm:$0xff] %v1591
          %v1593 = vld [vmem:[%s1465 + $0x1f8] sm:$0xff]
          %1594 = vst [vmem:[%s1466 + $0x1f8] sm:$0xff] %v1593
          %v1595 = vld [vmem:[%s1465 + $0x200] sm:$0xff]
          %1596 = vst [vmem:[%s1466 + $0x200] sm:$0xff] %v1595
          %v1597 = vld [vmem:[%s1465 + $0x208] sm:$0xff]
          %1598 = vst [vmem:[%s1466 + $0x208] sm:$0xff] %v1597
          %v1599 = vld [vmem:[%s1465 + $0x210] sm:$0xff]
          %1600 = vst [vmem:[%s1466 + $0x210] sm:$0xff] %v1599
          %v1601 = vld [vmem:[%s1465 + $0x218] sm:$0xff]
          %1602 = vst [vmem:[%s1466 + $0x218] sm:$0xff] %v1601
          %v1603 = vld [vmem:[%s1465 + $0x220] sm:$0xff]
          %1604 = vst [vmem:[%s1466 + $0x220] sm:$0xff] %v1603
          %v1605 = vld [vmem:[%s1465 + $0x228] sm:$0xff]
          %1606 = vst [vmem:[%s1466 + $0x228] sm:$0xff] %v1605
          %v1607 = vld [vmem:[%s1465 + $0x230] sm:$0xff]
          %1608 = vst [vmem:[%s1466 + $0x230] sm:$0xff] %v1607
          %v1609 = vld [vmem:[%s1465 + $0x238] sm:$0xff]
          %1610 = vst [vmem:[%s1466 + $0x238] sm:$0xff] %v1609
          %v1611 = vld [vmem:[%s1465 + $0x240] sm:$0xff]
          %1612 = vst [vmem:[%s1466 + $0x240] sm:$0xff] %v1611
          %v1613 = vld [vmem:[%s1465 + $0x248] sm:$0xff]
          %1614 = vst [vmem:[%s1466 + $0x248] sm:$0xff] %v1613
          %v1615 = vld [vmem:[%s1465 + $0x250] sm:$0xff]
          %1616 = vst [vmem:[%s1466 + $0x250] sm:$0xff] %v1615
          %v1617 = vld [vmem:[%s1465 + $0x258] sm:$0xff]
          %1618 = vst [vmem:[%s1466 + $0x258] sm:$0xff] %v1617
          %v1619 = vld [vmem:[%s1465 + $0x260] sm:$0xff]
          %1620 = vst [vmem:[%s1466 + $0x260] sm:$0xff] %v1619
          %v1621 = vld [vmem:[%s1465 + $0x268] sm:$0xff]
          %1622 = vst [vmem:[%s1466 + $0x268] sm:$0xff] %v1621
          %v1623 = vld [vmem:[%s1465 + $0x270] sm:$0xff]
          %1624 = vst [vmem:[%s1466 + $0x270] sm:$0xff] %v1623
          %v1625 = vld [vmem:[%s1465 + $0x278] sm:$0xff]
          %1626 = vst [vmem:[%s1466 + $0x278] sm:$0xff] %v1625
          %v1627 = vld [vmem:[%s1465 + $0x280] sm:$0xff]
          %1628 = vst [vmem:[%s1466 + $0x280] sm:$0xff] %v1627
          %v1629 = vld [vmem:[%s1465 + $0x288] sm:$0xff]
          %1630 = vst [vmem:[%s1466 + $0x288] sm:$0xff] %v1629
          %v1631 = vld [vmem:[%s1465 + $0x290] sm:$0xff]
          %1632 = vst [vmem:[%s1466 + $0x290] sm:$0xff] %v1631
          %v1633 = vld [vmem:[%s1465 + $0x298] sm:$0xff]
          %1634 = vst [vmem:[%s1466 + $0x298] sm:$0xff] %v1633
          %v1635 = vld [vmem:[%s1465 + $0x2a0] sm:$0xff]
          %1636 = vst [vmem:[%s1466 + $0x2a0] sm:$0xff] %v1635
          %v1637 = vld [vmem:[%s1465 + $0x2a8] sm:$0xff]
          %1638 = vst [vmem:[%s1466 + $0x2a8] sm:$0xff] %v1637
          %v1639 = vld [vmem:[%s1465 + $0x2b0] sm:$0xff]
          %1640 = vst [vmem:[%s1466 + $0x2b0] sm:$0xff] %v1639
          %v1641 = vld [vmem:[%s1465 + $0x2b8] sm:$0xff]
          %1642 = vst [vmem:[%s1466 + $0x2b8] sm:$0xff] %v1641
          %v1643 = vld [vmem:[%s1465 + $0x2c0] sm:$0xff]
          %1644 = vst [vmem:[%s1466 + $0x2c0] sm:$0xff] %v1643
          %v1645 = vld [vmem:[%s1465 + $0x2c8] sm:$0xff]
          %1646 = vst [vmem:[%s1466 + $0x2c8] sm:$0xff] %v1645
          %v1647 = vld [vmem:[%s1465 + $0x2d0] sm:$0xff]
          %1648 = vst [vmem:[%s1466 + $0x2d0] sm:$0xff] %v1647
          %v1649 = vld [vmem:[%s1465 + $0x2d8] sm:$0xff]
          %1650 = vst [vmem:[%s1466 + $0x2d8] sm:$0xff] %v1649
          %v1651 = vld [vmem:[%s1465 + $0x2e0] sm:$0xff]
          %1652 = vst [vmem:[%s1466 + $0x2e0] sm:$0xff] %v1651
          %v1653 = vld [vmem:[%s1465 + $0x2e8] sm:$0xff]
          %1654 = vst [vmem:[%s1466 + $0x2e8] sm:$0xff] %v1653
          %v1655 = vld [vmem:[%s1465 + $0x2f0] sm:$0xff]
          %1656 = vst [vmem:[%s1466 + $0x2f0] sm:$0xff] %v1655
          %v1657 = vld [vmem:[%s1465 + $0x2f8] sm:$0xff]
          %1658 = vst [vmem:[%s1466 + $0x2f8] sm:$0xff] %v1657
          %v1659 = vld [vmem:[%s1465 + $0x300] sm:$0xff]
          %1660 = vst [vmem:[%s1466 + $0x300] sm:$0xff] %v1659
          %v1661 = vld [vmem:[%s1465 + $0x308] sm:$0xff]
          %1662 = vst [vmem:[%s1466 + $0x308] sm:$0xff] %v1661
          %v1663 = vld [vmem:[%s1465 + $0x310] sm:$0xff]
          %1664 = vst [vmem:[%s1466 + $0x310] sm:$0xff] %v1663
          %v1665 = vld [vmem:[%s1465 + $0x318] sm:$0xff]
          %1666 = vst [vmem:[%s1466 + $0x318] sm:$0xff] %v1665
          %v1667 = vld [vmem:[%s1465 + $0x320] sm:$0xff]
          %1668 = vst [vmem:[%s1466 + $0x320] sm:$0xff] %v1667
          %v1669 = vld [vmem:[%s1465 + $0x328] sm:$0xff]
          %1670 = vst [vmem:[%s1466 + $0x328] sm:$0xff] %v1669
          %v1671 = vld [vmem:[%s1465 + $0x330] sm:$0xff]
          %1672 = vst [vmem:[%s1466 + $0x330] sm:$0xff] %v1671
          %v1673 = vld [vmem:[%s1465 + $0x338] sm:$0xff]
          %1674 = vst [vmem:[%s1466 + $0x338] sm:$0xff] %v1673
          %v1675 = vld [vmem:[%s1465 + $0x340] sm:$0xff]
          %1676 = vst [vmem:[%s1466 + $0x340] sm:$0xff] %v1675
          %v1677 = vld [vmem:[%s1465 + $0x348] sm:$0xff]
          %1678 = vst [vmem:[%s1466 + $0x348] sm:$0xff] %v1677
          %v1679 = vld [vmem:[%s1465 + $0x350] sm:$0xff]
          %1680 = vst [vmem:[%s1466 + $0x350] sm:$0xff] %v1679
          %v1681 = vld [vmem:[%s1465 + $0x358] sm:$0xff]
          %1682 = vst [vmem:[%s1466 + $0x358] sm:$0xff] %v1681
          %v1683 = vld [vmem:[%s1465 + $0x360] sm:$0xff]
          %1684 = vst [vmem:[%s1466 + $0x360] sm:$0xff] %v1683
          %v1685 = vld [vmem:[%s1465 + $0x368] sm:$0xff]
          %1686 = vst [vmem:[%s1466 + $0x368] sm:$0xff] %v1685
          %v1687 = vld [vmem:[%s1465 + $0x370] sm:$0xff]
          %1688 = vst [vmem:[%s1466 + $0x370] sm:$0xff] %v1687
          %v1689 = vld [vmem:[%s1465 + $0x378] sm:$0xff]
          %1690 = vst [vmem:[%s1466 + $0x378] sm:$0xff] %v1689
          %v1691 = vld [vmem:[%s1465 + $0x380] sm:$0xff]
          %1692 = vst [vmem:[%s1466 + $0x380] sm:$0xff] %v1691
          %v1693 = vld [vmem:[%s1465 + $0x388] sm:$0xff]
          %1694 = vst [vmem:[%s1466 + $0x388] sm:$0xff] %v1693
          %v1695 = vld [vmem:[%s1465 + $0x390] sm:$0xff]
          %1696 = vst [vmem:[%s1466 + $0x390] sm:$0xff] %v1695
          %v1697 = vld [vmem:[%s1465 + $0x398] sm:$0xff]
          %1698 = vst [vmem:[%s1466 + $0x398] sm:$0xff] %v1697
          %v1699 = vld [vmem:[%s1465 + $0x3a0] sm:$0xff]
          %1700 = vst [vmem:[%s1466 + $0x3a0] sm:$0xff] %v1699
          %v1701 = vld [vmem:[%s1465 + $0x3a8] sm:$0xff]
          %1702 = vst [vmem:[%s1466 + $0x3a8] sm:$0xff] %v1701
          %v1703 = vld [vmem:[%s1465 + $0x3b0] sm:$0xff]
          %1704 = vst [vmem:[%s1466 + $0x3b0] sm:$0xff] %v1703
          %v1705 = vld [vmem:[%s1465 + $0x3b8] sm:$0xff]
          %1706 = vst [vmem:[%s1466 + $0x3b8] sm:$0xff] %v1705
          %v1707 = vld [vmem:[%s1465 + $0x3c0] sm:$0xff]
          %1708 = vst [vmem:[%s1466 + $0x3c0] sm:$0xff] %v1707
          %v1709 = vld [vmem:[%s1465 + $0x3c8] sm:$0xff]
          %1710 = vst [vmem:[%s1466 + $0x3c8] sm:$0xff] %v1709
          %v1711 = vld [vmem:[%s1465 + $0x3d0] sm:$0xff]
          %1712 = vst [vmem:[%s1466 + $0x3d0] sm:$0xff] %v1711
          %v1713 = vld [vmem:[%s1465 + $0x3d8] sm:$0xff]
          %1714 = vst [vmem:[%s1466 + $0x3d8] sm:$0xff] %v1713
          %v1715 = vld [vmem:[%s1465 + $0x3e0] sm:$0xff]
          %1716 = vst [vmem:[%s1466 + $0x3e0] sm:$0xff] %v1715
          %v1717 = vld [vmem:[%s1465 + $0x3e8] sm:$0xff]
          %1718 = vst [vmem:[%s1466 + $0x3e8] sm:$0xff] %v1717
          %v1719 = vld [vmem:[%s1465 + $0x3f0] sm:$0xff]
          %1720 = vst [vmem:[%s1466 + $0x3f0] sm:$0xff] %v1719
          %v1721 = vld [vmem:[%s1465 + $0x3f8] sm:$0xff]
          %1722 = vst [vmem:[%s1466 + $0x3f8] sm:$0xff] %v1721
        $region171: #{tpu_custom_call.1} parent=165 // loop_footer
          %s1464 = sadd.s32 1, %s1460
        $region172: #{tpu_custom_call.1} parent=165 // loop_footer_branch
          %1459 = sbr.rel target = $region168
        $region173: #{tpu_custom_call.1} parent=165 // loop_exit
          _
      $region166: #{tpu_custom_call.1} parent=150 // pred_fallthru
        _
      %p1723 = pneg %p1455
      // Predicated region
      $region174: #{tpu_custom_call.1} parent=150 // pred_check
        _
      $region175: #{tpu_custom_call.1} parent=150 // pred_check_branch
        %1725 = sbr.rel (%p1455) target = $region177
      $region176: #{tpu_custom_call.1} parent=150 // pred_region
        %s1726 = sand.u32 1024, 7
      $region177: #{tpu_custom_call.1} parent=150 // pred_fallthru
        _
    $region151: #{tpu_custom_call.1} parent=1 // pred_fallthru
      _
    // Predicated region
    $region152: #{tpu_custom_call.1} parent=1 // pred_check
      %p1439 = pneg %p1435
    $region153: #{tpu_custom_call.1} parent=1 // pred_check_branch
      %1441 = sbr.rel (%p1439) target = $region155
    $region154: #{tpu_custom_call.1} parent=1 // pred_region
      %s1442 = sshll.u32 1, 1024
      %s1443 = ssub.s32 %s1442, 1
      loop: start=0, step=1, limit=1
      $region156: #{tpu_custom_call.1} parent=154 // loop_pre_header
        _
      $region157: #{tpu_custom_call.1} parent=154 // loop_header
        %s1445 = sphi 0, %s1449
        %p1446 = scmp.ge.s32.totalorder %s1445, 1
        %s1450 = sphi %s8, %s8
        %s1451 = sphi [#allocation5], [#allocation5]
      $region158: #{tpu_custom_call.1} parent=154 // loop_header_branch
        %1448 = sbr.rel (%p1446) target = $region162
      $region159: #{tpu_custom_call.1} parent=154 // loop_body
        %v1452 = vld [vmem:[%s1450] sm:%s1443]
        %1453 = vst [vmem:[%s1451] sm:%s1443] %v1452
      $region160: #{tpu_custom_call.1} parent=154 // loop_footer
        %s1449 = sadd.s32 1, %s1445
      $region161: #{tpu_custom_call.1} parent=154 // loop_footer_branch
        %1444 = sbr.rel target = $region157
      $region162: #{tpu_custom_call.1} parent=154 // loop_exit
        _
    $region155: #{tpu_custom_call.1} parent=1 // pred_fallthru
      _
    // Predicated region
    $region178: #{tpu_custom_call.1} parent=1 // pred_check
      _
    $region179: #{tpu_custom_call.1} parent=1 // pred_check_branch
      %1729 = sbr.rel (0) target = $region181
    $region180: #{tpu_custom_call.1} parent=1 // pred_region
      %1730 = vsyncadd %s1433, 16384
    $region181: #{tpu_custom_call.1} parent=1 // pred_fallthru
      _
    %v1731 = vld [vmem:[%s0] sm:$0x3]
    %v1732 = vld [vmem:[%s1] sm:$0xff]
    %v1733 = vld [vmem:[%s1 + $0x8] sm:$0xff]
    %vm1734 = vcmask 130048
    %v1736 = vsel %vm1734, %v1731, 0
    %1738 = vmatprep.subr.mxu0 0.0
    %1739 = vmatpush1.msra.mxu0 0.0
    %1740 = vmatprep.subr.mxu0 0.0
    %1741 = vmatpush1.msra.mxu0 0.0
    %1742 = vmatprep.subr.mxu0 0.0
    %1743 = vmatpush1.msra.mxu0 0.0
    %1744 = vmatprep.subr.mxu0 0.0
    %1745 = vmatpush1.msra.mxu0 0.0
    %1746 = vmatprep.subr.mxu0 0.0
    %1747 = vmatpush1.msra.mxu0 0.0
    %1748 = vmatprep.subr.mxu0 0.0
    %1749 = vmatpush1.msra.mxu0 0.0
    %1750 = vmatprep.subr.mxu0 0.0
    %1751 = vmatpush1.msra.mxu0 0.0
    %1752 = vmatprep.subr.mxu0 0.0
    %1753 = vmatpush1.msra.mxu0 0.0
    %1754 = vmatprep.subr.mxu0 0.0
    %1755 = vmatpush1.msra.mxu0 0.0
    %1756 = vmatprep.subr.mxu0 0.0
    %1757 = vmatpush1.msra.mxu0 0.0
    %1758 = vmatprep.subr.mxu0 0.0
    %1759 = vmatpush1.msra.mxu0 0.0
    %1760 = vmatprep.subr.mxu0 0.0
    %1761 = vmatpush1.msra.mxu0 0.0
    %1762 = vmatprep.subr.mxu0 0.0
    %1763 = vmatpush1.msra.mxu0 0.0
    %1764 = vmatprep.subr.mxu0 0.0
    %1765 = vmatpush1.msra.mxu0 0.0
    %1766 = vmatprep.subr.mxu0 0.0
    %1767 = vmatpush1.msra.mxu0 %v1733
    %1768 = vmatprep.subr.mxu0 0.0
    %1769 = vmatpush1.msra.mxu0 %v1732
    %1770 = vmatprep.subr.mxu0 0.0
    %1771 = vmatpush2.msra.mxu0 0.0
    %1772 = vmatprep.subr.mxu0 0.0
    %1773 = vmatpush2.msra.mxu0 0.0
    %1774 = vmatprep.subr.mxu0 0.0
    %1775 = vmatpush2.msra.mxu0 0.0
    %1776 = vmatprep.subr.mxu0 0.0
    %1777 = vmatpush2.msra.mxu0 0.0
    %1778 = vmatprep.subr.mxu0 0.0
    %1779 = vmatpush2.msra.mxu0 0.0
    %1780 = vmatprep.subr.mxu0 0.0
    %1781 = vmatpush2.msra.mxu0 0.0
    %1782 = vmatprep.subr.mxu0 0.0
    %1783 = vmatpush2.msra.mxu0 0.0
    %1784 = vmatprep.subr.mxu0 0.0
    %1785 = vmatpush2.msra.mxu0 0.0
    %1786 = vmatprep.subr.mxu0 0.0
    %1787 = vmatpush2.msra.mxu0 0.0
    %1788 = vmatprep.subr.mxu0 0.0
    %1789 = vmatpush2.msra.mxu0 0.0
    %1790 = vmatprep.subr.mxu0 0.0
    %1791 = vmatpush2.msra.mxu0 0.0
    %1792 = vmatprep.subr.mxu0 0.0
    %1793 = vmatpush2.msra.mxu0 0.0
    %1794 = vmatprep.subr.mxu0 0.0
    %1795 = vmatpush2.msra.mxu0 0.0
    %1796 = vmatprep.subr.mxu0 0.0
    %1797 = vmatpush2.msra.mxu0 0.0
    %1798 = vmatprep.subr.mxu0 0.0
    %1799 = vmatpush2.msra.mxu0 0.0
    %1800 = vmatprep.subr.mxu0 0.0
    %1801 = vmatpush2.msra.mxu0 0.0
    %1802 = vmatprep.mubr.f32.mxu0 0.0
    %1803 = vmatmul.mubr.f32.gmra.mxu0 %v1736
    %v1804 = vpop.f32.mrf.mxu0
    %v1805 = vadd.f32 0.0, %v1804
    %v1806 = vpop.f32.mrf.mxu0
    %1807 = vdwg.mxu0
    %s1808 = scalar_lea.vmem %s1, 16
    %v1809 = vld [vmem:[%s1808] sm:$0xff]
    %v1810 = vld [vmem:[%s1808 + $0x8] sm:$0xff]
    %1811 = vrot.lane.b32.xlu0 %v1731, 112
    %v1812 = vpop.permute.xlu0 %1811
    %v1813 = vsel %vm1734, %v1812, 0
    %1815 = vmatprep.subr.mxu0 0.0
    %1816 = vmatpush1.msra.mxu0 0.0
    %1817 = vmatprep.subr.mxu0 0.0
    %1818 = vmatpush1.msra.mxu0 0.0
    %1819 = vmatprep.subr.mxu0 0.0
    %1820 = vmatpush1.msra.mxu0 0.0
    %1821 = vmatprep.subr.mxu0 0.0
    %1822 = vmatpush1.msra.mxu0 0.0
    %1823 = vmatprep.subr.mxu0 0.0
    %1824 = vmatpush1.msra.mxu0 0.0
    %1825 = vmatprep.subr.mxu0 0.0
    %1826 = vmatpush1.msra.mxu0 0.0
    %1827 = vmatprep.subr.mxu0 0.0
    %1828 = vmatpush1.msra.mxu0 0.0
    %1829 = vmatprep.subr.mxu0 0.0
    %1830 = vmatpush1.msra.mxu0 0.0
    %1831 = vmatprep.subr.mxu0 0.0
    %1832 = vmatpush1.msra.mxu0 0.0
    %1833 = vmatprep.subr.mxu0 0.0
    %1834 = vmatpush1.msra.mxu0 0.0
    %1835 = vmatprep.subr.mxu0 0.0
    %1836 = vmatpush1.msra.mxu0 0.0
    %1837 = vmatprep.subr.mxu0 0.0
    %1838 = vmatpush1.msra.mxu0 0.0
    %1839 = vmatprep.subr.mxu0 0.0
    %1840 = vmatpush1.msra.mxu0 0.0
    %1841 = vmatprep.subr.mxu0 0.0
    %1842 = vmatpush1.msra.mxu0 0.0
    %1843 = vmatprep.subr.mxu0 0.0
    %1844 = vmatpush1.msra.mxu0 %v1810
    %1845 = vmatprep.subr.mxu0 0.0
    %1846 = vmatpush1.msra.mxu0 %v1809
    %1847 = vmatprep.subr.mxu0 0.0
    %1848 = vmatpush2.msra.mxu0 0.0
    %1849 = vmatprep.subr.mxu0 0.0
    %1850 = vmatpush2.msra.mxu0 0.0
    %1851 = vmatprep.subr.mxu0 0.0
    %1852 = vmatpush2.msra.mxu0 0.0
    %1853 = vmatprep.subr.mxu0 0.0
    %1854 = vmatpush2.msra.mxu0 0.0
    %1855 = vmatprep.subr.mxu0 0.0
    %1856 = vmatpush2.msra.mxu0 0.0
    %1857 = vmatprep.subr.mxu0 0.0
    %1858 = vmatpush2.msra.mxu0 0.0
    %1859 = vmatprep.subr.mxu0 0.0
    %1860 = vmatpush2.msra.mxu0 0.0
    %1861 = vmatprep.subr.mxu0 0.0
    %1862 = vmatpush2.msra.mxu0 0.0
    %1863 = vmatprep.subr.mxu0 0.0
    %1864 = vmatpush2.msra.mxu0 0.0
    %1865 = vmatprep.subr.mxu0 0.0
    %1866 = vmatpush2.msra.mxu0 0.0
    %1867 = vmatprep.subr.mxu0 0.0
    %1868 = vmatpush2.msra.mxu0 0.0
    %1869 = vmatprep.subr.mxu0 0.0
    %1870 = vmatpush2.msra.mxu0 0.0
    %1871 = vmatprep.subr.mxu0 0.0
    %1872 = vmatpush2.msra.mxu0 0.0
    %1873 = vmatprep.subr.mxu0 0.0
    %1874 = vmatpush2.msra.mxu0 0.0
    %1875 = vmatprep.subr.mxu0 0.0
    %1876 = vmatpush2.msra.mxu0 0.0
    %1877 = vmatprep.subr.mxu0 0.0
    %1878 = vmatpush2.msra.mxu0 0.0
    %1879 = vmatprep.mubr.f32.mxu0 0.0
    %1880 = vmatmul.mubr.f32.gmra.mxu0 %v1813
    %v1881 = vpop.f32.mrf.mxu0
    %v1882 = vadd.f32 0.0, %v1881
    %v1883 = vpop.f32.mrf.mxu0
    %1884 = vdwg.mxu0
    %s1885 = scalar_lea.vmem %s1, 32
    %v1886 = vld [vmem:[%s1885] sm:$0xff]
    %v1887 = vld [vmem:[%s1885 + $0x8] sm:$0xff]
    %1888 = vrot.lane.b32.xlu0 %v1731, 96
    %v1889 = vpop.permute.xlu0 %1888
    %v1890 = vsel %vm1734, %v1889, 0
    %1892 = vmatprep.subr.mxu0 0.0
    %1893 = vmatpush1.msra.mxu0 0.0
    %1894 = vmatprep.subr.mxu0 0.0
    %1895 = vmatpush1.msra.mxu0 0.0
    %1896 = vmatprep.subr.mxu0 0.0
    %1897 = vmatpush1.msra.mxu0 0.0
    %1898 = vmatprep.subr.mxu0 0.0
    %1899 = vmatpush1.msra.mxu0 0.0
    %1900 = vmatprep.subr.mxu0 0.0
    %1901 = vmatpush1.msra.mxu0 0.0
    %1902 = vmatprep.subr.mxu0 0.0
    %1903 = vmatpush1.msra.mxu0 0.0
    %1904 = vmatprep.subr.mxu0 0.0
    %1905 = vmatpush1.msra.mxu0 0.0
    %1906 = vmatprep.subr.mxu0 0.0
    %1907 = vmatpush1.msra.mxu0 0.0
    %1908 = vmatprep.subr.mxu0 0.0
    %1909 = vmatpush1.msra.mxu0 0.0
    %1910 = vmatprep.subr.mxu0 0.0
    %1911 = vmatpush1.msra.mxu0 0.0
    %1912 = vmatprep.subr.mxu0 0.0
    %1913 = vmatpush1.msra.mxu0 0.0
    %1914 = vmatprep.subr.mxu0 0.0
    %1915 = vmatpush1.msra.mxu0 0.0
    %1916 = vmatprep.subr.mxu0 0.0
    %1917 = vmatpush1.msra.mxu0 0.0
    %1918 = vmatprep.subr.mxu0 0.0
    %1919 = vmatpush1.msra.mxu0 0.0
    %1920 = vmatprep.subr.mxu0 0.0
    %1921 = vmatpush1.msra.mxu0 %v1887
    %1922 = vmatprep.subr.mxu0 0.0
    %1923 = vmatpush1.msra.mxu0 %v1886
    %1924 = vmatprep.subr.mxu0 0.0
    %1925 = vmatpush2.msra.mxu0 0.0
    %1926 = vmatprep.subr.mxu0 0.0
    %1927 = vmatpush2.msra.mxu0 0.0
    %1928 = vmatprep.subr.mxu0 0.0
    %1929 = vmatpush2.msra.mxu0 0.0
    %1930 = vmatprep.subr.mxu0 0.0
    %1931 = vmatpush2.msra.mxu0 0.0
    %1932 = vmatprep.subr.mxu0 0.0
    %1933 = vmatpush2.msra.mxu0 0.0
    %1934 = vmatprep.subr.mxu0 0.0
    %1935 = vmatpush2.msra.mxu0 0.0
    %1936 = vmatprep.subr.mxu0 0.0
    %1937 = vmatpush2.msra.mxu0 0.0
    %1938 = vmatprep.subr.mxu0 0.0
    %1939 = vmatpush2.msra.mxu0 0.0
    %1940 = vmatprep.subr.mxu0 0.0
    %1941 = vmatpush2.msra.mxu0 0.0
    %1942 = vmatprep.subr.mxu0 0.0
    %1943 = vmatpush2.msra.mxu0 0.0
    %1944 = vmatprep.subr.mxu0 0.0
    %1945 = vmatpush2.msra.mxu0 0.0
    %1946 = vmatprep.subr.mxu0 0.0
    %1947 = vmatpush2.msra.mxu0 0.0
    %1948 = vmatprep.subr.mxu0 0.0
    %1949 = vmatpush2.msra.mxu0 0.0
    %1950 = vmatprep.subr.mxu0 0.0
    %1951 = vmatpush2.msra.mxu0 0.0
    %1952 = vmatprep.subr.mxu0 0.0
    %1953 = vmatpush2.msra.mxu0 0.0
    %1954 = vmatprep.subr.mxu0 0.0
    %1955 = vmatpush2.msra.mxu0 0.0
    %1956 = vmatprep.mubr.f32.mxu0 0.0
    %1957 = vmatmul.mubr.f32.gmra.mxu0 %v1890
    %v1958 = vpop.f32.mrf.mxu0
    %v1959 = vadd.f32 0.0, %v1958
    %v1960 = vpop.f32.mrf.mxu0
    %1961 = vdwg.mxu0
    %s1962 = scalar_lea.vmem %s1, 48
    %v1963 = vld [vmem:[%s1962] sm:$0xff]
    %v1964 = vld [vmem:[%s1962 + $0x8] sm:$0xff]
    %1965 = vrot.lane.b32.xlu0 %v1731, 80
    %v1966 = vpop.permute.xlu0 %1965
    %v1967 = vsel %vm1734, %v1966, 0
    %1969 = vmatprep.subr.mxu0 0.0
    %1970 = vmatpush1.msra.mxu0 0.0
    %1971 = vmatprep.subr.mxu0 0.0
    %1972 = vmatpush1.msra.mxu0 0.0
    %1973 = vmatprep.subr.mxu0 0.0
    %1974 = vmatpush1.msra.mxu0 0.0
    %1975 = vmatprep.subr.mxu0 0.0
    %1976 = vmatpush1.msra.mxu0 0.0
    %1977 = vmatprep.subr.mxu0 0.0
    %1978 = vmatpush1.msra.mxu0 0.0
    %1979 = vmatprep.subr.mxu0 0.0
    %1980 = vmatpush1.msra.mxu0 0.0
    %1981 = vmatprep.subr.mxu0 0.0
    %1982 = vmatpush1.msra.mxu0 0.0
    %1983 = vmatprep.subr.mxu0 0.0
    %1984 = vmatpush1.msra.mxu0 0.0
    %1985 = vmatprep.subr.mxu0 0.0
    %1986 = vmatpush1.msra.mxu0 0.0
    %1987 = vmatprep.subr.mxu0 0.0
    %1988 = vmatpush1.msra.mxu0 0.0
    %1989 = vmatprep.subr.mxu0 0.0
    %1990 = vmatpush1.msra.mxu0 0.0
    %1991 = vmatprep.subr.mxu0 0.0
    %1992 = vmatpush1.msra.mxu0 0.0
    %1993 = vmatprep.subr.mxu0 0.0
    %1994 = vmatpush1.msra.mxu0 0.0
    %1995 = vmatprep.subr.mxu0 0.0
    %1996 = vmatpush1.msra.mxu0 0.0
    %1997 = vmatprep.subr.mxu0 0.0
    %1998 = vmatpush1.msra.mxu0 %v1964
    %1999 = vmatprep.subr.mxu0 0.0
    %2000 = vmatpush1.msra.mxu0 %v1963
    %2001 = vmatprep.subr.mxu0 0.0
    %2002 = vmatpush2.msra.mxu0 0.0
    %2003 = vmatprep.subr.mxu0 0.0
    %2004 = vmatpush2.msra.mxu0 0.0
    %2005 = vmatprep.subr.mxu0 0.0
    %2006 = vmatpush2.msra.mxu0 0.0
    %2007 = vmatprep.subr.mxu0 0.0
    %2008 = vmatpush2.msra.mxu0 0.0
    %2009 = vmatprep.subr.mxu0 0.0
    %2010 = vmatpush2.msra.mxu0 0.0
    %2011 = vmatprep.subr.mxu0 0.0
    %2012 = vmatpush2.msra.mxu0 0.0
    %2013 = vmatprep.subr.mxu0 0.0
    %2014 = vmatpush2.msra.mxu0 0.0
    %2015 = vmatprep.subr.mxu0 0.0
    %2016 = vmatpush2.msra.mxu0 0.0
    %2017 = vmatprep.subr.mxu0 0.0
    %2018 = vmatpush2.msra.mxu0 0.0
    %2019 = vmatprep.subr.mxu0 0.0
    %2020 = vmatpush2.msra.mxu0 0.0
    %2021 = vmatprep.subr.mxu0 0.0
    %2022 = vmatpush2.msra.mxu0 0.0
    %2023 = vmatprep.subr.mxu0 0.0
    %2024 = vmatpush2.msra.mxu0 0.0
    %2025 = vmatprep.subr.mxu0 0.0
    %2026 = vmatpush2.msra.mxu0 0.0
    %2027 = vmatprep.subr.mxu0 0.0
    %2028 = vmatpush2.msra.mxu0 0.0
    %2029 = vmatprep.subr.mxu0 0.0
    %2030 = vmatpush2.msra.mxu0 0.0
    %2031 = vmatprep.subr.mxu0 0.0
    %2032 = vmatpush2.msra.mxu0 0.0
    %2033 = vmatprep.mubr.f32.mxu0 0.0
    %2034 = vmatmul.mubr.f32.gmra.mxu0 %v1967
    %v2035 = vpop.f32.mrf.mxu0
    %v2036 = vadd.f32 0.0, %v2035
    %v2037 = vpop.f32.mrf.mxu0
    %2038 = vdwg.mxu0
    %2040 = vrot.lane.b32.xlu0 %v1882, 4
    %v2041 = vpop.permute.xlu0 %2040
    %2044 = vrot.lane.b32.xlu0 %v1959, 8
    %v2045 = vpop.permute.xlu0 %2044
    %2048 = vrot.lane.b32.xlu0 %v2036, 12
    %v2049 = vpop.permute.xlu0 %2048
    %vm2051 = vcmask 31744
    %v2052 = vsel %vm2051, %v1805, %v2041
    %vm2053 = vcmask 64512
    %v2054 = vsel %vm2053, %v2052, %v2045
    %vm2055 = vcmask 97280
    %v2056 = vsel %vm2055, %v2054, %v2049
    %v2057 = vld [vmem:[%s2] sm:$0xff]
    %v2058 = vld [vmem:[%s2 + $0x8] sm:$0xff]
    %v2059 = vld [vmem:[%s2 + $0x10] sm:$0xff]
    %v2060 = vld [vmem:[%s2 + $0x18] sm:$0xff]
    %v2061 = vld [vmem:[%s2 + $0x20] sm:$0xff]
    %v2062 = vld [vmem:[%s2 + $0x28] sm:$0xff]
    %v2063 = vld [vmem:[%s2 + $0x30] sm:$0xff]
    %v2064 = vld [vmem:[%s2 + $0x38] sm:$0xff]
    %v2065 = vld [vmem:[%s2 + $0x40] sm:$0xff]
    %v2066 = vld [vmem:[%s2 + $0x48] sm:$0xff]
    %v2067 = vld [vmem:[%s2 + $0x50] sm:$0xff]
    %v2068 = vld [vmem:[%s2 + $0x58] sm:$0xff]
    %v2069 = vld [vmem:[%s3] sm:$0x3f]
    %v2071 = vlaneseq
    %v2072 = vshrl.u32 %v2071, 7
    %v2073 = vsub.s32 0, %v2072
    %v2074 = vrot.slane %v2069, %v2073
    %v2075 = vlaneseq
    %v2076 = vshrl.u32 %v2075, 7
    %v2077 = vsub.s32 1, %v2076
    %v2078 = vrot.slane %v2069, %v2077
    %v2079 = vlaneseq
    %v2080 = vshrl.u32 %v2079, 7
    %v2081 = vsub.s32 2, %v2080
    %v2082 = vrot.slane %v2069, %v2081
    %v2083 = vlaneseq
    %v2084 = vshrl.u32 %v2083, 7
    %v2085 = vsub.s32 3, %v2084
    %v2086 = vrot.slane %v2069, %v2085
    %v2087 = vlaneseq
    %v2088 = vshrl.u32 %v2087, 7
    %v2089 = vsub.s32 4, %v2088
    %v2090 = vrot.slane %v2069, %v2089
    %v2091 = vlaneseq
    %v2092 = vshrl.u32 %v2091, 7
    %v2093 = vsub.s32 5, %v2092
    %v2094 = vrot.slane %v2069, %v2093
    %v2102 = vsel %vm1734, %v2056, 0
    %2104 = vmatprep.subr.mxu0 0.0
    %2105 = vmatpush1.msra.mxu0 0.0
    %2106 = vmatprep.subr.mxu0 0.0
    %2107 = vmatpush1.msra.mxu0 0.0
    %2108 = vmatprep.subr.mxu0 0.0
    %2109 = vmatpush1.msra.mxu0 0.0
    %2110 = vmatprep.subr.mxu0 0.0
    %2111 = vmatpush1.msra.mxu0 0.0
    %2112 = vmatprep.subr.mxu0 0.0
    %2113 = vmatpush1.msra.mxu0 0.0
    %2114 = vmatprep.subr.mxu0 0.0
    %2115 = vmatpush1.msra.mxu0 0.0
    %2116 = vmatprep.subr.mxu0 0.0
    %2117 = vmatpush1.msra.mxu0 0.0
    %2118 = vmatprep.subr.mxu0 0.0
    %2119 = vmatpush1.msra.mxu0 0.0
    %2120 = vmatprep.subr.mxu0 0.0
    %2121 = vmatpush1.msra.mxu0 0.0
    %2122 = vmatprep.subr.mxu0 0.0
    %2123 = vmatpush1.msra.mxu0 0.0
    %2124 = vmatprep.subr.mxu0 0.0
    %2125 = vmatpush1.msra.mxu0 0.0
    %2126 = vmatprep.subr.mxu0 0.0
    %2127 = vmatpush1.msra.mxu0 0.0
    %2128 = vmatprep.subr.mxu0 0.0
    %2129 = vmatpush1.msra.mxu0 0.0
    %2130 = vmatprep.subr.mxu0 0.0
    %2131 = vmatpush1.msra.mxu0 0.0
    %2132 = vmatprep.subr.mxu0 %v2064
    %2133 = vmatpush1.msra.mxu0 %v2063
    %2134 = vmatprep.subr.mxu0 %v2058
    %2135 = vmatpush1.msra.mxu0 %v2057
    %2136 = vmatprep.subr.mxu0 0.0
    %2137 = vmatpush2.msra.mxu0 0.0
    %2138 = vmatprep.subr.mxu0 0.0
    %2139 = vmatpush2.msra.mxu0 0.0
    %2140 = vmatprep.subr.mxu0 0.0
    %2141 = vmatpush2.msra.mxu0 0.0
    %2142 = vmatprep.subr.mxu0 0.0
    %2143 = vmatpush2.msra.mxu0 0.0
    %2144 = vmatprep.subr.mxu0 0.0
    %2145 = vmatpush2.msra.mxu0 0.0
    %2146 = vmatprep.subr.mxu0 0.0
    %2147 = vmatpush2.msra.mxu0 0.0
    %2148 = vmatprep.subr.mxu0 0.0
    %2149 = vmatpush2.msra.mxu0 0.0
    %2150 = vmatprep.subr.mxu0 0.0
    %2151 = vmatpush2.msra.mxu0 0.0
    %2152 = vmatprep.subr.mxu0 0.0
    %2153 = vmatpush2.msra.mxu0 0.0
    %2154 = vmatprep.subr.mxu0 0.0
    %2155 = vmatpush2.msra.mxu0 0.0
    %2156 = vmatprep.subr.mxu0 0.0
    %2157 = vmatpush2.msra.mxu0 0.0
    %2158 = vmatprep.subr.mxu0 0.0
    %2159 = vmatpush2.msra.mxu0 0.0
    %2160 = vmatprep.subr.mxu0 0.0
    %2161 = vmatpush2.msra.mxu0 0.0
    %2162 = vmatprep.subr.mxu0 0.0
    %2163 = vmatpush2.msra.mxu0 0.0
    %2164 = vmatprep.subr.mxu0 0.0
    %2165 = vmatpush2.msra.mxu0 0.0
    %2166 = vmatprep.subr.mxu0 0.0
    %2167 = vmatpush2.msra.mxu0 0.0
    %2168 = vmatprep.mubr.f32.mxu0 0.0
    %2169 = vmatmul.mubr.f32.gmra.mxu0 %v2102
    %v2170 = vpop.f32.mrf.mxu0
    %v2171 = vadd.f32 %v2074, %v2170
    %v2172 = vpop.f32.mrf.mxu0
    %v2173 = vadd.f32 %v2078, %v2172
    %2174 = vdwg.mxu0
    %2175 = vmatprep.subr.mxu0 0.0
    %2176 = vmatpush1.msra.mxu0 0.0
    %2177 = vmatprep.subr.mxu0 0.0
    %2178 = vmatpush1.msra.mxu0 0.0
    %2179 = vmatprep.subr.mxu0 0.0
    %2180 = vmatpush1.msra.mxu0 0.0
    %2181 = vmatprep.subr.mxu0 0.0
    %2182 = vmatpush1.msra.mxu0 0.0
    %2183 = vmatprep.subr.mxu0 0.0
    %2184 = vmatpush1.msra.mxu0 0.0
    %2185 = vmatprep.subr.mxu0 0.0
    %2186 = vmatpush1.msra.mxu0 0.0
    %2187 = vmatprep.subr.mxu0 0.0
    %2188 = vmatpush1.msra.mxu0 0.0
    %2189 = vmatprep.subr.mxu0 0.0
    %2190 = vmatpush1.msra.mxu0 0.0
    %2191 = vmatprep.subr.mxu0 0.0
    %2192 = vmatpush1.msra.mxu0 0.0
    %2193 = vmatprep.subr.mxu0 0.0
    %2194 = vmatpush1.msra.mxu0 0.0
    %2195 = vmatprep.subr.mxu0 0.0
    %2196 = vmatpush1.msra.mxu0 0.0
    %2197 = vmatprep.subr.mxu0 0.0
    %2198 = vmatpush1.msra.mxu0 0.0
    %2199 = vmatprep.subr.mxu0 0.0
    %2200 = vmatpush1.msra.mxu0 0.0
    %2201 = vmatprep.subr.mxu0 0.0
    %2202 = vmatpush1.msra.mxu0 0.0
    %2203 = vmatprep.subr.mxu0 %v2066
    %2204 = vmatpush1.msra.mxu0 %v2065
    %2205 = vmatprep.subr.mxu0 %v2060
    %2206 = vmatpush1.msra.mxu0 %v2059
    %2207 = vmatprep.subr.mxu0 0.0
    %2208 = vmatpush2.msra.mxu0 0.0
    %2209 = vmatprep.subr.mxu0 0.0
    %2210 = vmatpush2.msra.mxu0 0.0
    %2211 = vmatprep.subr.mxu0 0.0
    %2212 = vmatpush2.msra.mxu0 0.0
    %2213 = vmatprep.subr.mxu0 0.0
    %2214 = vmatpush2.msra.mxu0 0.0
    %2215 = vmatprep.subr.mxu0 0.0
    %2216 = vmatpush2.msra.mxu0 0.0
    %2217 = vmatprep.subr.mxu0 0.0
    %2218 = vmatpush2.msra.mxu0 0.0
    %2219 = vmatprep.subr.mxu0 0.0
    %2220 = vmatpush2.msra.mxu0 0.0
    %2221 = vmatprep.subr.mxu0 0.0
    %2222 = vmatpush2.msra.mxu0 0.0
    %2223 = vmatprep.subr.mxu0 0.0
    %2224 = vmatpush2.msra.mxu0 0.0
    %2225 = vmatprep.subr.mxu0 0.0
    %2226 = vmatpush2.msra.mxu0 0.0
    %2227 = vmatprep.subr.mxu0 0.0
    %2228 = vmatpush2.msra.mxu0 0.0
    %2229 = vmatprep.subr.mxu0 0.0
    %2230 = vmatpush2.msra.mxu0 0.0
    %2231 = vmatprep.subr.mxu0 0.0
    %2232 = vmatpush2.msra.mxu0 0.0
    %2233 = vmatprep.subr.mxu0 0.0
    %2234 = vmatpush2.msra.mxu0 0.0
    %2235 = vmatprep.subr.mxu0 0.0
    %2236 = vmatpush2.msra.mxu0 0.0
    %2237 = vmatprep.subr.mxu0 0.0
    %2238 = vmatpush2.msra.mxu0 0.0
    %2239 = vmatprep.mubr.f32.mxu0 0.0
    %2240 = vmatmul.mubr.f32.gmra.mxu0 %v2102
    %v2241 = vpop.f32.mrf.mxu0
    %v2242 = vadd.f32 %v2082, %v2241
    %v2243 = vpop.f32.mrf.mxu0
    %v2244 = vadd.f32 %v2086, %v2243
    %2245 = vdwg.mxu0
    %2246 = vmatprep.subr.mxu0 0.0
    %2247 = vmatpush1.msra.mxu0 0.0
    %2248 = vmatprep.subr.mxu0 0.0
    %2249 = vmatpush1.msra.mxu0 0.0
    %2250 = vmatprep.subr.mxu0 0.0
    %2251 = vmatpush1.msra.mxu0 0.0
    %2252 = vmatprep.subr.mxu0 0.0
    %2253 = vmatpush1.msra.mxu0 0.0
    %2254 = vmatprep.subr.mxu0 0.0
    %2255 = vmatpush1.msra.mxu0 0.0
    %2256 = vmatprep.subr.mxu0 0.0
    %2257 = vmatpush1.msra.mxu0 0.0
    %2258 = vmatprep.subr.mxu0 0.0
    %2259 = vmatpush1.msra.mxu0 0.0
    %2260 = vmatprep.subr.mxu0 0.0
    %2261 = vmatpush1.msra.mxu0 0.0
    %2262 = vmatprep.subr.mxu0 0.0
    %2263 = vmatpush1.msra.mxu0 0.0
    %2264 = vmatprep.subr.mxu0 0.0
    %2265 = vmatpush1.msra.mxu0 0.0
    %2266 = vmatprep.subr.mxu0 0.0
    %2267 = vmatpush1.msra.mxu0 0.0
    %2268 = vmatprep.subr.mxu0 0.0
    %2269 = vmatpush1.msra.mxu0 0.0
    %2270 = vmatprep.subr.mxu0 0.0
    %2271 = vmatpush1.msra.mxu0 0.0
    %2272 = vmatprep.subr.mxu0 0.0
    %2273 = vmatpush1.msra.mxu0 0.0
    %2274 = vmatprep.subr.mxu0 %v2068
    %2275 = vmatpush1.msra.mxu0 %v2067
    %2276 = vmatprep.subr.mxu0 %v2062
    %2277 = vmatpush1.msra.mxu0 %v2061
    %2278 = vmatprep.subr.mxu0 0.0
    %2279 = vmatpush2.msra.mxu0 0.0
    %2280 = vmatprep.subr.mxu0 0.0
    %2281 = vmatpush2.msra.mxu0 0.0
    %2282 = vmatprep.subr.mxu0 0.0
    %2283 = vmatpush2.msra.mxu0 0.0
    %2284 = vmatprep.subr.mxu0 0.0
    %2285 = vmatpush2.msra.mxu0 0.0
    %2286 = vmatprep.subr.mxu0 0.0
    %2287 = vmatpush2.msra.mxu0 0.0
    %2288 = vmatprep.subr.mxu0 0.0
    %2289 = vmatpush2.msra.mxu0 0.0
    %2290 = vmatprep.subr.mxu0 0.0
    %2291 = vmatpush2.msra.mxu0 0.0
    %2292 = vmatprep.subr.mxu0 0.0
    %2293 = vmatpush2.msra.mxu0 0.0
    %2294 = vmatprep.subr.mxu0 0.0
    %2295 = vmatpush2.msra.mxu0 0.0
    %2296 = vmatprep.subr.mxu0 0.0
    %2297 = vmatpush2.msra.mxu0 0.0
    %2298 = vmatprep.subr.mxu0 0.0
    %2299 = vmatpush2.msra.mxu0 0.0
    %2300 = vmatprep.subr.mxu0 0.0
    %2301 = vmatpush2.msra.mxu0 0.0
    %2302 = vmatprep.subr.mxu0 0.0
    %2303 = vmatpush2.msra.mxu0 0.0
    %2304 = vmatprep.subr.mxu0 0.0
    %2305 = vmatpush2.msra.mxu0 0.0
    %2306 = vmatprep.subr.mxu0 0.0
    %2307 = vmatpush2.msra.mxu0 0.0
    %2308 = vmatprep.subr.mxu0 0.0
    %2309 = vmatpush2.msra.mxu0 0.0
    %2310 = vmatprep.mubr.f32.mxu0 0.0
    %2311 = vmatmul.mubr.f32.gmra.mxu0 %v2102
    %v2312 = vpop.f32.mrf.mxu0
    %v2313 = vadd.f32 %v2090, %v2312
    %v2314 = vpop.f32.mrf.mxu0
    %v2315 = vadd.f32 %v2094, %v2314
    %2316 = vdwg.mxu0
    %v2317 = vmax.f32 %v2171, 0.0
    %v2318 = vmax.f32 %v2173, 0.0
    %v2319 = vmax.f32 %v2242, 0.0
    %v2320 = vmax.f32 %v2244, 0.0
    %v2321 = vmax.f32 %v2313, 0.0
    %v2322 = vmax.f32 %v2315, 0.0
    %2324 = vrot.lane.b32.xlu0 %v1805, 124
    %v2325 = vpop.permute.xlu0 %2324
    %2327 = vrot.lane.b32.xlu0 %v1959, 4
    %v2328 = vpop.permute.xlu0 %2327
    %2330 = vrot.lane.b32.xlu0 %v2036, 8
    %v2331 = vpop.permute.xlu0 %2330
    %v2333 = vsel %vm2051, %v2325, %v1882
    %v2334 = vsel %vm2053, %v2333, %v2328
    %v2335 = vsel %vm2055, %v2334, %v2331
    %s2336 = scalar_lea.vmem %s2, 96
    %v2337 = vld [vmem:[%s2336] sm:$0xff]
    %v2338 = vld [vmem:[%s2336 + $0x8] sm:$0xff]
    %v2339 = vld [vmem:[%s2336 + $0x10] sm:$0xff]
    %v2340 = vld [vmem:[%s2336 + $0x18] sm:$0xff]
    %v2341 = vld [vmem:[%s2336 + $0x20] sm:$0xff]
    %v2342 = vld [vmem:[%s2336 + $0x28] sm:$0xff]
    %v2343 = vld [vmem:[%s2336 + $0x30] sm:$0xff]
    %v2344 = vld [vmem:[%s2336 + $0x38] sm:$0xff]
    %v2345 = vld [vmem:[%s2336 + $0x40] sm:$0xff]
    %v2346 = vld [vmem:[%s2336 + $0x48] sm:$0xff]
    %v2347 = vld [vmem:[%s2336 + $0x50] sm:$0xff]
    %v2348 = vld [vmem:[%s2336 + $0x58] sm:$0xff]
    %s2349 = scalar_lea.vmem %s3, 6
    %v2350 = vld [vmem:[%s2349] sm:$0x3f]
    %v2352 = vlaneseq
    %v2353 = vshrl.u32 %v2352, 7
    %v2354 = vsub.s32 0, %v2353
    %v2355 = vrot.slane %v2350, %v2354
    %v2356 = vlaneseq
    %v2357 = vshrl.u32 %v2356, 7
    %v2358 = vsub.s32 1, %v2357
    %v2359 = vrot.slane %v2350, %v2358
    %v2360 = vlaneseq
    %v2361 = vshrl.u32 %v2360, 7
    %v2362 = vsub.s32 2, %v2361
    %v2363 = vrot.slane %v2350, %v2362
    %v2364 = vlaneseq
    %v2365 = vshrl.u32 %v2364, 7
    %v2366 = vsub.s32 3, %v2365
    %v2367 = vrot.slane %v2350, %v2366
    %v2368 = vlaneseq
    %v2369 = vshrl.u32 %v2368, 7
    %v2370 = vsub.s32 4, %v2369
    %v2371 = vrot.slane %v2350, %v2370
    %v2372 = vlaneseq
    %v2373 = vshrl.u32 %v2372, 7
    %v2374 = vsub.s32 5, %v2373
    %v2375 = vrot.slane %v2350, %v2374
    %v2383 = vsel %vm1734, %v2335, 0
    %2385 = vmatprep.subr.mxu0 0.0
    %2386 = vmatpush1.msra.mxu0 0.0
    %2387 = vmatprep.subr.mxu0 0.0
    %2388 = vmatpush1.msra.mxu0 0.0
    %2389 = vmatprep.subr.mxu0 0.0
    %2390 = vmatpush1.msra.mxu0 0.0
    %2391 = vmatprep.subr.mxu0 0.0
    %2392 = vmatpush1.msra.mxu0 0.0
    %2393 = vmatprep.subr.mxu0 0.0
    %2394 = vmatpush1.msra.mxu0 0.0
    %2395 = vmatprep.subr.mxu0 0.0
    %2396 = vmatpush1.msra.mxu0 0.0
    %2397 = vmatprep.subr.mxu0 0.0
    %2398 = vmatpush1.msra.mxu0 0.0
    %2399 = vmatprep.subr.mxu0 0.0
    %2400 = vmatpush1.msra.mxu0 0.0
    %2401 = vmatprep.subr.mxu0 0.0
    %2402 = vmatpush1.msra.mxu0 0.0
    %2403 = vmatprep.subr.mxu0 0.0
    %2404 = vmatpush1.msra.mxu0 0.0
    %2405 = vmatprep.subr.mxu0 0.0
    %2406 = vmatpush1.msra.mxu0 0.0
    %2407 = vmatprep.subr.mxu0 0.0
    %2408 = vmatpush1.msra.mxu0 0.0
    %2409 = vmatprep.subr.mxu0 0.0
    %2410 = vmatpush1.msra.mxu0 0.0
    %2411 = vmatprep.subr.mxu0 0.0
    %2412 = vmatpush1.msra.mxu0 0.0
    %2413 = vmatprep.subr.mxu0 %v2344
    %2414 = vmatpush1.msra.mxu0 %v2343
    %2415 = vmatprep.subr.mxu0 %v2338
    %2416 = vmatpush1.msra.mxu0 %v2337
    %2417 = vmatprep.subr.mxu0 0.0
    %2418 = vmatpush2.msra.mxu0 0.0
    %2419 = vmatprep.subr.mxu0 0.0
    %2420 = vmatpush2.msra.mxu0 0.0
    %2421 = vmatprep.subr.mxu0 0.0
    %2422 = vmatpush2.msra.mxu0 0.0
    %2423 = vmatprep.subr.mxu0 0.0
    %2424 = vmatpush2.msra.mxu0 0.0
    %2425 = vmatprep.subr.mxu0 0.0
    %2426 = vmatpush2.msra.mxu0 0.0
    %2427 = vmatprep.subr.mxu0 0.0
    %2428 = vmatpush2.msra.mxu0 0.0
    %2429 = vmatprep.subr.mxu0 0.0
    %2430 = vmatpush2.msra.mxu0 0.0
    %2431 = vmatprep.subr.mxu0 0.0
    %2432 = vmatpush2.msra.mxu0 0.0
    %2433 = vmatprep.subr.mxu0 0.0
    %2434 = vmatpush2.msra.mxu0 0.0
    %2435 = vmatprep.subr.mxu0 0.0
    %2436 = vmatpush2.msra.mxu0 0.0
    %2437 = vmatprep.subr.mxu0 0.0
    %2438 = vmatpush2.msra.mxu0 0.0
    %2439 = vmatprep.subr.mxu0 0.0
    %2440 = vmatpush2.msra.mxu0 0.0
    %2441 = vmatprep.subr.mxu0 0.0
    %2442 = vmatpush2.msra.mxu0 0.0
    %2443 = vmatprep.subr.mxu0 0.0
    %2444 = vmatpush2.msra.mxu0 0.0
    %2445 = vmatprep.subr.mxu0 0.0
    %2446 = vmatpush2.msra.mxu0 0.0
    %2447 = vmatprep.subr.mxu0 0.0
    %2448 = vmatpush2.msra.mxu0 0.0
    %2449 = vmatprep.mubr.f32.mxu0 0.0
    %2450 = vmatmul.mubr.f32.gmra.mxu0 %v2383
    %v2451 = vpop.f32.mrf.mxu0
    %v2452 = vadd.f32 %v2355, %v2451
    %v2453 = vpop.f32.mrf.mxu0
    %v2454 = vadd.f32 %v2359, %v2453
    %2455 = vdwg.mxu0
    %2456 = vmatprep.subr.mxu0 0.0
    %2457 = vmatpush1.msra.mxu0 0.0
    %2458 = vmatprep.subr.mxu0 0.0
    %2459 = vmatpush1.msra.mxu0 0.0
    %2460 = vmatprep.subr.mxu0 0.0
    %2461 = vmatpush1.msra.mxu0 0.0
    %2462 = vmatprep.subr.mxu0 0.0
    %2463 = vmatpush1.msra.mxu0 0.0
    %2464 = vmatprep.subr.mxu0 0.0
    %2465 = vmatpush1.msra.mxu0 0.0
    %2466 = vmatprep.subr.mxu0 0.0
    %2467 = vmatpush1.msra.mxu0 0.0
    %2468 = vmatprep.subr.mxu0 0.0
    %2469 = vmatpush1.msra.mxu0 0.0
    %2470 = vmatprep.subr.mxu0 0.0
    %2471 = vmatpush1.msra.mxu0 0.0
    %2472 = vmatprep.subr.mxu0 0.0
    %2473 = vmatpush1.msra.mxu0 0.0
    %2474 = vmatprep.subr.mxu0 0.0
    %2475 = vmatpush1.msra.mxu0 0.0
    %2476 = vmatprep.subr.mxu0 0.0
    %2477 = vmatpush1.msra.mxu0 0.0
    %2478 = vmatprep.subr.mxu0 0.0
    %2479 = vmatpush1.msra.mxu0 0.0
    %2480 = vmatprep.subr.mxu0 0.0
    %2481 = vmatpush1.msra.mxu0 0.0
    %2482 = vmatprep.subr.mxu0 0.0
    %2483 = vmatpush1.msra.mxu0 0.0
    %2484 = vmatprep.subr.mxu0 %v2346
    %2485 = vmatpush1.msra.mxu0 %v2345
    %2486 = vmatprep.subr.mxu0 %v2340
    %2487 = vmatpush1.msra.mxu0 %v2339
    %2488 = vmatprep.subr.mxu0 0.0
    %2489 = vmatpush2.msra.mxu0 0.0
    %2490 = vmatprep.subr.mxu0 0.0
    %2491 = vmatpush2.msra.mxu0 0.0
    %2492 = vmatprep.subr.mxu0 0.0
    %2493 = vmatpush2.msra.mxu0 0.0
    %2494 = vmatprep.subr.mxu0 0.0
    %2495 = vmatpush2.msra.mxu0 0.0
    %2496 = vmatprep.subr.mxu0 0.0
    %2497 = vmatpush2.msra.mxu0 0.0
    %2498 = vmatprep.subr.mxu0 0.0
    %2499 = vmatpush2.msra.mxu0 0.0
    %2500 = vmatprep.subr.mxu0 0.0
    %2501 = vmatpush2.msra.mxu0 0.0
    %2502 = vmatprep.subr.mxu0 0.0
    %2503 = vmatpush2.msra.mxu0 0.0
    %2504 = vmatprep.subr.mxu0 0.0
    %2505 = vmatpush2.msra.mxu0 0.0
    %2506 = vmatprep.subr.mxu0 0.0
    %2507 = vmatpush2.msra.mxu0 0.0
    %2508 = vmatprep.subr.mxu0 0.0
    %2509 = vmatpush2.msra.mxu0 0.0
    %2510 = vmatprep.subr.mxu0 0.0
    %2511 = vmatpush2.msra.mxu0 0.0
    %2512 = vmatprep.subr.mxu0 0.0
    %2513 = vmatpush2.msra.mxu0 0.0
    %2514 = vmatprep.subr.mxu0 0.0
    %2515 = vmatpush2.msra.mxu0 0.0
    %2516 = vmatprep.subr.mxu0 0.0
    %2517 = vmatpush2.msra.mxu0 0.0
    %2518 = vmatprep.subr.mxu0 0.0
    %2519 = vmatpush2.msra.mxu0 0.0
    %2520 = vmatprep.mubr.f32.mxu0 0.0
    %2521 = vmatmul.mubr.f32.gmra.mxu0 %v2383
    %v2522 = vpop.f32.mrf.mxu0
    %v2523 = vadd.f32 %v2363, %v2522
    %v2524 = vpop.f32.mrf.mxu0
    %v2525 = vadd.f32 %v2367, %v2524
    %2526 = vdwg.mxu0
    %2527 = vmatprep.subr.mxu0 0.0
    %2528 = vmatpush1.msra.mxu0 0.0
    %2529 = vmatprep.subr.mxu0 0.0
    %2530 = vmatpush1.msra.mxu0 0.0
    %2531 = vmatprep.subr.mxu0 0.0
    %2532 = vmatpush1.msra.mxu0 0.0
    %2533 = vmatprep.subr.mxu0 0.0
    %2534 = vmatpush1.msra.mxu0 0.0
    %2535 = vmatprep.subr.mxu0 0.0
    %2536 = vmatpush1.msra.mxu0 0.0
    %2537 = vmatprep.subr.mxu0 0.0
    %2538 = vmatpush1.msra.mxu0 0.0
    %2539 = vmatprep.subr.mxu0 0.0
    %2540 = vmatpush1.msra.mxu0 0.0
    %2541 = vmatprep.subr.mxu0 0.0
    %2542 = vmatpush1.msra.mxu0 0.0
    %2543 = vmatprep.subr.mxu0 0.0
    %2544 = vmatpush1.msra.mxu0 0.0
    %2545 = vmatprep.subr.mxu0 0.0
    %2546 = vmatpush1.msra.mxu0 0.0
    %2547 = vmatprep.subr.mxu0 0.0
    %2548 = vmatpush1.msra.mxu0 0.0
    %2549 = vmatprep.subr.mxu0 0.0
    %2550 = vmatpush1.msra.mxu0 0.0
    %2551 = vmatprep.subr.mxu0 0.0
    %2552 = vmatpush1.msra.mxu0 0.0
    %2553 = vmatprep.subr.mxu0 0.0
    %2554 = vmatpush1.msra.mxu0 0.0
    %2555 = vmatprep.subr.mxu0 %v2348
    %2556 = vmatpush1.msra.mxu0 %v2347
    %2557 = vmatprep.subr.mxu0 %v2342
    %2558 = vmatpush1.msra.mxu0 %v2341
    %2559 = vmatprep.subr.mxu0 0.0
    %2560 = vmatpush2.msra.mxu0 0.0
    %2561 = vmatprep.subr.mxu0 0.0
    %2562 = vmatpush2.msra.mxu0 0.0
    %2563 = vmatprep.subr.mxu0 0.0
    %2564 = vmatpush2.msra.mxu0 0.0
    %2565 = vmatprep.subr.mxu0 0.0
    %2566 = vmatpush2.msra.mxu0 0.0
    %2567 = vmatprep.subr.mxu0 0.0
    %2568 = vmatpush2.msra.mxu0 0.0
    %2569 = vmatprep.subr.mxu0 0.0
    %2570 = vmatpush2.msra.mxu0 0.0
    %2571 = vmatprep.subr.mxu0 0.0
    %2572 = vmatpush2.msra.mxu0 0.0
    %2573 = vmatprep.subr.mxu0 0.0
    %2574 = vmatpush2.msra.mxu0 0.0
    %2575 = vmatprep.subr.mxu0 0.0
    %2576 = vmatpush2.msra.mxu0 0.0
    %2577 = vmatprep.subr.mxu0 0.0
    %2578 = vmatpush2.msra.mxu0 0.0
    %2579 = vmatprep.subr.mxu0 0.0
    %2580 = vmatpush2.msra.mxu0 0.0
    %2581 = vmatprep.subr.mxu0 0.0
    %2582 = vmatpush2.msra.mxu0 0.0
    %2583 = vmatprep.subr.mxu0 0.0
    %2584 = vmatpush2.msra.mxu0 0.0
    %2585 = vmatprep.subr.mxu0 0.0
    %2586 = vmatpush2.msra.mxu0 0.0
    %2587 = vmatprep.subr.mxu0 0.0
    %2588 = vmatpush2.msra.mxu0 0.0
    %2589 = vmatprep.subr.mxu0 0.0
    %2590 = vmatpush2.msra.mxu0 0.0
    %2591 = vmatprep.mubr.f32.mxu0 0.0
    %2592 = vmatmul.mubr.f32.gmra.mxu0 %v2383
    %v2593 = vpop.f32.mrf.mxu0
    %v2594 = vadd.f32 %v2371, %v2593
    %v2595 = vpop.f32.mrf.mxu0
    %v2596 = vadd.f32 %v2375, %v2595
    %2597 = vdwg.mxu0
    %v2598 = vmax.f32 %v2452, 0.0
    %v2599 = vmax.f32 %v2454, 0.0
    %v2600 = vmax.f32 %v2523, 0.0
    %v2601 = vmax.f32 %v2525, 0.0
    %v2602 = vmax.f32 %v2594, 0.0
    %v2603 = vmax.f32 %v2596, 0.0
    %2604 = vrot.lane.b32.xlu0 %v1805, 120
    %v2605 = vpop.permute.xlu0 %2604
    %2607 = vrot.lane.b32.xlu0 %v1882, 124
    %v2608 = vpop.permute.xlu0 %2607
    %2610 = vrot.lane.b32.xlu0 %v2036, 4
    %v2611 = vpop.permute.xlu0 %2610
    %v2613 = vsel %vm2051, %v2605, %v2608
    %v2614 = vsel %vm2053, %v2613, %v1959
    %v2615 = vsel %vm2055, %v2614, %v2611
    %s2616 = scalar_lea.vmem %s2, 192
    %v2617 = vld [vmem:[%s2616] sm:$0xff]
    %v2618 = vld [vmem:[%s2616 + $0x8] sm:$0xff]
    %v2619 = vld [vmem:[%s2616 + $0x10] sm:$0xff]
    %v2620 = vld [vmem:[%s2616 + $0x18] sm:$0xff]
    %v2621 = vld [vmem:[%s2616 + $0x20] sm:$0xff]
    %v2622 = vld [vmem:[%s2616 + $0x28] sm:$0xff]
    %v2623 = vld [vmem:[%s2616 + $0x30] sm:$0xff]
    %v2624 = vld [vmem:[%s2616 + $0x38] sm:$0xff]
    %v2625 = vld [vmem:[%s2616 + $0x40] sm:$0xff]
    %v2626 = vld [vmem:[%s2616 + $0x48] sm:$0xff]
    %v2627 = vld [vmem:[%s2616 + $0x50] sm:$0xff]
    %v2628 = vld [vmem:[%s2616 + $0x58] sm:$0xff]
    %s2629 = scalar_lea.vmem %s3, 12
    %v2630 = vld [vmem:[%s2629] sm:$0x3f]
    %v2632 = vlaneseq
    %v2633 = vshrl.u32 %v2632, 7
    %v2634 = vsub.s32 0, %v2633
    %v2635 = vrot.slane %v2630, %v2634
    %v2636 = vlaneseq
    %v2637 = vshrl.u32 %v2636, 7
    %v2638 = vsub.s32 1, %v2637
    %v2639 = vrot.slane %v2630, %v2638
    %v2640 = vlaneseq
    %v2641 = vshrl.u32 %v2640, 7
    %v2642 = vsub.s32 2, %v2641
    %v2643 = vrot.slane %v2630, %v2642
    %v2644 = vlaneseq
    %v2645 = vshrl.u32 %v2644, 7
    %v2646 = vsub.s32 3, %v2645
    %v2647 = vrot.slane %v2630, %v2646
    %v2648 = vlaneseq
    %v2649 = vshrl.u32 %v2648, 7
    %v2650 = vsub.s32 4, %v2649
    %v2651 = vrot.slane %v2630, %v2650
    %v2652 = vlaneseq
    %v2653 = vshrl.u32 %v2652, 7
    %v2654 = vsub.s32 5, %v2653
    %v2655 = vrot.slane %v2630, %v2654
    %v2663 = vsel %vm1734, %v2615, 0
    %2665 = vmatprep.subr.mxu0 0.0
    %2666 = vmatpush1.msra.mxu0 0.0
    %2667 = vmatprep.subr.mxu0 0.0
    %2668 = vmatpush1.msra.mxu0 0.0
    %2669 = vmatprep.subr.mxu0 0.0
    %2670 = vmatpush1.msra.mxu0 0.0
    %2671 = vmatprep.subr.mxu0 0.0
    %2672 = vmatpush1.msra.mxu0 0.0
    %2673 = vmatprep.subr.mxu0 0.0
    %2674 = vmatpush1.msra.mxu0 0.0
    %2675 = vmatprep.subr.mxu0 0.0
    %2676 = vmatpush1.msra.mxu0 0.0
    %2677 = vmatprep.subr.mxu0 0.0
    %2678 = vmatpush1.msra.mxu0 0.0
    %2679 = vmatprep.subr.mxu0 0.0
    %2680 = vmatpush1.msra.mxu0 0.0
    %2681 = vmatprep.subr.mxu0 0.0
    %2682 = vmatpush1.msra.mxu0 0.0
    %2683 = vmatprep.subr.mxu0 0.0
    %2684 = vmatpush1.msra.mxu0 0.0
    %2685 = vmatprep.subr.mxu0 0.0
    %2686 = vmatpush1.msra.mxu0 0.0
    %2687 = vmatprep.subr.mxu0 0.0
    %2688 = vmatpush1.msra.mxu0 0.0
    %2689 = vmatprep.subr.mxu0 0.0
    %2690 = vmatpush1.msra.mxu0 0.0
    %2691 = vmatprep.subr.mxu0 0.0
    %2692 = vmatpush1.msra.mxu0 0.0
    %2693 = vmatprep.subr.mxu0 %v2624
    %2694 = vmatpush1.msra.mxu0 %v2623
    %2695 = vmatprep.subr.mxu0 %v2618
    %2696 = vmatpush1.msra.mxu0 %v2617
    %2697 = vmatprep.subr.mxu0 0.0
    %2698 = vmatpush2.msra.mxu0 0.0
    %2699 = vmatprep.subr.mxu0 0.0
    %2700 = vmatpush2.msra.mxu0 0.0
    %2701 = vmatprep.subr.mxu0 0.0
    %2702 = vmatpush2.msra.mxu0 0.0
    %2703 = vmatprep.subr.mxu0 0.0
    %2704 = vmatpush2.msra.mxu0 0.0
    %2705 = vmatprep.subr.mxu0 0.0
    %2706 = vmatpush2.msra.mxu0 0.0
    %2707 = vmatprep.subr.mxu0 0.0
    %2708 = vmatpush2.msra.mxu0 0.0
    %2709 = vmatprep.subr.mxu0 0.0
    %2710 = vmatpush2.msra.mxu0 0.0
    %2711 = vmatprep.subr.mxu0 0.0
    %2712 = vmatpush2.msra.mxu0 0.0
    %2713 = vmatprep.subr.mxu0 0.0
    %2714 = vmatpush2.msra.mxu0 0.0
    %2715 = vmatprep.subr.mxu0 0.0
    %2716 = vmatpush2.msra.mxu0 0.0
    %2717 = vmatprep.subr.mxu0 0.0
    %2718 = vmatpush2.msra.mxu0 0.0
    %2719 = vmatprep.subr.mxu0 0.0
    %2720 = vmatpush2.msra.mxu0 0.0
    %2721 = vmatprep.subr.mxu0 0.0
    %2722 = vmatpush2.msra.mxu0 0.0
    %2723 = vmatprep.subr.mxu0 0.0
    %2724 = vmatpush2.msra.mxu0 0.0
    %2725 = vmatprep.subr.mxu0 0.0
    %2726 = vmatpush2.msra.mxu0 0.0
    %2727 = vmatprep.subr.mxu0 0.0
    %2728 = vmatpush2.msra.mxu0 0.0
    %2729 = vmatprep.mubr.f32.mxu0 0.0
    %2730 = vmatmul.mubr.f32.gmra.mxu0 %v2663
    %v2731 = vpop.f32.mrf.mxu0
    %v2732 = vadd.f32 %v2635, %v2731
    %v2733 = vpop.f32.mrf.mxu0
    %v2734 = vadd.f32 %v2639, %v2733
    %2735 = vdwg.mxu0
    %2736 = vmatprep.subr.mxu0 0.0
    %2737 = vmatpush1.msra.mxu0 0.0
    %2738 = vmatprep.subr.mxu0 0.0
    %2739 = vmatpush1.msra.mxu0 0.0
    %2740 = vmatprep.subr.mxu0 0.0
    %2741 = vmatpush1.msra.mxu0 0.0
    %2742 = vmatprep.subr.mxu0 0.0
    %2743 = vmatpush1.msra.mxu0 0.0
    %2744 = vmatprep.subr.mxu0 0.0
    %2745 = vmatpush1.msra.mxu0 0.0
    %2746 = vmatprep.subr.mxu0 0.0
    %2747 = vmatpush1.msra.mxu0 0.0
    %2748 = vmatprep.subr.mxu0 0.0
    %2749 = vmatpush1.msra.mxu0 0.0
    %2750 = vmatprep.subr.mxu0 0.0
    %2751 = vmatpush1.msra.mxu0 0.0
    %2752 = vmatprep.subr.mxu0 0.0
    %2753 = vmatpush1.msra.mxu0 0.0
    %2754 = vmatprep.subr.mxu0 0.0
    %2755 = vmatpush1.msra.mxu0 0.0
    %2756 = vmatprep.subr.mxu0 0.0
    %2757 = vmatpush1.msra.mxu0 0.0
    %2758 = vmatprep.subr.mxu0 0.0
    %2759 = vmatpush1.msra.mxu0 0.0
    %2760 = vmatprep.subr.mxu0 0.0
    %2761 = vmatpush1.msra.mxu0 0.0
    %2762 = vmatprep.subr.mxu0 0.0
    %2763 = vmatpush1.msra.mxu0 0.0
    %2764 = vmatprep.subr.mxu0 %v2626
    %2765 = vmatpush1.msra.mxu0 %v2625
    %2766 = vmatprep.subr.mxu0 %v2620
    %2767 = vmatpush1.msra.mxu0 %v2619
    %2768 = vmatprep.subr.mxu0 0.0
    %2769 = vmatpush2.msra.mxu0 0.0
    %2770 = vmatprep.subr.mxu0 0.0
    %2771 = vmatpush2.msra.mxu0 0.0
    %2772 = vmatprep.subr.mxu0 0.0
    %2773 = vmatpush2.msra.mxu0 0.0
    %2774 = vmatprep.subr.mxu0 0.0
    %2775 = vmatpush2.msra.mxu0 0.0
    %2776 = vmatprep.subr.mxu0 0.0
    %2777 = vmatpush2.msra.mxu0 0.0
    %2778 = vmatprep.subr.mxu0 0.0
    %2779 = vmatpush2.msra.mxu0 0.0
    %2780 = vmatprep.subr.mxu0 0.0
    %2781 = vmatpush2.msra.mxu0 0.0
    %2782 = vmatprep.subr.mxu0 0.0
    %2783 = vmatpush2.msra.mxu0 0.0
    %2784 = vmatprep.subr.mxu0 0.0
    %2785 = vmatpush2.msra.mxu0 0.0
    %2786 = vmatprep.subr.mxu0 0.0
    %2787 = vmatpush2.msra.mxu0 0.0
    %2788 = vmatprep.subr.mxu0 0.0
    %2789 = vmatpush2.msra.mxu0 0.0
    %2790 = vmatprep.subr.mxu0 0.0
    %2791 = vmatpush2.msra.mxu0 0.0
    %2792 = vmatprep.subr.mxu0 0.0
    %2793 = vmatpush2.msra.mxu0 0.0
    %2794 = vmatprep.subr.mxu0 0.0
    %2795 = vmatpush2.msra.mxu0 0.0
    %2796 = vmatprep.subr.mxu0 0.0
    %2797 = vmatpush2.msra.mxu0 0.0
    %2798 = vmatprep.subr.mxu0 0.0
    %2799 = vmatpush2.msra.mxu0 0.0
    %2800 = vmatprep.mubr.f32.mxu0 0.0
    %2801 = vmatmul.mubr.f32.gmra.mxu0 %v2663
    %v2802 = vpop.f32.mrf.mxu0
    %v2803 = vadd.f32 %v2643, %v2802
    %v2804 = vpop.f32.mrf.mxu0
    %v2805 = vadd.f32 %v2647, %v2804
    %2806 = vdwg.mxu0
    %2807 = vmatprep.subr.mxu0 0.0
    %2808 = vmatpush1.msra.mxu0 0.0
    %2809 = vmatprep.subr.mxu0 0.0
    %2810 = vmatpush1.msra.mxu0 0.0
    %2811 = vmatprep.subr.mxu0 0.0
    %2812 = vmatpush1.msra.mxu0 0.0
    %2813 = vmatprep.subr.mxu0 0.0
    %2814 = vmatpush1.msra.mxu0 0.0
    %2815 = vmatprep.subr.mxu0 0.0
    %2816 = vmatpush1.msra.mxu0 0.0
    %2817 = vmatprep.subr.mxu0 0.0
    %2818 = vmatpush1.msra.mxu0 0.0
    %2819 = vmatprep.subr.mxu0 0.0
    %2820 = vmatpush1.msra.mxu0 0.0
    %2821 = vmatprep.subr.mxu0 0.0
    %2822 = vmatpush1.msra.mxu0 0.0
    %2823 = vmatprep.subr.mxu0 0.0
    %2824 = vmatpush1.msra.mxu0 0.0
    %2825 = vmatprep.subr.mxu0 0.0
    %2826 = vmatpush1.msra.mxu0 0.0
    %2827 = vmatprep.subr.mxu0 0.0
    %2828 = vmatpush1.msra.mxu0 0.0
    %2829 = vmatprep.subr.mxu0 0.0
    %2830 = vmatpush1.msra.mxu0 0.0
    %2831 = vmatprep.subr.mxu0 0.0
    %2832 = vmatpush1.msra.mxu0 0.0
    %2833 = vmatprep.subr.mxu0 0.0
    %2834 = vmatpush1.msra.mxu0 0.0
    %2835 = vmatprep.subr.mxu0 %v2628
    %2836 = vmatpush1.msra.mxu0 %v2627
    %2837 = vmatprep.subr.mxu0 %v2622
    %2838 = vmatpush1.msra.mxu0 %v2621
    %2839 = vmatprep.subr.mxu0 0.0
    %2840 = vmatpush2.msra.mxu0 0.0
    %2841 = vmatprep.subr.mxu0 0.0
    %2842 = vmatpush2.msra.mxu0 0.0
    %2843 = vmatprep.subr.mxu0 0.0
    %2844 = vmatpush2.msra.mxu0 0.0
    %2845 = vmatprep.subr.mxu0 0.0
    %2846 = vmatpush2.msra.mxu0 0.0
    %2847 = vmatprep.subr.mxu0 0.0
    %2848 = vmatpush2.msra.mxu0 0.0
    %2849 = vmatprep.subr.mxu0 0.0
    %2850 = vmatpush2.msra.mxu0 0.0
    %2851 = vmatprep.subr.mxu0 0.0
    %2852 = vmatpush2.msra.mxu0 0.0
    %2853 = vmatprep.subr.mxu0 0.0
    %2854 = vmatpush2.msra.mxu0 0.0
    %2855 = vmatprep.subr.mxu0 0.0
    %2856 = vmatpush2.msra.mxu0 0.0
    %2857 = vmatprep.subr.mxu0 0.0
    %2858 = vmatpush2.msra.mxu0 0.0
    %2859 = vmatprep.subr.mxu0 0.0
    %2860 = vmatpush2.msra.mxu0 0.0
    %2861 = vmatprep.subr.mxu0 0.0
    %2862 = vmatpush2.msra.mxu0 0.0
    %2863 = vmatprep.subr.mxu0 0.0
    %2864 = vmatpush2.msra.mxu0 0.0
    %2865 = vmatprep.subr.mxu0 0.0
    %2866 = vmatpush2.msra.mxu0 0.0
    %2867 = vmatprep.subr.mxu0 0.0
    %2868 = vmatpush2.msra.mxu0 0.0
    %2869 = vmatprep.subr.mxu0 0.0
    %2870 = vmatpush2.msra.mxu0 0.0
    %2871 = vmatprep.mubr.f32.mxu0 0.0
    %2872 = vmatmul.mubr.f32.gmra.mxu0 %v2663
    %v2873 = vpop.f32.mrf.mxu0
    %v2874 = vadd.f32 %v2651, %v2873
    %v2875 = vpop.f32.mrf.mxu0
    %v2876 = vadd.f32 %v2655, %v2875
    %2877 = vdwg.mxu0
    %v2878 = vmax.f32 %v2732, 0.0
    %v2879 = vmax.f32 %v2734, 0.0
    %v2880 = vmax.f32 %v2803, 0.0
    %v2881 = vmax.f32 %v2805, 0.0
    %v2882 = vmax.f32 %v2874, 0.0
    %v2883 = vmax.f32 %v2876, 0.0
    %2884 = vrot.lane.b32.xlu0 %v1805, 116
    %v2885 = vpop.permute.xlu0 %2884
    %2887 = vrot.lane.b32.xlu0 %v1882, 120
    %v2888 = vpop.permute.xlu0 %2887
    %2890 = vrot.lane.b32.xlu0 %v1959, 124
    %v2891 = vpop.permute.xlu0 %2890
    %v2893 = vsel %vm2051, %v2885, %v2888
    %v2894 = vsel %vm2053, %v2893, %v2891
    %v2895 = vsel %vm2055, %v2894, %v2036
    %s2896 = scalar_lea.vmem %s2, 288
    %v2897 = vld [vmem:[%s2896] sm:$0xff]
    %v2898 = vld [vmem:[%s2896 + $0x8] sm:$0xff]
    %v2899 = vld [vmem:[%s2896 + $0x10] sm:$0xff]
    %v2900 = vld [vmem:[%s2896 + $0x18] sm:$0xff]
    %v2901 = vld [vmem:[%s2896 + $0x20] sm:$0xff]
    %v2902 = vld [vmem:[%s2896 + $0x28] sm:$0xff]
    %v2903 = vld [vmem:[%s2896 + $0x30] sm:$0xff]
    %v2904 = vld [vmem:[%s2896 + $0x38] sm:$0xff]
    %v2905 = vld [vmem:[%s2896 + $0x40] sm:$0xff]
    %v2906 = vld [vmem:[%s2896 + $0x48] sm:$0xff]
    %v2907 = vld [vmem:[%s2896 + $0x50] sm:$0xff]
    %v2908 = vld [vmem:[%s2896 + $0x58] sm:$0xff]
    %s2909 = scalar_lea.vmem %s3, 18
    %v2910 = vld [vmem:[%s2909] sm:$0x3f]
    %v2912 = vlaneseq
    %v2913 = vshrl.u32 %v2912, 7
    %v2914 = vsub.s32 0, %v2913
    %v2915 = vrot.slane %v2910, %v2914
    %v2916 = vlaneseq
    %v2917 = vshrl.u32 %v2916, 7
    %v2918 = vsub.s32 1, %v2917
    %v2919 = vrot.slane %v2910, %v2918
    %v2920 = vlaneseq
    %v2921 = vshrl.u32 %v2920, 7
    %v2922 = vsub.s32 2, %v2921
    %v2923 = vrot.slane %v2910, %v2922
    %v2924 = vlaneseq
    %v2925 = vshrl.u32 %v2924, 7
    %v2926 = vsub.s32 3, %v2925
    %v2927 = vrot.slane %v2910, %v2926
    %v2928 = vlaneseq
    %v2929 = vshrl.u32 %v2928, 7
    %v2930 = vsub.s32 4, %v2929
    %v2931 = vrot.slane %v2910, %v2930
    %v2932 = vlaneseq
    %v2933 = vshrl.u32 %v2932, 7
    %v2934 = vsub.s32 5, %v2933
    %v2935 = vrot.slane %v2910, %v2934
    %v2943 = vsel %vm1734, %v2895, 0
    %2945 = vmatprep.subr.mxu0 0.0
    %2946 = vmatpush1.msra.mxu0 0.0
    %2947 = vmatprep.subr.mxu0 0.0
    %2948 = vmatpush1.msra.mxu0 0.0
    %2949 = vmatprep.subr.mxu0 0.0
    %2950 = vmatpush1.msra.mxu0 0.0
    %2951 = vmatprep.subr.mxu0 0.0
    %2952 = vmatpush1.msra.mxu0 0.0
    %2953 = vmatprep.subr.mxu0 0.0
    %2954 = vmatpush1.msra.mxu0 0.0
    %2955 = vmatprep.subr.mxu0 0.0
    %2956 = vmatpush1.msra.mxu0 0.0
    %2957 = vmatprep.subr.mxu0 0.0
    %2958 = vmatpush1.msra.mxu0 0.0
    %2959 = vmatprep.subr.mxu0 0.0
    %2960 = vmatpush1.msra.mxu0 0.0
    %2961 = vmatprep.subr.mxu0 0.0
    %2962 = vmatpush1.msra.mxu0 0.0
    %2963 = vmatprep.subr.mxu0 0.0
    %2964 = vmatpush1.msra.mxu0 0.0
    %2965 = vmatprep.subr.mxu0 0.0
    %2966 = vmatpush1.msra.mxu0 0.0
    %2967 = vmatprep.subr.mxu0 0.0
    %2968 = vmatpush1.msra.mxu0 0.0
    %2969 = vmatprep.subr.mxu0 0.0
    %2970 = vmatpush1.msra.mxu0 0.0
    %2971 = vmatprep.subr.mxu0 0.0
    %2972 = vmatpush1.msra.mxu0 0.0
    %2973 = vmatprep.subr.mxu0 %v2904
    %2974 = vmatpush1.msra.mxu0 %v2903
    %2975 = vmatprep.subr.mxu0 %v2898
    %2976 = vmatpush1.msra.mxu0 %v2897
    %2977 = vmatprep.subr.mxu0 0.0
    %2978 = vmatpush2.msra.mxu0 0.0
    %2979 = vmatprep.subr.mxu0 0.0
    %2980 = vmatpush2.msra.mxu0 0.0
    %2981 = vmatprep.subr.mxu0 0.0
    %2982 = vmatpush2.msra.mxu0 0.0
    %2983 = vmatprep.subr.mxu0 0.0
    %2984 = vmatpush2.msra.mxu0 0.0
    %2985 = vmatprep.subr.mxu0 0.0
    %2986 = vmatpush2.msra.mxu0 0.0
    %2987 = vmatprep.subr.mxu0 0.0
    %2988 = vmatpush2.msra.mxu0 0.0
    %2989 = vmatprep.subr.mxu0 0.0
    %2990 = vmatpush2.msra.mxu0 0.0
    %2991 = vmatprep.subr.mxu0 0.0
    %2992 = vmatpush2.msra.mxu0 0.0
    %2993 = vmatprep.subr.mxu0 0.0
    %2994 = vmatpush2.msra.mxu0 0.0
    %2995 = vmatprep.subr.mxu0 0.0
    %2996 = vmatpush2.msra.mxu0 0.0
    %2997 = vmatprep.subr.mxu0 0.0
    %2998 = vmatpush2.msra.mxu0 0.0
    %2999 = vmatprep.subr.mxu0 0.0
    %3000 = vmatpush2.msra.mxu0 0.0
    %3001 = vmatprep.subr.mxu0 0.0
    %3002 = vmatpush2.msra.mxu0 0.0
    %3003 = vmatprep.subr.mxu0 0.0
    %3004 = vmatpush2.msra.mxu0 0.0
    %3005 = vmatprep.subr.mxu0 0.0
    %3006 = vmatpush2.msra.mxu0 0.0
    %3007 = vmatprep.subr.mxu0 0.0
    %3008 = vmatpush2.msra.mxu0 0.0
    %3009 = vmatprep.mubr.f32.mxu0 0.0
    %3010 = vmatmul.mubr.f32.gmra.mxu0 %v2943
    %v3011 = vpop.f32.mrf.mxu0
    %v3012 = vadd.f32 %v2915, %v3011
    %v3013 = vpop.f32.mrf.mxu0
    %v3014 = vadd.f32 %v2919, %v3013
    %3015 = vdwg.mxu0
    %3016 = vmatprep.subr.mxu0 0.0
    %3017 = vmatpush1.msra.mxu0 0.0
    %3018 = vmatprep.subr.mxu0 0.0
    %3019 = vmatpush1.msra.mxu0 0.0
    %3020 = vmatprep.subr.mxu0 0.0
    %3021 = vmatpush1.msra.mxu0 0.0
    %3022 = vmatprep.subr.mxu0 0.0
    %3023 = vmatpush1.msra.mxu0 0.0
    %3024 = vmatprep.subr.mxu0 0.0
    %3025 = vmatpush1.msra.mxu0 0.0
    %3026 = vmatprep.subr.mxu0 0.0
    %3027 = vmatpush1.msra.mxu0 0.0
    %3028 = vmatprep.subr.mxu0 0.0
    %3029 = vmatpush1.msra.mxu0 0.0
    %3030 = vmatprep.subr.mxu0 0.0
    %3031 = vmatpush1.msra.mxu0 0.0
    %3032 = vmatprep.subr.mxu0 0.0
    %3033 = vmatpush1.msra.mxu0 0.0
    %3034 = vmatprep.subr.mxu0 0.0
    %3035 = vmatpush1.msra.mxu0 0.0
    %3036 = vmatprep.subr.mxu0 0.0
    %3037 = vmatpush1.msra.mxu0 0.0
    %3038 = vmatprep.subr.mxu0 0.0
    %3039 = vmatpush1.msra.mxu0 0.0
    %3040 = vmatprep.subr.mxu0 0.0
    %3041 = vmatpush1.msra.mxu0 0.0
    %3042 = vmatprep.subr.mxu0 0.0
    %3043 = vmatpush1.msra.mxu0 0.0
    %3044 = vmatprep.subr.mxu0 %v2906
    %3045 = vmatpush1.msra.mxu0 %v2905
    %3046 = vmatprep.subr.mxu0 %v2900
    %3047 = vmatpush1.msra.mxu0 %v2899
    %3048 = vmatprep.subr.mxu0 0.0
    %3049 = vmatpush2.msra.mxu0 0.0
    %3050 = vmatprep.subr.mxu0 0.0
    %3051 = vmatpush2.msra.mxu0 0.0
    %3052 = vmatprep.subr.mxu0 0.0
    %3053 = vmatpush2.msra.mxu0 0.0
    %3054 = vmatprep.subr.mxu0 0.0
    %3055 = vmatpush2.msra.mxu0 0.0
    %3056 = vmatprep.subr.mxu0 0.0
    %3057 = vmatpush2.msra.mxu0 0.0
    %3058 = vmatprep.subr.mxu0 0.0
    %3059 = vmatpush2.msra.mxu0 0.0
    %3060 = vmatprep.subr.mxu0 0.0
    %3061 = vmatpush2.msra.mxu0 0.0
    %3062 = vmatprep.subr.mxu0 0.0
    %3063 = vmatpush2.msra.mxu0 0.0
    %3064 = vmatprep.subr.mxu0 0.0
    %3065 = vmatpush2.msra.mxu0 0.0
    %3066 = vmatprep.subr.mxu0 0.0
    %3067 = vmatpush2.msra.mxu0 0.0
    %3068 = vmatprep.subr.mxu0 0.0
    %3069 = vmatpush2.msra.mxu0 0.0
    %3070 = vmatprep.subr.mxu0 0.0
    %3071 = vmatpush2.msra.mxu0 0.0
    %3072 = vmatprep.subr.mxu0 0.0
    %3073 = vmatpush2.msra.mxu0 0.0
    %3074 = vmatprep.subr.mxu0 0.0
    %3075 = vmatpush2.msra.mxu0 0.0
    %3076 = vmatprep.subr.mxu0 0.0
    %3077 = vmatpush2.msra.mxu0 0.0
    %3078 = vmatprep.subr.mxu0 0.0
    %3079 = vmatpush2.msra.mxu0 0.0
    %3080 = vmatprep.mubr.f32.mxu0 0.0
    %3081 = vmatmul.mubr.f32.gmra.mxu0 %v2943
    %v3082 = vpop.f32.mrf.mxu0
    %v3083 = vadd.f32 %v2923, %v3082
    %v3084 = vpop.f32.mrf.mxu0
    %v3085 = vadd.f32 %v2927, %v3084
    %3086 = vdwg.mxu0
    %3087 = vmatprep.subr.mxu0 0.0
    %3088 = vmatpush1.msra.mxu0 0.0
    %3089 = vmatprep.subr.mxu0 0.0
    %3090 = vmatpush1.msra.mxu0 0.0
    %3091 = vmatprep.subr.mxu0 0.0
    %3092 = vmatpush1.msra.mxu0 0.0
    %3093 = vmatprep.subr.mxu0 0.0
    %3094 = vmatpush1.msra.mxu0 0.0
    %3095 = vmatprep.subr.mxu0 0.0
    %3096 = vmatpush1.msra.mxu0 0.0
    %3097 = vmatprep.subr.mxu0 0.0
    %3098 = vmatpush1.msra.mxu0 0.0
    %3099 = vmatprep.subr.mxu0 0.0
    %3100 = vmatpush1.msra.mxu0 0.0
    %3101 = vmatprep.subr.mxu0 0.0
    %3102 = vmatpush1.msra.mxu0 0.0
    %3103 = vmatprep.subr.mxu0 0.0
    %3104 = vmatpush1.msra.mxu0 0.0
    %3105 = vmatprep.subr.mxu0 0.0
    %3106 = vmatpush1.msra.mxu0 0.0
    %3107 = vmatprep.subr.mxu0 0.0
    %3108 = vmatpush1.msra.mxu0 0.0
    %3109 = vmatprep.subr.mxu0 0.0
    %3110 = vmatpush1.msra.mxu0 0.0
    %3111 = vmatprep.subr.mxu0 0.0
    %3112 = vmatpush1.msra.mxu0 0.0
    %3113 = vmatprep.subr.mxu0 0.0
    %3114 = vmatpush1.msra.mxu0 0.0
    %3115 = vmatprep.subr.mxu0 %v2908
    %3116 = vmatpush1.msra.mxu0 %v2907
    %3117 = vmatprep.subr.mxu0 %v2902
    %3118 = vmatpush1.msra.mxu0 %v2901
    %3119 = vmatprep.subr.mxu0 0.0
    %3120 = vmatpush2.msra.mxu0 0.0
    %3121 = vmatprep.subr.mxu0 0.0
    %3122 = vmatpush2.msra.mxu0 0.0
    %3123 = vmatprep.subr.mxu0 0.0
    %3124 = vmatpush2.msra.mxu0 0.0
    %3125 = vmatprep.subr.mxu0 0.0
    %3126 = vmatpush2.msra.mxu0 0.0
    %3127 = vmatprep.subr.mxu0 0.0
    %3128 = vmatpush2.msra.mxu0 0.0
    %3129 = vmatprep.subr.mxu0 0.0
    %3130 = vmatpush2.msra.mxu0 0.0
    %3131 = vmatprep.subr.mxu0 0.0
    %3132 = vmatpush2.msra.mxu0 0.0
    %3133 = vmatprep.subr.mxu0 0.0
    %3134 = vmatpush2.msra.mxu0 0.0
    %3135 = vmatprep.subr.mxu0 0.0
    %3136 = vmatpush2.msra.mxu0 0.0
    %3137 = vmatprep.subr.mxu0 0.0
    %3138 = vmatpush2.msra.mxu0 0.0
    %3139 = vmatprep.subr.mxu0 0.0
    %3140 = vmatpush2.msra.mxu0 0.0
    %3141 = vmatprep.subr.mxu0 0.0
    %3142 = vmatpush2.msra.mxu0 0.0
    %3143 = vmatprep.subr.mxu0 0.0
    %3144 = vmatpush2.msra.mxu0 0.0
    %3145 = vmatprep.subr.mxu0 0.0
    %3146 = vmatpush2.msra.mxu0 0.0
    %3147 = vmatprep.subr.mxu0 0.0
    %3148 = vmatpush2.msra.mxu0 0.0
    %3149 = vmatprep.subr.mxu0 0.0
    %3150 = vmatpush2.msra.mxu0 0.0
    %3151 = vmatprep.mubr.f32.mxu0 0.0
    %3152 = vmatmul.mubr.f32.gmra.mxu0 %v2943
    %v3153 = vpop.f32.mrf.mxu0
    %v3154 = vadd.f32 %v2931, %v3153
    %v3155 = vpop.f32.mrf.mxu0
    %v3156 = vadd.f32 %v2935, %v3155
    %3157 = vdwg.mxu0
    %v3158 = vmax.f32 %v3012, 0.0
    %v3159 = vmax.f32 %v3014, 0.0
    %v3160 = vmax.f32 %v3083, 0.0
    %v3161 = vmax.f32 %v3085, 0.0
    %v3162 = vmax.f32 %v3154, 0.0
    %v3163 = vmax.f32 %v3156, 0.0
    %s3164 = smul.u32 4, 4
    %s3165 = smul.u32 %s3164, 94
    %s3166 = smul.u32 %s3165, 2
    %s3167 = sshll.u32 %s3166, 4
    %3168 = dma.done [#allocation6], %s3167
    %s3169 = smul.u32 %s3164, 32
    %s3170 = smul.u32 %s3169, 2
    %s3171 = sshll.u32 %s3170, 4
    %3172 = dma.done %s837, %s3171
    %v3173 = vpack.c.bf16 %v2317, %v2317
    %v3174 = vpack.c.bf16 %v2318, %v2318
    %v3175 = vpack.c.bf16 %v2319, %v2319
    %v3176 = vpack.c.bf16 %v2320, %v2320
    %v3177 = vpack.c.bf16 %v2321, %v2321
    %v3178 = vpack.c.bf16 %v2322, %v2322
    %v3179 = vpack.c.bf16 %v2598, %v2598
    %v3180 = vpack.c.bf16 %v2599, %v2599
    %v3181 = vpack.c.bf16 %v2600, %v2600
    %v3182 = vpack.c.bf16 %v2601, %v2601
    %v3183 = vpack.c.bf16 %v2602, %v2602
    %v3184 = vpack.c.bf16 %v2603, %v2603
    %v3185 = vpack.c.bf16 %v2878, %v2878
    %v3186 = vpack.c.bf16 %v2879, %v2879
    %v3187 = vpack.c.bf16 %v2880, %v2880
    %v3188 = vpack.c.bf16 %v2881, %v2881
    %v3189 = vpack.c.bf16 %v2882, %v2882
    %v3190 = vpack.c.bf16 %v2883, %v2883
    %v3191 = vpack.c.bf16 %v3158, %v3158
    %v3192 = vpack.c.bf16 %v3159, %v3159
    %v3193 = vpack.c.bf16 %v3160, %v3160
    %v3194 = vpack.c.bf16 %v3161, %v3161
    %v3195 = vpack.c.bf16 %v3162, %v3162
    %v3196 = vpack.c.bf16 %v3163, %v3163
    %3199 = vrot.lane.b32.xlu0 %v3179, 60
    %v3200 = vpop.permute.xlu0 %3199
    %3201 = vrot.lane.b32.xlu0 %v3180, 60
    %v3202 = vpop.permute.xlu0 %3201
    %vm3203 = vcmask 490496
    %v3204 = vsel %vm3203, %v3200, %v3202
    %3207 = vrot.lane.b32.xlu0 %v3185, 120
    %v3208 = vpop.permute.xlu0 %3207
    %3209 = vrot.lane.b32.xlu0 %v3186, 120
    %v3210 = vpop.permute.xlu0 %3209
    %vm3211 = vcmask 982016
    %v3212 = vsel %vm3211, %v3208, %v3210
    %3216 = vrot.lane.b32.xlu0 %v3191, 51
    %v3217 = vpop.permute.xlu0 %3216
    %3218 = vrot.lane.b32.xlu0 %v3192, 51
    %v3219 = vpop.permute.xlu0 %3218
    %vm3220 = vcmask 416768
    %v3221 = vsel %vm3220, %v3217, %v3219
    %vm3222 = vcmask 490496
    %v3225 = vsel %vm3222, %v3174, %v3200
    %vm3227 = vcmask 982016
    %v3230 = vsel %vm3227, %v3204, %v3208
    %vm3232 = vcmask 416768
    %v3235 = vsel %vm3232, %v3210, %v3217
    %v3237 = vld [vmem:[#allocation2] sm:$0xff]
    %v3238 = vld [vmem:[#allocation2 + $0x8] sm:$0xff]
    %v3239 = vld [vmem:[#allocation2 + $0x10] sm:$0xff]
    %v3240 = vld [vmem:[#allocation2 + $0x18] sm:$0xff]
    %v3241 = vld [vmem:[#allocation2 + $0x20] sm:$0xff]
    %v3242 = vld [vmem:[#allocation2 + $0x28] sm:$0xff]
    %v3243 = vld [vmem:[#allocation2 + $0x30] sm:$0xff]
    %v3244 = vld [vmem:[#allocation2 + $0x38] sm:$0xff]
    %v3245 = vld [vmem:[#allocation2 + $0x40] sm:$0xff]
    %v3246 = vld [vmem:[#allocation2 + $0x48] sm:$0xff]
    %v3247 = vld [vmem:[#allocation2 + $0x50] sm:$0xff]
    %v3248 = vld [vmem:[#allocation2 + $0x58] sm:$0xff]
    %v3249 = vld [vmem:[#allocation2 + $0x60] sm:$0xff]
    %v3250 = vld [vmem:[#allocation2 + $0x68] sm:$0xff]
    %v3251 = vld [vmem:[#allocation2 + $0x70] sm:$0xff]
    %v3252 = vld [vmem:[#allocation2 + $0x78] sm:$0xff]
    %v3253 = vld [vmem:[#allocation2 + $0x80] sm:$0xff]
    %v3254 = vld [vmem:[#allocation2 + $0x88] sm:$0xff]
    %v3255 = vld [vmem:[#allocation2 + $0x90] sm:$0xff]
    %v3256 = vld [vmem:[#allocation2 + $0x98] sm:$0xff]
    %v3257 = vld [vmem:[#allocation2 + $0xa0] sm:$0xff]
    %v3258 = vld [vmem:[#allocation2 + $0xa8] sm:$0xff]
    %v3259 = vld [vmem:[#allocation2 + $0xb0] sm:$0xff]
    %v3260 = vld [vmem:[#allocation2 + $0xb8] sm:$0xff]
    %v3261 = vld [vmem:[#allocation2 + $0xc0] sm:$0xff]
    %v3262 = vld [vmem:[#allocation2 + $0xc8] sm:$0xff]
    %v3263 = vld [vmem:[#allocation2 + $0xd0] sm:$0xff]
    %v3264 = vld [vmem:[#allocation2 + $0xd8] sm:$0xff]
    %v3265 = vld [vmem:[#allocation2 + $0xe0] sm:$0xff]
    %v3266 = vld [vmem:[#allocation2 + $0xe8] sm:$0xff]
    %v3267 = vld [vmem:[#allocation2 + $0xf0] sm:$0xff]
    %v3268 = vld [vmem:[#allocation2 + $0xf8] sm:$0xff]
    %v3269 = vld [vmem:[#allocation2 + $0x100] sm:$0xff]
    %v3270 = vld [vmem:[#allocation2 + $0x108] sm:$0xff]
    %v3271 = vld [vmem:[#allocation2 + $0x110] sm:$0xff]
    %v3272 = vld [vmem:[#allocation2 + $0x118] sm:$0xff]
    %v3273 = vld [vmem:[#allocation2 + $0x120] sm:$0xff]
    %v3274 = vld [vmem:[#allocation2 + $0x128] sm:$0xff]
    %v3275 = vld [vmem:[#allocation2 + $0x130] sm:$0xff]
    %v3276 = vld [vmem:[#allocation2 + $0x138] sm:$0xff]
    %v3277 = vld [vmem:[#allocation2 + $0x140] sm:$0xff]
    %v3278 = vld [vmem:[#allocation2 + $0x148] sm:$0xff]
    %v3279 = vld [vmem:[#allocation2 + $0x150] sm:$0xff]
    %v3280 = vld [vmem:[#allocation2 + $0x158] sm:$0xff]
    %v3281 = vld [vmem:[#allocation2 + $0x160] sm:$0xff]
    %v3282 = vld [vmem:[#allocation2 + $0x168] sm:$0xff]
    %v3283 = vld [vmem:[#allocation2 + $0x170] sm:$0xff]
    %v3284 = vld [vmem:[#allocation2 + $0x178] sm:$0xff]
    %v3285 = vld [vmem:[#allocation2 + $0x180] sm:$0xff]
    %v3286 = vld [vmem:[#allocation2 + $0x188] sm:$0xff]
    %v3287 = vld [vmem:[#allocation2 + $0x190] sm:$0xff]
    %v3288 = vld [vmem:[#allocation2 + $0x198] sm:$0xff]
    %v3289 = vld [vmem:[#allocation2 + $0x1a0] sm:$0xff]
    %v3290 = vld [vmem:[#allocation2 + $0x1a8] sm:$0xff]
    %v3291 = vld [vmem:[#allocation2 + $0x1b0] sm:$0xff]
    %v3292 = vld [vmem:[#allocation2 + $0x1b8] sm:$0xff]
    %v3293 = vld [vmem:[#allocation2 + $0x1c0] sm:$0xff]
    %v3294 = vld [vmem:[#allocation2 + $0x1c8] sm:$0xff]
    %v3295 = vld [vmem:[#allocation2 + $0x1d0] sm:$0xff]
    %v3296 = vld [vmem:[#allocation2 + $0x1d8] sm:$0xff]
    %v3297 = vld [vmem:[#allocation2 + $0x1e0] sm:$0xff]
    %v3298 = vld [vmem:[#allocation2 + $0x1e8] sm:$0xff]
    %v3299 = vld [vmem:[#allocation2 + $0x1f0] sm:$0xff]
    %v3300 = vld [vmem:[#allocation2 + $0x1f8] sm:$0xff]
    %v3301 = vld [vmem:[#allocation2 + $0x200] sm:$0xff]
    %v3302 = vld [vmem:[#allocation2 + $0x208] sm:$0xff]
    %v3303 = vld [vmem:[#allocation2 + $0x210] sm:$0xff]
    %v3304 = vld [vmem:[#allocation2 + $0x218] sm:$0xff]
    %v3305 = vld [vmem:[#allocation2 + $0x220] sm:$0xff]
    %v3306 = vld [vmem:[#allocation2 + $0x228] sm:$0xff]
    %v3307 = vld [vmem:[#allocation2 + $0x230] sm:$0xff]
    %v3308 = vld [vmem:[#allocation2 + $0x238] sm:$0xff]
    %v3309 = vld [vmem:[#allocation2 + $0x240] sm:$0xff]
    %v3310 = vld [vmem:[#allocation2 + $0x248] sm:$0xff]
    %v3311 = vld [vmem:[#allocation2 + $0x250] sm:$0xff]
    %v3312 = vld [vmem:[#allocation2 + $0x258] sm:$0xff]
    %v3313 = vld [vmem:[#allocation2 + $0x260] sm:$0xff]
    %v3314 = vld [vmem:[#allocation2 + $0x268] sm:$0xff]
    %v3315 = vld [vmem:[#allocation2 + $0x270] sm:$0xff]
    %v3316 = vld [vmem:[#allocation2 + $0x278] sm:$0xff]
    %v3317 = vld [vmem:[#allocation2 + $0x280] sm:$0xff]
    %v3318 = vld [vmem:[#allocation2 + $0x288] sm:$0xff]
    %v3319 = vld [vmem:[#allocation2 + $0x290] sm:$0xff]
    %v3320 = vld [vmem:[#allocation2 + $0x298] sm:$0xff]
    %v3321 = vld [vmem:[#allocation2 + $0x2a0] sm:$0xff]
    %v3322 = vld [vmem:[#allocation2 + $0x2a8] sm:$0xff]
    %v3323 = vld [vmem:[#allocation2 + $0x2b0] sm:$0xff]
    %v3324 = vld [vmem:[#allocation2 + $0x2b8] sm:$0xff]
    %v3325 = vld [vmem:[#allocation2 + $0x2c0] sm:$0xff]
    %v3326 = vld [vmem:[#allocation2 + $0x2c8] sm:$0xff]
    %v3327 = vld [vmem:[#allocation2 + $0x2d0] sm:$0xff]
    %v3328 = vld [vmem:[#allocation2 + $0x2d8] sm:$0xff]
    %v3329 = vld [vmem:[#allocation2 + $0x2e0] sm:$0xff]
    %v3330 = vld [vmem:[#allocation2 + $0x2e8] sm:$0x77]
    %v3425 = vunpack.c.l.b16 %v3237
    %v3426 = vunpack.c.h.b16 %v3237
    %v3427 = vunpack.c.l.b16 %v3238
    %v3428 = vunpack.c.h.b16 %v3238
    %v3429 = vunpack.c.l.b16 %v3239
    %v3430 = vunpack.c.h.b16 %v3239
    %v3431 = vunpack.c.l.b16 %v3240
    %v3432 = vunpack.c.h.b16 %v3240
    %v3433 = vunpack.c.l.b16 %v3241
    %v3434 = vunpack.c.h.b16 %v3241
    %v3435 = vunpack.c.l.b16 %v3242
    %v3436 = vunpack.c.h.b16 %v3242
    %v3437 = vunpack.c.l.b16 %v3243
    %v3438 = vunpack.c.h.b16 %v3243
    %v3439 = vunpack.c.l.b16 %v3244
    %v3440 = vunpack.c.h.b16 %v3244
    %v3441 = vunpack.c.l.b16 %v3245
    %v3442 = vunpack.c.h.b16 %v3245
    %v3443 = vunpack.c.l.b16 %v3246
    %v3444 = vunpack.c.h.b16 %v3246
    %v3445 = vunpack.c.l.b16 %v3247
    %v3446 = vunpack.c.h.b16 %v3247
    %v3447 = vunpack.c.l.b16 %v3248
    %v3448 = vunpack.c.h.b16 %v3248
    %v3449 = vunpack.c.l.b16 %v3249
    %v3450 = vunpack.c.h.b16 %v3249
    %v3451 = vunpack.c.l.b16 %v3250
    %v3452 = vunpack.c.h.b16 %v3250
    %v3453 = vunpack.c.l.b16 %v3251
    %v3454 = vunpack.c.h.b16 %v3251
    %v3455 = vunpack.c.l.b16 %v3252
    %v3456 = vunpack.c.h.b16 %v3252
    %v3457 = vunpack.c.l.b16 %v3253
    %v3458 = vunpack.c.h.b16 %v3253
    %v3459 = vunpack.c.l.b16 %v3254
    %v3460 = vunpack.c.h.b16 %v3254
    %v3461 = vunpack.c.l.b16 %v3255
    %v3462 = vunpack.c.h.b16 %v3255
    %v3463 = vunpack.c.l.b16 %v3256
    %v3464 = vunpack.c.h.b16 %v3256
    %v3465 = vunpack.c.l.b16 %v3257
    %v3466 = vunpack.c.h.b16 %v3257
    %v3467 = vunpack.c.l.b16 %v3258
    %v3468 = vunpack.c.h.b16 %v3258
    %v3469 = vunpack.c.l.b16 %v3259
    %v3470 = vunpack.c.h.b16 %v3259
    %v3471 = vunpack.c.l.b16 %v3260
    %v3472 = vunpack.c.h.b16 %v3260
    %v3473 = vunpack.c.l.b16 %v3261
    %v3474 = vunpack.c.h.b16 %v3261
    %v3475 = vunpack.c.l.b16 %v3262
    %v3476 = vunpack.c.h.b16 %v3262
    %v3477 = vunpack.c.l.b16 %v3263
    %v3478 = vunpack.c.h.b16 %v3263
    %v3479 = vunpack.c.l.b16 %v3264
    %v3480 = vunpack.c.h.b16 %v3264
    %v3481 = vunpack.c.l.b16 %v3265
    %v3482 = vunpack.c.h.b16 %v3265
    %v3483 = vunpack.c.l.b16 %v3266
    %v3484 = vunpack.c.h.b16 %v3266
    %v3485 = vunpack.c.l.b16 %v3267
    %v3486 = vunpack.c.h.b16 %v3267
    %v3487 = vunpack.c.l.b16 %v3268
    %v3488 = vunpack.c.h.b16 %v3268
    %v3489 = vunpack.c.l.b16 %v3269
    %v3490 = vunpack.c.h.b16 %v3269
    %v3491 = vunpack.c.l.b16 %v3270
    %v3492 = vunpack.c.h.b16 %v3270
    %v3493 = vunpack.c.l.b16 %v3271
    %v3494 = vunpack.c.h.b16 %v3271
    %v3495 = vunpack.c.l.b16 %v3272
    %v3496 = vunpack.c.h.b16 %v3272
    %v3497 = vunpack.c.l.b16 %v3273
    %v3498 = vunpack.c.h.b16 %v3273
    %v3499 = vunpack.c.l.b16 %v3274
    %v3500 = vunpack.c.h.b16 %v3274
    %v3501 = vunpack.c.l.b16 %v3275
    %v3502 = vunpack.c.h.b16 %v3275
    %v3503 = vunpack.c.l.b16 %v3276
    %v3504 = vunpack.c.h.b16 %v3276
    %v3505 = vunpack.c.l.b16 %v3277
    %v3506 = vunpack.c.h.b16 %v3277
    %v3507 = vunpack.c.l.b16 %v3278
    %v3508 = vunpack.c.h.b16 %v3278
    %v3509 = vunpack.c.l.b16 %v3279
    %v3510 = vunpack.c.h.b16 %v3279
    %v3511 = vunpack.c.l.b16 %v3280
    %v3512 = vunpack.c.h.b16 %v3280
    %v3513 = vunpack.c.l.b16 %v3281
    %v3514 = vunpack.c.h.b16 %v3281
    %v3515 = vunpack.c.l.b16 %v3282
    %v3516 = vunpack.c.h.b16 %v3282
    %v3517 = vunpack.c.l.b16 %v3283
    %v3518 = vunpack.c.h.b16 %v3283
    %v3519 = vunpack.c.l.b16 %v3284
    %v3520 = vunpack.c.h.b16 %v3284
    %v3521 = vunpack.c.l.b16 %v3285
    %v3522 = vunpack.c.h.b16 %v3285
    %v3523 = vunpack.c.l.b16 %v3286
    %v3524 = vunpack.c.h.b16 %v3286
    %v3525 = vunpack.c.l.b16 %v3287
    %v3526 = vunpack.c.h.b16 %v3287
    %v3527 = vunpack.c.l.b16 %v3288
    %v3528 = vunpack.c.h.b16 %v3288
    %v3529 = vunpack.c.l.b16 %v3289
    %v3530 = vunpack.c.h.b16 %v3289
    %v3531 = vunpack.c.l.b16 %v3290
    %v3532 = vunpack.c.h.b16 %v3290
    %v3533 = vunpack.c.l.b16 %v3291
    %v3534 = vunpack.c.h.b16 %v3291
    %v3535 = vunpack.c.l.b16 %v3292
    %v3536 = vunpack.c.h.b16 %v3292
    %v3537 = vunpack.c.l.b16 %v3293
    %v3538 = vunpack.c.h.b16 %v3293
    %v3539 = vunpack.c.l.b16 %v3294
    %v3540 = vunpack.c.h.b16 %v3294
    %v3541 = vunpack.c.l.b16 %v3295
    %v3542 = vunpack.c.h.b16 %v3295
    %v3543 = vunpack.c.l.b16 %v3296
    %v3544 = vunpack.c.h.b16 %v3296
    %v3545 = vunpack.c.l.b16 %v3297
    %v3546 = vunpack.c.h.b16 %v3297
    %v3547 = vunpack.c.l.b16 %v3298
    %v3548 = vunpack.c.h.b16 %v3298
    %v3549 = vunpack.c.l.b16 %v3299
    %v3550 = vunpack.c.h.b16 %v3299
    %v3551 = vunpack.c.l.b16 %v3300
    %v3552 = vunpack.c.h.b16 %v3300
    %v3553 = vunpack.c.l.b16 %v3301
    %v3554 = vunpack.c.h.b16 %v3301
    %v3555 = vunpack.c.l.b16 %v3302
    %v3556 = vunpack.c.h.b16 %v3302
    %v3557 = vunpack.c.l.b16 %v3303
    %v3558 = vunpack.c.h.b16 %v3303
    %v3559 = vunpack.c.l.b16 %v3304
    %v3560 = vunpack.c.h.b16 %v3304
    %v3561 = vunpack.c.l.b16 %v3305
    %v3562 = vunpack.c.h.b16 %v3305
    %v3563 = vunpack.c.l.b16 %v3306
    %v3564 = vunpack.c.h.b16 %v3306
    %v3565 = vunpack.c.l.b16 %v3307
    %v3566 = vunpack.c.h.b16 %v3307
    %v3567 = vunpack.c.l.b16 %v3308
    %v3568 = vunpack.c.h.b16 %v3308
    %v3569 = vunpack.c.l.b16 %v3309
    %v3570 = vunpack.c.h.b16 %v3309
    %v3571 = vunpack.c.l.b16 %v3310
    %v3572 = vunpack.c.h.b16 %v3310
    %v3573 = vunpack.c.l.b16 %v3311
    %v3574 = vunpack.c.h.b16 %v3311
    %v3575 = vunpack.c.l.b16 %v3312
    %v3576 = vunpack.c.h.b16 %v3312
    %v3577 = vunpack.c.l.b16 %v3313
    %v3578 = vunpack.c.h.b16 %v3313
    %v3579 = vunpack.c.l.b16 %v3314
    %v3580 = vunpack.c.h.b16 %v3314
    %v3581 = vunpack.c.l.b16 %v3315
    %v3582 = vunpack.c.h.b16 %v3315
    %v3583 = vunpack.c.l.b16 %v3316
    %v3584 = vunpack.c.h.b16 %v3316
    %v3585 = vunpack.c.l.b16 %v3317
    %v3586 = vunpack.c.h.b16 %v3317
    %v3587 = vunpack.c.l.b16 %v3318
    %v3588 = vunpack.c.h.b16 %v3318
    %v3589 = vunpack.c.l.b16 %v3319
    %v3590 = vunpack.c.h.b16 %v3319
    %v3591 = vunpack.c.l.b16 %v3320
    %v3592 = vunpack.c.h.b16 %v3320
    %v3593 = vunpack.c.l.b16 %v3321
    %v3594 = vunpack.c.h.b16 %v3321
    %v3595 = vunpack.c.l.b16 %v3322
    %v3596 = vunpack.c.h.b16 %v3322
    %v3597 = vunpack.c.l.b16 %v3323
    %v3598 = vunpack.c.h.b16 %v3323
    %v3599 = vunpack.c.l.b16 %v3324
    %v3600 = vunpack.c.h.b16 %v3324
    %v3601 = vunpack.c.l.b16 %v3325
    %v3602 = vunpack.c.h.b16 %v3325
    %v3603 = vunpack.c.l.b16 %v3326
    %v3604 = vunpack.c.h.b16 %v3326
    %v3605 = vunpack.c.l.b16 %v3327
    %v3606 = vunpack.c.h.b16 %v3327
    %v3607 = vunpack.c.l.b16 %v3328
    %v3608 = vunpack.c.h.b16 %v3328
    %v3609 = vunpack.c.l.b16 %v3329
    %v3610 = vunpack.c.h.b16 %v3329
    %v3611 = vunpack.c.l.b16 %v3330
    %v3612 = vunpack.c.h.b16 %v3330
    %v3613 = vpack.c.b16 %v3427, %v3425
    %v3614 = vpack.c.b16 %v3428, %v3426
    %v3615 = vpack.c.b16 %v3431, %v3429
    %v3616 = vpack.c.b16 %v3432, %v3430
    %v3617 = vpack.c.b16 %v3435, %v3433
    %v3618 = vpack.c.b16 %v3436, %v3434
    %v3619 = vpack.c.b16 %v3439, %v3437
    %v3620 = vpack.c.b16 %v3440, %v3438
    %v3621 = vpack.c.b16 %v3443, %v3441
    %v3622 = vpack.c.b16 %v3444, %v3442
    %v3623 = vpack.c.b16 %v3447, %v3445
    %v3624 = vpack.c.b16 %v3448, %v3446
    %v3625 = vpack.c.b16 %v3451, %v3449
    %v3626 = vpack.c.b16 %v3452, %v3450
    %v3627 = vpack.c.b16 %v3455, %v3453
    %v3628 = vpack.c.b16 %v3456, %v3454
    %v3629 = vpack.c.b16 %v3459, %v3457
    %v3630 = vpack.c.b16 %v3460, %v3458
    %v3631 = vpack.c.b16 %v3463, %v3461
    %v3632 = vpack.c.b16 %v3464, %v3462
    %v3633 = vpack.c.b16 %v3467, %v3465
    %v3634 = vpack.c.b16 %v3468, %v3466
    %v3635 = vpack.c.b16 %v3471, %v3469
    %v3636 = vpack.c.b16 %v3472, %v3470
    %v3637 = vpack.c.b16 %v3475, %v3473
    %v3638 = vpack.c.b16 %v3476, %v3474
    %v3639 = vpack.c.b16 %v3479, %v3477
    %v3640 = vpack.c.b16 %v3480, %v3478
    %v3641 = vpack.c.b16 %v3483, %v3481
    %v3642 = vpack.c.b16 %v3484, %v3482
    %v3643 = vpack.c.b16 %v3487, %v3485
    %v3644 = vpack.c.b16 %v3488, %v3486
    %v3645 = vpack.c.b16 %v3491, %v3489
    %v3646 = vpack.c.b16 %v3492, %v3490
    %v3647 = vpack.c.b16 %v3495, %v3493
    %v3648 = vpack.c.b16 %v3496, %v3494
    %v3649 = vpack.c.b16 %v3499, %v3497
    %v3650 = vpack.c.b16 %v3500, %v3498
    %v3651 = vpack.c.b16 %v3503, %v3501
    %v3652 = vpack.c.b16 %v3504, %v3502
    %v3653 = vpack.c.b16 %v3507, %v3505
    %v3654 = vpack.c.b16 %v3508, %v3506
    %v3655 = vpack.c.b16 %v3511, %v3509
    %v3656 = vpack.c.b16 %v3512, %v3510
    %v3657 = vpack.c.b16 %v3515, %v3513
    %v3658 = vpack.c.b16 %v3516, %v3514
    %v3659 = vpack.c.b16 %v3519, %v3517
    %v3660 = vpack.c.b16 %v3520, %v3518
    %v3661 = vpack.c.b16 %v3523, %v3521
    %v3662 = vpack.c.b16 %v3524, %v3522
    %v3663 = vpack.c.b16 %v3527, %v3525
    %v3664 = vpack.c.b16 %v3528, %v3526
    %v3665 = vpack.c.b16 %v3531, %v3529
    %v3666 = vpack.c.b16 %v3532, %v3530
    %v3667 = vpack.c.b16 %v3535, %v3533
    %v3668 = vpack.c.b16 %v3536, %v3534
    %v3669 = vpack.c.b16 %v3539, %v3537
    %v3670 = vpack.c.b16 %v3540, %v3538
    %v3671 = vpack.c.b16 %v3543, %v3541
    %v3672 = vpack.c.b16 %v3544, %v3542
    %v3673 = vpack.c.b16 %v3547, %v3545
    %v3674 = vpack.c.b16 %v3548, %v3546
    %v3675 = vpack.c.b16 %v3551, %v3549
    %v3676 = vpack.c.b16 %v3552, %v3550
    %v3677 = vpack.c.b16 %v3555, %v3553
    %v3678 = vpack.c.b16 %v3556, %v3554
    %v3679 = vpack.c.b16 %v3559, %v3557
    %v3680 = vpack.c.b16 %v3560, %v3558
    %v3681 = vpack.c.b16 %v3563, %v3561
    %v3682 = vpack.c.b16 %v3564, %v3562
    %v3683 = vpack.c.b16 %v3567, %v3565
    %v3684 = vpack.c.b16 %v3568, %v3566
    %v3685 = vpack.c.b16 %v3571, %v3569
    %v3686 = vpack.c.b16 %v3572, %v3570
    %v3687 = vpack.c.b16 %v3575, %v3573
    %v3688 = vpack.c.b16 %v3576, %v3574
    %v3689 = vpack.c.b16 %v3579, %v3577
    %v3690 = vpack.c.b16 %v3580, %v3578
    %v3691 = vpack.c.b16 %v3583, %v3581
    %v3692 = vpack.c.b16 %v3584, %v3582
    %v3693 = vpack.c.b16 %v3587, %v3585
    %v3694 = vpack.c.b16 %v3588, %v3586
    %v3695 = vpack.c.b16 %v3591, %v3589
    %v3696 = vpack.c.b16 %v3592, %v3590
    %v3697 = vpack.c.b16 %v3595, %v3593
    %v3698 = vpack.c.b16 %v3596, %v3594
    %v3699 = vpack.c.b16 %v3599, %v3597
    %v3700 = vpack.c.b16 %v3600, %v3598
    %v3701 = vpack.c.b16 %v3603, %v3601
    %v3702 = vpack.c.b16 %v3604, %v3602
    %v3703 = vpack.c.b16 %v3607, %v3605
    %v3704 = vpack.c.b16 %v3608, %v3606
    %v3705 = vpack.c.b16 %v3611, %v3609
    %v3706 = vpack.c.b16 %v3612, %v3610
    %vm3799 = vcmask 900096
    %v3801 = vsel %vm3799, %v3221, 0
    %vm3803 = vcmask 1046528
    %v3805 = vsel %vm3803, %v3705, 0
    %v3808 = vsel %vm3803, %v3706, 0
    %3810 = vmatprep.subr.bf16.mxu0 %v3628
    %3811 = vmatpush1.bf16.msra.mxu0 %v3627
    %3812 = vmatprep.subr.bf16.mxu0 %v3626
    %3813 = vmatpush1.bf16.msra.mxu0 %v3625
    %3814 = vmatprep.subr.bf16.mxu0 %v3624
    %3815 = vmatpush1.bf16.msra.mxu0 %v3623
    %3816 = vmatprep.subr.bf16.mxu0 %v3622
    %3817 = vmatpush1.bf16.msra.mxu0 %v3621
    %3818 = vmatprep.subr.bf16.mxu0 %v3620
    %3819 = vmatpush1.bf16.msra.mxu0 %v3619
    %3820 = vmatprep.subr.bf16.mxu0 %v3618
    %3821 = vmatpush1.bf16.msra.mxu0 %v3617
    %3822 = vmatprep.subr.bf16.mxu0 %v3616
    %3823 = vmatpush1.bf16.msra.mxu0 %v3615
    %3824 = vmatprep.subr.bf16.mxu0 %v3614
    %3825 = vmatpush1.bf16.msra.mxu0 %v3613
    %3826 = vmatprep.subr.bf16.mxu0 %v3644
    %3827 = vmatpush2.bf16.msra.mxu0 %v3643
    %3828 = vmatprep.subr.bf16.mxu0 %v3642
    %3829 = vmatpush2.bf16.msra.mxu0 %v3641
    %3830 = vmatprep.subr.bf16.mxu0 %v3640
    %3831 = vmatpush2.bf16.msra.mxu0 %v3639
    %3832 = vmatprep.subr.bf16.mxu0 %v3638
    %3833 = vmatpush2.bf16.msra.mxu0 %v3637
    %3834 = vmatprep.subr.bf16.mxu0 %v3636
    %3835 = vmatpush2.bf16.msra.mxu0 %v3635
    %3836 = vmatprep.subr.bf16.mxu0 %v3634
    %3837 = vmatpush2.bf16.msra.mxu0 %v3633
    %3838 = vmatprep.subr.bf16.mxu0 %v3632
    %3839 = vmatpush2.bf16.msra.mxu0 %v3631
    %3840 = vmatprep.subr.bf16.mxu0 %v3630
    %3841 = vmatpush2.bf16.msra.mxu0 %v3629
    %3842 = vmatprep.mubr.bf16.mxu0 %v3225
    %3843 = vmatmul.mubr.bf16.gmra.mxu0 %v3173
    %v3844 = vpop.f32.mrf.mxu0
    %v3845 = vadd.f32 0.0, %v3844
    %v3846 = vpop.f32.mrf.mxu0
    %v3847 = vadd.f32 0.0, %v3846
    %v3848 = vpop.f32.mrf.mxu0
    %v3849 = vpop.f32.mrf.mxu0
    %3850 = vdwg.mxu0
    %3851 = vmatprep.subr.bf16.mxu0 %v3660
    %3852 = vmatpush1.bf16.msra.mxu0 %v3659
    %3853 = vmatprep.subr.bf16.mxu0 %v3658
    %3854 = vmatpush1.bf16.msra.mxu0 %v3657
    %3855 = vmatprep.subr.bf16.mxu0 %v3656
    %3856 = vmatpush1.bf16.msra.mxu0 %v3655
    %3857 = vmatprep.subr.bf16.mxu0 %v3654
    %3858 = vmatpush1.bf16.msra.mxu0 %v3653
    %3859 = vmatprep.subr.bf16.mxu0 %v3652
    %3860 = vmatpush1.bf16.msra.mxu0 %v3651
    %3861 = vmatprep.subr.bf16.mxu0 %v3650
    %3862 = vmatpush1.bf16.msra.mxu0 %v3649
    %3863 = vmatprep.subr.bf16.mxu0 %v3648
    %3864 = vmatpush1.bf16.msra.mxu0 %v3647
    %3865 = vmatprep.subr.bf16.mxu0 %v3646
    %3866 = vmatpush1.bf16.msra.mxu0 %v3645
    %3867 = vmatprep.subr.bf16.mxu0 %v3676
    %3868 = vmatpush2.bf16.msra.mxu0 %v3675
    %3869 = vmatprep.subr.bf16.mxu0 %v3674
    %3870 = vmatpush2.bf16.msra.mxu0 %v3673
    %3871 = vmatprep.subr.bf16.mxu0 %v3672
    %3872 = vmatpush2.bf16.msra.mxu0 %v3671
    %3873 = vmatprep.subr.bf16.mxu0 %v3670
    %3874 = vmatpush2.bf16.msra.mxu0 %v3669
    %3875 = vmatprep.subr.bf16.mxu0 %v3668
    %3876 = vmatpush2.bf16.msra.mxu0 %v3667
    %3877 = vmatprep.subr.bf16.mxu0 %v3666
    %3878 = vmatpush2.bf16.msra.mxu0 %v3665
    %3879 = vmatprep.subr.bf16.mxu0 %v3664
    %3880 = vmatpush2.bf16.msra.mxu0 %v3663
    %3881 = vmatprep.subr.bf16.mxu0 %v3662
    %3882 = vmatpush2.bf16.msra.mxu0 %v3661
    %3883 = vmatprep.mubr.bf16.mxu0 %v3212
    %3884 = vmatmul.mubr.bf16.gmra.mxu0 %v3230
    %v3885 = vpop.f32.mrf.mxu0
    %v3886 = vadd.f32 %v3845, %v3885
    %v3887 = vpop.f32.mrf.mxu0
    %v3888 = vadd.f32 %v3847, %v3887
    %v3889 = vpop.f32.mrf.mxu0
    %v3890 = vpop.f32.mrf.mxu0
    %3891 = vdwg.mxu0
    %3892 = vmatprep.subr.bf16.mxu0 %v3692
    %3893 = vmatpush1.bf16.msra.mxu0 %v3691
    %3894 = vmatprep.subr.bf16.mxu0 %v3690
    %3895 = vmatpush1.bf16.msra.mxu0 %v3689
    %3896 = vmatprep.subr.bf16.mxu0 %v3688
    %3897 = vmatpush1.bf16.msra.mxu0 %v3687
    %3898 = vmatprep.subr.bf16.mxu0 %v3686
    %3899 = vmatpush1.bf16.msra.mxu0 %v3685
    %3900 = vmatprep.subr.bf16.mxu0 %v3684
    %3901 = vmatpush1.bf16.msra.mxu0 %v3683
    %3902 = vmatprep.subr.bf16.mxu0 %v3682
    %3903 = vmatpush1.bf16.msra.mxu0 %v3681
    %3904 = vmatprep.subr.bf16.mxu0 %v3680
    %3905 = vmatpush1.bf16.msra.mxu0 %v3679
    %3906 = vmatprep.subr.bf16.mxu0 %v3678
    %3907 = vmatpush1.bf16.msra.mxu0 %v3677
    %3908 = vmatprep.subr.bf16.mxu0 0
    %3909 = vmatpush2.bf16.msra.mxu0 0
    %3910 = vmatprep.subr.bf16.mxu0 %v3808
    %3911 = vmatpush2.bf16.msra.mxu0 %v3805
    %3912 = vmatprep.subr.bf16.mxu0 %v3704
    %3913 = vmatpush2.bf16.msra.mxu0 %v3703
    %3914 = vmatprep.subr.bf16.mxu0 %v3702
    %3915 = vmatpush2.bf16.msra.mxu0 %v3701
    %3916 = vmatprep.subr.bf16.mxu0 %v3700
    %3917 = vmatpush2.bf16.msra.mxu0 %v3699
    %3918 = vmatprep.subr.bf16.mxu0 %v3698
    %3919 = vmatpush2.bf16.msra.mxu0 %v3697
    %3920 = vmatprep.subr.bf16.mxu0 %v3696
    %3921 = vmatpush2.bf16.msra.mxu0 %v3695
    %3922 = vmatprep.subr.bf16.mxu0 %v3694
    %3923 = vmatpush2.bf16.msra.mxu0 %v3693
    %3924 = vmatprep.mubr.bf16.mxu0 %v3801
    %3925 = vmatmul.mubr.bf16.gmra.mxu0 %v3235
    %v3926 = vpop.f32.mrf.mxu0
    %v3927 = vadd.f32 %v3886, %v3926
    %v3928 = vpop.f32.mrf.mxu0
    %v3929 = vadd.f32 %v3888, %v3928
    %v3930 = vpop.f32.mrf.mxu0
    %v3931 = vpop.f32.mrf.mxu0
    %3932 = vdwg.mxu0
    %3935 = vrot.lane.b32.xlu0 %v3174, 68
    %v3936 = vpop.permute.xlu0 %3935
    %3937 = vrot.lane.b32.xlu0 %v3175, 68
    %v3938 = vpop.permute.xlu0 %3937
    %vm3939 = vcmask 556032
    %v3940 = vsel %vm3939, %v3936, %v3938
    %3943 = vrot.lane.b32.xlu0 %v3180, 127
    %v3944 = vpop.permute.xlu0 %3943
    %3945 = vrot.lane.b32.xlu0 %v3181, 127
    %v3946 = vpop.permute.xlu0 %3945
    %vm3947 = vcmask 1039360
    %v3948 = vsel %vm3947, %v3944, %v3946
    %3950 = vrot.lane.b32.xlu0 %v3186, 59
    %v3951 = vpop.permute.xlu0 %3950
    %3952 = vrot.lane.b32.xlu0 %v3187, 59
    %v3953 = vpop.permute.xlu0 %3952
    %vm3954 = vcmask 482304
    %v3955 = vsel %vm3954, %v3951, %v3953
    %3958 = vrot.lane.b32.xlu0 %v3192, 119
    %v3959 = vpop.permute.xlu0 %3958
    %3960 = vrot.lane.b32.xlu0 %v3193, 119
    %v3961 = vpop.permute.xlu0 %3960
    %vm3962 = vcmask 973824
    %v3963 = vsel %vm3962, %v3959, %v3961
    %vm3964 = vcmask 482304
    %v3967 = vsel %vm3964, %v3938, %v3948
    %vm3969 = vcmask 965632
    %v3972 = vsel %vm3969, %v3946, %v3951
    %vm3974 = vcmask 408576
    %v3977 = vsel %vm3974, %v3953, %v3963
    %s3979 = scalar_lea.vmem [#allocation2], 752
    %v3980 = vld [vmem:[%s3979] sm:$0xff]
    %v3981 = vld [vmem:[%s3979 + $0x8] sm:$0xff]
    %v3982 = vld [vmem:[%s3979 + $0x10] sm:$0xff]
    %v3983 = vld [vmem:[%s3979 + $0x18] sm:$0xff]
    %v3984 = vld [vmem:[%s3979 + $0x20] sm:$0xff]
    %v3985 = vld [vmem:[%s3979 + $0x28] sm:$0xff]
    %v3986 = vld [vmem:[%s3979 + $0x30] sm:$0xff]
    %v3987 = vld [vmem:[%s3979 + $0x38] sm:$0xff]
    %v3988 = vld [vmem:[%s3979 + $0x40] sm:$0xff]
    %v3989 = vld [vmem:[%s3979 + $0x48] sm:$0xff]
    %v3990 = vld [vmem:[%s3979 + $0x50] sm:$0xff]
    %v3991 = vld [vmem:[%s3979 + $0x58] sm:$0xff]
    %v3992 = vld [vmem:[%s3979 + $0x60] sm:$0xff]
    %v3993 = vld [vmem:[%s3979 + $0x68] sm:$0xff]
    %v3994 = vld [vmem:[%s3979 + $0x70] sm:$0xff]
    %v3995 = vld [vmem:[%s3979 + $0x78] sm:$0xff]
    %v3996 = vld [vmem:[%s3979 + $0x80] sm:$0xff]
    %v3997 = vld [vmem:[%s3979 + $0x88] sm:$0xff]
    %v3998 = vld [vmem:[%s3979 + $0x90] sm:$0xff]
    %v3999 = vld [vmem:[%s3979 + $0x98] sm:$0xff]
    %v4000 = vld [vmem:[%s3979 + $0xa0] sm:$0xff]
    %v4001 = vld [vmem:[%s3979 + $0xa8] sm:$0xff]
    %v4002 = vld [vmem:[%s3979 + $0xb0] sm:$0xff]
    %v4003 = vld [vmem:[%s3979 + $0xb8] sm:$0xff]
    %v4004 = vld [vmem:[%s3979 + $0xc0] sm:$0xff]
    %v4005 = vld [vmem:[%s3979 + $0xc8] sm:$0xff]
    %v4006 = vld [vmem:[%s3979 + $0xd0] sm:$0xff]
    %v4007 = vld [vmem:[%s3979 + $0xd8] sm:$0xff]
    %v4008 = vld [vmem:[%s3979 + $0xe0] sm:$0xff]
    %v4009 = vld [vmem:[%s3979 + $0xe8] sm:$0xff]
    %v4010 = vld [vmem:[%s3979 + $0xf0] sm:$0xff]
    %v4011 = vld [vmem:[%s3979 + $0xf8] sm:$0xff]
    %v4012 = vld [vmem:[%s3979 + $0x100] sm:$0xff]
    %v4013 = vld [vmem:[%s3979 + $0x108] sm:$0xff]
    %v4014 = vld [vmem:[%s3979 + $0x110] sm:$0xff]
    %v4015 = vld [vmem:[%s3979 + $0x118] sm:$0xff]
    %v4016 = vld [vmem:[%s3979 + $0x120] sm:$0xff]
    %v4017 = vld [vmem:[%s3979 + $0x128] sm:$0xff]
    %v4018 = vld [vmem:[%s3979 + $0x130] sm:$0xff]
    %v4019 = vld [vmem:[%s3979 + $0x138] sm:$0xff]
    %v4020 = vld [vmem:[%s3979 + $0x140] sm:$0xff]
    %v4021 = vld [vmem:[%s3979 + $0x148] sm:$0xff]
    %v4022 = vld [vmem:[%s3979 + $0x150] sm:$0xff]
    %v4023 = vld [vmem:[%s3979 + $0x158] sm:$0xff]
    %v4024 = vld [vmem:[%s3979 + $0x160] sm:$0xff]
    %v4025 = vld [vmem:[%s3979 + $0x168] sm:$0xff]
    %v4026 = vld [vmem:[%s3979 + $0x170] sm:$0xff]
    %v4027 = vld [vmem:[%s3979 + $0x178] sm:$0xff]
    %v4028 = vld [vmem:[%s3979 + $0x180] sm:$0xff]
    %v4029 = vld [vmem:[%s3979 + $0x188] sm:$0xff]
    %v4030 = vld [vmem:[%s3979 + $0x190] sm:$0xff]
    %v4031 = vld [vmem:[%s3979 + $0x198] sm:$0xff]
    %v4032 = vld [vmem:[%s3979 + $0x1a0] sm:$0xff]
    %v4033 = vld [vmem:[%s3979 + $0x1a8] sm:$0xff]
    %v4034 = vld [vmem:[%s3979 + $0x1b0] sm:$0xff]
    %v4035 = vld [vmem:[%s3979 + $0x1b8] sm:$0xff]
    %v4036 = vld [vmem:[%s3979 + $0x1c0] sm:$0xff]
    %v4037 = vld [vmem:[%s3979 + $0x1c8] sm:$0xff]
    %v4038 = vld [vmem:[%s3979 + $0x1d0] sm:$0xff]
    %v4039 = vld [vmem:[%s3979 + $0x1d8] sm:$0xff]
    %v4040 = vld [vmem:[%s3979 + $0x1e0] sm:$0xff]
    %v4041 = vld [vmem:[%s3979 + $0x1e8] sm:$0xff]
    %v4042 = vld [vmem:[%s3979 + $0x1f0] sm:$0xff]
    %v4043 = vld [vmem:[%s3979 + $0x1f8] sm:$0xff]
    %v4044 = vld [vmem:[%s3979 + $0x200] sm:$0xff]
    %v4045 = vld [vmem:[%s3979 + $0x208] sm:$0xff]
    %v4046 = vld [vmem:[%s3979 + $0x210] sm:$0xff]
    %v4047 = vld [vmem:[%s3979 + $0x218] sm:$0xff]
    %v4048 = vld [vmem:[%s3979 + $0x220] sm:$0xff]
    %v4049 = vld [vmem:[%s3979 + $0x228] sm:$0xff]
    %v4050 = vld [vmem:[%s3979 + $0x230] sm:$0xff]
    %v4051 = vld [vmem:[%s3979 + $0x238] sm:$0xff]
    %v4052 = vld [vmem:[%s3979 + $0x240] sm:$0xff]
    %v4053 = vld [vmem:[%s3979 + $0x248] sm:$0xff]
    %v4054 = vld [vmem:[%s3979 + $0x250] sm:$0xff]
    %v4055 = vld [vmem:[%s3979 + $0x258] sm:$0xff]
    %v4056 = vld [vmem:[%s3979 + $0x260] sm:$0xff]
    %v4057 = vld [vmem:[%s3979 + $0x268] sm:$0xff]
    %v4058 = vld [vmem:[%s3979 + $0x270] sm:$0xff]
    %v4059 = vld [vmem:[%s3979 + $0x278] sm:$0xff]
    %v4060 = vld [vmem:[%s3979 + $0x280] sm:$0xff]
    %v4061 = vld [vmem:[%s3979 + $0x288] sm:$0xff]
    %v4062 = vld [vmem:[%s3979 + $0x290] sm:$0xff]
    %v4063 = vld [vmem:[%s3979 + $0x298] sm:$0xff]
    %v4064 = vld [vmem:[%s3979 + $0x2a0] sm:$0xff]
    %v4065 = vld [vmem:[%s3979 + $0x2a8] sm:$0xff]
    %v4066 = vld [vmem:[%s3979 + $0x2b0] sm:$0xff]
    %v4067 = vld [vmem:[%s3979 + $0x2b8] sm:$0xff]
    %v4068 = vld [vmem:[%s3979 + $0x2c0] sm:$0xff]
    %v4069 = vld [vmem:[%s3979 + $0x2c8] sm:$0xff]
    %v4070 = vld [vmem:[%s3979 + $0x2d0] sm:$0xff]
    %v4071 = vld [vmem:[%s3979 + $0x2d8] sm:$0xff]
    %v4072 = vld [vmem:[%s3979 + $0x2e0] sm:$0xff]
    %v4073 = vld [vmem:[%s3979 + $0x2e8] sm:$0x77]
    %v4168 = vunpack.c.l.b16 %v3980
    %v4169 = vunpack.c.h.b16 %v3980
    %v4170 = vunpack.c.l.b16 %v3981
    %v4171 = vunpack.c.h.b16 %v3981
    %v4172 = vunpack.c.l.b16 %v3982
    %v4173 = vunpack.c.h.b16 %v3982
    %v4174 = vunpack.c.l.b16 %v3983
    %v4175 = vunpack.c.h.b16 %v3983
    %v4176 = vunpack.c.l.b16 %v3984
    %v4177 = vunpack.c.h.b16 %v3984
    %v4178 = vunpack.c.l.b16 %v3985
    %v4179 = vunpack.c.h.b16 %v3985
    %v4180 = vunpack.c.l.b16 %v3986
    %v4181 = vunpack.c.h.b16 %v3986
    %v4182 = vunpack.c.l.b16 %v3987
    %v4183 = vunpack.c.h.b16 %v3987
    %v4184 = vunpack.c.l.b16 %v3988
    %v4185 = vunpack.c.h.b16 %v3988
    %v4186 = vunpack.c.l.b16 %v3989
    %v4187 = vunpack.c.h.b16 %v3989
    %v4188 = vunpack.c.l.b16 %v3990
    %v4189 = vunpack.c.h.b16 %v3990
    %v4190 = vunpack.c.l.b16 %v3991
    %v4191 = vunpack.c.h.b16 %v3991
    %v4192 = vunpack.c.l.b16 %v3992
    %v4193 = vunpack.c.h.b16 %v3992
    %v4194 = vunpack.c.l.b16 %v3993
    %v4195 = vunpack.c.h.b16 %v3993
    %v4196 = vunpack.c.l.b16 %v3994
    %v4197 = vunpack.c.h.b16 %v3994
    %v4198 = vunpack.c.l.b16 %v3995
    %v4199 = vunpack.c.h.b16 %v3995
    %v4200 = vunpack.c.l.b16 %v3996
    %v4201 = vunpack.c.h.b16 %v3996
    %v4202 = vunpack.c.l.b16 %v3997
    %v4203 = vunpack.c.h.b16 %v3997
    %v4204 = vunpack.c.l.b16 %v3998
    %v4205 = vunpack.c.h.b16 %v3998
    %v4206 = vunpack.c.l.b16 %v3999
    %v4207 = vunpack.c.h.b16 %v3999
    %v4208 = vunpack.c.l.b16 %v4000
    %v4209 = vunpack.c.h.b16 %v4000
    %v4210 = vunpack.c.l.b16 %v4001
    %v4211 = vunpack.c.h.b16 %v4001
    %v4212 = vunpack.c.l.b16 %v4002
    %v4213 = vunpack.c.h.b16 %v4002
    %v4214 = vunpack.c.l.b16 %v4003
    %v4215 = vunpack.c.h.b16 %v4003
    %v4216 = vunpack.c.l.b16 %v4004
    %v4217 = vunpack.c.h.b16 %v4004
    %v4218 = vunpack.c.l.b16 %v4005
    %v4219 = vunpack.c.h.b16 %v4005
    %v4220 = vunpack.c.l.b16 %v4006
    %v4221 = vunpack.c.h.b16 %v4006
    %v4222 = vunpack.c.l.b16 %v4007
    %v4223 = vunpack.c.h.b16 %v4007
    %v4224 = vunpack.c.l.b16 %v4008
    %v4225 = vunpack.c.h.b16 %v4008
    %v4226 = vunpack.c.l.b16 %v4009
    %v4227 = vunpack.c.h.b16 %v4009
    %v4228 = vunpack.c.l.b16 %v4010
    %v4229 = vunpack.c.h.b16 %v4010
    %v4230 = vunpack.c.l.b16 %v4011
    %v4231 = vunpack.c.h.b16 %v4011
    %v4232 = vunpack.c.l.b16 %v4012
    %v4233 = vunpack.c.h.b16 %v4012
    %v4234 = vunpack.c.l.b16 %v4013
    %v4235 = vunpack.c.h.b16 %v4013
    %v4236 = vunpack.c.l.b16 %v4014
    %v4237 = vunpack.c.h.b16 %v4014
    %v4238 = vunpack.c.l.b16 %v4015
    %v4239 = vunpack.c.h.b16 %v4015
    %v4240 = vunpack.c.l.b16 %v4016
    %v4241 = vunpack.c.h.b16 %v4016
    %v4242 = vunpack.c.l.b16 %v4017
    %v4243 = vunpack.c.h.b16 %v4017
    %v4244 = vunpack.c.l.b16 %v4018
    %v4245 = vunpack.c.h.b16 %v4018
    %v4246 = vunpack.c.l.b16 %v4019
    %v4247 = vunpack.c.h.b16 %v4019
    %v4248 = vunpack.c.l.b16 %v4020
    %v4249 = vunpack.c.h.b16 %v4020
    %v4250 = vunpack.c.l.b16 %v4021
    %v4251 = vunpack.c.h.b16 %v4021
    %v4252 = vunpack.c.l.b16 %v4022
    %v4253 = vunpack.c.h.b16 %v4022
    %v4254 = vunpack.c.l.b16 %v4023
    %v4255 = vunpack.c.h.b16 %v4023
    %v4256 = vunpack.c.l.b16 %v4024
    %v4257 = vunpack.c.h.b16 %v4024
    %v4258 = vunpack.c.l.b16 %v4025
    %v4259 = vunpack.c.h.b16 %v4025
    %v4260 = vunpack.c.l.b16 %v4026
    %v4261 = vunpack.c.h.b16 %v4026
    %v4262 = vunpack.c.l.b16 %v4027
    %v4263 = vunpack.c.h.b16 %v4027
    %v4264 = vunpack.c.l.b16 %v4028
    %v4265 = vunpack.c.h.b16 %v4028
    %v4266 = vunpack.c.l.b16 %v4029
    %v4267 = vunpack.c.h.b16 %v4029
    %v4268 = vunpack.c.l.b16 %v4030
    %v4269 = vunpack.c.h.b16 %v4030
    %v4270 = vunpack.c.l.b16 %v4031
    %v4271 = vunpack.c.h.b16 %v4031
    %v4272 = vunpack.c.l.b16 %v4032
    %v4273 = vunpack.c.h.b16 %v4032
    %v4274 = vunpack.c.l.b16 %v4033
    %v4275 = vunpack.c.h.b16 %v4033
    %v4276 = vunpack.c.l.b16 %v4034
    %v4277 = vunpack.c.h.b16 %v4034
    %v4278 = vunpack.c.l.b16 %v4035
    %v4279 = vunpack.c.h.b16 %v4035
    %v4280 = vunpack.c.l.b16 %v4036
    %v4281 = vunpack.c.h.b16 %v4036
    %v4282 = vunpack.c.l.b16 %v4037
    %v4283 = vunpack.c.h.b16 %v4037
    %v4284 = vunpack.c.l.b16 %v4038
    %v4285 = vunpack.c.h.b16 %v4038
    %v4286 = vunpack.c.l.b16 %v4039
    %v4287 = vunpack.c.h.b16 %v4039
    %v4288 = vunpack.c.l.b16 %v4040
    %v4289 = vunpack.c.h.b16 %v4040
    %v4290 = vunpack.c.l.b16 %v4041
    %v4291 = vunpack.c.h.b16 %v4041
    %v4292 = vunpack.c.l.b16 %v4042
    %v4293 = vunpack.c.h.b16 %v4042
    %v4294 = vunpack.c.l.b16 %v4043
    %v4295 = vunpack.c.h.b16 %v4043
    %v4296 = vunpack.c.l.b16 %v4044
    %v4297 = vunpack.c.h.b16 %v4044
    %v4298 = vunpack.c.l.b16 %v4045
    %v4299 = vunpack.c.h.b16 %v4045
    %v4300 = vunpack.c.l.b16 %v4046
    %v4301 = vunpack.c.h.b16 %v4046
    %v4302 = vunpack.c.l.b16 %v4047
    %v4303 = vunpack.c.h.b16 %v4047
    %v4304 = vunpack.c.l.b16 %v4048
    %v4305 = vunpack.c.h.b16 %v4048
    %v4306 = vunpack.c.l.b16 %v4049
    %v4307 = vunpack.c.h.b16 %v4049
    %v4308 = vunpack.c.l.b16 %v4050
    %v4309 = vunpack.c.h.b16 %v4050
    %v4310 = vunpack.c.l.b16 %v4051
    %v4311 = vunpack.c.h.b16 %v4051
    %v4312 = vunpack.c.l.b16 %v4052
    %v4313 = vunpack.c.h.b16 %v4052
    %v4314 = vunpack.c.l.b16 %v4053
    %v4315 = vunpack.c.h.b16 %v4053
    %v4316 = vunpack.c.l.b16 %v4054
    %v4317 = vunpack.c.h.b16 %v4054
    %v4318 = vunpack.c.l.b16 %v4055
    %v4319 = vunpack.c.h.b16 %v4055
    %v4320 = vunpack.c.l.b16 %v4056
    %v4321 = vunpack.c.h.b16 %v4056
    %v4322 = vunpack.c.l.b16 %v4057
    %v4323 = vunpack.c.h.b16 %v4057
    %v4324 = vunpack.c.l.b16 %v4058
    %v4325 = vunpack.c.h.b16 %v4058
    %v4326 = vunpack.c.l.b16 %v4059
    %v4327 = vunpack.c.h.b16 %v4059
    %v4328 = vunpack.c.l.b16 %v4060
    %v4329 = vunpack.c.h.b16 %v4060
    %v4330 = vunpack.c.l.b16 %v4061
    %v4331 = vunpack.c.h.b16 %v4061
    %v4332 = vunpack.c.l.b16 %v4062
    %v4333 = vunpack.c.h.b16 %v4062
    %v4334 = vunpack.c.l.b16 %v4063
    %v4335 = vunpack.c.h.b16 %v4063
    %v4336 = vunpack.c.l.b16 %v4064
    %v4337 = vunpack.c.h.b16 %v4064
    %v4338 = vunpack.c.l.b16 %v4065
    %v4339 = vunpack.c.h.b16 %v4065
    %v4340 = vunpack.c.l.b16 %v4066
    %v4341 = vunpack.c.h.b16 %v4066
    %v4342 = vunpack.c.l.b16 %v4067
    %v4343 = vunpack.c.h.b16 %v4067
    %v4344 = vunpack.c.l.b16 %v4068
    %v4345 = vunpack.c.h.b16 %v4068
    %v4346 = vunpack.c.l.b16 %v4069
    %v4347 = vunpack.c.h.b16 %v4069
    %v4348 = vunpack.c.l.b16 %v4070
    %v4349 = vunpack.c.h.b16 %v4070
    %v4350 = vunpack.c.l.b16 %v4071
    %v4351 = vunpack.c.h.b16 %v4071
    %v4352 = vunpack.c.l.b16 %v4072
    %v4353 = vunpack.c.h.b16 %v4072
    %v4354 = vunpack.c.l.b16 %v4073
    %v4355 = vunpack.c.h.b16 %v4073
    %v4356 = vpack.c.b16 %v4170, %v4168
    %v4357 = vpack.c.b16 %v4171, %v4169
    %v4358 = vpack.c.b16 %v4174, %v4172
    %v4359 = vpack.c.b16 %v4175, %v4173
    %v4360 = vpack.c.b16 %v4178, %v4176
    %v4361 = vpack.c.b16 %v4179, %v4177
    %v4362 = vpack.c.b16 %v4182, %v4180
    %v4363 = vpack.c.b16 %v4183, %v4181
    %v4364 = vpack.c.b16 %v4186, %v4184
    %v4365 = vpack.c.b16 %v4187, %v4185
    %v4366 = vpack.c.b16 %v4190, %v4188
    %v4367 = vpack.c.b16 %v4191, %v4189
    %v4368 = vpack.c.b16 %v4194, %v4192
    %v4369 = vpack.c.b16 %v4195, %v4193
    %v4370 = vpack.c.b16 %v4198, %v4196
    %v4371 = vpack.c.b16 %v4199, %v4197
    %v4372 = vpack.c.b16 %v4202, %v4200
    %v4373 = vpack.c.b16 %v4203, %v4201
    %v4374 = vpack.c.b16 %v4206, %v4204
    %v4375 = vpack.c.b16 %v4207, %v4205
    %v4376 = vpack.c.b16 %v4210, %v4208
    %v4377 = vpack.c.b16 %v4211, %v4209
    %v4378 = vpack.c.b16 %v4214, %v4212
    %v4379 = vpack.c.b16 %v4215, %v4213
    %v4380 = vpack.c.b16 %v4218, %v4216
    %v4381 = vpack.c.b16 %v4219, %v4217
    %v4382 = vpack.c.b16 %v4222, %v4220
    %v4383 = vpack.c.b16 %v4223, %v4221
    %v4384 = vpack.c.b16 %v4226, %v4224
    %v4385 = vpack.c.b16 %v4227, %v4225
    %v4386 = vpack.c.b16 %v4230, %v4228
    %v4387 = vpack.c.b16 %v4231, %v4229
    %v4388 = vpack.c.b16 %v4234, %v4232
    %v4389 = vpack.c.b16 %v4235, %v4233
    %v4390 = vpack.c.b16 %v4238, %v4236
    %v4391 = vpack.c.b16 %v4239, %v4237
    %v4392 = vpack.c.b16 %v4242, %v4240
    %v4393 = vpack.c.b16 %v4243, %v4241
    %v4394 = vpack.c.b16 %v4246, %v4244
    %v4395 = vpack.c.b16 %v4247, %v4245
    %v4396 = vpack.c.b16 %v4250, %v4248
    %v4397 = vpack.c.b16 %v4251, %v4249
    %v4398 = vpack.c.b16 %v4254, %v4252
    %v4399 = vpack.c.b16 %v4255, %v4253
    %v4400 = vpack.c.b16 %v4258, %v4256
    %v4401 = vpack.c.b16 %v4259, %v4257
    %v4402 = vpack.c.b16 %v4262, %v4260
    %v4403 = vpack.c.b16 %v4263, %v4261
    %v4404 = vpack.c.b16 %v4266, %v4264
    %v4405 = vpack.c.b16 %v4267, %v4265
    %v4406 = vpack.c.b16 %v4270, %v4268
    %v4407 = vpack.c.b16 %v4271, %v4269
    %v4408 = vpack.c.b16 %v4274, %v4272
    %v4409 = vpack.c.b16 %v4275, %v4273
    %v4410 = vpack.c.b16 %v4278, %v4276
    %v4411 = vpack.c.b16 %v4279, %v4277
    %v4412 = vpack.c.b16 %v4282, %v4280
    %v4413 = vpack.c.b16 %v4283, %v4281
    %v4414 = vpack.c.b16 %v4286, %v4284
    %v4415 = vpack.c.b16 %v4287, %v4285
    %v4416 = vpack.c.b16 %v4290, %v4288
    %v4417 = vpack.c.b16 %v4291, %v4289
    %v4418 = vpack.c.b16 %v4294, %v4292
    %v4419 = vpack.c.b16 %v4295, %v4293
    %v4420 = vpack.c.b16 %v4298, %v4296
    %v4421 = vpack.c.b16 %v4299, %v4297
    %v4422 = vpack.c.b16 %v4302, %v4300
    %v4423 = vpack.c.b16 %v4303, %v4301
    %v4424 = vpack.c.b16 %v4306, %v4304
    %v4425 = vpack.c.b16 %v4307, %v4305
    %v4426 = vpack.c.b16 %v4310, %v4308
    %v4427 = vpack.c.b16 %v4311, %v4309
    %v4428 = vpack.c.b16 %v4314, %v4312
    %v4429 = vpack.c.b16 %v4315, %v4313
    %v4430 = vpack.c.b16 %v4318, %v4316
    %v4431 = vpack.c.b16 %v4319, %v4317
    %v4432 = vpack.c.b16 %v4322, %v4320
    %v4433 = vpack.c.b16 %v4323, %v4321
    %v4434 = vpack.c.b16 %v4326, %v4324
    %v4435 = vpack.c.b16 %v4327, %v4325
    %v4436 = vpack.c.b16 %v4330, %v4328
    %v4437 = vpack.c.b16 %v4331, %v4329
    %v4438 = vpack.c.b16 %v4334, %v4332
    %v4439 = vpack.c.b16 %v4335, %v4333
    %v4440 = vpack.c.b16 %v4338, %v4336
    %v4441 = vpack.c.b16 %v4339, %v4337
    %v4442 = vpack.c.b16 %v4342, %v4340
    %v4443 = vpack.c.b16 %v4343, %v4341
    %v4444 = vpack.c.b16 %v4346, %v4344
    %v4445 = vpack.c.b16 %v4347, %v4345
    %v4446 = vpack.c.b16 %v4350, %v4348
    %v4447 = vpack.c.b16 %v4351, %v4349
    %v4448 = vpack.c.b16 %v4354, %v4352
    %v4449 = vpack.c.b16 %v4355, %v4353
    %v4543 = vsel %vm3799, %v3961, 0
    %v4546 = vsel %vm3803, %v4448, 0
    %v4549 = vsel %vm3803, %v4449, 0
    %4551 = vmatprep.subr.bf16.mxu0 %v4371
    %4552 = vmatpush1.bf16.msra.mxu0 %v4370
    %4553 = vmatprep.subr.bf16.mxu0 %v4369
    %4554 = vmatpush1.bf16.msra.mxu0 %v4368
    %4555 = vmatprep.subr.bf16.mxu0 %v4367
    %4556 = vmatpush1.bf16.msra.mxu0 %v4366
    %4557 = vmatprep.subr.bf16.mxu0 %v4365
    %4558 = vmatpush1.bf16.msra.mxu0 %v4364
    %4559 = vmatprep.subr.bf16.mxu0 %v4363
    %4560 = vmatpush1.bf16.msra.mxu0 %v4362
    %4561 = vmatprep.subr.bf16.mxu0 %v4361
    %4562 = vmatpush1.bf16.msra.mxu0 %v4360
    %4563 = vmatprep.subr.bf16.mxu0 %v4359
    %4564 = vmatpush1.bf16.msra.mxu0 %v4358
    %4565 = vmatprep.subr.bf16.mxu0 %v4357
    %4566 = vmatpush1.bf16.msra.mxu0 %v4356
    %4567 = vmatprep.subr.bf16.mxu0 %v4387
    %4568 = vmatpush2.bf16.msra.mxu0 %v4386
    %4569 = vmatprep.subr.bf16.mxu0 %v4385
    %4570 = vmatpush2.bf16.msra.mxu0 %v4384
    %4571 = vmatprep.subr.bf16.mxu0 %v4383
    %4572 = vmatpush2.bf16.msra.mxu0 %v4382
    %4573 = vmatprep.subr.bf16.mxu0 %v4381
    %4574 = vmatpush2.bf16.msra.mxu0 %v4380
    %4575 = vmatprep.subr.bf16.mxu0 %v4379
    %4576 = vmatpush2.bf16.msra.mxu0 %v4378
    %4577 = vmatprep.subr.bf16.mxu0 %v4377
    %4578 = vmatpush2.bf16.msra.mxu0 %v4376
    %4579 = vmatprep.subr.bf16.mxu0 %v4375
    %4580 = vmatpush2.bf16.msra.mxu0 %v4374
    %4581 = vmatprep.subr.bf16.mxu0 %v4373
    %4582 = vmatpush2.bf16.msra.mxu0 %v4372
    %4583 = vmatprep.mubr.bf16.mxu0 %v3967
    %4584 = vmatmul.mubr.bf16.gmra.mxu0 %v3940
    %v4585 = vpop.f32.mrf.mxu0
    %v4586 = vadd.f32 0.0, %v4585
    %v4587 = vpop.f32.mrf.mxu0
    %v4588 = vadd.f32 0.0, %v4587
    %v4589 = vpop.f32.mrf.mxu0
    %v4590 = vpop.f32.mrf.mxu0
    %4591 = vdwg.mxu0
    %4592 = vmatprep.subr.bf16.mxu0 %v4403
    %4593 = vmatpush1.bf16.msra.mxu0 %v4402
    %4594 = vmatprep.subr.bf16.mxu0 %v4401
    %4595 = vmatpush1.bf16.msra.mxu0 %v4400
    %4596 = vmatprep.subr.bf16.mxu0 %v4399
    %4597 = vmatpush1.bf16.msra.mxu0 %v4398
    %4598 = vmatprep.subr.bf16.mxu0 %v4397
    %4599 = vmatpush1.bf16.msra.mxu0 %v4396
    %4600 = vmatprep.subr.bf16.mxu0 %v4395
    %4601 = vmatpush1.bf16.msra.mxu0 %v4394
    %4602 = vmatprep.subr.bf16.mxu0 %v4393
    %4603 = vmatpush1.bf16.msra.mxu0 %v4392
    %4604 = vmatprep.subr.bf16.mxu0 %v4391
    %4605 = vmatpush1.bf16.msra.mxu0 %v4390
    %4606 = vmatprep.subr.bf16.mxu0 %v4389
    %4607 = vmatpush1.bf16.msra.mxu0 %v4388
    %4608 = vmatprep.subr.bf16.mxu0 %v4419
    %4609 = vmatpush2.bf16.msra.mxu0 %v4418
    %4610 = vmatprep.subr.bf16.mxu0 %v4417
    %4611 = vmatpush2.bf16.msra.mxu0 %v4416
    %4612 = vmatprep.subr.bf16.mxu0 %v4415
    %4613 = vmatpush2.bf16.msra.mxu0 %v4414
    %4614 = vmatprep.subr.bf16.mxu0 %v4413
    %4615 = vmatpush2.bf16.msra.mxu0 %v4412
    %4616 = vmatprep.subr.bf16.mxu0 %v4411
    %4617 = vmatpush2.bf16.msra.mxu0 %v4410
    %4618 = vmatprep.subr.bf16.mxu0 %v4409
    %4619 = vmatpush2.bf16.msra.mxu0 %v4408
    %4620 = vmatprep.subr.bf16.mxu0 %v4407
    %4621 = vmatpush2.bf16.msra.mxu0 %v4406
    %4622 = vmatprep.subr.bf16.mxu0 %v4405
    %4623 = vmatpush2.bf16.msra.mxu0 %v4404
    %4624 = vmatprep.mubr.bf16.mxu0 %v3955
    %4625 = vmatmul.mubr.bf16.gmra.mxu0 %v3972
    %v4626 = vpop.f32.mrf.mxu0
    %v4627 = vadd.f32 %v4586, %v4626
    %v4628 = vpop.f32.mrf.mxu0
    %v4629 = vadd.f32 %v4588, %v4628
    %v4630 = vpop.f32.mrf.mxu0
    %v4631 = vpop.f32.mrf.mxu0
    %4632 = vdwg.mxu0
    %4633 = vmatprep.subr.bf16.mxu0 %v4435
    %4634 = vmatpush1.bf16.msra.mxu0 %v4434
    %4635 = vmatprep.subr.bf16.mxu0 %v4433
    %4636 = vmatpush1.bf16.msra.mxu0 %v4432
    %4637 = vmatprep.subr.bf16.mxu0 %v4431
    %4638 = vmatpush1.bf16.msra.mxu0 %v4430
    %4639 = vmatprep.subr.bf16.mxu0 %v4429
    %4640 = vmatpush1.bf16.msra.mxu0 %v4428
    %4641 = vmatprep.subr.bf16.mxu0 %v4427
    %4642 = vmatpush1.bf16.msra.mxu0 %v4426
    %4643 = vmatprep.subr.bf16.mxu0 %v4425
    %4644 = vmatpush1.bf16.msra.mxu0 %v4424
    %4645 = vmatprep.subr.bf16.mxu0 %v4423
    %4646 = vmatpush1.bf16.msra.mxu0 %v4422
    %4647 = vmatprep.subr.bf16.mxu0 %v4421
    %4648 = vmatpush1.bf16.msra.mxu0 %v4420
    %4649 = vmatprep.subr.bf16.mxu0 0
    %4650 = vmatpush2.bf16.msra.mxu0 0
    %4651 = vmatprep.subr.bf16.mxu0 %v4549
    %4652 = vmatpush2.bf16.msra.mxu0 %v4546
    %4653 = vmatprep.subr.bf16.mxu0 %v4447
    %4654 = vmatpush2.bf16.msra.mxu0 %v4446
    %4655 = vmatprep.subr.bf16.mxu0 %v4445
    %4656 = vmatpush2.bf16.msra.mxu0 %v4444
    %4657 = vmatprep.subr.bf16.mxu0 %v4443
    %4658 = vmatpush2.bf16.msra.mxu0 %v4442
    %4659 = vmatprep.subr.bf16.mxu0 %v4441
    %4660 = vmatpush2.bf16.msra.mxu0 %v4440
    %4661 = vmatprep.subr.bf16.mxu0 %v4439
    %4662 = vmatpush2.bf16.msra.mxu0 %v4438
    %4663 = vmatprep.subr.bf16.mxu0 %v4437
    %4664 = vmatpush2.bf16.msra.mxu0 %v4436
    %4665 = vmatprep.mubr.bf16.mxu0 %v4543
    %4666 = vmatmul.mubr.bf16.gmra.mxu0 %v3977
    %v4667 = vpop.f32.mrf.mxu0
    %v4668 = vadd.f32 %v4627, %v4667
    %v4669 = vpop.f32.mrf.mxu0
    %v4670 = vadd.f32 %v4629, %v4669
    %v4671 = vpop.f32.mrf.mxu0
    %v4672 = vpop.f32.mrf.mxu0
    %4673 = vdwg.mxu0
    %4676 = vrot.lane.b32.xlu0 %v3175, 9
    %v4677 = vpop.permute.xlu0 %4676
    %4678 = vrot.lane.b32.xlu0 %v3176, 9
    %v4679 = vpop.permute.xlu0 %4678
    %4680 = vrot.lane.b32.xlu0 %v3177, 9
    %v4681 = vpop.permute.xlu0 %4680
    %vm4682 = vcmask 72704
    %v4683 = vsel %vm4682, %v4677, %v4679
    %v4684 = vsel %vm4682, %v4679, %v4681
    %4688 = vrot.lane.b32.xlu0 %v3181, 69
    %v4689 = vpop.permute.xlu0 %4688
    %4690 = vrot.lane.b32.xlu0 %v3182, 69
    %v4691 = vpop.permute.xlu0 %4690
    %4692 = vrot.lane.b32.xlu0 %v3183, 69
    %v4693 = vpop.permute.xlu0 %4692
    %vm4694 = vcmask 564224
    %v4695 = vsel %vm4694, %v4689, %v4691
    %v4696 = vsel %vm4694, %v4691, %v4693
    %4699 = vrot.lane.b32.xlu0 %v3187, 1
    %v4700 = vpop.permute.xlu0 %4699
    %4701 = vrot.lane.b32.xlu0 %v3188, 1
    %v4702 = vpop.permute.xlu0 %4701
    %4703 = vrot.lane.b32.xlu0 %v3189, 1
    %v4704 = vpop.permute.xlu0 %4703
    %vm4705 = vcmask 7168
    %v4706 = vsel %vm4705, %v4700, %v4702
    %v4707 = vsel %vm4705, %v4702, %v4704
    %4711 = vrot.lane.b32.xlu0 %v3193, 60
    %v4712 = vpop.permute.xlu0 %4711
    %4713 = vrot.lane.b32.xlu0 %v3194, 60
    %v4714 = vpop.permute.xlu0 %4713
    %4715 = vrot.lane.b32.xlu0 %v3195, 60
    %v4716 = vpop.permute.xlu0 %4715
    %v4717 = vsel %vm3203, %v4712, %v4714
    %v4718 = vsel %vm3203, %v4714, %v4716
    %v4721 = vsel %vm3222, %v4684, %v4695
    %v4725 = vsel %vm3227, %v4696, %v4700
    %v4729 = vsel %vm3232, %v4707, %v4717
    %s4731 = scalar_lea.vmem [#allocation2], 1504
    %v4732 = vld [vmem:[%s4731] sm:$0xff]
    %v4733 = vld [vmem:[%s4731 + $0x8] sm:$0xff]
    %v4734 = vld [vmem:[%s4731 + $0x10] sm:$0xff]
    %v4735 = vld [vmem:[%s4731 + $0x18] sm:$0xff]
    %v4736 = vld [vmem:[%s4731 + $0x20] sm:$0xff]
    %v4737 = vld [vmem:[%s4731 + $0x28] sm:$0xff]
    %v4738 = vld [vmem:[%s4731 + $0x30] sm:$0xff]
    %v4739 = vld [vmem:[%s4731 + $0x38] sm:$0xff]
    %v4740 = vld [vmem:[%s4731 + $0x40] sm:$0xff]
    %v4741 = vld [vmem:[%s4731 + $0x48] sm:$0xff]
    %v4742 = vld [vmem:[%s4731 + $0x50] sm:$0xff]
    %v4743 = vld [vmem:[%s4731 + $0x58] sm:$0xff]
    %v4744 = vld [vmem:[%s4731 + $0x60] sm:$0xff]
    %v4745 = vld [vmem:[%s4731 + $0x68] sm:$0xff]
    %v4746 = vld [vmem:[%s4731 + $0x70] sm:$0xff]
    %v4747 = vld [vmem:[%s4731 + $0x78] sm:$0xff]
    %v4748 = vld [vmem:[%s4731 + $0x80] sm:$0xff]
    %v4749 = vld [vmem:[%s4731 + $0x88] sm:$0xff]
    %v4750 = vld [vmem:[%s4731 + $0x90] sm:$0xff]
    %v4751 = vld [vmem:[%s4731 + $0x98] sm:$0xff]
    %v4752 = vld [vmem:[%s4731 + $0xa0] sm:$0xff]
    %v4753 = vld [vmem:[%s4731 + $0xa8] sm:$0xff]
    %v4754 = vld [vmem:[%s4731 + $0xb0] sm:$0xff]
    %v4755 = vld [vmem:[%s4731 + $0xb8] sm:$0xff]
    %v4756 = vld [vmem:[%s4731 + $0xc0] sm:$0xff]
    %v4757 = vld [vmem:[%s4731 + $0xc8] sm:$0xff]
    %v4758 = vld [vmem:[%s4731 + $0xd0] sm:$0xff]
    %v4759 = vld [vmem:[%s4731 + $0xd8] sm:$0xff]
    %v4760 = vld [vmem:[%s4731 + $0xe0] sm:$0xff]
    %v4761 = vld [vmem:[%s4731 + $0xe8] sm:$0xff]
    %v4762 = vld [vmem:[%s4731 + $0xf0] sm:$0xff]
    %v4763 = vld [vmem:[%s4731 + $0xf8] sm:$0xff]
    %v4764 = vld [vmem:[%s4731 + $0x100] sm:$0xff]
    %v4765 = vld [vmem:[%s4731 + $0x108] sm:$0xff]
    %v4766 = vld [vmem:[%s4731 + $0x110] sm:$0xff]
    %v4767 = vld [vmem:[%s4731 + $0x118] sm:$0xff]
    %v4768 = vld [vmem:[%s4731 + $0x120] sm:$0xff]
    %v4769 = vld [vmem:[%s4731 + $0x128] sm:$0xff]
    %v4770 = vld [vmem:[%s4731 + $0x130] sm:$0xff]
    %v4771 = vld [vmem:[%s4731 + $0x138] sm:$0xff]
    %v4772 = vld [vmem:[%s4731 + $0x140] sm:$0xff]
    %v4773 = vld [vmem:[%s4731 + $0x148] sm:$0xff]
    %v4774 = vld [vmem:[%s4731 + $0x150] sm:$0xff]
    %v4775 = vld [vmem:[%s4731 + $0x158] sm:$0xff]
    %v4776 = vld [vmem:[%s4731 + $0x160] sm:$0xff]
    %v4777 = vld [vmem:[%s4731 + $0x168] sm:$0xff]
    %v4778 = vld [vmem:[%s4731 + $0x170] sm:$0xff]
    %v4779 = vld [vmem:[%s4731 + $0x178] sm:$0xff]
    %v4780 = vld [vmem:[%s4731 + $0x180] sm:$0xff]
    %v4781 = vld [vmem:[%s4731 + $0x188] sm:$0xff]
    %v4782 = vld [vmem:[%s4731 + $0x190] sm:$0xff]
    %v4783 = vld [vmem:[%s4731 + $0x198] sm:$0xff]
    %v4784 = vld [vmem:[%s4731 + $0x1a0] sm:$0xff]
    %v4785 = vld [vmem:[%s4731 + $0x1a8] sm:$0xff]
    %v4786 = vld [vmem:[%s4731 + $0x1b0] sm:$0xff]
    %v4787 = vld [vmem:[%s4731 + $0x1b8] sm:$0xff]
    %v4788 = vld [vmem:[%s4731 + $0x1c0] sm:$0xff]
    %v4789 = vld [vmem:[%s4731 + $0x1c8] sm:$0xff]
    %v4790 = vld [vmem:[%s4731 + $0x1d0] sm:$0xff]
    %v4791 = vld [vmem:[%s4731 + $0x1d8] sm:$0xff]
    %v4792 = vld [vmem:[%s4731 + $0x1e0] sm:$0xff]
    %v4793 = vld [vmem:[%s4731 + $0x1e8] sm:$0xff]
    %v4794 = vld [vmem:[%s4731 + $0x1f0] sm:$0xff]
    %v4795 = vld [vmem:[%s4731 + $0x1f8] sm:$0xff]
    %v4796 = vld [vmem:[%s4731 + $0x200] sm:$0xff]
    %v4797 = vld [vmem:[%s4731 + $0x208] sm:$0xff]
    %v4798 = vld [vmem:[%s4731 + $0x210] sm:$0xff]
    %v4799 = vld [vmem:[%s4731 + $0x218] sm:$0xff]
    %v4800 = vld [vmem:[%s4731 + $0x220] sm:$0xff]
    %v4801 = vld [vmem:[%s4731 + $0x228] sm:$0xff]
    %v4802 = vld [vmem:[%s4731 + $0x230] sm:$0xff]
    %v4803 = vld [vmem:[%s4731 + $0x238] sm:$0xff]
    %v4804 = vld [vmem:[%s4731 + $0x240] sm:$0xff]
    %v4805 = vld [vmem:[%s4731 + $0x248] sm:$0xff]
    %v4806 = vld [vmem:[%s4731 + $0x250] sm:$0xff]
    %v4807 = vld [vmem:[%s4731 + $0x258] sm:$0xff]
    %v4808 = vld [vmem:[%s4731 + $0x260] sm:$0xff]
    %v4809 = vld [vmem:[%s4731 + $0x268] sm:$0xff]
    %v4810 = vld [vmem:[%s4731 + $0x270] sm:$0xff]
    %v4811 = vld [vmem:[%s4731 + $0x278] sm:$0xff]
    %v4812 = vld [vmem:[%s4731 + $0x280] sm:$0xff]
    %v4813 = vld [vmem:[%s4731 + $0x288] sm:$0xff]
    %v4814 = vld [vmem:[%s4731 + $0x290] sm:$0xff]
    %v4815 = vld [vmem:[%s4731 + $0x298] sm:$0xff]
    %v4816 = vld [vmem:[%s4731 + $0x2a0] sm:$0xff]
    %v4817 = vld [vmem:[%s4731 + $0x2a8] sm:$0xff]
    %v4818 = vld [vmem:[%s4731 + $0x2b0] sm:$0xff]
    %v4819 = vld [vmem:[%s4731 + $0x2b8] sm:$0xff]
    %v4820 = vld [vmem:[%s4731 + $0x2c0] sm:$0xff]
    %v4821 = vld [vmem:[%s4731 + $0x2c8] sm:$0xff]
    %v4822 = vld [vmem:[%s4731 + $0x2d0] sm:$0xff]
    %v4823 = vld [vmem:[%s4731 + $0x2d8] sm:$0xff]
    %v4824 = vld [vmem:[%s4731 + $0x2e0] sm:$0xff]
    %v4825 = vld [vmem:[%s4731 + $0x2e8] sm:$0x77]
    %v4920 = vunpack.c.l.b16 %v4732
    %v4921 = vunpack.c.h.b16 %v4732
    %v4922 = vunpack.c.l.b16 %v4733
    %v4923 = vunpack.c.h.b16 %v4733
    %v4924 = vunpack.c.l.b16 %v4734
    %v4925 = vunpack.c.h.b16 %v4734
    %v4926 = vunpack.c.l.b16 %v4735
    %v4927 = vunpack.c.h.b16 %v4735
    %v4928 = vunpack.c.l.b16 %v4736
    %v4929 = vunpack.c.h.b16 %v4736
    %v4930 = vunpack.c.l.b16 %v4737
    %v4931 = vunpack.c.h.b16 %v4737
    %v4932 = vunpack.c.l.b16 %v4738
    %v4933 = vunpack.c.h.b16 %v4738
    %v4934 = vunpack.c.l.b16 %v4739
    %v4935 = vunpack.c.h.b16 %v4739
    %v4936 = vunpack.c.l.b16 %v4740
    %v4937 = vunpack.c.h.b16 %v4740
    %v4938 = vunpack.c.l.b16 %v4741
    %v4939 = vunpack.c.h.b16 %v4741
    %v4940 = vunpack.c.l.b16 %v4742
    %v4941 = vunpack.c.h.b16 %v4742
    %v4942 = vunpack.c.l.b16 %v4743
    %v4943 = vunpack.c.h.b16 %v4743
    %v4944 = vunpack.c.l.b16 %v4744
    %v4945 = vunpack.c.h.b16 %v4744
    %v4946 = vunpack.c.l.b16 %v4745
    %v4947 = vunpack.c.h.b16 %v4745
    %v4948 = vunpack.c.l.b16 %v4746
    %v4949 = vunpack.c.h.b16 %v4746
    %v4950 = vunpack.c.l.b16 %v4747
    %v4951 = vunpack.c.h.b16 %v4747
    %v4952 = vunpack.c.l.b16 %v4748
    %v4953 = vunpack.c.h.b16 %v4748
    %v4954 = vunpack.c.l.b16 %v4749
    %v4955 = vunpack.c.h.b16 %v4749
    %v4956 = vunpack.c.l.b16 %v4750
    %v4957 = vunpack.c.h.b16 %v4750
    %v4958 = vunpack.c.l.b16 %v4751
    %v4959 = vunpack.c.h.b16 %v4751
    %v4960 = vunpack.c.l.b16 %v4752
    %v4961 = vunpack.c.h.b16 %v4752
    %v4962 = vunpack.c.l.b16 %v4753
    %v4963 = vunpack.c.h.b16 %v4753
    %v4964 = vunpack.c.l.b16 %v4754
    %v4965 = vunpack.c.h.b16 %v4754
    %v4966 = vunpack.c.l.b16 %v4755
    %v4967 = vunpack.c.h.b16 %v4755
    %v4968 = vunpack.c.l.b16 %v4756
    %v4969 = vunpack.c.h.b16 %v4756
    %v4970 = vunpack.c.l.b16 %v4757
    %v4971 = vunpack.c.h.b16 %v4757
    %v4972 = vunpack.c.l.b16 %v4758
    %v4973 = vunpack.c.h.b16 %v4758
    %v4974 = vunpack.c.l.b16 %v4759
    %v4975 = vunpack.c.h.b16 %v4759
    %v4976 = vunpack.c.l.b16 %v4760
    %v4977 = vunpack.c.h.b16 %v4760
    %v4978 = vunpack.c.l.b16 %v4761
    %v4979 = vunpack.c.h.b16 %v4761
    %v4980 = vunpack.c.l.b16 %v4762
    %v4981 = vunpack.c.h.b16 %v4762
    %v4982 = vunpack.c.l.b16 %v4763
    %v4983 = vunpack.c.h.b16 %v4763
    %v4984 = vunpack.c.l.b16 %v4764
    %v4985 = vunpack.c.h.b16 %v4764
    %v4986 = vunpack.c.l.b16 %v4765
    %v4987 = vunpack.c.h.b16 %v4765
    %v4988 = vunpack.c.l.b16 %v4766
    %v4989 = vunpack.c.h.b16 %v4766
    %v4990 = vunpack.c.l.b16 %v4767
    %v4991 = vunpack.c.h.b16 %v4767
    %v4992 = vunpack.c.l.b16 %v4768
    %v4993 = vunpack.c.h.b16 %v4768
    %v4994 = vunpack.c.l.b16 %v4769
    %v4995 = vunpack.c.h.b16 %v4769
    %v4996 = vunpack.c.l.b16 %v4770
    %v4997 = vunpack.c.h.b16 %v4770
    %v4998 = vunpack.c.l.b16 %v4771
    %v4999 = vunpack.c.h.b16 %v4771
    %v5000 = vunpack.c.l.b16 %v4772
    %v5001 = vunpack.c.h.b16 %v4772
    %v5002 = vunpack.c.l.b16 %v4773
    %v5003 = vunpack.c.h.b16 %v4773
    %v5004 = vunpack.c.l.b16 %v4774
    %v5005 = vunpack.c.h.b16 %v4774
    %v5006 = vunpack.c.l.b16 %v4775
    %v5007 = vunpack.c.h.b16 %v4775
    %v5008 = vunpack.c.l.b16 %v4776
    %v5009 = vunpack.c.h.b16 %v4776
    %v5010 = vunpack.c.l.b16 %v4777
    %v5011 = vunpack.c.h.b16 %v4777
    %v5012 = vunpack.c.l.b16 %v4778
    %v5013 = vunpack.c.h.b16 %v4778
    %v5014 = vunpack.c.l.b16 %v4779
    %v5015 = vunpack.c.h.b16 %v4779
    %v5016 = vunpack.c.l.b16 %v4780
    %v5017 = vunpack.c.h.b16 %v4780
    %v5018 = vunpack.c.l.b16 %v4781
    %v5019 = vunpack.c.h.b16 %v4781
    %v5020 = vunpack.c.l.b16 %v4782
    %v5021 = vunpack.c.h.b16 %v4782
    %v5022 = vunpack.c.l.b16 %v4783
    %v5023 = vunpack.c.h.b16 %v4783
    %v5024 = vunpack.c.l.b16 %v4784
    %v5025 = vunpack.c.h.b16 %v4784
    %v5026 = vunpack.c.l.b16 %v4785
    %v5027 = vunpack.c.h.b16 %v4785
    %v5028 = vunpack.c.l.b16 %v4786
    %v5029 = vunpack.c.h.b16 %v4786
    %v5030 = vunpack.c.l.b16 %v4787
    %v5031 = vunpack.c.h.b16 %v4787
    %v5032 = vunpack.c.l.b16 %v4788
    %v5033 = vunpack.c.h.b16 %v4788
    %v5034 = vunpack.c.l.b16 %v4789
    %v5035 = vunpack.c.h.b16 %v4789
    %v5036 = vunpack.c.l.b16 %v4790
    %v5037 = vunpack.c.h.b16 %v4790
    %v5038 = vunpack.c.l.b16 %v4791
    %v5039 = vunpack.c.h.b16 %v4791
    %v5040 = vunpack.c.l.b16 %v4792
    %v5041 = vunpack.c.h.b16 %v4792
    %v5042 = vunpack.c.l.b16 %v4793
    %v5043 = vunpack.c.h.b16 %v4793
    %v5044 = vunpack.c.l.b16 %v4794
    %v5045 = vunpack.c.h.b16 %v4794
    %v5046 = vunpack.c.l.b16 %v4795
    %v5047 = vunpack.c.h.b16 %v4795
    %v5048 = vunpack.c.l.b16 %v4796
    %v5049 = vunpack.c.h.b16 %v4796
    %v5050 = vunpack.c.l.b16 %v4797
    %v5051 = vunpack.c.h.b16 %v4797
    %v5052 = vunpack.c.l.b16 %v4798
    %v5053 = vunpack.c.h.b16 %v4798
    %v5054 = vunpack.c.l.b16 %v4799
    %v5055 = vunpack.c.h.b16 %v4799
    %v5056 = vunpack.c.l.b16 %v4800
    %v5057 = vunpack.c.h.b16 %v4800
    %v5058 = vunpack.c.l.b16 %v4801
    %v5059 = vunpack.c.h.b16 %v4801
    %v5060 = vunpack.c.l.b16 %v4802
    %v5061 = vunpack.c.h.b16 %v4802
    %v5062 = vunpack.c.l.b16 %v4803
    %v5063 = vunpack.c.h.b16 %v4803
    %v5064 = vunpack.c.l.b16 %v4804
    %v5065 = vunpack.c.h.b16 %v4804
    %v5066 = vunpack.c.l.b16 %v4805
    %v5067 = vunpack.c.h.b16 %v4805
    %v5068 = vunpack.c.l.b16 %v4806
    %v5069 = vunpack.c.h.b16 %v4806
    %v5070 = vunpack.c.l.b16 %v4807
    %v5071 = vunpack.c.h.b16 %v4807
    %v5072 = vunpack.c.l.b16 %v4808
    %v5073 = vunpack.c.h.b16 %v4808
    %v5074 = vunpack.c.l.b16 %v4809
    %v5075 = vunpack.c.h.b16 %v4809
    %v5076 = vunpack.c.l.b16 %v4810
    %v5077 = vunpack.c.h.b16 %v4810
    %v5078 = vunpack.c.l.b16 %v4811
    %v5079 = vunpack.c.h.b16 %v4811
    %v5080 = vunpack.c.l.b16 %v4812
    %v5081 = vunpack.c.h.b16 %v4812
    %v5082 = vunpack.c.l.b16 %v4813
    %v5083 = vunpack.c.h.b16 %v4813
    %v5084 = vunpack.c.l.b16 %v4814
    %v5085 = vunpack.c.h.b16 %v4814
    %v5086 = vunpack.c.l.b16 %v4815
    %v5087 = vunpack.c.h.b16 %v4815
    %v5088 = vunpack.c.l.b16 %v4816
    %v5089 = vunpack.c.h.b16 %v4816
    %v5090 = vunpack.c.l.b16 %v4817
    %v5091 = vunpack.c.h.b16 %v4817
    %v5092 = vunpack.c.l.b16 %v4818
    %v5093 = vunpack.c.h.b16 %v4818
    %v5094 = vunpack.c.l.b16 %v4819
    %v5095 = vunpack.c.h.b16 %v4819
    %v5096 = vunpack.c.l.b16 %v4820
    %v5097 = vunpack.c.h.b16 %v4820
    %v5098 = vunpack.c.l.b16 %v4821
    %v5099 = vunpack.c.h.b16 %v4821
    %v5100 = vunpack.c.l.b16 %v4822
    %v5101 = vunpack.c.h.b16 %v4822
    %v5102 = vunpack.c.l.b16 %v4823
    %v5103 = vunpack.c.h.b16 %v4823
    %v5104 = vunpack.c.l.b16 %v4824
    %v5105 = vunpack.c.h.b16 %v4824
    %v5106 = vunpack.c.l.b16 %v4825
    %v5107 = vunpack.c.h.b16 %v4825
    %v5108 = vpack.c.b16 %v4922, %v4920
    %v5109 = vpack.c.b16 %v4923, %v4921
    %v5110 = vpack.c.b16 %v4926, %v4924
    %v5111 = vpack.c.b16 %v4927, %v4925
    %v5112 = vpack.c.b16 %v4930, %v4928
    %v5113 = vpack.c.b16 %v4931, %v4929
    %v5114 = vpack.c.b16 %v4934, %v4932
    %v5115 = vpack.c.b16 %v4935, %v4933
    %v5116 = vpack.c.b16 %v4938, %v4936
    %v5117 = vpack.c.b16 %v4939, %v4937
    %v5118 = vpack.c.b16 %v4942, %v4940
    %v5119 = vpack.c.b16 %v4943, %v4941
    %v5120 = vpack.c.b16 %v4946, %v4944
    %v5121 = vpack.c.b16 %v4947, %v4945
    %v5122 = vpack.c.b16 %v4950, %v4948
    %v5123 = vpack.c.b16 %v4951, %v4949
    %v5124 = vpack.c.b16 %v4954, %v4952
    %v5125 = vpack.c.b16 %v4955, %v4953
    %v5126 = vpack.c.b16 %v4958, %v4956
    %v5127 = vpack.c.b16 %v4959, %v4957
    %v5128 = vpack.c.b16 %v4962, %v4960
    %v5129 = vpack.c.b16 %v4963, %v4961
    %v5130 = vpack.c.b16 %v4966, %v4964
    %v5131 = vpack.c.b16 %v4967, %v4965
    %v5132 = vpack.c.b16 %v4970, %v4968
    %v5133 = vpack.c.b16 %v4971, %v4969
    %v5134 = vpack.c.b16 %v4974, %v4972
    %v5135 = vpack.c.b16 %v4975, %v4973
    %v5136 = vpack.c.b16 %v4978, %v4976
    %v5137 = vpack.c.b16 %v4979, %v4977
    %v5138 = vpack.c.b16 %v4982, %v4980
    %v5139 = vpack.c.b16 %v4983, %v4981
    %v5140 = vpack.c.b16 %v4986, %v4984
    %v5141 = vpack.c.b16 %v4987, %v4985
    %v5142 = vpack.c.b16 %v4990, %v4988
    %v5143 = vpack.c.b16 %v4991, %v4989
    %v5144 = vpack.c.b16 %v4994, %v4992
    %v5145 = vpack.c.b16 %v4995, %v4993
    %v5146 = vpack.c.b16 %v4998, %v4996
    %v5147 = vpack.c.b16 %v4999, %v4997
    %v5148 = vpack.c.b16 %v5002, %v5000
    %v5149 = vpack.c.b16 %v5003, %v5001
    %v5150 = vpack.c.b16 %v5006, %v5004
    %v5151 = vpack.c.b16 %v5007, %v5005
    %v5152 = vpack.c.b16 %v5010, %v5008
    %v5153 = vpack.c.b16 %v5011, %v5009
    %v5154 = vpack.c.b16 %v5014, %v5012
    %v5155 = vpack.c.b16 %v5015, %v5013
    %v5156 = vpack.c.b16 %v5018, %v5016
    %v5157 = vpack.c.b16 %v5019, %v5017
    %v5158 = vpack.c.b16 %v5022, %v5020
    %v5159 = vpack.c.b16 %v5023, %v5021
    %v5160 = vpack.c.b16 %v5026, %v5024
    %v5161 = vpack.c.b16 %v5027, %v5025
    %v5162 = vpack.c.b16 %v5030, %v5028
    %v5163 = vpack.c.b16 %v5031, %v5029
    %v5164 = vpack.c.b16 %v5034, %v5032
    %v5165 = vpack.c.b16 %v5035, %v5033
    %v5166 = vpack.c.b16 %v5038, %v5036
    %v5167 = vpack.c.b16 %v5039, %v5037
    %v5168 = vpack.c.b16 %v5042, %v5040
    %v5169 = vpack.c.b16 %v5043, %v5041
    %v5170 = vpack.c.b16 %v5046, %v5044
    %v5171 = vpack.c.b16 %v5047, %v5045
    %v5172 = vpack.c.b16 %v5050, %v5048
    %v5173 = vpack.c.b16 %v5051, %v5049
    %v5174 = vpack.c.b16 %v5054, %v5052
    %v5175 = vpack.c.b16 %v5055, %v5053
    %v5176 = vpack.c.b16 %v5058, %v5056
    %v5177 = vpack.c.b16 %v5059, %v5057
    %v5178 = vpack.c.b16 %v5062, %v5060
    %v5179 = vpack.c.b16 %v5063, %v5061
    %v5180 = vpack.c.b16 %v5066, %v5064
    %v5181 = vpack.c.b16 %v5067, %v5065
    %v5182 = vpack.c.b16 %v5070, %v5068
    %v5183 = vpack.c.b16 %v5071, %v5069
    %v5184 = vpack.c.b16 %v5074, %v5072
    %v5185 = vpack.c.b16 %v5075, %v5073
    %v5186 = vpack.c.b16 %v5078, %v5076
    %v5187 = vpack.c.b16 %v5079, %v5077
    %v5188 = vpack.c.b16 %v5082, %v5080
    %v5189 = vpack.c.b16 %v5083, %v5081
    %v5190 = vpack.c.b16 %v5086, %v5084
    %v5191 = vpack.c.b16 %v5087, %v5085
    %v5192 = vpack.c.b16 %v5090, %v5088
    %v5193 = vpack.c.b16 %v5091, %v5089
    %v5194 = vpack.c.b16 %v5094, %v5092
    %v5195 = vpack.c.b16 %v5095, %v5093
    %v5196 = vpack.c.b16 %v5098, %v5096
    %v5197 = vpack.c.b16 %v5099, %v5097
    %v5198 = vpack.c.b16 %v5102, %v5100
    %v5199 = vpack.c.b16 %v5103, %v5101
    %v5200 = vpack.c.b16 %v5106, %v5104
    %v5201 = vpack.c.b16 %v5107, %v5105
    %v5295 = vsel %vm3799, %v4718, 0
    %v5298 = vsel %vm3803, %v5200, 0
    %v5301 = vsel %vm3803, %v5201, 0
    %5303 = vmatprep.subr.bf16.mxu0 %v5123
    %5304 = vmatpush1.bf16.msra.mxu0 %v5122
    %5305 = vmatprep.subr.bf16.mxu0 %v5121
    %5306 = vmatpush1.bf16.msra.mxu0 %v5120
    %5307 = vmatprep.subr.bf16.mxu0 %v5119
    %5308 = vmatpush1.bf16.msra.mxu0 %v5118
    %5309 = vmatprep.subr.bf16.mxu0 %v5117
    %5310 = vmatpush1.bf16.msra.mxu0 %v5116
    %5311 = vmatprep.subr.bf16.mxu0 %v5115
    %5312 = vmatpush1.bf16.msra.mxu0 %v5114
    %5313 = vmatprep.subr.bf16.mxu0 %v5113
    %5314 = vmatpush1.bf16.msra.mxu0 %v5112
    %5315 = vmatprep.subr.bf16.mxu0 %v5111
    %5316 = vmatpush1.bf16.msra.mxu0 %v5110
    %5317 = vmatprep.subr.bf16.mxu0 %v5109
    %5318 = vmatpush1.bf16.msra.mxu0 %v5108
    %5319 = vmatprep.subr.bf16.mxu0 %v5139
    %5320 = vmatpush2.bf16.msra.mxu0 %v5138
    %5321 = vmatprep.subr.bf16.mxu0 %v5137
    %5322 = vmatpush2.bf16.msra.mxu0 %v5136
    %5323 = vmatprep.subr.bf16.mxu0 %v5135
    %5324 = vmatpush2.bf16.msra.mxu0 %v5134
    %5325 = vmatprep.subr.bf16.mxu0 %v5133
    %5326 = vmatpush2.bf16.msra.mxu0 %v5132
    %5327 = vmatprep.subr.bf16.mxu0 %v5131
    %5328 = vmatpush2.bf16.msra.mxu0 %v5130
    %5329 = vmatprep.subr.bf16.mxu0 %v5129
    %5330 = vmatpush2.bf16.msra.mxu0 %v5128
    %5331 = vmatprep.subr.bf16.mxu0 %v5127
    %5332 = vmatpush2.bf16.msra.mxu0 %v5126
    %5333 = vmatprep.subr.bf16.mxu0 %v5125
    %5334 = vmatpush2.bf16.msra.mxu0 %v5124
    %5335 = vmatprep.mubr.bf16.mxu0 %v4721
    %5336 = vmatmul.mubr.bf16.gmra.mxu0 %v4683
    %v5337 = vpop.f32.mrf.mxu0
    %v5338 = vadd.f32 0.0, %v5337
    %v5339 = vpop.f32.mrf.mxu0
    %v5340 = vadd.f32 0.0, %v5339
    %v5341 = vpop.f32.mrf.mxu0
    %v5342 = vpop.f32.mrf.mxu0
    %5343 = vdwg.mxu0
    %5344 = vmatprep.subr.bf16.mxu0 %v5155
    %5345 = vmatpush1.bf16.msra.mxu0 %v5154
    %5346 = vmatprep.subr.bf16.mxu0 %v5153
    %5347 = vmatpush1.bf16.msra.mxu0 %v5152
    %5348 = vmatprep.subr.bf16.mxu0 %v5151
    %5349 = vmatpush1.bf16.msra.mxu0 %v5150
    %5350 = vmatprep.subr.bf16.mxu0 %v5149
    %5351 = vmatpush1.bf16.msra.mxu0 %v5148
    %5352 = vmatprep.subr.bf16.mxu0 %v5147
    %5353 = vmatpush1.bf16.msra.mxu0 %v5146
    %5354 = vmatprep.subr.bf16.mxu0 %v5145
    %5355 = vmatpush1.bf16.msra.mxu0 %v5144
    %5356 = vmatprep.subr.bf16.mxu0 %v5143
    %5357 = vmatpush1.bf16.msra.mxu0 %v5142
    %5358 = vmatprep.subr.bf16.mxu0 %v5141
    %5359 = vmatpush1.bf16.msra.mxu0 %v5140
    %5360 = vmatprep.subr.bf16.mxu0 %v5171
    %5361 = vmatpush2.bf16.msra.mxu0 %v5170
    %5362 = vmatprep.subr.bf16.mxu0 %v5169
    %5363 = vmatpush2.bf16.msra.mxu0 %v5168
    %5364 = vmatprep.subr.bf16.mxu0 %v5167
    %5365 = vmatpush2.bf16.msra.mxu0 %v5166
    %5366 = vmatprep.subr.bf16.mxu0 %v5165
    %5367 = vmatpush2.bf16.msra.mxu0 %v5164
    %5368 = vmatprep.subr.bf16.mxu0 %v5163
    %5369 = vmatpush2.bf16.msra.mxu0 %v5162
    %5370 = vmatprep.subr.bf16.mxu0 %v5161
    %5371 = vmatpush2.bf16.msra.mxu0 %v5160
    %5372 = vmatprep.subr.bf16.mxu0 %v5159
    %5373 = vmatpush2.bf16.msra.mxu0 %v5158
    %5374 = vmatprep.subr.bf16.mxu0 %v5157
    %5375 = vmatpush2.bf16.msra.mxu0 %v5156
    %5376 = vmatprep.mubr.bf16.mxu0 %v4706
    %5377 = vmatmul.mubr.bf16.gmra.mxu0 %v4725
    %v5378 = vpop.f32.mrf.mxu0
    %v5379 = vadd.f32 %v5338, %v5378
    %v5380 = vpop.f32.mrf.mxu0
    %v5381 = vadd.f32 %v5340, %v5380
    %v5382 = vpop.f32.mrf.mxu0
    %v5383 = vpop.f32.mrf.mxu0
    %5384 = vdwg.mxu0
    %5385 = vmatprep.subr.bf16.mxu0 %v5187
    %5386 = vmatpush1.bf16.msra.mxu0 %v5186
    %5387 = vmatprep.subr.bf16.mxu0 %v5185
    %5388 = vmatpush1.bf16.msra.mxu0 %v5184
    %5389 = vmatprep.subr.bf16.mxu0 %v5183
    %5390 = vmatpush1.bf16.msra.mxu0 %v5182
    %5391 = vmatprep.subr.bf16.mxu0 %v5181
    %5392 = vmatpush1.bf16.msra.mxu0 %v5180
    %5393 = vmatprep.subr.bf16.mxu0 %v5179
    %5394 = vmatpush1.bf16.msra.mxu0 %v5178
    %5395 = vmatprep.subr.bf16.mxu0 %v5177
    %5396 = vmatpush1.bf16.msra.mxu0 %v5176
    %5397 = vmatprep.subr.bf16.mxu0 %v5175
    %5398 = vmatpush1.bf16.msra.mxu0 %v5174
    %5399 = vmatprep.subr.bf16.mxu0 %v5173
    %5400 = vmatpush1.bf16.msra.mxu0 %v5172
    %5401 = vmatprep.subr.bf16.mxu0 0
    %5402 = vmatpush2.bf16.msra.mxu0 0
    %5403 = vmatprep.subr.bf16.mxu0 %v5301
    %5404 = vmatpush2.bf16.msra.mxu0 %v5298
    %5405 = vmatprep.subr.bf16.mxu0 %v5199
    %5406 = vmatpush2.bf16.msra.mxu0 %v5198
    %5407 = vmatprep.subr.bf16.mxu0 %v5197
    %5408 = vmatpush2.bf16.msra.mxu0 %v5196
    %5409 = vmatprep.subr.bf16.mxu0 %v5195
    %5410 = vmatpush2.bf16.msra.mxu0 %v5194
    %5411 = vmatprep.subr.bf16.mxu0 %v5193
    %5412 = vmatpush2.bf16.msra.mxu0 %v5192
    %5413 = vmatprep.subr.bf16.mxu0 %v5191
    %5414 = vmatpush2.bf16.msra.mxu0 %v5190
    %5415 = vmatprep.subr.bf16.mxu0 %v5189
    %5416 = vmatpush2.bf16.msra.mxu0 %v5188
    %5417 = vmatprep.mubr.bf16.mxu0 %v5295
    %5418 = vmatmul.mubr.bf16.gmra.mxu0 %v4729
    %v5419 = vpop.f32.mrf.mxu0
    %v5420 = vadd.f32 %v5379, %v5419
    %v5421 = vpop.f32.mrf.mxu0
    %v5422 = vadd.f32 %v5381, %v5421
    %v5423 = vpop.f32.mrf.mxu0
    %v5424 = vpop.f32.mrf.mxu0
    %5425 = vdwg.mxu0
    %5427 = vrot.lane.b32.xlu0 %v3177, 77
    %v5428 = vpop.permute.xlu0 %5427
    %5429 = vrot.lane.b32.xlu0 %v3178, 77
    %v5430 = vpop.permute.xlu0 %5429
    %vm5431 = vcmask 629760
    %v5432 = vsel %vm5431, %v5428, %v5430
    %5435 = vrot.lane.b32.xlu0 %v3183, 8
    %v5436 = vpop.permute.xlu0 %5435
    %5437 = vrot.lane.b32.xlu0 %v3184, 8
    %v5438 = vpop.permute.xlu0 %5437
    %vm5439 = vcmask 64512
    %v5440 = vsel %vm5439, %v5436, %v5438
    %5442 = vrot.lane.b32.xlu0 %v3189, 68
    %v5443 = vpop.permute.xlu0 %5442
    %5444 = vrot.lane.b32.xlu0 %v3190, 68
    %v5445 = vpop.permute.xlu0 %5444
    %v5446 = vsel %vm3939, %v5443, %v5445
    %v5450 = vsel %vm3964, %v5430, %v5436
    %v5454 = vsel %vm3969, %v5440, %v5443
    %v5458 = vsel %vm3974, %v5445, %v3195
    %s5460 = scalar_lea.vmem [#allocation2], 2256
    %v5461 = vld [vmem:[%s5460] sm:$0xff]
    %v5462 = vld [vmem:[%s5460 + $0x8] sm:$0xff]
    %v5463 = vld [vmem:[%s5460 + $0x10] sm:$0xff]
    %v5464 = vld [vmem:[%s5460 + $0x18] sm:$0xff]
    %v5465 = vld [vmem:[%s5460 + $0x20] sm:$0xff]
    %v5466 = vld [vmem:[%s5460 + $0x28] sm:$0xff]
    %v5467 = vld [vmem:[%s5460 + $0x30] sm:$0xff]
    %v5468 = vld [vmem:[%s5460 + $0x38] sm:$0xff]
    %v5469 = vld [vmem:[%s5460 + $0x40] sm:$0xff]
    %v5470 = vld [vmem:[%s5460 + $0x48] sm:$0xff]
    %v5471 = vld [vmem:[%s5460 + $0x50] sm:$0xff]
    %v5472 = vld [vmem:[%s5460 + $0x58] sm:$0xff]
    %v5473 = vld [vmem:[%s5460 + $0x60] sm:$0xff]
    %v5474 = vld [vmem:[%s5460 + $0x68] sm:$0xff]
    %v5475 = vld [vmem:[%s5460 + $0x70] sm:$0xff]
    %v5476 = vld [vmem:[%s5460 + $0x78] sm:$0xff]
    %v5477 = vld [vmem:[%s5460 + $0x80] sm:$0xff]
    %v5478 = vld [vmem:[%s5460 + $0x88] sm:$0xff]
    %v5479 = vld [vmem:[%s5460 + $0x90] sm:$0xff]
    %v5480 = vld [vmem:[%s5460 + $0x98] sm:$0xff]
    %v5481 = vld [vmem:[%s5460 + $0xa0] sm:$0xff]
    %v5482 = vld [vmem:[%s5460 + $0xa8] sm:$0xff]
    %v5483 = vld [vmem:[%s5460 + $0xb0] sm:$0xff]
    %v5484 = vld [vmem:[%s5460 + $0xb8] sm:$0xff]
    %v5485 = vld [vmem:[%s5460 + $0xc0] sm:$0xff]
    %v5486 = vld [vmem:[%s5460 + $0xc8] sm:$0xff]
    %v5487 = vld [vmem:[%s5460 + $0xd0] sm:$0xff]
    %v5488 = vld [vmem:[%s5460 + $0xd8] sm:$0xff]
    %v5489 = vld [vmem:[%s5460 + $0xe0] sm:$0xff]
    %v5490 = vld [vmem:[%s5460 + $0xe8] sm:$0xff]
    %v5491 = vld [vmem:[%s5460 + $0xf0] sm:$0xff]
    %v5492 = vld [vmem:[%s5460 + $0xf8] sm:$0xff]
    %v5493 = vld [vmem:[%s5460 + $0x100] sm:$0xff]
    %v5494 = vld [vmem:[%s5460 + $0x108] sm:$0xff]
    %v5495 = vld [vmem:[%s5460 + $0x110] sm:$0xff]
    %v5496 = vld [vmem:[%s5460 + $0x118] sm:$0xff]
    %v5497 = vld [vmem:[%s5460 + $0x120] sm:$0xff]
    %v5498 = vld [vmem:[%s5460 + $0x128] sm:$0xff]
    %v5499 = vld [vmem:[%s5460 + $0x130] sm:$0xff]
    %v5500 = vld [vmem:[%s5460 + $0x138] sm:$0xff]
    %v5501 = vld [vmem:[%s5460 + $0x140] sm:$0xff]
    %v5502 = vld [vmem:[%s5460 + $0x148] sm:$0xff]
    %v5503 = vld [vmem:[%s5460 + $0x150] sm:$0xff]
    %v5504 = vld [vmem:[%s5460 + $0x158] sm:$0xff]
    %v5505 = vld [vmem:[%s5460 + $0x160] sm:$0xff]
    %v5506 = vld [vmem:[%s5460 + $0x168] sm:$0xff]
    %v5507 = vld [vmem:[%s5460 + $0x170] sm:$0xff]
    %v5508 = vld [vmem:[%s5460 + $0x178] sm:$0xff]
    %v5509 = vld [vmem:[%s5460 + $0x180] sm:$0xff]
    %v5510 = vld [vmem:[%s5460 + $0x188] sm:$0xff]
    %v5511 = vld [vmem:[%s5460 + $0x190] sm:$0xff]
    %v5512 = vld [vmem:[%s5460 + $0x198] sm:$0xff]
    %v5513 = vld [vmem:[%s5460 + $0x1a0] sm:$0xff]
    %v5514 = vld [vmem:[%s5460 + $0x1a8] sm:$0xff]
    %v5515 = vld [vmem:[%s5460 + $0x1b0] sm:$0xff]
    %v5516 = vld [vmem:[%s5460 + $0x1b8] sm:$0xff]
    %v5517 = vld [vmem:[%s5460 + $0x1c0] sm:$0xff]
    %v5518 = vld [vmem:[%s5460 + $0x1c8] sm:$0xff]
    %v5519 = vld [vmem:[%s5460 + $0x1d0] sm:$0xff]
    %v5520 = vld [vmem:[%s5460 + $0x1d8] sm:$0xff]
    %v5521 = vld [vmem:[%s5460 + $0x1e0] sm:$0xff]
    %v5522 = vld [vmem:[%s5460 + $0x1e8] sm:$0xff]
    %v5523 = vld [vmem:[%s5460 + $0x1f0] sm:$0xff]
    %v5524 = vld [vmem:[%s5460 + $0x1f8] sm:$0xff]
    %v5525 = vld [vmem:[%s5460 + $0x200] sm:$0xff]
    %v5526 = vld [vmem:[%s5460 + $0x208] sm:$0xff]
    %v5527 = vld [vmem:[%s5460 + $0x210] sm:$0xff]
    %v5528 = vld [vmem:[%s5460 + $0x218] sm:$0xff]
    %v5529 = vld [vmem:[%s5460 + $0x220] sm:$0xff]
    %v5530 = vld [vmem:[%s5460 + $0x228] sm:$0xff]
    %v5531 = vld [vmem:[%s5460 + $0x230] sm:$0xff]
    %v5532 = vld [vmem:[%s5460 + $0x238] sm:$0xff]
    %v5533 = vld [vmem:[%s5460 + $0x240] sm:$0xff]
    %v5534 = vld [vmem:[%s5460 + $0x248] sm:$0xff]
    %v5535 = vld [vmem:[%s5460 + $0x250] sm:$0xff]
    %v5536 = vld [vmem:[%s5460 + $0x258] sm:$0xff]
    %v5537 = vld [vmem:[%s5460 + $0x260] sm:$0xff]
    %v5538 = vld [vmem:[%s5460 + $0x268] sm:$0xff]
    %v5539 = vld [vmem:[%s5460 + $0x270] sm:$0xff]
    %v5540 = vld [vmem:[%s5460 + $0x278] sm:$0xff]
    %v5541 = vld [vmem:[%s5460 + $0x280] sm:$0xff]
    %v5542 = vld [vmem:[%s5460 + $0x288] sm:$0xff]
    %v5543 = vld [vmem:[%s5460 + $0x290] sm:$0xff]
    %v5544 = vld [vmem:[%s5460 + $0x298] sm:$0xff]
    %v5545 = vld [vmem:[%s5460 + $0x2a0] sm:$0xff]
    %v5546 = vld [vmem:[%s5460 + $0x2a8] sm:$0xff]
    %v5547 = vld [vmem:[%s5460 + $0x2b0] sm:$0xff]
    %v5548 = vld [vmem:[%s5460 + $0x2b8] sm:$0xff]
    %v5549 = vld [vmem:[%s5460 + $0x2c0] sm:$0xff]
    %v5550 = vld [vmem:[%s5460 + $0x2c8] sm:$0xff]
    %v5551 = vld [vmem:[%s5460 + $0x2d0] sm:$0xff]
    %v5552 = vld [vmem:[%s5460 + $0x2d8] sm:$0xff]
    %v5553 = vld [vmem:[%s5460 + $0x2e0] sm:$0xff]
    %v5554 = vld [vmem:[%s5460 + $0x2e8] sm:$0x77]
    %v5649 = vunpack.c.l.b16 %v5461
    %v5650 = vunpack.c.h.b16 %v5461
    %v5651 = vunpack.c.l.b16 %v5462
    %v5652 = vunpack.c.h.b16 %v5462
    %v5653 = vunpack.c.l.b16 %v5463
    %v5654 = vunpack.c.h.b16 %v5463
    %v5655 = vunpack.c.l.b16 %v5464
    %v5656 = vunpack.c.h.b16 %v5464
    %v5657 = vunpack.c.l.b16 %v5465
    %v5658 = vunpack.c.h.b16 %v5465
    %v5659 = vunpack.c.l.b16 %v5466
    %v5660 = vunpack.c.h.b16 %v5466
    %v5661 = vunpack.c.l.b16 %v5467
    %v5662 = vunpack.c.h.b16 %v5467
    %v5663 = vunpack.c.l.b16 %v5468
    %v5664 = vunpack.c.h.b16 %v5468
    %v5665 = vunpack.c.l.b16 %v5469
    %v5666 = vunpack.c.h.b16 %v5469
    %v5667 = vunpack.c.l.b16 %v5470
    %v5668 = vunpack.c.h.b16 %v5470
    %v5669 = vunpack.c.l.b16 %v5471
    %v5670 = vunpack.c.h.b16 %v5471
    %v5671 = vunpack.c.l.b16 %v5472
    %v5672 = vunpack.c.h.b16 %v5472
    %v5673 = vunpack.c.l.b16 %v5473
    %v5674 = vunpack.c.h.b16 %v5473
    %v5675 = vunpack.c.l.b16 %v5474
    %v5676 = vunpack.c.h.b16 %v5474
    %v5677 = vunpack.c.l.b16 %v5475
    %v5678 = vunpack.c.h.b16 %v5475
    %v5679 = vunpack.c.l.b16 %v5476
    %v5680 = vunpack.c.h.b16 %v5476
    %v5681 = vunpack.c.l.b16 %v5477
    %v5682 = vunpack.c.h.b16 %v5477
    %v5683 = vunpack.c.l.b16 %v5478
    %v5684 = vunpack.c.h.b16 %v5478
    %v5685 = vunpack.c.l.b16 %v5479
    %v5686 = vunpack.c.h.b16 %v5479
    %v5687 = vunpack.c.l.b16 %v5480
    %v5688 = vunpack.c.h.b16 %v5480
    %v5689 = vunpack.c.l.b16 %v5481
    %v5690 = vunpack.c.h.b16 %v5481
    %v5691 = vunpack.c.l.b16 %v5482
    %v5692 = vunpack.c.h.b16 %v5482
    %v5693 = vunpack.c.l.b16 %v5483
    %v5694 = vunpack.c.h.b16 %v5483
    %v5695 = vunpack.c.l.b16 %v5484
    %v5696 = vunpack.c.h.b16 %v5484
    %v5697 = vunpack.c.l.b16 %v5485
    %v5698 = vunpack.c.h.b16 %v5485
    %v5699 = vunpack.c.l.b16 %v5486
    %v5700 = vunpack.c.h.b16 %v5486
    %v5701 = vunpack.c.l.b16 %v5487
    %v5702 = vunpack.c.h.b16 %v5487
    %v5703 = vunpack.c.l.b16 %v5488
    %v5704 = vunpack.c.h.b16 %v5488
    %v5705 = vunpack.c.l.b16 %v5489
    %v5706 = vunpack.c.h.b16 %v5489
    %v5707 = vunpack.c.l.b16 %v5490
    %v5708 = vunpack.c.h.b16 %v5490
    %v5709 = vunpack.c.l.b16 %v5491
    %v5710 = vunpack.c.h.b16 %v5491
    %v5711 = vunpack.c.l.b16 %v5492
    %v5712 = vunpack.c.h.b16 %v5492
    %v5713 = vunpack.c.l.b16 %v5493
    %v5714 = vunpack.c.h.b16 %v5493
    %v5715 = vunpack.c.l.b16 %v5494
    %v5716 = vunpack.c.h.b16 %v5494
    %v5717 = vunpack.c.l.b16 %v5495
    %v5718 = vunpack.c.h.b16 %v5495
    %v5719 = vunpack.c.l.b16 %v5496
    %v5720 = vunpack.c.h.b16 %v5496
    %v5721 = vunpack.c.l.b16 %v5497
    %v5722 = vunpack.c.h.b16 %v5497
    %v5723 = vunpack.c.l.b16 %v5498
    %v5724 = vunpack.c.h.b16 %v5498
    %v5725 = vunpack.c.l.b16 %v5499
    %v5726 = vunpack.c.h.b16 %v5499
    %v5727 = vunpack.c.l.b16 %v5500
    %v5728 = vunpack.c.h.b16 %v5500
    %v5729 = vunpack.c.l.b16 %v5501
    %v5730 = vunpack.c.h.b16 %v5501
    %v5731 = vunpack.c.l.b16 %v5502
    %v5732 = vunpack.c.h.b16 %v5502
    %v5733 = vunpack.c.l.b16 %v5503
    %v5734 = vunpack.c.h.b16 %v5503
    %v5735 = vunpack.c.l.b16 %v5504
    %v5736 = vunpack.c.h.b16 %v5504
    %v5737 = vunpack.c.l.b16 %v5505
    %v5738 = vunpack.c.h.b16 %v5505
    %v5739 = vunpack.c.l.b16 %v5506
    %v5740 = vunpack.c.h.b16 %v5506
    %v5741 = vunpack.c.l.b16 %v5507
    %v5742 = vunpack.c.h.b16 %v5507
    %v5743 = vunpack.c.l.b16 %v5508
    %v5744 = vunpack.c.h.b16 %v5508
    %v5745 = vunpack.c.l.b16 %v5509
    %v5746 = vunpack.c.h.b16 %v5509
    %v5747 = vunpack.c.l.b16 %v5510
    %v5748 = vunpack.c.h.b16 %v5510
    %v5749 = vunpack.c.l.b16 %v5511
    %v5750 = vunpack.c.h.b16 %v5511
    %v5751 = vunpack.c.l.b16 %v5512
    %v5752 = vunpack.c.h.b16 %v5512
    %v5753 = vunpack.c.l.b16 %v5513
    %v5754 = vunpack.c.h.b16 %v5513
    %v5755 = vunpack.c.l.b16 %v5514
    %v5756 = vunpack.c.h.b16 %v5514
    %v5757 = vunpack.c.l.b16 %v5515
    %v5758 = vunpack.c.h.b16 %v5515
    %v5759 = vunpack.c.l.b16 %v5516
    %v5760 = vunpack.c.h.b16 %v5516
    %v5761 = vunpack.c.l.b16 %v5517
    %v5762 = vunpack.c.h.b16 %v5517
    %v5763 = vunpack.c.l.b16 %v5518
    %v5764 = vunpack.c.h.b16 %v5518
    %v5765 = vunpack.c.l.b16 %v5519
    %v5766 = vunpack.c.h.b16 %v5519
    %v5767 = vunpack.c.l.b16 %v5520
    %v5768 = vunpack.c.h.b16 %v5520
    %v5769 = vunpack.c.l.b16 %v5521
    %v5770 = vunpack.c.h.b16 %v5521
    %v5771 = vunpack.c.l.b16 %v5522
    %v5772 = vunpack.c.h.b16 %v5522
    %v5773 = vunpack.c.l.b16 %v5523
    %v5774 = vunpack.c.h.b16 %v5523
    %v5775 = vunpack.c.l.b16 %v5524
    %v5776 = vunpack.c.h.b16 %v5524
    %v5777 = vunpack.c.l.b16 %v5525
    %v5778 = vunpack.c.h.b16 %v5525
    %v5779 = vunpack.c.l.b16 %v5526
    %v5780 = vunpack.c.h.b16 %v5526
    %v5781 = vunpack.c.l.b16 %v5527
    %v5782 = vunpack.c.h.b16 %v5527
    %v5783 = vunpack.c.l.b16 %v5528
    %v5784 = vunpack.c.h.b16 %v5528
    %v5785 = vunpack.c.l.b16 %v5529
    %v5786 = vunpack.c.h.b16 %v5529
    %v5787 = vunpack.c.l.b16 %v5530
    %v5788 = vunpack.c.h.b16 %v5530
    %v5789 = vunpack.c.l.b16 %v5531
    %v5790 = vunpack.c.h.b16 %v5531
    %v5791 = vunpack.c.l.b16 %v5532
    %v5792 = vunpack.c.h.b16 %v5532
    %v5793 = vunpack.c.l.b16 %v5533
    %v5794 = vunpack.c.h.b16 %v5533
    %v5795 = vunpack.c.l.b16 %v5534
    %v5796 = vunpack.c.h.b16 %v5534
    %v5797 = vunpack.c.l.b16 %v5535
    %v5798 = vunpack.c.h.b16 %v5535
    %v5799 = vunpack.c.l.b16 %v5536
    %v5800 = vunpack.c.h.b16 %v5536
    %v5801 = vunpack.c.l.b16 %v5537
    %v5802 = vunpack.c.h.b16 %v5537
    %v5803 = vunpack.c.l.b16 %v5538
    %v5804 = vunpack.c.h.b16 %v5538
    %v5805 = vunpack.c.l.b16 %v5539
    %v5806 = vunpack.c.h.b16 %v5539
    %v5807 = vunpack.c.l.b16 %v5540
    %v5808 = vunpack.c.h.b16 %v5540
    %v5809 = vunpack.c.l.b16 %v5541
    %v5810 = vunpack.c.h.b16 %v5541
    %v5811 = vunpack.c.l.b16 %v5542
    %v5812 = vunpack.c.h.b16 %v5542
    %v5813 = vunpack.c.l.b16 %v5543
    %v5814 = vunpack.c.h.b16 %v5543
    %v5815 = vunpack.c.l.b16 %v5544
    %v5816 = vunpack.c.h.b16 %v5544
    %v5817 = vunpack.c.l.b16 %v5545
    %v5818 = vunpack.c.h.b16 %v5545
    %v5819 = vunpack.c.l.b16 %v5546
    %v5820 = vunpack.c.h.b16 %v5546
    %v5821 = vunpack.c.l.b16 %v5547
    %v5822 = vunpack.c.h.b16 %v5547
    %v5823 = vunpack.c.l.b16 %v5548
    %v5824 = vunpack.c.h.b16 %v5548
    %v5825 = vunpack.c.l.b16 %v5549
    %v5826 = vunpack.c.h.b16 %v5549
    %v5827 = vunpack.c.l.b16 %v5550
    %v5828 = vunpack.c.h.b16 %v5550
    %v5829 = vunpack.c.l.b16 %v5551
    %v5830 = vunpack.c.h.b16 %v5551
    %v5831 = vunpack.c.l.b16 %v5552
    %v5832 = vunpack.c.h.b16 %v5552
    %v5833 = vunpack.c.l.b16 %v5553
    %v5834 = vunpack.c.h.b16 %v5553
    %v5835 = vunpack.c.l.b16 %v5554
    %v5836 = vunpack.c.h.b16 %v5554
    %v5837 = vpack.c.b16 %v5651, %v5649
    %v5838 = vpack.c.b16 %v5652, %v5650
    %v5839 = vpack.c.b16 %v5655, %v5653
    %v5840 = vpack.c.b16 %v5656, %v5654
    %v5841 = vpack.c.b16 %v5659, %v5657
    %v5842 = vpack.c.b16 %v5660, %v5658
    %v5843 = vpack.c.b16 %v5663, %v5661
    %v5844 = vpack.c.b16 %v5664, %v5662
    %v5845 = vpack.c.b16 %v5667, %v5665
    %v5846 = vpack.c.b16 %v5668, %v5666
    %v5847 = vpack.c.b16 %v5671, %v5669
    %v5848 = vpack.c.b16 %v5672, %v5670
    %v5849 = vpack.c.b16 %v5675, %v5673
    %v5850 = vpack.c.b16 %v5676, %v5674
    %v5851 = vpack.c.b16 %v5679, %v5677
    %v5852 = vpack.c.b16 %v5680, %v5678
    %v5853 = vpack.c.b16 %v5683, %v5681
    %v5854 = vpack.c.b16 %v5684, %v5682
    %v5855 = vpack.c.b16 %v5687, %v5685
    %v5856 = vpack.c.b16 %v5688, %v5686
    %v5857 = vpack.c.b16 %v5691, %v5689
    %v5858 = vpack.c.b16 %v5692, %v5690
    %v5859 = vpack.c.b16 %v5695, %v5693
    %v5860 = vpack.c.b16 %v5696, %v5694
    %v5861 = vpack.c.b16 %v5699, %v5697
    %v5862 = vpack.c.b16 %v5700, %v5698
    %v5863 = vpack.c.b16 %v5703, %v5701
    %v5864 = vpack.c.b16 %v5704, %v5702
    %v5865 = vpack.c.b16 %v5707, %v5705
    %v5866 = vpack.c.b16 %v5708, %v5706
    %v5867 = vpack.c.b16 %v5711, %v5709
    %v5868 = vpack.c.b16 %v5712, %v5710
    %v5869 = vpack.c.b16 %v5715, %v5713
    %v5870 = vpack.c.b16 %v5716, %v5714
    %v5871 = vpack.c.b16 %v5719, %v5717
    %v5872 = vpack.c.b16 %v5720, %v5718
    %v5873 = vpack.c.b16 %v5723, %v5721
    %v5874 = vpack.c.b16 %v5724, %v5722
    %v5875 = vpack.c.b16 %v5727, %v5725
    %v5876 = vpack.c.b16 %v5728, %v5726
    %v5877 = vpack.c.b16 %v5731, %v5729
    %v5878 = vpack.c.b16 %v5732, %v5730
    %v5879 = vpack.c.b16 %v5735, %v5733
    %v5880 = vpack.c.b16 %v5736, %v5734
    %v5881 = vpack.c.b16 %v5739, %v5737
    %v5882 = vpack.c.b16 %v5740, %v5738
    %v5883 = vpack.c.b16 %v5743, %v5741
    %v5884 = vpack.c.b16 %v5744, %v5742
    %v5885 = vpack.c.b16 %v5747, %v5745
    %v5886 = vpack.c.b16 %v5748, %v5746
    %v5887 = vpack.c.b16 %v5751, %v5749
    %v5888 = vpack.c.b16 %v5752, %v5750
    %v5889 = vpack.c.b16 %v5755, %v5753
    %v5890 = vpack.c.b16 %v5756, %v5754
    %v5891 = vpack.c.b16 %v5759, %v5757
    %v5892 = vpack.c.b16 %v5760, %v5758
    %v5893 = vpack.c.b16 %v5763, %v5761
    %v5894 = vpack.c.b16 %v5764, %v5762
    %v5895 = vpack.c.b16 %v5767, %v5765
    %v5896 = vpack.c.b16 %v5768, %v5766
    %v5897 = vpack.c.b16 %v5771, %v5769
    %v5898 = vpack.c.b16 %v5772, %v5770
    %v5899 = vpack.c.b16 %v5775, %v5773
    %v5900 = vpack.c.b16 %v5776, %v5774
    %v5901 = vpack.c.b16 %v5779, %v5777
    %v5902 = vpack.c.b16 %v5780, %v5778
    %v5903 = vpack.c.b16 %v5783, %v5781
    %v5904 = vpack.c.b16 %v5784, %v5782
    %v5905 = vpack.c.b16 %v5787, %v5785
    %v5906 = vpack.c.b16 %v5788, %v5786
    %v5907 = vpack.c.b16 %v5791, %v5789
    %v5908 = vpack.c.b16 %v5792, %v5790
    %v5909 = vpack.c.b16 %v5795, %v5793
    %v5910 = vpack.c.b16 %v5796, %v5794
    %v5911 = vpack.c.b16 %v5799, %v5797
    %v5912 = vpack.c.b16 %v5800, %v5798
    %v5913 = vpack.c.b16 %v5803, %v5801
    %v5914 = vpack.c.b16 %v5804, %v5802
    %v5915 = vpack.c.b16 %v5807, %v5805
    %v5916 = vpack.c.b16 %v5808, %v5806
    %v5917 = vpack.c.b16 %v5811, %v5809
    %v5918 = vpack.c.b16 %v5812, %v5810
    %v5919 = vpack.c.b16 %v5815, %v5813
    %v5920 = vpack.c.b16 %v5816, %v5814
    %v5921 = vpack.c.b16 %v5819, %v5817
    %v5922 = vpack.c.b16 %v5820, %v5818
    %v5923 = vpack.c.b16 %v5823, %v5821
    %v5924 = vpack.c.b16 %v5824, %v5822
    %v5925 = vpack.c.b16 %v5827, %v5825
    %v5926 = vpack.c.b16 %v5828, %v5826
    %v5927 = vpack.c.b16 %v5831, %v5829
    %v5928 = vpack.c.b16 %v5832, %v5830
    %v5929 = vpack.c.b16 %v5835, %v5833
    %v5930 = vpack.c.b16 %v5836, %v5834
    %v6024 = vsel %vm3799, %v3196, 0
    %v6027 = vsel %vm3803, %v5929, 0
    %v6030 = vsel %vm3803, %v5930, 0
    %6032 = vmatprep.subr.bf16.mxu0 %v5852
    %6033 = vmatpush1.bf16.msra.mxu0 %v5851
    %6034 = vmatprep.subr.bf16.mxu0 %v5850
    %6035 = vmatpush1.bf16.msra.mxu0 %v5849
    %6036 = vmatprep.subr.bf16.mxu0 %v5848
    %6037 = vmatpush1.bf16.msra.mxu0 %v5847
    %6038 = vmatprep.subr.bf16.mxu0 %v5846
    %6039 = vmatpush1.bf16.msra.mxu0 %v5845
    %6040 = vmatprep.subr.bf16.mxu0 %v5844
    %6041 = vmatpush1.bf16.msra.mxu0 %v5843
    %6042 = vmatprep.subr.bf16.mxu0 %v5842
    %6043 = vmatpush1.bf16.msra.mxu0 %v5841
    %6044 = vmatprep.subr.bf16.mxu0 %v5840
    %6045 = vmatpush1.bf16.msra.mxu0 %v5839
    %6046 = vmatprep.subr.bf16.mxu0 %v5838
    %6047 = vmatpush1.bf16.msra.mxu0 %v5837
    %6048 = vmatprep.subr.bf16.mxu0 %v5868
    %6049 = vmatpush2.bf16.msra.mxu0 %v5867
    %6050 = vmatprep.subr.bf16.mxu0 %v5866
    %6051 = vmatpush2.bf16.msra.mxu0 %v5865
    %6052 = vmatprep.subr.bf16.mxu0 %v5864
    %6053 = vmatpush2.bf16.msra.mxu0 %v5863
    %6054 = vmatprep.subr.bf16.mxu0 %v5862
    %6055 = vmatpush2.bf16.msra.mxu0 %v5861
    %6056 = vmatprep.subr.bf16.mxu0 %v5860
    %6057 = vmatpush2.bf16.msra.mxu0 %v5859
    %6058 = vmatprep.subr.bf16.mxu0 %v5858
    %6059 = vmatpush2.bf16.msra.mxu0 %v5857
    %6060 = vmatprep.subr.bf16.mxu0 %v5856
    %6061 = vmatpush2.bf16.msra.mxu0 %v5855
    %6062 = vmatprep.subr.bf16.mxu0 %v5854
    %6063 = vmatpush2.bf16.msra.mxu0 %v5853
    %6064 = vmatprep.mubr.bf16.mxu0 %v5450
    %6065 = vmatmul.mubr.bf16.gmra.mxu0 %v5432
    %v6066 = vpop.f32.mrf.mxu0
    %v6067 = vadd.f32 0.0, %v6066
    %v6068 = vpop.f32.mrf.mxu0
    %v6069 = vadd.f32 0.0, %v6068
    %v6070 = vpop.f32.mrf.mxu0
    %v6071 = vpop.f32.mrf.mxu0
    %6072 = vdwg.mxu0
    %6073 = vmatprep.subr.bf16.mxu0 %v5884
    %6074 = vmatpush1.bf16.msra.mxu0 %v5883
    %6075 = vmatprep.subr.bf16.mxu0 %v5882
    %6076 = vmatpush1.bf16.msra.mxu0 %v5881
    %6077 = vmatprep.subr.bf16.mxu0 %v5880
    %6078 = vmatpush1.bf16.msra.mxu0 %v5879
    %6079 = vmatprep.subr.bf16.mxu0 %v5878
    %6080 = vmatpush1.bf16.msra.mxu0 %v5877
    %6081 = vmatprep.subr.bf16.mxu0 %v5876
    %6082 = vmatpush1.bf16.msra.mxu0 %v5875
    %6083 = vmatprep.subr.bf16.mxu0 %v5874
    %6084 = vmatpush1.bf16.msra.mxu0 %v5873
    %6085 = vmatprep.subr.bf16.mxu0 %v5872
    %6086 = vmatpush1.bf16.msra.mxu0 %v5871
    %6087 = vmatprep.subr.bf16.mxu0 %v5870
    %6088 = vmatpush1.bf16.msra.mxu0 %v5869
    %6089 = vmatprep.subr.bf16.mxu0 %v5900
    %6090 = vmatpush2.bf16.msra.mxu0 %v5899
    %6091 = vmatprep.subr.bf16.mxu0 %v5898
    %6092 = vmatpush2.bf16.msra.mxu0 %v5897
    %6093 = vmatprep.subr.bf16.mxu0 %v5896
    %6094 = vmatpush2.bf16.msra.mxu0 %v5895
    %6095 = vmatprep.subr.bf16.mxu0 %v5894
    %6096 = vmatpush2.bf16.msra.mxu0 %v5893
    %6097 = vmatprep.subr.bf16.mxu0 %v5892
    %6098 = vmatpush2.bf16.msra.mxu0 %v5891
    %6099 = vmatprep.subr.bf16.mxu0 %v5890
    %6100 = vmatpush2.bf16.msra.mxu0 %v5889
    %6101 = vmatprep.subr.bf16.mxu0 %v5888
    %6102 = vmatpush2.bf16.msra.mxu0 %v5887
    %6103 = vmatprep.subr.bf16.mxu0 %v5886
    %6104 = vmatpush2.bf16.msra.mxu0 %v5885
    %6105 = vmatprep.mubr.bf16.mxu0 %v5446
    %6106 = vmatmul.mubr.bf16.gmra.mxu0 %v5454
    %v6107 = vpop.f32.mrf.mxu0
    %v6108 = vadd.f32 %v6067, %v6107
    %v6109 = vpop.f32.mrf.mxu0
    %v6110 = vadd.f32 %v6069, %v6109
    %v6111 = vpop.f32.mrf.mxu0
    %v6112 = vpop.f32.mrf.mxu0
    %6113 = vdwg.mxu0
    %6114 = vmatprep.subr.bf16.mxu0 %v5916
    %6115 = vmatpush1.bf16.msra.mxu0 %v5915
    %6116 = vmatprep.subr.bf16.mxu0 %v5914
    %6117 = vmatpush1.bf16.msra.mxu0 %v5913
    %6118 = vmatprep.subr.bf16.mxu0 %v5912
    %6119 = vmatpush1.bf16.msra.mxu0 %v5911
    %6120 = vmatprep.subr.bf16.mxu0 %v5910
    %6121 = vmatpush1.bf16.msra.mxu0 %v5909
    %6122 = vmatprep.subr.bf16.mxu0 %v5908
    %6123 = vmatpush1.bf16.msra.mxu0 %v5907
    %6124 = vmatprep.subr.bf16.mxu0 %v5906
    %6125 = vmatpush1.bf16.msra.mxu0 %v5905
    %6126 = vmatprep.subr.bf16.mxu0 %v5904
    %6127 = vmatpush1.bf16.msra.mxu0 %v5903
    %6128 = vmatprep.subr.bf16.mxu0 %v5902
    %6129 = vmatpush1.bf16.msra.mxu0 %v5901
    %6130 = vmatprep.subr.bf16.mxu0 0
    %6131 = vmatpush2.bf16.msra.mxu0 0
    %6132 = vmatprep.subr.bf16.mxu0 %v6030
    %6133 = vmatpush2.bf16.msra.mxu0 %v6027
    %6134 = vmatprep.subr.bf16.mxu0 %v5928
    %6135 = vmatpush2.bf16.msra.mxu0 %v5927
    %6136 = vmatprep.subr.bf16.mxu0 %v5926
    %6137 = vmatpush2.bf16.msra.mxu0 %v5925
    %6138 = vmatprep.subr.bf16.mxu0 %v5924
    %6139 = vmatpush2.bf16.msra.mxu0 %v5923
    %6140 = vmatprep.subr.bf16.mxu0 %v5922
    %6141 = vmatpush2.bf16.msra.mxu0 %v5921
    %6142 = vmatprep.subr.bf16.mxu0 %v5920
    %6143 = vmatpush2.bf16.msra.mxu0 %v5919
    %6144 = vmatprep.subr.bf16.mxu0 %v5918
    %6145 = vmatpush2.bf16.msra.mxu0 %v5917
    %6146 = vmatprep.mubr.bf16.mxu0 %v6024
    %6147 = vmatmul.mubr.bf16.gmra.mxu0 %v5458
    %v6148 = vpop.f32.mrf.mxu0
    %v6149 = vadd.f32 %v6108, %v6148
    %v6150 = vpop.f32.mrf.mxu0
    %v6151 = vadd.f32 %v6110, %v6150
    %v6152 = vpop.f32.mrf.mxu0
    %v6153 = vpop.f32.mrf.mxu0
    %6154 = vdwg.mxu0
    %6156 = vrot.lane.b32.xlu0 %v4668, 63
    %v6157 = vpop.permute.xlu0 %6156
    %6160 = vrot.lane.b32.xlu0 %v5420, 125
    %v6161 = vpop.permute.xlu0 %6160
    %6164 = vrot.lane.b32.xlu0 %v6149, 60
    %v6165 = vpop.permute.xlu0 %6164
    %vm6167 = vcmask 515072
    %v6168 = vsel %vm6167, %v3927, %v6157
    %vm6169 = vcmask 1022976
    %v6170 = vsel %vm6169, %v6168, %v6161
    %v6171 = vsel %vm3222, %v6161, %v6165
    %v6172 = vpack.c.bf16 %v6170, %v6170
    %v6173 = vpack.c.bf16 %v6171, %v6171
    %v6174 = vld [vmem:[#allocation3] sm:$0xff]
    %v6175 = vld [vmem:[#allocation3 + $0x8] sm:$0xff]
    %v6176 = vld [vmem:[#allocation3 + $0x10] sm:$0xff]
    %v6177 = vld [vmem:[#allocation3 + $0x18] sm:$0xff]
    %v6178 = vld [vmem:[#allocation3 + $0x20] sm:$0xff]
    %v6179 = vld [vmem:[#allocation3 + $0x28] sm:$0xff]
    %v6180 = vld [vmem:[#allocation3 + $0x30] sm:$0xff]
    %v6181 = vld [vmem:[#allocation3 + $0x38] sm:$0xff]
    %v6182 = vld [vmem:[#allocation3 + $0x40] sm:$0xff]
    %v6183 = vld [vmem:[#allocation3 + $0x48] sm:$0xff]
    %v6184 = vld [vmem:[#allocation3 + $0x50] sm:$0xff]
    %v6185 = vld [vmem:[#allocation3 + $0x58] sm:$0xff]
    %v6186 = vld [vmem:[#allocation3 + $0x60] sm:$0xff]
    %v6187 = vld [vmem:[#allocation3 + $0x68] sm:$0xff]
    %v6188 = vld [vmem:[#allocation3 + $0x70] sm:$0xff]
    %v6189 = vld [vmem:[#allocation3 + $0x78] sm:$0xff]
    %v6190 = vld [vmem:[#allocation3 + $0x80] sm:$0xff]
    %v6191 = vld [vmem:[#allocation3 + $0x88] sm:$0xff]
    %v6192 = vld [vmem:[#allocation3 + $0x90] sm:$0xff]
    %v6193 = vld [vmem:[#allocation3 + $0x98] sm:$0xff]
    %v6194 = vld [vmem:[#allocation3 + $0xa0] sm:$0xff]
    %v6195 = vld [vmem:[#allocation3 + $0xa8] sm:$0xff]
    %v6196 = vld [vmem:[#allocation3 + $0xb0] sm:$0xff]
    %v6197 = vld [vmem:[#allocation3 + $0xb8] sm:$0xff]
    %v6198 = vld [vmem:[#allocation3 + $0xc0] sm:$0xff]
    %v6199 = vld [vmem:[#allocation3 + $0xc8] sm:$0xff]
    %v6200 = vld [vmem:[#allocation3 + $0xd0] sm:$0xff]
    %v6201 = vld [vmem:[#allocation3 + $0xd8] sm:$0xff]
    %v6202 = vld [vmem:[#allocation3 + $0xe0] sm:$0xff]
    %v6203 = vld [vmem:[#allocation3 + $0xe8] sm:$0xff]
    %v6204 = vld [vmem:[#allocation3 + $0xf0] sm:$0xff]
    %v6205 = vld [vmem:[#allocation3 + $0xf8] sm:$0x11]
    %v6206 = vld [vmem:[%s6] sm:$0x3]
    %v6208 = vlaneseq
    %v6209 = vshrl.u32 %v6208, 7
    %v6210 = vsub.s32 0, %v6209
    %v6211 = vrot.slane %v6206, %v6210
    %v6212 = vlaneseq
    %v6213 = vshrl.u32 %v6212, 7
    %v6214 = vsub.s32 1, %v6213
    %v6215 = vrot.slane %v6206, %v6214
    %v6250 = vunpack.c.l.b16 %v6174
    %v6251 = vunpack.c.h.b16 %v6174
    %v6252 = vunpack.c.l.b16 %v6175
    %v6253 = vunpack.c.h.b16 %v6175
    %v6254 = vunpack.c.l.b16 %v6176
    %v6255 = vunpack.c.h.b16 %v6176
    %v6256 = vunpack.c.l.b16 %v6177
    %v6257 = vunpack.c.h.b16 %v6177
    %v6258 = vunpack.c.l.b16 %v6178
    %v6259 = vunpack.c.h.b16 %v6178
    %v6260 = vunpack.c.l.b16 %v6179
    %v6261 = vunpack.c.h.b16 %v6179
    %v6262 = vunpack.c.l.b16 %v6180
    %v6263 = vunpack.c.h.b16 %v6180
    %v6264 = vunpack.c.l.b16 %v6181
    %v6265 = vunpack.c.h.b16 %v6181
    %v6266 = vunpack.c.l.b16 %v6182
    %v6267 = vunpack.c.h.b16 %v6182
    %v6268 = vunpack.c.l.b16 %v6183
    %v6269 = vunpack.c.h.b16 %v6183
    %v6270 = vunpack.c.l.b16 %v6184
    %v6271 = vunpack.c.h.b16 %v6184
    %v6272 = vunpack.c.l.b16 %v6185
    %v6273 = vunpack.c.h.b16 %v6185
    %v6274 = vunpack.c.l.b16 %v6186
    %v6275 = vunpack.c.h.b16 %v6186
    %v6276 = vunpack.c.l.b16 %v6187
    %v6277 = vunpack.c.h.b16 %v6187
    %v6278 = vunpack.c.l.b16 %v6188
    %v6279 = vunpack.c.h.b16 %v6188
    %v6280 = vunpack.c.l.b16 %v6189
    %v6281 = vunpack.c.h.b16 %v6189
    %v6282 = vunpack.c.l.b16 %v6190
    %v6283 = vunpack.c.h.b16 %v6190
    %v6284 = vunpack.c.l.b16 %v6191
    %v6285 = vunpack.c.h.b16 %v6191
    %v6286 = vunpack.c.l.b16 %v6192
    %v6287 = vunpack.c.h.b16 %v6192
    %v6288 = vunpack.c.l.b16 %v6193
    %v6289 = vunpack.c.h.b16 %v6193
    %v6290 = vunpack.c.l.b16 %v6194
    %v6291 = vunpack.c.h.b16 %v6194
    %v6292 = vunpack.c.l.b16 %v6195
    %v6293 = vunpack.c.h.b16 %v6195
    %v6294 = vunpack.c.l.b16 %v6196
    %v6295 = vunpack.c.h.b16 %v6196
    %v6296 = vunpack.c.l.b16 %v6197
    %v6297 = vunpack.c.h.b16 %v6197
    %v6298 = vunpack.c.l.b16 %v6198
    %v6299 = vunpack.c.h.b16 %v6198
    %v6300 = vunpack.c.l.b16 %v6199
    %v6301 = vunpack.c.h.b16 %v6199
    %v6302 = vunpack.c.l.b16 %v6200
    %v6303 = vunpack.c.h.b16 %v6200
    %v6304 = vunpack.c.l.b16 %v6201
    %v6305 = vunpack.c.h.b16 %v6201
    %v6306 = vunpack.c.l.b16 %v6202
    %v6307 = vunpack.c.h.b16 %v6202
    %v6308 = vunpack.c.l.b16 %v6203
    %v6309 = vunpack.c.h.b16 %v6203
    %v6310 = vunpack.c.l.b16 %v6204
    %v6311 = vunpack.c.h.b16 %v6204
    %v6312 = vunpack.c.l.b16 %v6205
    %v6313 = vunpack.c.h.b16 %v6205
    %v6314 = vpack.c.b16 %v6252, %v6250
    %v6315 = vpack.c.b16 %v6253, %v6251
    %v6316 = vpack.c.b16 %v6256, %v6254
    %v6317 = vpack.c.b16 %v6257, %v6255
    %v6318 = vpack.c.b16 %v6260, %v6258
    %v6319 = vpack.c.b16 %v6261, %v6259
    %v6320 = vpack.c.b16 %v6264, %v6262
    %v6321 = vpack.c.b16 %v6265, %v6263
    %v6322 = vpack.c.b16 %v6268, %v6266
    %v6323 = vpack.c.b16 %v6269, %v6267
    %v6324 = vpack.c.b16 %v6272, %v6270
    %v6325 = vpack.c.b16 %v6273, %v6271
    %v6326 = vpack.c.b16 %v6276, %v6274
    %v6327 = vpack.c.b16 %v6277, %v6275
    %v6328 = vpack.c.b16 %v6280, %v6278
    %v6329 = vpack.c.b16 %v6281, %v6279
    %v6330 = vpack.c.b16 %v6284, %v6282
    %v6331 = vpack.c.b16 %v6285, %v6283
    %v6332 = vpack.c.b16 %v6288, %v6286
    %v6333 = vpack.c.b16 %v6289, %v6287
    %v6334 = vpack.c.b16 %v6292, %v6290
    %v6335 = vpack.c.b16 %v6293, %v6291
    %v6336 = vpack.c.b16 %v6296, %v6294
    %v6337 = vpack.c.b16 %v6297, %v6295
    %v6338 = vpack.c.b16 %v6300, %v6298
    %v6339 = vpack.c.b16 %v6301, %v6299
    %v6340 = vpack.c.b16 %v6304, %v6302
    %v6341 = vpack.c.b16 %v6305, %v6303
    %v6342 = vpack.c.b16 %v6308, %v6306
    %v6343 = vpack.c.b16 %v6309, %v6307
    %v6344 = vpack.c.b16 %v6312, %v6310
    %v6345 = vpack.c.b16 %v6313, %v6311
    %vm6376 = vcmask 998400
    %v6378 = vsel %vm6376, %v6173, 0
    %vm6380 = vcmask 1044480
    %v6382 = vsel %vm6380, %v6344, 0
    %v6385 = vsel %vm6380, %v6345, 0
    %6387 = vmatprep.subr.bf16.mxu0 %v6329
    %6388 = vmatpush1.bf16.msra.mxu0 %v6328
    %6389 = vmatprep.subr.bf16.mxu0 %v6327
    %6390 = vmatpush1.bf16.msra.mxu0 %v6326
    %6391 = vmatprep.subr.bf16.mxu0 %v6325
    %6392 = vmatpush1.bf16.msra.mxu0 %v6324
    %6393 = vmatprep.subr.bf16.mxu0 %v6323
    %6394 = vmatpush1.bf16.msra.mxu0 %v6322
    %6395 = vmatprep.subr.bf16.mxu0 %v6321
    %6396 = vmatpush1.bf16.msra.mxu0 %v6320
    %6397 = vmatprep.subr.bf16.mxu0 %v6319
    %6398 = vmatpush1.bf16.msra.mxu0 %v6318
    %6399 = vmatprep.subr.bf16.mxu0 %v6317
    %6400 = vmatpush1.bf16.msra.mxu0 %v6316
    %6401 = vmatprep.subr.bf16.mxu0 %v6315
    %6402 = vmatpush1.bf16.msra.mxu0 %v6314
    %6403 = vmatprep.subr.bf16.mxu0 %v6385
    %6404 = vmatpush2.bf16.msra.mxu0 %v6382
    %6405 = vmatprep.subr.bf16.mxu0 %v6343
    %6406 = vmatpush2.bf16.msra.mxu0 %v6342
    %6407 = vmatprep.subr.bf16.mxu0 %v6341
    %6408 = vmatpush2.bf16.msra.mxu0 %v6340
    %6409 = vmatprep.subr.bf16.mxu0 %v6339
    %6410 = vmatpush2.bf16.msra.mxu0 %v6338
    %6411 = vmatprep.subr.bf16.mxu0 %v6337
    %6412 = vmatpush2.bf16.msra.mxu0 %v6336
    %6413 = vmatprep.subr.bf16.mxu0 %v6335
    %6414 = vmatpush2.bf16.msra.mxu0 %v6334
    %6415 = vmatprep.subr.bf16.mxu0 %v6333
    %6416 = vmatpush2.bf16.msra.mxu0 %v6332
    %6417 = vmatprep.subr.bf16.mxu0 %v6331
    %6418 = vmatpush2.bf16.msra.mxu0 %v6330
    %6419 = vmatprep.mubr.bf16.mxu0 %v6378
    %6420 = vmatmul.mubr.bf16.gmra.mxu0 %v6172
    %v6421 = vpop.f32.mrf.mxu0
    %v6422 = vadd.f32 %v6211, %v6421
    %v6423 = vpop.f32.mrf.mxu0
    %v6424 = vadd.f32 %v6215, %v6423
    %v6425 = vpop.f32.mrf.mxu0
    %v6426 = vpop.f32.mrf.mxu0
    %6427 = vdwg.mxu0
    %v6428 = vmax.f32 %v6422, 0.0
    %v6429 = vmax.f32 %v6424, 0.0
    %6431 = vrot.lane.b32.xlu0 %v3927, 65
    %v6432 = vpop.permute.xlu0 %6431
    %6434 = vrot.lane.b32.xlu0 %v4668, 1
    %v6435 = vpop.permute.xlu0 %6434
    %6437 = vrot.lane.b32.xlu0 %v5420, 62
    %v6438 = vpop.permute.xlu0 %6437
    %6440 = vrot.lane.b32.xlu0 %v6149, 126
    %v6441 = vpop.permute.xlu0 %6440
    %v6443 = vsel %vm6167, %v6432, %v6435
    %v6444 = vsel %vm6169, %v6443, %v6438
    %v6445 = vsel %vm3222, %v6438, %v6441
    %v6446 = vpack.c.bf16 %v6444, %v6444
    %v6447 = vpack.c.bf16 %v6445, %v6445
    %s6448 = scalar_lea.vmem [#allocation3], 256
    %v6449 = vld [vmem:[%s6448] sm:$0xff]
    %v6450 = vld [vmem:[%s6448 + $0x8] sm:$0xff]
    %v6451 = vld [vmem:[%s6448 + $0x10] sm:$0xff]
    %v6452 = vld [vmem:[%s6448 + $0x18] sm:$0xff]
    %v6453 = vld [vmem:[%s6448 + $0x20] sm:$0xff]
    %v6454 = vld [vmem:[%s6448 + $0x28] sm:$0xff]
    %v6455 = vld [vmem:[%s6448 + $0x30] sm:$0xff]
    %v6456 = vld [vmem:[%s6448 + $0x38] sm:$0xff]
    %v6457 = vld [vmem:[%s6448 + $0x40] sm:$0xff]
    %v6458 = vld [vmem:[%s6448 + $0x48] sm:$0xff]
    %v6459 = vld [vmem:[%s6448 + $0x50] sm:$0xff]
    %v6460 = vld [vmem:[%s6448 + $0x58] sm:$0xff]
    %v6461 = vld [vmem:[%s6448 + $0x60] sm:$0xff]
    %v6462 = vld [vmem:[%s6448 + $0x68] sm:$0xff]
    %v6463 = vld [vmem:[%s6448 + $0x70] sm:$0xff]
    %v6464 = vld [vmem:[%s6448 + $0x78] sm:$0xff]
    %v6465 = vld [vmem:[%s6448 + $0x80] sm:$0xff]
    %v6466 = vld [vmem:[%s6448 + $0x88] sm:$0xff]
    %v6467 = vld [vmem:[%s6448 + $0x90] sm:$0xff]
    %v6468 = vld [vmem:[%s6448 + $0x98] sm:$0xff]
    %v6469 = vld [vmem:[%s6448 + $0xa0] sm:$0xff]
    %v6470 = vld [vmem:[%s6448 + $0xa8] sm:$0xff]
    %v6471 = vld [vmem:[%s6448 + $0xb0] sm:$0xff]
    %v6472 = vld [vmem:[%s6448 + $0xb8] sm:$0xff]
    %v6473 = vld [vmem:[%s6448 + $0xc0] sm:$0xff]
    %v6474 = vld [vmem:[%s6448 + $0xc8] sm:$0xff]
    %v6475 = vld [vmem:[%s6448 + $0xd0] sm:$0xff]
    %v6476 = vld [vmem:[%s6448 + $0xd8] sm:$0xff]
    %v6477 = vld [vmem:[%s6448 + $0xe0] sm:$0xff]
    %v6478 = vld [vmem:[%s6448 + $0xe8] sm:$0xff]
    %v6479 = vld [vmem:[%s6448 + $0xf0] sm:$0xff]
    %v6480 = vld [vmem:[%s6448 + $0xf8] sm:$0x11]
    %s6481 = scalar_lea.vmem %s6, 2
    %v6482 = vld [vmem:[%s6481] sm:$0x3]
    %v6484 = vlaneseq
    %v6485 = vshrl.u32 %v6484, 7
    %v6486 = vsub.s32 0, %v6485
    %v6487 = vrot.slane %v6482, %v6486
    %v6488 = vlaneseq
    %v6489 = vshrl.u32 %v6488, 7
    %v6490 = vsub.s32 1, %v6489
    %v6491 = vrot.slane %v6482, %v6490
    %v6526 = vunpack.c.l.b16 %v6449
    %v6527 = vunpack.c.h.b16 %v6449
    %v6528 = vunpack.c.l.b16 %v6450
    %v6529 = vunpack.c.h.b16 %v6450
    %v6530 = vunpack.c.l.b16 %v6451
    %v6531 = vunpack.c.h.b16 %v6451
    %v6532 = vunpack.c.l.b16 %v6452
    %v6533 = vunpack.c.h.b16 %v6452
    %v6534 = vunpack.c.l.b16 %v6453
    %v6535 = vunpack.c.h.b16 %v6453
    %v6536 = vunpack.c.l.b16 %v6454
    %v6537 = vunpack.c.h.b16 %v6454
    %v6538 = vunpack.c.l.b16 %v6455
    %v6539 = vunpack.c.h.b16 %v6455
    %v6540 = vunpack.c.l.b16 %v6456
    %v6541 = vunpack.c.h.b16 %v6456
    %v6542 = vunpack.c.l.b16 %v6457
    %v6543 = vunpack.c.h.b16 %v6457
    %v6544 = vunpack.c.l.b16 %v6458
    %v6545 = vunpack.c.h.b16 %v6458
    %v6546 = vunpack.c.l.b16 %v6459
    %v6547 = vunpack.c.h.b16 %v6459
    %v6548 = vunpack.c.l.b16 %v6460
    %v6549 = vunpack.c.h.b16 %v6460
    %v6550 = vunpack.c.l.b16 %v6461
    %v6551 = vunpack.c.h.b16 %v6461
    %v6552 = vunpack.c.l.b16 %v6462
    %v6553 = vunpack.c.h.b16 %v6462
    %v6554 = vunpack.c.l.b16 %v6463
    %v6555 = vunpack.c.h.b16 %v6463
    %v6556 = vunpack.c.l.b16 %v6464
    %v6557 = vunpack.c.h.b16 %v6464
    %v6558 = vunpack.c.l.b16 %v6465
    %v6559 = vunpack.c.h.b16 %v6465
    %v6560 = vunpack.c.l.b16 %v6466
    %v6561 = vunpack.c.h.b16 %v6466
    %v6562 = vunpack.c.l.b16 %v6467
    %v6563 = vunpack.c.h.b16 %v6467
    %v6564 = vunpack.c.l.b16 %v6468
    %v6565 = vunpack.c.h.b16 %v6468
    %v6566 = vunpack.c.l.b16 %v6469
    %v6567 = vunpack.c.h.b16 %v6469
    %v6568 = vunpack.c.l.b16 %v6470
    %v6569 = vunpack.c.h.b16 %v6470
    %v6570 = vunpack.c.l.b16 %v6471
    %v6571 = vunpack.c.h.b16 %v6471
    %v6572 = vunpack.c.l.b16 %v6472
    %v6573 = vunpack.c.h.b16 %v6472
    %v6574 = vunpack.c.l.b16 %v6473
    %v6575 = vunpack.c.h.b16 %v6473
    %v6576 = vunpack.c.l.b16 %v6474
    %v6577 = vunpack.c.h.b16 %v6474
    %v6578 = vunpack.c.l.b16 %v6475
    %v6579 = vunpack.c.h.b16 %v6475
    %v6580 = vunpack.c.l.b16 %v6476
    %v6581 = vunpack.c.h.b16 %v6476
    %v6582 = vunpack.c.l.b16 %v6477
    %v6583 = vunpack.c.h.b16 %v6477
    %v6584 = vunpack.c.l.b16 %v6478
    %v6585 = vunpack.c.h.b16 %v6478
    %v6586 = vunpack.c.l.b16 %v6479
    %v6587 = vunpack.c.h.b16 %v6479
    %v6588 = vunpack.c.l.b16 %v6480
    %v6589 = vunpack.c.h.b16 %v6480
    %v6590 = vpack.c.b16 %v6528, %v6526
    %v6591 = vpack.c.b16 %v6529, %v6527
    %v6592 = vpack.c.b16 %v6532, %v6530
    %v6593 = vpack.c.b16 %v6533, %v6531
    %v6594 = vpack.c.b16 %v6536, %v6534
    %v6595 = vpack.c.b16 %v6537, %v6535
    %v6596 = vpack.c.b16 %v6540, %v6538
    %v6597 = vpack.c.b16 %v6541, %v6539
    %v6598 = vpack.c.b16 %v6544, %v6542
    %v6599 = vpack.c.b16 %v6545, %v6543
    %v6600 = vpack.c.b16 %v6548, %v6546
    %v6601 = vpack.c.b16 %v6549, %v6547
    %v6602 = vpack.c.b16 %v6552, %v6550
    %v6603 = vpack.c.b16 %v6553, %v6551
    %v6604 = vpack.c.b16 %v6556, %v6554
    %v6605 = vpack.c.b16 %v6557, %v6555
    %v6606 = vpack.c.b16 %v6560, %v6558
    %v6607 = vpack.c.b16 %v6561, %v6559
    %v6608 = vpack.c.b16 %v6564, %v6562
    %v6609 = vpack.c.b16 %v6565, %v6563
    %v6610 = vpack.c.b16 %v6568, %v6566
    %v6611 = vpack.c.b16 %v6569, %v6567
    %v6612 = vpack.c.b16 %v6572, %v6570
    %v6613 = vpack.c.b16 %v6573, %v6571
    %v6614 = vpack.c.b16 %v6576, %v6574
    %v6615 = vpack.c.b16 %v6577, %v6575
    %v6616 = vpack.c.b16 %v6580, %v6578
    %v6617 = vpack.c.b16 %v6581, %v6579
    %v6618 = vpack.c.b16 %v6584, %v6582
    %v6619 = vpack.c.b16 %v6585, %v6583
    %v6620 = vpack.c.b16 %v6588, %v6586
    %v6621 = vpack.c.b16 %v6589, %v6587
    %v6653 = vsel %vm6376, %v6447, 0
    %v6656 = vsel %vm6380, %v6620, 0
    %v6659 = vsel %vm6380, %v6621, 0
    %6661 = vmatprep.subr.bf16.mxu0 %v6605
    %6662 = vmatpush1.bf16.msra.mxu0 %v6604
    %6663 = vmatprep.subr.bf16.mxu0 %v6603
    %6664 = vmatpush1.bf16.msra.mxu0 %v6602
    %6665 = vmatprep.subr.bf16.mxu0 %v6601
    %6666 = vmatpush1.bf16.msra.mxu0 %v6600
    %6667 = vmatprep.subr.bf16.mxu0 %v6599
    %6668 = vmatpush1.bf16.msra.mxu0 %v6598
    %6669 = vmatprep.subr.bf16.mxu0 %v6597
    %6670 = vmatpush1.bf16.msra.mxu0 %v6596
    %6671 = vmatprep.subr.bf16.mxu0 %v6595
    %6672 = vmatpush1.bf16.msra.mxu0 %v6594
    %6673 = vmatprep.subr.bf16.mxu0 %v6593
    %6674 = vmatpush1.bf16.msra.mxu0 %v6592
    %6675 = vmatprep.subr.bf16.mxu0 %v6591
    %6676 = vmatpush1.bf16.msra.mxu0 %v6590
    %6677 = vmatprep.subr.bf16.mxu0 %v6659
    %6678 = vmatpush2.bf16.msra.mxu0 %v6656
    %6679 = vmatprep.subr.bf16.mxu0 %v6619
    %6680 = vmatpush2.bf16.msra.mxu0 %v6618
    %6681 = vmatprep.subr.bf16.mxu0 %v6617
    %6682 = vmatpush2.bf16.msra.mxu0 %v6616
    %6683 = vmatprep.subr.bf16.mxu0 %v6615
    %6684 = vmatpush2.bf16.msra.mxu0 %v6614
    %6685 = vmatprep.subr.bf16.mxu0 %v6613
    %6686 = vmatpush2.bf16.msra.mxu0 %v6612
    %6687 = vmatprep.subr.bf16.mxu0 %v6611
    %6688 = vmatpush2.bf16.msra.mxu0 %v6610
    %6689 = vmatprep.subr.bf16.mxu0 %v6609
    %6690 = vmatpush2.bf16.msra.mxu0 %v6608
    %6691 = vmatprep.subr.bf16.mxu0 %v6607
    %6692 = vmatpush2.bf16.msra.mxu0 %v6606
    %6693 = vmatprep.mubr.bf16.mxu0 %v6653
    %6694 = vmatmul.mubr.bf16.gmra.mxu0 %v6446
    %v6695 = vpop.f32.mrf.mxu0
    %v6696 = vadd.f32 %v6487, %v6695
    %v6697 = vpop.f32.mrf.mxu0
    %v6698 = vadd.f32 %v6491, %v6697
    %v6699 = vpop.f32.mrf.mxu0
    %v6700 = vpop.f32.mrf.mxu0
    %6701 = vdwg.mxu0
    %v6702 = vmax.f32 %v6696, 0.0
    %v6703 = vmax.f32 %v6698, 0.0
    %6705 = vrot.lane.b32.xlu0 %v3927, 2
    %v6706 = vpop.permute.xlu0 %6705
    %6707 = vrot.lane.b32.xlu0 %v3929, 2
    %v6708 = vpop.permute.xlu0 %6707
    %vm6709 = vcmask 15360
    %v6710 = vsel %vm6709, %v6706, %v6708
    %6713 = vrot.lane.b32.xlu0 %v4668, 66
    %v6714 = vpop.permute.xlu0 %6713
    %6715 = vrot.lane.b32.xlu0 %v4670, 66
    %v6716 = vpop.permute.xlu0 %6715
    %vm6717 = vcmask 539648
    %v6718 = vsel %vm6717, %v6714, %v6716
    %6721 = vrot.lane.b32.xlu0 %v5420, 127
    %v6722 = vpop.permute.xlu0 %6721
    %6723 = vrot.lane.b32.xlu0 %v5422, 127
    %v6724 = vpop.permute.xlu0 %6723
    %vm6725 = vcmask 1039360
    %v6726 = vsel %vm6725, %v6722, %v6724
    %6730 = vrot.lane.b32.xlu0 %v6149, 63
    %v6731 = vpop.permute.xlu0 %6730
    %6732 = vrot.lane.b32.xlu0 %v6151, 63
    %v6733 = vpop.permute.xlu0 %6732
    %v6734 = vsel %vm6167, %v6731, %v6733
    %vm6736 = vcmask 506880
    %v6737 = vsel %vm6736, %v6710, %v6718
    %v6738 = vsel %vm6169, %v6737, %v6726
    %v6739 = vsel %vm3964, %v6724, %v6734
    %v6740 = vpack.c.bf16 %v6738, %v6738
    %v6741 = vpack.c.bf16 %v6739, %v6739
    %s6742 = scalar_lea.vmem [#allocation3], 512
    %v6743 = vld [vmem:[%s6742] sm:$0xff]
    %v6744 = vld [vmem:[%s6742 + $0x8] sm:$0xff]
    %v6745 = vld [vmem:[%s6742 + $0x10] sm:$0xff]
    %v6746 = vld [vmem:[%s6742 + $0x18] sm:$0xff]
    %v6747 = vld [vmem:[%s6742 + $0x20] sm:$0xff]
    %v6748 = vld [vmem:[%s6742 + $0x28] sm:$0xff]
    %v6749 = vld [vmem:[%s6742 + $0x30] sm:$0xff]
    %v6750 = vld [vmem:[%s6742 + $0x38] sm:$0xff]
    %v6751 = vld [vmem:[%s6742 + $0x40] sm:$0xff]
    %v6752 = vld [vmem:[%s6742 + $0x48] sm:$0xff]
    %v6753 = vld [vmem:[%s6742 + $0x50] sm:$0xff]
    %v6754 = vld [vmem:[%s6742 + $0x58] sm:$0xff]
    %v6755 = vld [vmem:[%s6742 + $0x60] sm:$0xff]
    %v6756 = vld [vmem:[%s6742 + $0x68] sm:$0xff]
    %v6757 = vld [vmem:[%s6742 + $0x70] sm:$0xff]
    %v6758 = vld [vmem:[%s6742 + $0x78] sm:$0xff]
    %v6759 = vld [vmem:[%s6742 + $0x80] sm:$0xff]
    %v6760 = vld [vmem:[%s6742 + $0x88] sm:$0xff]
    %v6761 = vld [vmem:[%s6742 + $0x90] sm:$0xff]
    %v6762 = vld [vmem:[%s6742 + $0x98] sm:$0xff]
    %v6763 = vld [vmem:[%s6742 + $0xa0] sm:$0xff]
    %v6764 = vld [vmem:[%s6742 + $0xa8] sm:$0xff]
    %v6765 = vld [vmem:[%s6742 + $0xb0] sm:$0xff]
    %v6766 = vld [vmem:[%s6742 + $0xb8] sm:$0xff]
    %v6767 = vld [vmem:[%s6742 + $0xc0] sm:$0xff]
    %v6768 = vld [vmem:[%s6742 + $0xc8] sm:$0xff]
    %v6769 = vld [vmem:[%s6742 + $0xd0] sm:$0xff]
    %v6770 = vld [vmem:[%s6742 + $0xd8] sm:$0xff]
    %v6771 = vld [vmem:[%s6742 + $0xe0] sm:$0xff]
    %v6772 = vld [vmem:[%s6742 + $0xe8] sm:$0xff]
    %v6773 = vld [vmem:[%s6742 + $0xf0] sm:$0xff]
    %v6774 = vld [vmem:[%s6742 + $0xf8] sm:$0x11]
    %s6775 = scalar_lea.vmem %s6, 4
    %v6776 = vld [vmem:[%s6775] sm:$0x3]
    %v6778 = vlaneseq
    %v6779 = vshrl.u32 %v6778, 7
    %v6780 = vsub.s32 0, %v6779
    %v6781 = vrot.slane %v6776, %v6780
    %v6782 = vlaneseq
    %v6783 = vshrl.u32 %v6782, 7
    %v6784 = vsub.s32 1, %v6783
    %v6785 = vrot.slane %v6776, %v6784
    %v6820 = vunpack.c.l.b16 %v6743
    %v6821 = vunpack.c.h.b16 %v6743
    %v6822 = vunpack.c.l.b16 %v6744
    %v6823 = vunpack.c.h.b16 %v6744
    %v6824 = vunpack.c.l.b16 %v6745
    %v6825 = vunpack.c.h.b16 %v6745
    %v6826 = vunpack.c.l.b16 %v6746
    %v6827 = vunpack.c.h.b16 %v6746
    %v6828 = vunpack.c.l.b16 %v6747
    %v6829 = vunpack.c.h.b16 %v6747
    %v6830 = vunpack.c.l.b16 %v6748
    %v6831 = vunpack.c.h.b16 %v6748
    %v6832 = vunpack.c.l.b16 %v6749
    %v6833 = vunpack.c.h.b16 %v6749
    %v6834 = vunpack.c.l.b16 %v6750
    %v6835 = vunpack.c.h.b16 %v6750
    %v6836 = vunpack.c.l.b16 %v6751
    %v6837 = vunpack.c.h.b16 %v6751
    %v6838 = vunpack.c.l.b16 %v6752
    %v6839 = vunpack.c.h.b16 %v6752
    %v6840 = vunpack.c.l.b16 %v6753
    %v6841 = vunpack.c.h.b16 %v6753
    %v6842 = vunpack.c.l.b16 %v6754
    %v6843 = vunpack.c.h.b16 %v6754
    %v6844 = vunpack.c.l.b16 %v6755
    %v6845 = vunpack.c.h.b16 %v6755
    %v6846 = vunpack.c.l.b16 %v6756
    %v6847 = vunpack.c.h.b16 %v6756
    %v6848 = vunpack.c.l.b16 %v6757
    %v6849 = vunpack.c.h.b16 %v6757
    %v6850 = vunpack.c.l.b16 %v6758
    %v6851 = vunpack.c.h.b16 %v6758
    %v6852 = vunpack.c.l.b16 %v6759
    %v6853 = vunpack.c.h.b16 %v6759
    %v6854 = vunpack.c.l.b16 %v6760
    %v6855 = vunpack.c.h.b16 %v6760
    %v6856 = vunpack.c.l.b16 %v6761
    %v6857 = vunpack.c.h.b16 %v6761
    %v6858 = vunpack.c.l.b16 %v6762
    %v6859 = vunpack.c.h.b16 %v6762
    %v6860 = vunpack.c.l.b16 %v6763
    %v6861 = vunpack.c.h.b16 %v6763
    %v6862 = vunpack.c.l.b16 %v6764
    %v6863 = vunpack.c.h.b16 %v6764
    %v6864 = vunpack.c.l.b16 %v6765
    %v6865 = vunpack.c.h.b16 %v6765
    %v6866 = vunpack.c.l.b16 %v6766
    %v6867 = vunpack.c.h.b16 %v6766
    %v6868 = vunpack.c.l.b16 %v6767
    %v6869 = vunpack.c.h.b16 %v6767
    %v6870 = vunpack.c.l.b16 %v6768
    %v6871 = vunpack.c.h.b16 %v6768
    %v6872 = vunpack.c.l.b16 %v6769
    %v6873 = vunpack.c.h.b16 %v6769
    %v6874 = vunpack.c.l.b16 %v6770
    %v6875 = vunpack.c.h.b16 %v6770
    %v6876 = vunpack.c.l.b16 %v6771
    %v6877 = vunpack.c.h.b16 %v6771
    %v6878 = vunpack.c.l.b16 %v6772
    %v6879 = vunpack.c.h.b16 %v6772
    %v6880 = vunpack.c.l.b16 %v6773
    %v6881 = vunpack.c.h.b16 %v6773
    %v6882 = vunpack.c.l.b16 %v6774
    %v6883 = vunpack.c.h.b16 %v6774
    %v6884 = vpack.c.b16 %v6822, %v6820
    %v6885 = vpack.c.b16 %v6823, %v6821
    %v6886 = vpack.c.b16 %v6826, %v6824
    %v6887 = vpack.c.b16 %v6827, %v6825
    %v6888 = vpack.c.b16 %v6830, %v6828
    %v6889 = vpack.c.b16 %v6831, %v6829
    %v6890 = vpack.c.b16 %v6834, %v6832
    %v6891 = vpack.c.b16 %v6835, %v6833
    %v6892 = vpack.c.b16 %v6838, %v6836
    %v6893 = vpack.c.b16 %v6839, %v6837
    %v6894 = vpack.c.b16 %v6842, %v6840
    %v6895 = vpack.c.b16 %v6843, %v6841
    %v6896 = vpack.c.b16 %v6846, %v6844
    %v6897 = vpack.c.b16 %v6847, %v6845
    %v6898 = vpack.c.b16 %v6850, %v6848
    %v6899 = vpack.c.b16 %v6851, %v6849
    %v6900 = vpack.c.b16 %v6854, %v6852
    %v6901 = vpack.c.b16 %v6855, %v6853
    %v6902 = vpack.c.b16 %v6858, %v6856
    %v6903 = vpack.c.b16 %v6859, %v6857
    %v6904 = vpack.c.b16 %v6862, %v6860
    %v6905 = vpack.c.b16 %v6863, %v6861
    %v6906 = vpack.c.b16 %v6866, %v6864
    %v6907 = vpack.c.b16 %v6867, %v6865
    %v6908 = vpack.c.b16 %v6870, %v6868
    %v6909 = vpack.c.b16 %v6871, %v6869
    %v6910 = vpack.c.b16 %v6874, %v6872
    %v6911 = vpack.c.b16 %v6875, %v6873
    %v6912 = vpack.c.b16 %v6878, %v6876
    %v6913 = vpack.c.b16 %v6879, %v6877
    %v6914 = vpack.c.b16 %v6882, %v6880
    %v6915 = vpack.c.b16 %v6883, %v6881
    %v6947 = vsel %vm6376, %v6741, 0
    %v6950 = vsel %vm6380, %v6914, 0
    %v6953 = vsel %vm6380, %v6915, 0
    %6955 = vmatprep.subr.bf16.mxu0 %v6899
    %6956 = vmatpush1.bf16.msra.mxu0 %v6898
    %6957 = vmatprep.subr.bf16.mxu0 %v6897
    %6958 = vmatpush1.bf16.msra.mxu0 %v6896
    %6959 = vmatprep.subr.bf16.mxu0 %v6895
    %6960 = vmatpush1.bf16.msra.mxu0 %v6894
    %6961 = vmatprep.subr.bf16.mxu0 %v6893
    %6962 = vmatpush1.bf16.msra.mxu0 %v6892
    %6963 = vmatprep.subr.bf16.mxu0 %v6891
    %6964 = vmatpush1.bf16.msra.mxu0 %v6890
    %6965 = vmatprep.subr.bf16.mxu0 %v6889
    %6966 = vmatpush1.bf16.msra.mxu0 %v6888
    %6967 = vmatprep.subr.bf16.mxu0 %v6887
    %6968 = vmatpush1.bf16.msra.mxu0 %v6886
    %6969 = vmatprep.subr.bf16.mxu0 %v6885
    %6970 = vmatpush1.bf16.msra.mxu0 %v6884
    %6971 = vmatprep.subr.bf16.mxu0 %v6953
    %6972 = vmatpush2.bf16.msra.mxu0 %v6950
    %6973 = vmatprep.subr.bf16.mxu0 %v6913
    %6974 = vmatpush2.bf16.msra.mxu0 %v6912
    %6975 = vmatprep.subr.bf16.mxu0 %v6911
    %6976 = vmatpush2.bf16.msra.mxu0 %v6910
    %6977 = vmatprep.subr.bf16.mxu0 %v6909
    %6978 = vmatpush2.bf16.msra.mxu0 %v6908
    %6979 = vmatprep.subr.bf16.mxu0 %v6907
    %6980 = vmatpush2.bf16.msra.mxu0 %v6906
    %6981 = vmatprep.subr.bf16.mxu0 %v6905
    %6982 = vmatpush2.bf16.msra.mxu0 %v6904
    %6983 = vmatprep.subr.bf16.mxu0 %v6903
    %6984 = vmatpush2.bf16.msra.mxu0 %v6902
    %6985 = vmatprep.subr.bf16.mxu0 %v6901
    %6986 = vmatpush2.bf16.msra.mxu0 %v6900
    %6987 = vmatprep.mubr.bf16.mxu0 %v6947
    %6988 = vmatmul.mubr.bf16.gmra.mxu0 %v6740
    %v6989 = vpop.f32.mrf.mxu0
    %v6990 = vadd.f32 %v6781, %v6989
    %v6991 = vpop.f32.mrf.mxu0
    %v6992 = vadd.f32 %v6785, %v6991
    %v6993 = vpop.f32.mrf.mxu0
    %v6994 = vpop.f32.mrf.mxu0
    %6995 = vdwg.mxu0
    %v6996 = vmax.f32 %v6990, 0.0
    %v6997 = vmax.f32 %v6992, 0.0
    %6998 = vrot.lane.b32.xlu0 %v3929, 68
    %v6999 = vpop.permute.xlu0 %6998
    %7001 = vrot.lane.b32.xlu0 %v4670, 3
    %v7002 = vpop.permute.xlu0 %7001
    %7004 = vrot.lane.b32.xlu0 %v5422, 65
    %v7005 = vpop.permute.xlu0 %7004
    %v7007 = vsel %vm6736, %v6999, %v7002
    %v7008 = vsel %vm6169, %v7007, %v7005
    %v7009 = vsel %vm3964, %v7005, %v6151
    %v7010 = vpack.c.bf16 %v7008, %v7008
    %v7011 = vpack.c.bf16 %v7009, %v7009
    %s7012 = scalar_lea.vmem [#allocation3], 768
    %v7013 = vld [vmem:[%s7012] sm:$0xff]
    %v7014 = vld [vmem:[%s7012 + $0x8] sm:$0xff]
    %v7015 = vld [vmem:[%s7012 + $0x10] sm:$0xff]
    %v7016 = vld [vmem:[%s7012 + $0x18] sm:$0xff]
    %v7017 = vld [vmem:[%s7012 + $0x20] sm:$0xff]
    %v7018 = vld [vmem:[%s7012 + $0x28] sm:$0xff]
    %v7019 = vld [vmem:[%s7012 + $0x30] sm:$0xff]
    %v7020 = vld [vmem:[%s7012 + $0x38] sm:$0xff]
    %v7021 = vld [vmem:[%s7012 + $0x40] sm:$0xff]
    %v7022 = vld [vmem:[%s7012 + $0x48] sm:$0xff]
    %v7023 = vld [vmem:[%s7012 + $0x50] sm:$0xff]
    %v7024 = vld [vmem:[%s7012 + $0x58] sm:$0xff]
    %v7025 = vld [vmem:[%s7012 + $0x60] sm:$0xff]
    %v7026 = vld [vmem:[%s7012 + $0x68] sm:$0xff]
    %v7027 = vld [vmem:[%s7012 + $0x70] sm:$0xff]
    %v7028 = vld [vmem:[%s7012 + $0x78] sm:$0xff]
    %v7029 = vld [vmem:[%s7012 + $0x80] sm:$0xff]
    %v7030 = vld [vmem:[%s7012 + $0x88] sm:$0xff]
    %v7031 = vld [vmem:[%s7012 + $0x90] sm:$0xff]
    %v7032 = vld [vmem:[%s7012 + $0x98] sm:$0xff]
    %v7033 = vld [vmem:[%s7012 + $0xa0] sm:$0xff]
    %v7034 = vld [vmem:[%s7012 + $0xa8] sm:$0xff]
    %v7035 = vld [vmem:[%s7012 + $0xb0] sm:$0xff]
    %v7036 = vld [vmem:[%s7012 + $0xb8] sm:$0xff]
    %v7037 = vld [vmem:[%s7012 + $0xc0] sm:$0xff]
    %v7038 = vld [vmem:[%s7012 + $0xc8] sm:$0xff]
    %v7039 = vld [vmem:[%s7012 + $0xd0] sm:$0xff]
    %v7040 = vld [vmem:[%s7012 + $0xd8] sm:$0xff]
    %v7041 = vld [vmem:[%s7012 + $0xe0] sm:$0xff]
    %v7042 = vld [vmem:[%s7012 + $0xe8] sm:$0xff]
    %v7043 = vld [vmem:[%s7012 + $0xf0] sm:$0xff]
    %v7044 = vld [vmem:[%s7012 + $0xf8] sm:$0x11]
    %s7045 = scalar_lea.vmem %s6, 6
    %v7046 = vld [vmem:[%s7045] sm:$0x3]
    %v7048 = vlaneseq
    %v7049 = vshrl.u32 %v7048, 7
    %v7050 = vsub.s32 0, %v7049
    %v7051 = vrot.slane %v7046, %v7050
    %v7052 = vlaneseq
    %v7053 = vshrl.u32 %v7052, 7
    %v7054 = vsub.s32 1, %v7053
    %v7055 = vrot.slane %v7046, %v7054
    %v7090 = vunpack.c.l.b16 %v7013
    %v7091 = vunpack.c.h.b16 %v7013
    %v7092 = vunpack.c.l.b16 %v7014
    %v7093 = vunpack.c.h.b16 %v7014
    %v7094 = vunpack.c.l.b16 %v7015
    %v7095 = vunpack.c.h.b16 %v7015
    %v7096 = vunpack.c.l.b16 %v7016
    %v7097 = vunpack.c.h.b16 %v7016
    %v7098 = vunpack.c.l.b16 %v7017
    %v7099 = vunpack.c.h.b16 %v7017
    %v7100 = vunpack.c.l.b16 %v7018
    %v7101 = vunpack.c.h.b16 %v7018
    %v7102 = vunpack.c.l.b16 %v7019
    %v7103 = vunpack.c.h.b16 %v7019
    %v7104 = vunpack.c.l.b16 %v7020
    %v7105 = vunpack.c.h.b16 %v7020
    %v7106 = vunpack.c.l.b16 %v7021
    %v7107 = vunpack.c.h.b16 %v7021
    %v7108 = vunpack.c.l.b16 %v7022
    %v7109 = vunpack.c.h.b16 %v7022
    %v7110 = vunpack.c.l.b16 %v7023
    %v7111 = vunpack.c.h.b16 %v7023
    %v7112 = vunpack.c.l.b16 %v7024
    %v7113 = vunpack.c.h.b16 %v7024
    %v7114 = vunpack.c.l.b16 %v7025
    %v7115 = vunpack.c.h.b16 %v7025
    %v7116 = vunpack.c.l.b16 %v7026
    %v7117 = vunpack.c.h.b16 %v7026
    %v7118 = vunpack.c.l.b16 %v7027
    %v7119 = vunpack.c.h.b16 %v7027
    %v7120 = vunpack.c.l.b16 %v7028
    %v7121 = vunpack.c.h.b16 %v7028
    %v7122 = vunpack.c.l.b16 %v7029
    %v7123 = vunpack.c.h.b16 %v7029
    %v7124 = vunpack.c.l.b16 %v7030
    %v7125 = vunpack.c.h.b16 %v7030
    %v7126 = vunpack.c.l.b16 %v7031
    %v7127 = vunpack.c.h.b16 %v7031
    %v7128 = vunpack.c.l.b16 %v7032
    %v7129 = vunpack.c.h.b16 %v7032
    %v7130 = vunpack.c.l.b16 %v7033
    %v7131 = vunpack.c.h.b16 %v7033
    %v7132 = vunpack.c.l.b16 %v7034
    %v7133 = vunpack.c.h.b16 %v7034
    %v7134 = vunpack.c.l.b16 %v7035
    %v7135 = vunpack.c.h.b16 %v7035
    %v7136 = vunpack.c.l.b16 %v7036
    %v7137 = vunpack.c.h.b16 %v7036
    %v7138 = vunpack.c.l.b16 %v7037
    %v7139 = vunpack.c.h.b16 %v7037
    %v7140 = vunpack.c.l.b16 %v7038
    %v7141 = vunpack.c.h.b16 %v7038
    %v7142 = vunpack.c.l.b16 %v7039
    %v7143 = vunpack.c.h.b16 %v7039
    %v7144 = vunpack.c.l.b16 %v7040
    %v7145 = vunpack.c.h.b16 %v7040
    %v7146 = vunpack.c.l.b16 %v7041
    %v7147 = vunpack.c.h.b16 %v7041
    %v7148 = vunpack.c.l.b16 %v7042
    %v7149 = vunpack.c.h.b16 %v7042
    %v7150 = vunpack.c.l.b16 %v7043
    %v7151 = vunpack.c.h.b16 %v7043
    %v7152 = vunpack.c.l.b16 %v7044
    %v7153 = vunpack.c.h.b16 %v7044
    %v7154 = vpack.c.b16 %v7092, %v7090
    %v7155 = vpack.c.b16 %v7093, %v7091
    %v7156 = vpack.c.b16 %v7096, %v7094
    %v7157 = vpack.c.b16 %v7097, %v7095
    %v7158 = vpack.c.b16 %v7100, %v7098
    %v7159 = vpack.c.b16 %v7101, %v7099
    %v7160 = vpack.c.b16 %v7104, %v7102
    %v7161 = vpack.c.b16 %v7105, %v7103
    %v7162 = vpack.c.b16 %v7108, %v7106
    %v7163 = vpack.c.b16 %v7109, %v7107
    %v7164 = vpack.c.b16 %v7112, %v7110
    %v7165 = vpack.c.b16 %v7113, %v7111
    %v7166 = vpack.c.b16 %v7116, %v7114
    %v7167 = vpack.c.b16 %v7117, %v7115
    %v7168 = vpack.c.b16 %v7120, %v7118
    %v7169 = vpack.c.b16 %v7121, %v7119
    %v7170 = vpack.c.b16 %v7124, %v7122
    %v7171 = vpack.c.b16 %v7125, %v7123
    %v7172 = vpack.c.b16 %v7128, %v7126
    %v7173 = vpack.c.b16 %v7129, %v7127
    %v7174 = vpack.c.b16 %v7132, %v7130
    %v7175 = vpack.c.b16 %v7133, %v7131
    %v7176 = vpack.c.b16 %v7136, %v7134
    %v7177 = vpack.c.b16 %v7137, %v7135
    %v7178 = vpack.c.b16 %v7140, %v7138
    %v7179 = vpack.c.b16 %v7141, %v7139
    %v7180 = vpack.c.b16 %v7144, %v7142
    %v7181 = vpack.c.b16 %v7145, %v7143
    %v7182 = vpack.c.b16 %v7148, %v7146
    %v7183 = vpack.c.b16 %v7149, %v7147
    %v7184 = vpack.c.b16 %v7152, %v7150
    %v7185 = vpack.c.b16 %v7153, %v7151
    %v7217 = vsel %vm6376, %v7011, 0
    %v7220 = vsel %vm6380, %v7184, 0
    %v7223 = vsel %vm6380, %v7185, 0
    %7225 = vmatprep.subr.bf16.mxu0 %v7169
    %7226 = vmatpush1.bf16.msra.mxu0 %v7168
    %7227 = vmatprep.subr.bf16.mxu0 %v7167
    %7228 = vmatpush1.bf16.msra.mxu0 %v7166
    %7229 = vmatprep.subr.bf16.mxu0 %v7165
    %7230 = vmatpush1.bf16.msra.mxu0 %v7164
    %7231 = vmatprep.subr.bf16.mxu0 %v7163
    %7232 = vmatpush1.bf16.msra.mxu0 %v7162
    %7233 = vmatprep.subr.bf16.mxu0 %v7161
    %7234 = vmatpush1.bf16.msra.mxu0 %v7160
    %7235 = vmatprep.subr.bf16.mxu0 %v7159
    %7236 = vmatpush1.bf16.msra.mxu0 %v7158
    %7237 = vmatprep.subr.bf16.mxu0 %v7157
    %7238 = vmatpush1.bf16.msra.mxu0 %v7156
    %7239 = vmatprep.subr.bf16.mxu0 %v7155
    %7240 = vmatpush1.bf16.msra.mxu0 %v7154
    %7241 = vmatprep.subr.bf16.mxu0 %v7223
    %7242 = vmatpush2.bf16.msra.mxu0 %v7220
    %7243 = vmatprep.subr.bf16.mxu0 %v7183
    %7244 = vmatpush2.bf16.msra.mxu0 %v7182
    %7245 = vmatprep.subr.bf16.mxu0 %v7181
    %7246 = vmatpush2.bf16.msra.mxu0 %v7180
    %7247 = vmatprep.subr.bf16.mxu0 %v7179
    %7248 = vmatpush2.bf16.msra.mxu0 %v7178
    %7249 = vmatprep.subr.bf16.mxu0 %v7177
    %7250 = vmatpush2.bf16.msra.mxu0 %v7176
    %7251 = vmatprep.subr.bf16.mxu0 %v7175
    %7252 = vmatpush2.bf16.msra.mxu0 %v7174
    %7253 = vmatprep.subr.bf16.mxu0 %v7173
    %7254 = vmatpush2.bf16.msra.mxu0 %v7172
    %7255 = vmatprep.subr.bf16.mxu0 %v7171
    %7256 = vmatpush2.bf16.msra.mxu0 %v7170
    %7257 = vmatprep.mubr.bf16.mxu0 %v7217
    %7258 = vmatmul.mubr.bf16.gmra.mxu0 %v7010
    %v7259 = vpop.f32.mrf.mxu0
    %v7260 = vadd.f32 %v7051, %v7259
    %v7261 = vpop.f32.mrf.mxu0
    %v7262 = vadd.f32 %v7055, %v7261
    %v7263 = vpop.f32.mrf.mxu0
    %v7264 = vpop.f32.mrf.mxu0
    %7265 = vdwg.mxu0
    %v7266 = vmax.f32 %v7260, 0.0
    %v7267 = vmax.f32 %v7262, 0.0
    %s7268 = sshll.u32 %s3170, 4
    %7269 = dma.done %s1135, %s7268
    %s7270 = sshll.u32 %s3170, 4
    %7271 = dma.done %s1433, %s7270
    %v7272 = vpack.c.bf16 %v6428, %v6428
    %v7273 = vpack.c.bf16 %v6429, %v6429
    %v7274 = vpack.c.bf16 %v6702, %v6702
    %v7275 = vpack.c.bf16 %v6703, %v6703
    %v7276 = vpack.c.bf16 %v6996, %v6996
    %v7277 = vpack.c.bf16 %v6997, %v6997
    %v7278 = vpack.c.bf16 %v7266, %v7266
    %v7279 = vpack.c.bf16 %v7267, %v7267
    %7281 = vrot.lane.b32.xlu0 %v7274, 63
    %v7282 = vpop.permute.xlu0 %7281
    %7284 = vrot.lane.b32.xlu0 %v7276, 126
    %v7285 = vpop.permute.xlu0 %7284
    %7287 = vrot.lane.b32.xlu0 %v7278, 60
    %v7288 = vpop.permute.xlu0 %7287
    %v7291 = vsel %vm6167, %v7272, %v7282
    %vm7292 = vcmask 1031168
    %v7294 = vsel %vm7292, %v7291, %v7285
    %v7297 = vsel %vm3222, %v7285, %v7288
    %v7298 = vld [vmem:[#allocation4] sm:$0xff]
    %v7299 = vld [vmem:[#allocation4 + $0x8] sm:$0xff]
    %v7300 = vld [vmem:[#allocation4 + $0x10] sm:$0xff]
    %v7301 = vld [vmem:[#allocation4 + $0x18] sm:$0xff]
    %v7302 = vld [vmem:[#allocation4 + $0x20] sm:$0xff]
    %v7303 = vld [vmem:[#allocation4 + $0x28] sm:$0xff]
    %v7304 = vld [vmem:[#allocation4 + $0x30] sm:$0xff]
    %v7305 = vld [vmem:[#allocation4 + $0x38] sm:$0xff]
    %v7306 = vld [vmem:[#allocation4 + $0x40] sm:$0xff]
    %v7307 = vld [vmem:[#allocation4 + $0x48] sm:$0xff]
    %v7308 = vld [vmem:[#allocation4 + $0x50] sm:$0xff]
    %v7309 = vld [vmem:[#allocation4 + $0x58] sm:$0xff]
    %v7310 = vld [vmem:[#allocation4 + $0x60] sm:$0xff]
    %v7311 = vld [vmem:[#allocation4 + $0x68] sm:$0xff]
    %v7312 = vld [vmem:[#allocation4 + $0x70] sm:$0xff]
    %v7313 = vld [vmem:[#allocation4 + $0x78] sm:$0xff]
    %v7314 = vld [vmem:[#allocation4 + $0x80] sm:$0xff]
    %v7315 = vld [vmem:[#allocation4 + $0x88] sm:$0xff]
    %v7316 = vld [vmem:[#allocation4 + $0x90] sm:$0xff]
    %v7317 = vld [vmem:[#allocation4 + $0x98] sm:$0xff]
    %v7318 = vld [vmem:[#allocation4 + $0xa0] sm:$0xff]
    %v7319 = vld [vmem:[#allocation4 + $0xa8] sm:$0xff]
    %v7320 = vld [vmem:[#allocation4 + $0xb0] sm:$0xff]
    %v7321 = vld [vmem:[#allocation4 + $0xb8] sm:$0xff]
    %v7322 = vld [vmem:[#allocation4 + $0xc0] sm:$0xff]
    %v7323 = vld [vmem:[#allocation4 + $0xc8] sm:$0xff]
    %v7324 = vld [vmem:[#allocation4 + $0xd0] sm:$0xff]
    %v7325 = vld [vmem:[#allocation4 + $0xd8] sm:$0xff]
    %v7326 = vld [vmem:[#allocation4 + $0xe0] sm:$0xff]
    %v7327 = vld [vmem:[#allocation4 + $0xe8] sm:$0xff]
    %v7328 = vld [vmem:[#allocation4 + $0xf0] sm:$0xff]
    %v7329 = vld [vmem:[#allocation4 + $0xf8] sm:$0x11]
    %v7362 = vunpack.c.l.b16 %v7298
    %v7363 = vunpack.c.h.b16 %v7298
    %v7364 = vunpack.c.l.b16 %v7299
    %v7365 = vunpack.c.h.b16 %v7299
    %v7366 = vunpack.c.l.b16 %v7300
    %v7367 = vunpack.c.h.b16 %v7300
    %v7368 = vunpack.c.l.b16 %v7301
    %v7369 = vunpack.c.h.b16 %v7301
    %v7370 = vunpack.c.l.b16 %v7302
    %v7371 = vunpack.c.h.b16 %v7302
    %v7372 = vunpack.c.l.b16 %v7303
    %v7373 = vunpack.c.h.b16 %v7303
    %v7374 = vunpack.c.l.b16 %v7304
    %v7375 = vunpack.c.h.b16 %v7304
    %v7376 = vunpack.c.l.b16 %v7305
    %v7377 = vunpack.c.h.b16 %v7305
    %v7378 = vunpack.c.l.b16 %v7306
    %v7379 = vunpack.c.h.b16 %v7306
    %v7380 = vunpack.c.l.b16 %v7307
    %v7381 = vunpack.c.h.b16 %v7307
    %v7382 = vunpack.c.l.b16 %v7308
    %v7383 = vunpack.c.h.b16 %v7308
    %v7384 = vunpack.c.l.b16 %v7309
    %v7385 = vunpack.c.h.b16 %v7309
    %v7386 = vunpack.c.l.b16 %v7310
    %v7387 = vunpack.c.h.b16 %v7310
    %v7388 = vunpack.c.l.b16 %v7311
    %v7389 = vunpack.c.h.b16 %v7311
    %v7390 = vunpack.c.l.b16 %v7312
    %v7391 = vunpack.c.h.b16 %v7312
    %v7392 = vunpack.c.l.b16 %v7313
    %v7393 = vunpack.c.h.b16 %v7313
    %v7394 = vunpack.c.l.b16 %v7314
    %v7395 = vunpack.c.h.b16 %v7314
    %v7396 = vunpack.c.l.b16 %v7315
    %v7397 = vunpack.c.h.b16 %v7315
    %v7398 = vunpack.c.l.b16 %v7316
    %v7399 = vunpack.c.h.b16 %v7316
    %v7400 = vunpack.c.l.b16 %v7317
    %v7401 = vunpack.c.h.b16 %v7317
    %v7402 = vunpack.c.l.b16 %v7318
    %v7403 = vunpack.c.h.b16 %v7318
    %v7404 = vunpack.c.l.b16 %v7319
    %v7405 = vunpack.c.h.b16 %v7319
    %v7406 = vunpack.c.l.b16 %v7320
    %v7407 = vunpack.c.h.b16 %v7320
    %v7408 = vunpack.c.l.b16 %v7321
    %v7409 = vunpack.c.h.b16 %v7321
    %v7410 = vunpack.c.l.b16 %v7322
    %v7411 = vunpack.c.h.b16 %v7322
    %v7412 = vunpack.c.l.b16 %v7323
    %v7413 = vunpack.c.h.b16 %v7323
    %v7414 = vunpack.c.l.b16 %v7324
    %v7415 = vunpack.c.h.b16 %v7324
    %v7416 = vunpack.c.l.b16 %v7325
    %v7417 = vunpack.c.h.b16 %v7325
    %v7418 = vunpack.c.l.b16 %v7326
    %v7419 = vunpack.c.h.b16 %v7326
    %v7420 = vunpack.c.l.b16 %v7327
    %v7421 = vunpack.c.h.b16 %v7327
    %v7422 = vunpack.c.l.b16 %v7328
    %v7423 = vunpack.c.h.b16 %v7328
    %v7424 = vunpack.c.l.b16 %v7329
    %v7425 = vunpack.c.h.b16 %v7329
    %v7426 = vpack.c.b16 %v7364, %v7362
    %v7427 = vpack.c.b16 %v7365, %v7363
    %v7428 = vpack.c.b16 %v7368, %v7366
    %v7429 = vpack.c.b16 %v7369, %v7367
    %v7430 = vpack.c.b16 %v7372, %v7370
    %v7431 = vpack.c.b16 %v7373, %v7371
    %v7432 = vpack.c.b16 %v7376, %v7374
    %v7433 = vpack.c.b16 %v7377, %v7375
    %v7434 = vpack.c.b16 %v7380, %v7378
    %v7435 = vpack.c.b16 %v7381, %v7379
    %v7436 = vpack.c.b16 %v7384, %v7382
    %v7437 = vpack.c.b16 %v7385, %v7383
    %v7438 = vpack.c.b16 %v7388, %v7386
    %v7439 = vpack.c.b16 %v7389, %v7387
    %v7440 = vpack.c.b16 %v7392, %v7390
    %v7441 = vpack.c.b16 %v7393, %v7391
    %v7442 = vpack.c.b16 %v7396, %v7394
    %v7443 = vpack.c.b16 %v7397, %v7395
    %v7444 = vpack.c.b16 %v7400, %v7398
    %v7445 = vpack.c.b16 %v7401, %v7399
    %v7446 = vpack.c.b16 %v7404, %v7402
    %v7447 = vpack.c.b16 %v7405, %v7403
    %v7448 = vpack.c.b16 %v7408, %v7406
    %v7449 = vpack.c.b16 %v7409, %v7407
    %v7450 = vpack.c.b16 %v7412, %v7410
    %v7451 = vpack.c.b16 %v7413, %v7411
    %v7452 = vpack.c.b16 %v7416, %v7414
    %v7453 = vpack.c.b16 %v7417, %v7415
    %v7454 = vpack.c.b16 %v7420, %v7418
    %v7455 = vpack.c.b16 %v7421, %v7419
    %v7456 = vpack.c.b16 %v7424, %v7422
    %v7457 = vpack.c.b16 %v7425, %v7423
    %v7488 = vsel %vm6376, %v7297, 0
    %v7491 = vsel %vm6380, %v7456, 0
    %v7494 = vsel %vm6380, %v7457, 0
    %7496 = vmatprep.subr.bf16.mxu0 %v7441
    %7497 = vmatpush1.bf16.msra.mxu0 %v7440
    %7498 = vmatprep.subr.bf16.mxu0 %v7439
    %7499 = vmatpush1.bf16.msra.mxu0 %v7438
    %7500 = vmatprep.subr.bf16.mxu0 %v7437
    %7501 = vmatpush1.bf16.msra.mxu0 %v7436
    %7502 = vmatprep.subr.bf16.mxu0 %v7435
    %7503 = vmatpush1.bf16.msra.mxu0 %v7434
    %7504 = vmatprep.subr.bf16.mxu0 %v7433
    %7505 = vmatpush1.bf16.msra.mxu0 %v7432
    %7506 = vmatprep.subr.bf16.mxu0 %v7431
    %7507 = vmatpush1.bf16.msra.mxu0 %v7430
    %7508 = vmatprep.subr.bf16.mxu0 %v7429
    %7509 = vmatpush1.bf16.msra.mxu0 %v7428
    %7510 = vmatprep.subr.bf16.mxu0 %v7427
    %7511 = vmatpush1.bf16.msra.mxu0 %v7426
    %7512 = vmatprep.subr.bf16.mxu0 %v7494
    %7513 = vmatpush2.bf16.msra.mxu0 %v7491
    %7514 = vmatprep.subr.bf16.mxu0 %v7455
    %7515 = vmatpush2.bf16.msra.mxu0 %v7454
    %7516 = vmatprep.subr.bf16.mxu0 %v7453
    %7517 = vmatpush2.bf16.msra.mxu0 %v7452
    %7518 = vmatprep.subr.bf16.mxu0 %v7451
    %7519 = vmatpush2.bf16.msra.mxu0 %v7450
    %7520 = vmatprep.subr.bf16.mxu0 %v7449
    %7521 = vmatpush2.bf16.msra.mxu0 %v7448
    %7522 = vmatprep.subr.bf16.mxu0 %v7447
    %7523 = vmatpush2.bf16.msra.mxu0 %v7446
    %7524 = vmatprep.subr.bf16.mxu0 %v7445
    %7525 = vmatpush2.bf16.msra.mxu0 %v7444
    %7526 = vmatprep.subr.bf16.mxu0 %v7443
    %7527 = vmatpush2.bf16.msra.mxu0 %v7442
    %7528 = vmatprep.mubr.bf16.mxu0 %v7488
    %7529 = vmatmul.mubr.bf16.gmra.mxu0 %v7294
    %v7530 = vpop.f32.mrf.mxu0
    %v7531 = vadd.f32 0.0, %v7530
    %v7532 = vpop.f32.mrf.mxu0
    %v7533 = vadd.f32 0.0, %v7532
    %v7534 = vpop.f32.mrf.mxu0
    %v7535 = vpop.f32.mrf.mxu0
    %7536 = vdwg.mxu0
    %7538 = vrot.lane.b32.xlu0 %v7272, 65
    %v7539 = vpop.permute.xlu0 %7538
    %7540 = vrot.lane.b32.xlu0 %v7274, 127
    %v7541 = vpop.permute.xlu0 %7540
    %7542 = vrot.lane.b32.xlu0 %v7276, 62
    %v7543 = vpop.permute.xlu0 %7542
    %7544 = vrot.lane.b32.xlu0 %v7278, 125
    %v7545 = vpop.permute.xlu0 %7544
    %v7548 = vsel %vm6736, %v7539, %v7541
    %vm7549 = vcmask 1014784
    %v7551 = vsel %vm7549, %v7548, %v7543
    %v7554 = vsel %vm3964, %v7543, %v7545
    %s7555 = scalar_lea.vmem [#allocation4], 256
    %v7556 = vld [vmem:[%s7555] sm:$0xff]
    %v7557 = vld [vmem:[%s7555 + $0x8] sm:$0xff]
    %v7558 = vld [vmem:[%s7555 + $0x10] sm:$0xff]
    %v7559 = vld [vmem:[%s7555 + $0x18] sm:$0xff]
    %v7560 = vld [vmem:[%s7555 + $0x20] sm:$0xff]
    %v7561 = vld [vmem:[%s7555 + $0x28] sm:$0xff]
    %v7562 = vld [vmem:[%s7555 + $0x30] sm:$0xff]
    %v7563 = vld [vmem:[%s7555 + $0x38] sm:$0xff]
    %v7564 = vld [vmem:[%s7555 + $0x40] sm:$0xff]
    %v7565 = vld [vmem:[%s7555 + $0x48] sm:$0xff]
    %v7566 = vld [vmem:[%s7555 + $0x50] sm:$0xff]
    %v7567 = vld [vmem:[%s7555 + $0x58] sm:$0xff]
    %v7568 = vld [vmem:[%s7555 + $0x60] sm:$0xff]
    %v7569 = vld [vmem:[%s7555 + $0x68] sm:$0xff]
    %v7570 = vld [vmem:[%s7555 + $0x70] sm:$0xff]
    %v7571 = vld [vmem:[%s7555 + $0x78] sm:$0xff]
    %v7572 = vld [vmem:[%s7555 + $0x80] sm:$0xff]
    %v7573 = vld [vmem:[%s7555 + $0x88] sm:$0xff]
    %v7574 = vld [vmem:[%s7555 + $0x90] sm:$0xff]
    %v7575 = vld [vmem:[%s7555 + $0x98] sm:$0xff]
    %v7576 = vld [vmem:[%s7555 + $0xa0] sm:$0xff]
    %v7577 = vld [vmem:[%s7555 + $0xa8] sm:$0xff]
    %v7578 = vld [vmem:[%s7555 + $0xb0] sm:$0xff]
    %v7579 = vld [vmem:[%s7555 + $0xb8] sm:$0xff]
    %v7580 = vld [vmem:[%s7555 + $0xc0] sm:$0xff]
    %v7581 = vld [vmem:[%s7555 + $0xc8] sm:$0xff]
    %v7582 = vld [vmem:[%s7555 + $0xd0] sm:$0xff]
    %v7583 = vld [vmem:[%s7555 + $0xd8] sm:$0xff]
    %v7584 = vld [vmem:[%s7555 + $0xe0] sm:$0xff]
    %v7585 = vld [vmem:[%s7555 + $0xe8] sm:$0xff]
    %v7586 = vld [vmem:[%s7555 + $0xf0] sm:$0xff]
    %v7587 = vld [vmem:[%s7555 + $0xf8] sm:$0x11]
    %v7620 = vunpack.c.l.b16 %v7556
    %v7621 = vunpack.c.h.b16 %v7556
    %v7622 = vunpack.c.l.b16 %v7557
    %v7623 = vunpack.c.h.b16 %v7557
    %v7624 = vunpack.c.l.b16 %v7558
    %v7625 = vunpack.c.h.b16 %v7558
    %v7626 = vunpack.c.l.b16 %v7559
    %v7627 = vunpack.c.h.b16 %v7559
    %v7628 = vunpack.c.l.b16 %v7560
    %v7629 = vunpack.c.h.b16 %v7560
    %v7630 = vunpack.c.l.b16 %v7561
    %v7631 = vunpack.c.h.b16 %v7561
    %v7632 = vunpack.c.l.b16 %v7562
    %v7633 = vunpack.c.h.b16 %v7562
    %v7634 = vunpack.c.l.b16 %v7563
    %v7635 = vunpack.c.h.b16 %v7563
    %v7636 = vunpack.c.l.b16 %v7564
    %v7637 = vunpack.c.h.b16 %v7564
    %v7638 = vunpack.c.l.b16 %v7565
    %v7639 = vunpack.c.h.b16 %v7565
    %v7640 = vunpack.c.l.b16 %v7566
    %v7641 = vunpack.c.h.b16 %v7566
    %v7642 = vunpack.c.l.b16 %v7567
    %v7643 = vunpack.c.h.b16 %v7567
    %v7644 = vunpack.c.l.b16 %v7568
    %v7645 = vunpack.c.h.b16 %v7568
    %v7646 = vunpack.c.l.b16 %v7569
    %v7647 = vunpack.c.h.b16 %v7569
    %v7648 = vunpack.c.l.b16 %v7570
    %v7649 = vunpack.c.h.b16 %v7570
    %v7650 = vunpack.c.l.b16 %v7571
    %v7651 = vunpack.c.h.b16 %v7571
    %v7652 = vunpack.c.l.b16 %v7572
    %v7653 = vunpack.c.h.b16 %v7572
    %v7654 = vunpack.c.l.b16 %v7573
    %v7655 = vunpack.c.h.b16 %v7573
    %v7656 = vunpack.c.l.b16 %v7574
    %v7657 = vunpack.c.h.b16 %v7574
    %v7658 = vunpack.c.l.b16 %v7575
    %v7659 = vunpack.c.h.b16 %v7575
    %v7660 = vunpack.c.l.b16 %v7576
    %v7661 = vunpack.c.h.b16 %v7576
    %v7662 = vunpack.c.l.b16 %v7577
    %v7663 = vunpack.c.h.b16 %v7577
    %v7664 = vunpack.c.l.b16 %v7578
    %v7665 = vunpack.c.h.b16 %v7578
    %v7666 = vunpack.c.l.b16 %v7579
    %v7667 = vunpack.c.h.b16 %v7579
    %v7668 = vunpack.c.l.b16 %v7580
    %v7669 = vunpack.c.h.b16 %v7580
    %v7670 = vunpack.c.l.b16 %v7581
    %v7671 = vunpack.c.h.b16 %v7581
    %v7672 = vunpack.c.l.b16 %v7582
    %v7673 = vunpack.c.h.b16 %v7582
    %v7674 = vunpack.c.l.b16 %v7583
    %v7675 = vunpack.c.h.b16 %v7583
    %v7676 = vunpack.c.l.b16 %v7584
    %v7677 = vunpack.c.h.b16 %v7584
    %v7678 = vunpack.c.l.b16 %v7585
    %v7679 = vunpack.c.h.b16 %v7585
    %v7680 = vunpack.c.l.b16 %v7586
    %v7681 = vunpack.c.h.b16 %v7586
    %v7682 = vunpack.c.l.b16 %v7587
    %v7683 = vunpack.c.h.b16 %v7587
    %v7684 = vpack.c.b16 %v7622, %v7620
    %v7685 = vpack.c.b16 %v7623, %v7621
    %v7686 = vpack.c.b16 %v7626, %v7624
    %v7687 = vpack.c.b16 %v7627, %v7625
    %v7688 = vpack.c.b16 %v7630, %v7628
    %v7689 = vpack.c.b16 %v7631, %v7629
    %v7690 = vpack.c.b16 %v7634, %v7632
    %v7691 = vpack.c.b16 %v7635, %v7633
    %v7692 = vpack.c.b16 %v7638, %v7636
    %v7693 = vpack.c.b16 %v7639, %v7637
    %v7694 = vpack.c.b16 %v7642, %v7640
    %v7695 = vpack.c.b16 %v7643, %v7641
    %v7696 = vpack.c.b16 %v7646, %v7644
    %v7697 = vpack.c.b16 %v7647, %v7645
    %v7698 = vpack.c.b16 %v7650, %v7648
    %v7699 = vpack.c.b16 %v7651, %v7649
    %v7700 = vpack.c.b16 %v7654, %v7652
    %v7701 = vpack.c.b16 %v7655, %v7653
    %v7702 = vpack.c.b16 %v7658, %v7656
    %v7703 = vpack.c.b16 %v7659, %v7657
    %v7704 = vpack.c.b16 %v7662, %v7660
    %v7705 = vpack.c.b16 %v7663, %v7661
    %v7706 = vpack.c.b16 %v7666, %v7664
    %v7707 = vpack.c.b16 %v7667, %v7665
    %v7708 = vpack.c.b16 %v7670, %v7668
    %v7709 = vpack.c.b16 %v7671, %v7669
    %v7710 = vpack.c.b16 %v7674, %v7672
    %v7711 = vpack.c.b16 %v7675, %v7673
    %v7712 = vpack.c.b16 %v7678, %v7676
    %v7713 = vpack.c.b16 %v7679, %v7677
    %v7714 = vpack.c.b16 %v7682, %v7680
    %v7715 = vpack.c.b16 %v7683, %v7681
    %v7746 = vsel %vm6376, %v7554, 0
    %v7749 = vsel %vm6380, %v7714, 0
    %v7752 = vsel %vm6380, %v7715, 0
    %7754 = vmatprep.subr.bf16.mxu0 %v7699
    %7755 = vmatpush1.bf16.msra.mxu0 %v7698
    %7756 = vmatprep.subr.bf16.mxu0 %v7697
    %7757 = vmatpush1.bf16.msra.mxu0 %v7696
    %7758 = vmatprep.subr.bf16.mxu0 %v7695
    %7759 = vmatpush1.bf16.msra.mxu0 %v7694
    %7760 = vmatprep.subr.bf16.mxu0 %v7693
    %7761 = vmatpush1.bf16.msra.mxu0 %v7692
    %7762 = vmatprep.subr.bf16.mxu0 %v7691
    %7763 = vmatpush1.bf16.msra.mxu0 %v7690
    %7764 = vmatprep.subr.bf16.mxu0 %v7689
    %7765 = vmatpush1.bf16.msra.mxu0 %v7688
    %7766 = vmatprep.subr.bf16.mxu0 %v7687
    %7767 = vmatpush1.bf16.msra.mxu0 %v7686
    %7768 = vmatprep.subr.bf16.mxu0 %v7685
    %7769 = vmatpush1.bf16.msra.mxu0 %v7684
    %7770 = vmatprep.subr.bf16.mxu0 %v7752
    %7771 = vmatpush2.bf16.msra.mxu0 %v7749
    %7772 = vmatprep.subr.bf16.mxu0 %v7713
    %7773 = vmatpush2.bf16.msra.mxu0 %v7712
    %7774 = vmatprep.subr.bf16.mxu0 %v7711
    %7775 = vmatpush2.bf16.msra.mxu0 %v7710
    %7776 = vmatprep.subr.bf16.mxu0 %v7709
    %7777 = vmatpush2.bf16.msra.mxu0 %v7708
    %7778 = vmatprep.subr.bf16.mxu0 %v7707
    %7779 = vmatpush2.bf16.msra.mxu0 %v7706
    %7780 = vmatprep.subr.bf16.mxu0 %v7705
    %7781 = vmatpush2.bf16.msra.mxu0 %v7704
    %7782 = vmatprep.subr.bf16.mxu0 %v7703
    %7783 = vmatpush2.bf16.msra.mxu0 %v7702
    %7784 = vmatprep.subr.bf16.mxu0 %v7701
    %7785 = vmatpush2.bf16.msra.mxu0 %v7700
    %7786 = vmatprep.mubr.bf16.mxu0 %v7746
    %7787 = vmatmul.mubr.bf16.gmra.mxu0 %v7551
    %v7788 = vpop.f32.mrf.mxu0
    %v7789 = vadd.f32 0.0, %v7788
    %v7790 = vpop.f32.mrf.mxu0
    %v7791 = vadd.f32 0.0, %v7790
    %v7792 = vpop.f32.mrf.mxu0
    %v7793 = vpop.f32.mrf.mxu0
    %7794 = vdwg.mxu0
    %7796 = vrot.lane.b32.xlu0 %v7272, 3
    %v7797 = vpop.permute.xlu0 %7796
    %7798 = vrot.lane.b32.xlu0 %v7273, 3
    %v7799 = vpop.permute.xlu0 %7798
    %vm7800 = vcmask 23552
    %v7801 = vsel %vm7800, %v7797, %v7799
    %7803 = vrot.lane.b32.xlu0 %v7274, 66
    %v7804 = vpop.permute.xlu0 %7803
    %7805 = vrot.lane.b32.xlu0 %v7275, 66
    %v7806 = vpop.permute.xlu0 %7805
    %vm7807 = vcmask 539648
    %v7808 = vsel %vm7807, %v7804, %v7806
    %7810 = vrot.lane.b32.xlu0 %v7276, 1
    %v7811 = vpop.permute.xlu0 %7810
    %7812 = vrot.lane.b32.xlu0 %v7277, 1
    %v7813 = vpop.permute.xlu0 %7812
    %v7814 = vsel %vm4705, %v7811, %v7813
    %7816 = vrot.lane.b32.xlu0 %v7278, 63
    %v7817 = vpop.permute.xlu0 %7816
    %7818 = vrot.lane.b32.xlu0 %v7279, 63
    %v7819 = vpop.permute.xlu0 %7818
    %vm7820 = vcmask 515072
    %v7821 = vsel %vm7820, %v7817, %v7819
    %v7824 = vsel %vm6167, %v7801, %v7808
    %v7826 = vsel %vm7292, %v7824, %v7811
    %v7830 = vsel %vm3222, %v7814, %v7821
    %s7831 = scalar_lea.vmem [#allocation4], 512
    %v7832 = vld [vmem:[%s7831] sm:$0xff]
    %v7833 = vld [vmem:[%s7831 + $0x8] sm:$0xff]
    %v7834 = vld [vmem:[%s7831 + $0x10] sm:$0xff]
    %v7835 = vld [vmem:[%s7831 + $0x18] sm:$0xff]
    %v7836 = vld [vmem:[%s7831 + $0x20] sm:$0xff]
    %v7837 = vld [vmem:[%s7831 + $0x28] sm:$0xff]
    %v7838 = vld [vmem:[%s7831 + $0x30] sm:$0xff]
    %v7839 = vld [vmem:[%s7831 + $0x38] sm:$0xff]
    %v7840 = vld [vmem:[%s7831 + $0x40] sm:$0xff]
    %v7841 = vld [vmem:[%s7831 + $0x48] sm:$0xff]
    %v7842 = vld [vmem:[%s7831 + $0x50] sm:$0xff]
    %v7843 = vld [vmem:[%s7831 + $0x58] sm:$0xff]
    %v7844 = vld [vmem:[%s7831 + $0x60] sm:$0xff]
    %v7845 = vld [vmem:[%s7831 + $0x68] sm:$0xff]
    %v7846 = vld [vmem:[%s7831 + $0x70] sm:$0xff]
    %v7847 = vld [vmem:[%s7831 + $0x78] sm:$0xff]
    %v7848 = vld [vmem:[%s7831 + $0x80] sm:$0xff]
    %v7849 = vld [vmem:[%s7831 + $0x88] sm:$0xff]
    %v7850 = vld [vmem:[%s7831 + $0x90] sm:$0xff]
    %v7851 = vld [vmem:[%s7831 + $0x98] sm:$0xff]
    %v7852 = vld [vmem:[%s7831 + $0xa0] sm:$0xff]
    %v7853 = vld [vmem:[%s7831 + $0xa8] sm:$0xff]
    %v7854 = vld [vmem:[%s7831 + $0xb0] sm:$0xff]
    %v7855 = vld [vmem:[%s7831 + $0xb8] sm:$0xff]
    %v7856 = vld [vmem:[%s7831 + $0xc0] sm:$0xff]
    %v7857 = vld [vmem:[%s7831 + $0xc8] sm:$0xff]
    %v7858 = vld [vmem:[%s7831 + $0xd0] sm:$0xff]
    %v7859 = vld [vmem:[%s7831 + $0xd8] sm:$0xff]
    %v7860 = vld [vmem:[%s7831 + $0xe0] sm:$0xff]
    %v7861 = vld [vmem:[%s7831 + $0xe8] sm:$0xff]
    %v7862 = vld [vmem:[%s7831 + $0xf0] sm:$0xff]
    %v7863 = vld [vmem:[%s7831 + $0xf8] sm:$0x11]
    %v7896 = vunpack.c.l.b16 %v7832
    %v7897 = vunpack.c.h.b16 %v7832
    %v7898 = vunpack.c.l.b16 %v7833
    %v7899 = vunpack.c.h.b16 %v7833
    %v7900 = vunpack.c.l.b16 %v7834
    %v7901 = vunpack.c.h.b16 %v7834
    %v7902 = vunpack.c.l.b16 %v7835
    %v7903 = vunpack.c.h.b16 %v7835
    %v7904 = vunpack.c.l.b16 %v7836
    %v7905 = vunpack.c.h.b16 %v7836
    %v7906 = vunpack.c.l.b16 %v7837
    %v7907 = vunpack.c.h.b16 %v7837
    %v7908 = vunpack.c.l.b16 %v7838
    %v7909 = vunpack.c.h.b16 %v7838
    %v7910 = vunpack.c.l.b16 %v7839
    %v7911 = vunpack.c.h.b16 %v7839
    %v7912 = vunpack.c.l.b16 %v7840
    %v7913 = vunpack.c.h.b16 %v7840
    %v7914 = vunpack.c.l.b16 %v7841
    %v7915 = vunpack.c.h.b16 %v7841
    %v7916 = vunpack.c.l.b16 %v7842
    %v7917 = vunpack.c.h.b16 %v7842
    %v7918 = vunpack.c.l.b16 %v7843
    %v7919 = vunpack.c.h.b16 %v7843
    %v7920 = vunpack.c.l.b16 %v7844
    %v7921 = vunpack.c.h.b16 %v7844
    %v7922 = vunpack.c.l.b16 %v7845
    %v7923 = vunpack.c.h.b16 %v7845
    %v7924 = vunpack.c.l.b16 %v7846
    %v7925 = vunpack.c.h.b16 %v7846
    %v7926 = vunpack.c.l.b16 %v7847
    %v7927 = vunpack.c.h.b16 %v7847
    %v7928 = vunpack.c.l.b16 %v7848
    %v7929 = vunpack.c.h.b16 %v7848
    %v7930 = vunpack.c.l.b16 %v7849
    %v7931 = vunpack.c.h.b16 %v7849
    %v7932 = vunpack.c.l.b16 %v7850
    %v7933 = vunpack.c.h.b16 %v7850
    %v7934 = vunpack.c.l.b16 %v7851
    %v7935 = vunpack.c.h.b16 %v7851
    %v7936 = vunpack.c.l.b16 %v7852
    %v7937 = vunpack.c.h.b16 %v7852
    %v7938 = vunpack.c.l.b16 %v7853
    %v7939 = vunpack.c.h.b16 %v7853
    %v7940 = vunpack.c.l.b16 %v7854
    %v7941 = vunpack.c.h.b16 %v7854
    %v7942 = vunpack.c.l.b16 %v7855
    %v7943 = vunpack.c.h.b16 %v7855
    %v7944 = vunpack.c.l.b16 %v7856
    %v7945 = vunpack.c.h.b16 %v7856
    %v7946 = vunpack.c.l.b16 %v7857
    %v7947 = vunpack.c.h.b16 %v7857
    %v7948 = vunpack.c.l.b16 %v7858
    %v7949 = vunpack.c.h.b16 %v7858
    %v7950 = vunpack.c.l.b16 %v7859
    %v7951 = vunpack.c.h.b16 %v7859
    %v7952 = vunpack.c.l.b16 %v7860
    %v7953 = vunpack.c.h.b16 %v7860
    %v7954 = vunpack.c.l.b16 %v7861
    %v7955 = vunpack.c.h.b16 %v7861
    %v7956 = vunpack.c.l.b16 %v7862
    %v7957 = vunpack.c.h.b16 %v7862
    %v7958 = vunpack.c.l.b16 %v7863
    %v7959 = vunpack.c.h.b16 %v7863
    %v7960 = vpack.c.b16 %v7898, %v7896
    %v7961 = vpack.c.b16 %v7899, %v7897
    %v7962 = vpack.c.b16 %v7902, %v7900
    %v7963 = vpack.c.b16 %v7903, %v7901
    %v7964 = vpack.c.b16 %v7906, %v7904
    %v7965 = vpack.c.b16 %v7907, %v7905
    %v7966 = vpack.c.b16 %v7910, %v7908
    %v7967 = vpack.c.b16 %v7911, %v7909
    %v7968 = vpack.c.b16 %v7914, %v7912
    %v7969 = vpack.c.b16 %v7915, %v7913
    %v7970 = vpack.c.b16 %v7918, %v7916
    %v7971 = vpack.c.b16 %v7919, %v7917
    %v7972 = vpack.c.b16 %v7922, %v7920
    %v7973 = vpack.c.b16 %v7923, %v7921
    %v7974 = vpack.c.b16 %v7926, %v7924
    %v7975 = vpack.c.b16 %v7927, %v7925
    %v7976 = vpack.c.b16 %v7930, %v7928
    %v7977 = vpack.c.b16 %v7931, %v7929
    %v7978 = vpack.c.b16 %v7934, %v7932
    %v7979 = vpack.c.b16 %v7935, %v7933
    %v7980 = vpack.c.b16 %v7938, %v7936
    %v7981 = vpack.c.b16 %v7939, %v7937
    %v7982 = vpack.c.b16 %v7942, %v7940
    %v7983 = vpack.c.b16 %v7943, %v7941
    %v7984 = vpack.c.b16 %v7946, %v7944
    %v7985 = vpack.c.b16 %v7947, %v7945
    %v7986 = vpack.c.b16 %v7950, %v7948
    %v7987 = vpack.c.b16 %v7951, %v7949
    %v7988 = vpack.c.b16 %v7954, %v7952
    %v7989 = vpack.c.b16 %v7955, %v7953
    %v7990 = vpack.c.b16 %v7958, %v7956
    %v7991 = vpack.c.b16 %v7959, %v7957
    %v8022 = vsel %vm6376, %v7830, 0
    %v8025 = vsel %vm6380, %v7990, 0
    %v8028 = vsel %vm6380, %v7991, 0
    %8030 = vmatprep.subr.bf16.mxu0 %v7975
    %8031 = vmatpush1.bf16.msra.mxu0 %v7974
    %8032 = vmatprep.subr.bf16.mxu0 %v7973
    %8033 = vmatpush1.bf16.msra.mxu0 %v7972
    %8034 = vmatprep.subr.bf16.mxu0 %v7971
    %8035 = vmatpush1.bf16.msra.mxu0 %v7970
    %8036 = vmatprep.subr.bf16.mxu0 %v7969
    %8037 = vmatpush1.bf16.msra.mxu0 %v7968
    %8038 = vmatprep.subr.bf16.mxu0 %v7967
    %8039 = vmatpush1.bf16.msra.mxu0 %v7966
    %8040 = vmatprep.subr.bf16.mxu0 %v7965
    %8041 = vmatpush1.bf16.msra.mxu0 %v7964
    %8042 = vmatprep.subr.bf16.mxu0 %v7963
    %8043 = vmatpush1.bf16.msra.mxu0 %v7962
    %8044 = vmatprep.subr.bf16.mxu0 %v7961
    %8045 = vmatpush1.bf16.msra.mxu0 %v7960
    %8046 = vmatprep.subr.bf16.mxu0 %v8028
    %8047 = vmatpush2.bf16.msra.mxu0 %v8025
    %8048 = vmatprep.subr.bf16.mxu0 %v7989
    %8049 = vmatpush2.bf16.msra.mxu0 %v7988
    %8050 = vmatprep.subr.bf16.mxu0 %v7987
    %8051 = vmatpush2.bf16.msra.mxu0 %v7986
    %8052 = vmatprep.subr.bf16.mxu0 %v7985
    %8053 = vmatpush2.bf16.msra.mxu0 %v7984
    %8054 = vmatprep.subr.bf16.mxu0 %v7983
    %8055 = vmatpush2.bf16.msra.mxu0 %v7982
    %8056 = vmatprep.subr.bf16.mxu0 %v7981
    %8057 = vmatpush2.bf16.msra.mxu0 %v7980
    %8058 = vmatprep.subr.bf16.mxu0 %v7979
    %8059 = vmatpush2.bf16.msra.mxu0 %v7978
    %8060 = vmatprep.subr.bf16.mxu0 %v7977
    %8061 = vmatpush2.bf16.msra.mxu0 %v7976
    %8062 = vmatprep.mubr.bf16.mxu0 %v8022
    %8063 = vmatmul.mubr.bf16.gmra.mxu0 %v7826
    %v8064 = vpop.f32.mrf.mxu0
    %v8065 = vadd.f32 0.0, %v8064
    %v8066 = vpop.f32.mrf.mxu0
    %v8067 = vadd.f32 0.0, %v8066
    %v8068 = vpop.f32.mrf.mxu0
    %v8069 = vpop.f32.mrf.mxu0
    %8070 = vdwg.mxu0
    %8071 = vrot.lane.b32.xlu0 %v7273, 68
    %v8072 = vpop.permute.xlu0 %8071
    %8073 = vrot.lane.b32.xlu0 %v7275, 2
    %v8074 = vpop.permute.xlu0 %8073
    %8075 = vrot.lane.b32.xlu0 %v7277, 65
    %v8076 = vpop.permute.xlu0 %8075
    %v8079 = vsel %vm6736, %v8072, %v8074
    %v8081 = vsel %vm7549, %v8079, %v8076
    %v8084 = vsel %vm3964, %v8076, %v7279
    %s8085 = scalar_lea.vmem [#allocation4], 768
    %v8086 = vld [vmem:[%s8085] sm:$0xff]
    %v8087 = vld [vmem:[%s8085 + $0x8] sm:$0xff]
    %v8088 = vld [vmem:[%s8085 + $0x10] sm:$0xff]
    %v8089 = vld [vmem:[%s8085 + $0x18] sm:$0xff]
    %v8090 = vld [vmem:[%s8085 + $0x20] sm:$0xff]
    %v8091 = vld [vmem:[%s8085 + $0x28] sm:$0xff]
    %v8092 = vld [vmem:[%s8085 + $0x30] sm:$0xff]
    %v8093 = vld [vmem:[%s8085 + $0x38] sm:$0xff]
    %v8094 = vld [vmem:[%s8085 + $0x40] sm:$0xff]
    %v8095 = vld [vmem:[%s8085 + $0x48] sm:$0xff]
    %v8096 = vld [vmem:[%s8085 + $0x50] sm:$0xff]
    %v8097 = vld [vmem:[%s8085 + $0x58] sm:$0xff]
    %v8098 = vld [vmem:[%s8085 + $0x60] sm:$0xff]
    %v8099 = vld [vmem:[%s8085 + $0x68] sm:$0xff]
    %v8100 = vld [vmem:[%s8085 + $0x70] sm:$0xff]
    %v8101 = vld [vmem:[%s8085 + $0x78] sm:$0xff]
    %v8102 = vld [vmem:[%s8085 + $0x80] sm:$0xff]
    %v8103 = vld [vmem:[%s8085 + $0x88] sm:$0xff]
    %v8104 = vld [vmem:[%s8085 + $0x90] sm:$0xff]
    %v8105 = vld [vmem:[%s8085 + $0x98] sm:$0xff]
    %v8106 = vld [vmem:[%s8085 + $0xa0] sm:$0xff]
    %v8107 = vld [vmem:[%s8085 + $0xa8] sm:$0xff]
    %v8108 = vld [vmem:[%s8085 + $0xb0] sm:$0xff]
    %v8109 = vld [vmem:[%s8085 + $0xb8] sm:$0xff]
    %v8110 = vld [vmem:[%s8085 + $0xc0] sm:$0xff]
    %v8111 = vld [vmem:[%s8085 + $0xc8] sm:$0xff]
    %v8112 = vld [vmem:[%s8085 + $0xd0] sm:$0xff]
    %v8113 = vld [vmem:[%s8085 + $0xd8] sm:$0xff]
    %v8114 = vld [vmem:[%s8085 + $0xe0] sm:$0xff]
    %v8115 = vld [vmem:[%s8085 + $0xe8] sm:$0xff]
    %v8116 = vld [vmem:[%s8085 + $0xf0] sm:$0xff]
    %v8117 = vld [vmem:[%s8085 + $0xf8] sm:$0x11]
    %v8150 = vunpack.c.l.b16 %v8086
    %v8151 = vunpack.c.h.b16 %v8086
    %v8152 = vunpack.c.l.b16 %v8087
    %v8153 = vunpack.c.h.b16 %v8087
    %v8154 = vunpack.c.l.b16 %v8088
    %v8155 = vunpack.c.h.b16 %v8088
    %v8156 = vunpack.c.l.b16 %v8089
    %v8157 = vunpack.c.h.b16 %v8089
    %v8158 = vunpack.c.l.b16 %v8090
    %v8159 = vunpack.c.h.b16 %v8090
    %v8160 = vunpack.c.l.b16 %v8091
    %v8161 = vunpack.c.h.b16 %v8091
    %v8162 = vunpack.c.l.b16 %v8092
    %v8163 = vunpack.c.h.b16 %v8092
    %v8164 = vunpack.c.l.b16 %v8093
    %v8165 = vunpack.c.h.b16 %v8093
    %v8166 = vunpack.c.l.b16 %v8094
    %v8167 = vunpack.c.h.b16 %v8094
    %v8168 = vunpack.c.l.b16 %v8095
    %v8169 = vunpack.c.h.b16 %v8095
    %v8170 = vunpack.c.l.b16 %v8096
    %v8171 = vunpack.c.h.b16 %v8096
    %v8172 = vunpack.c.l.b16 %v8097
    %v8173 = vunpack.c.h.b16 %v8097
    %v8174 = vunpack.c.l.b16 %v8098
    %v8175 = vunpack.c.h.b16 %v8098
    %v8176 = vunpack.c.l.b16 %v8099
    %v8177 = vunpack.c.h.b16 %v8099
    %v8178 = vunpack.c.l.b16 %v8100
    %v8179 = vunpack.c.h.b16 %v8100
    %v8180 = vunpack.c.l.b16 %v8101
    %v8181 = vunpack.c.h.b16 %v8101
    %v8182 = vunpack.c.l.b16 %v8102
    %v8183 = vunpack.c.h.b16 %v8102
    %v8184 = vunpack.c.l.b16 %v8103
    %v8185 = vunpack.c.h.b16 %v8103
    %v8186 = vunpack.c.l.b16 %v8104
    %v8187 = vunpack.c.h.b16 %v8104
    %v8188 = vunpack.c.l.b16 %v8105
    %v8189 = vunpack.c.h.b16 %v8105
    %v8190 = vunpack.c.l.b16 %v8106
    %v8191 = vunpack.c.h.b16 %v8106
    %v8192 = vunpack.c.l.b16 %v8107
    %v8193 = vunpack.c.h.b16 %v8107
    %v8194 = vunpack.c.l.b16 %v8108
    %v8195 = vunpack.c.h.b16 %v8108
    %v8196 = vunpack.c.l.b16 %v8109
    %v8197 = vunpack.c.h.b16 %v8109
    %v8198 = vunpack.c.l.b16 %v8110
    %v8199 = vunpack.c.h.b16 %v8110
    %v8200 = vunpack.c.l.b16 %v8111
    %v8201 = vunpack.c.h.b16 %v8111
    %v8202 = vunpack.c.l.b16 %v8112
    %v8203 = vunpack.c.h.b16 %v8112
    %v8204 = vunpack.c.l.b16 %v8113
    %v8205 = vunpack.c.h.b16 %v8113
    %v8206 = vunpack.c.l.b16 %v8114
    %v8207 = vunpack.c.h.b16 %v8114
    %v8208 = vunpack.c.l.b16 %v8115
    %v8209 = vunpack.c.h.b16 %v8115
    %v8210 = vunpack.c.l.b16 %v8116
    %v8211 = vunpack.c.h.b16 %v8116
    %v8212 = vunpack.c.l.b16 %v8117
    %v8213 = vunpack.c.h.b16 %v8117
    %v8214 = vpack.c.b16 %v8152, %v8150
    %v8215 = vpack.c.b16 %v8153, %v8151
    %v8216 = vpack.c.b16 %v8156, %v8154
    %v8217 = vpack.c.b16 %v8157, %v8155
    %v8218 = vpack.c.b16 %v8160, %v8158
    %v8219 = vpack.c.b16 %v8161, %v8159
    %v8220 = vpack.c.b16 %v8164, %v8162
    %v8221 = vpack.c.b16 %v8165, %v8163
    %v8222 = vpack.c.b16 %v8168, %v8166
    %v8223 = vpack.c.b16 %v8169, %v8167
    %v8224 = vpack.c.b16 %v8172, %v8170
    %v8225 = vpack.c.b16 %v8173, %v8171
    %v8226 = vpack.c.b16 %v8176, %v8174
    %v8227 = vpack.c.b16 %v8177, %v8175
    %v8228 = vpack.c.b16 %v8180, %v8178
    %v8229 = vpack.c.b16 %v8181, %v8179
    %v8230 = vpack.c.b16 %v8184, %v8182
    %v8231 = vpack.c.b16 %v8185, %v8183
    %v8232 = vpack.c.b16 %v8188, %v8186
    %v8233 = vpack.c.b16 %v8189, %v8187
    %v8234 = vpack.c.b16 %v8192, %v8190
    %v8235 = vpack.c.b16 %v8193, %v8191
    %v8236 = vpack.c.b16 %v8196, %v8194
    %v8237 = vpack.c.b16 %v8197, %v8195
    %v8238 = vpack.c.b16 %v8200, %v8198
    %v8239 = vpack.c.b16 %v8201, %v8199
    %v8240 = vpack.c.b16 %v8204, %v8202
    %v8241 = vpack.c.b16 %v8205, %v8203
    %v8242 = vpack.c.b16 %v8208, %v8206
    %v8243 = vpack.c.b16 %v8209, %v8207
    %v8244 = vpack.c.b16 %v8212, %v8210
    %v8245 = vpack.c.b16 %v8213, %v8211
    %v8276 = vsel %vm6376, %v8084, 0
    %v8279 = vsel %vm6380, %v8244, 0
    %v8282 = vsel %vm6380, %v8245, 0
    %8284 = vmatprep.subr.bf16.mxu0 %v8229
    %8285 = vmatpush1.bf16.msra.mxu0 %v8228
    %8286 = vmatprep.subr.bf16.mxu0 %v8227
    %8287 = vmatpush1.bf16.msra.mxu0 %v8226
    %8288 = vmatprep.subr.bf16.mxu0 %v8225
    %8289 = vmatpush1.bf16.msra.mxu0 %v8224
    %8290 = vmatprep.subr.bf16.mxu0 %v8223
    %8291 = vmatpush1.bf16.msra.mxu0 %v8222
    %8292 = vmatprep.subr.bf16.mxu0 %v8221
    %8293 = vmatpush1.bf16.msra.mxu0 %v8220
    %8294 = vmatprep.subr.bf16.mxu0 %v8219
    %8295 = vmatpush1.bf16.msra.mxu0 %v8218
    %8296 = vmatprep.subr.bf16.mxu0 %v8217
    %8297 = vmatpush1.bf16.msra.mxu0 %v8216
    %8298 = vmatprep.subr.bf16.mxu0 %v8215
    %8299 = vmatpush1.bf16.msra.mxu0 %v8214
    %8300 = vmatprep.subr.bf16.mxu0 %v8282
    %8301 = vmatpush2.bf16.msra.mxu0 %v8279
    %8302 = vmatprep.subr.bf16.mxu0 %v8243
    %8303 = vmatpush2.bf16.msra.mxu0 %v8242
    %8304 = vmatprep.subr.bf16.mxu0 %v8241
    %8305 = vmatpush2.bf16.msra.mxu0 %v8240
    %8306 = vmatprep.subr.bf16.mxu0 %v8239
    %8307 = vmatpush2.bf16.msra.mxu0 %v8238
    %8308 = vmatprep.subr.bf16.mxu0 %v8237
    %8309 = vmatpush2.bf16.msra.mxu0 %v8236
    %8310 = vmatprep.subr.bf16.mxu0 %v8235
    %8311 = vmatpush2.bf16.msra.mxu0 %v8234
    %8312 = vmatprep.subr.bf16.mxu0 %v8233
    %8313 = vmatpush2.bf16.msra.mxu0 %v8232
    %8314 = vmatprep.subr.bf16.mxu0 %v8231
    %8315 = vmatpush2.bf16.msra.mxu0 %v8230
    %8316 = vmatprep.mubr.bf16.mxu0 %v8276
    %8317 = vmatmul.mubr.bf16.gmra.mxu0 %v8081
    %v8318 = vpop.f32.mrf.mxu0
    %v8319 = vadd.f32 0.0, %v8318
    %v8320 = vpop.f32.mrf.mxu0
    %v8321 = vadd.f32 0.0, %v8320
    %v8322 = vpop.f32.mrf.mxu0
    %v8323 = vpop.f32.mrf.mxu0
    %8324 = vdwg.mxu0
    %8326 = vrot.lane.b32.xlu0 %v7789, 63
    %v8327 = vpop.permute.xlu0 %8326
    %8330 = vrot.lane.b32.xlu0 %v8065, 125
    %v8331 = vpop.permute.xlu0 %8330
    %8334 = vrot.lane.b32.xlu0 %v8319, 60
    %v8335 = vpop.permute.xlu0 %8334
    %v8337 = vsel %vm6167, %v7531, %v8327
    %v8338 = vsel %vm6169, %v8337, %v8331
    %v8339 = vsel %vm3222, %v8331, %v8335
    %v8340 = vpack.c.bf16 %v8338, %v8338
    %v8341 = vpack.c.bf16 %v8339, %v8339
    %v8342 = vld [vmem:[#allocation5] sm:$0xff]
    %v8343 = vld [vmem:[#allocation5 + $0x8] sm:$0xff]
    %v8344 = vld [vmem:[#allocation5 + $0x10] sm:$0xff]
    %v8345 = vld [vmem:[#allocation5 + $0x18] sm:$0xff]
    %v8346 = vld [vmem:[#allocation5 + $0x20] sm:$0xff]
    %v8347 = vld [vmem:[#allocation5 + $0x28] sm:$0xff]
    %v8348 = vld [vmem:[#allocation5 + $0x30] sm:$0xff]
    %v8349 = vld [vmem:[#allocation5 + $0x38] sm:$0xff]
    %v8350 = vld [vmem:[#allocation5 + $0x40] sm:$0xff]
    %v8351 = vld [vmem:[#allocation5 + $0x48] sm:$0xff]
    %v8352 = vld [vmem:[#allocation5 + $0x50] sm:$0xff]
    %v8353 = vld [vmem:[#allocation5 + $0x58] sm:$0xff]
    %v8354 = vld [vmem:[#allocation5 + $0x60] sm:$0xff]
    %v8355 = vld [vmem:[#allocation5 + $0x68] sm:$0xff]
    %v8356 = vld [vmem:[#allocation5 + $0x70] sm:$0xff]
    %v8357 = vld [vmem:[#allocation5 + $0x78] sm:$0xff]
    %v8358 = vld [vmem:[#allocation5 + $0x80] sm:$0xff]
    %v8359 = vld [vmem:[#allocation5 + $0x88] sm:$0xff]
    %v8360 = vld [vmem:[#allocation5 + $0x90] sm:$0xff]
    %v8361 = vld [vmem:[#allocation5 + $0x98] sm:$0xff]
    %v8362 = vld [vmem:[#allocation5 + $0xa0] sm:$0xff]
    %v8363 = vld [vmem:[#allocation5 + $0xa8] sm:$0xff]
    %v8364 = vld [vmem:[#allocation5 + $0xb0] sm:$0xff]
    %v8365 = vld [vmem:[#allocation5 + $0xb8] sm:$0xff]
    %v8366 = vld [vmem:[#allocation5 + $0xc0] sm:$0xff]
    %v8367 = vld [vmem:[#allocation5 + $0xc8] sm:$0xff]
    %v8368 = vld [vmem:[#allocation5 + $0xd0] sm:$0xff]
    %v8369 = vld [vmem:[#allocation5 + $0xd8] sm:$0xff]
    %v8370 = vld [vmem:[#allocation5 + $0xe0] sm:$0xff]
    %v8371 = vld [vmem:[#allocation5 + $0xe8] sm:$0xff]
    %v8372 = vld [vmem:[#allocation5 + $0xf0] sm:$0xff]
    %v8373 = vld [vmem:[#allocation5 + $0xf8] sm:$0x11]
    %v8374 = vld [vmem:[%s9] sm:$0x3]
    %v8376 = vlaneseq
    %v8377 = vshrl.u32 %v8376, 7
    %v8378 = vsub.s32 0, %v8377
    %v8379 = vrot.slane %v8374, %v8378
    %v8380 = vlaneseq
    %v8381 = vshrl.u32 %v8380, 7
    %v8382 = vsub.s32 1, %v8381
    %v8383 = vrot.slane %v8374, %v8382
    %v8418 = vunpack.c.l.b16 %v8342
    %v8419 = vunpack.c.h.b16 %v8342
    %v8420 = vunpack.c.l.b16 %v8343
    %v8421 = vunpack.c.h.b16 %v8343
    %v8422 = vunpack.c.l.b16 %v8344
    %v8423 = vunpack.c.h.b16 %v8344
    %v8424 = vunpack.c.l.b16 %v8345
    %v8425 = vunpack.c.h.b16 %v8345
    %v8426 = vunpack.c.l.b16 %v8346
    %v8427 = vunpack.c.h.b16 %v8346
    %v8428 = vunpack.c.l.b16 %v8347
    %v8429 = vunpack.c.h.b16 %v8347
    %v8430 = vunpack.c.l.b16 %v8348
    %v8431 = vunpack.c.h.b16 %v8348
    %v8432 = vunpack.c.l.b16 %v8349
    %v8433 = vunpack.c.h.b16 %v8349
    %v8434 = vunpack.c.l.b16 %v8350
    %v8435 = vunpack.c.h.b16 %v8350
    %v8436 = vunpack.c.l.b16 %v8351
    %v8437 = vunpack.c.h.b16 %v8351
    %v8438 = vunpack.c.l.b16 %v8352
    %v8439 = vunpack.c.h.b16 %v8352
    %v8440 = vunpack.c.l.b16 %v8353
    %v8441 = vunpack.c.h.b16 %v8353
    %v8442 = vunpack.c.l.b16 %v8354
    %v8443 = vunpack.c.h.b16 %v8354
    %v8444 = vunpack.c.l.b16 %v8355
    %v8445 = vunpack.c.h.b16 %v8355
    %v8446 = vunpack.c.l.b16 %v8356
    %v8447 = vunpack.c.h.b16 %v8356
    %v8448 = vunpack.c.l.b16 %v8357
    %v8449 = vunpack.c.h.b16 %v8357
    %v8450 = vunpack.c.l.b16 %v8358
    %v8451 = vunpack.c.h.b16 %v8358
    %v8452 = vunpack.c.l.b16 %v8359
    %v8453 = vunpack.c.h.b16 %v8359
    %v8454 = vunpack.c.l.b16 %v8360
    %v8455 = vunpack.c.h.b16 %v8360
    %v8456 = vunpack.c.l.b16 %v8361
    %v8457 = vunpack.c.h.b16 %v8361
    %v8458 = vunpack.c.l.b16 %v8362
    %v8459 = vunpack.c.h.b16 %v8362
    %v8460 = vunpack.c.l.b16 %v8363
    %v8461 = vunpack.c.h.b16 %v8363
    %v8462 = vunpack.c.l.b16 %v8364
    %v8463 = vunpack.c.h.b16 %v8364
    %v8464 = vunpack.c.l.b16 %v8365
    %v8465 = vunpack.c.h.b16 %v8365
    %v8466 = vunpack.c.l.b16 %v8366
    %v8467 = vunpack.c.h.b16 %v8366
    %v8468 = vunpack.c.l.b16 %v8367
    %v8469 = vunpack.c.h.b16 %v8367
    %v8470 = vunpack.c.l.b16 %v8368
    %v8471 = vunpack.c.h.b16 %v8368
    %v8472 = vunpack.c.l.b16 %v8369
    %v8473 = vunpack.c.h.b16 %v8369
    %v8474 = vunpack.c.l.b16 %v8370
    %v8475 = vunpack.c.h.b16 %v8370
    %v8476 = vunpack.c.l.b16 %v8371
    %v8477 = vunpack.c.h.b16 %v8371
    %v8478 = vunpack.c.l.b16 %v8372
    %v8479 = vunpack.c.h.b16 %v8372
    %v8480 = vunpack.c.l.b16 %v8373
    %v8481 = vunpack.c.h.b16 %v8373
    %v8482 = vpack.c.b16 %v8420, %v8418
    %v8483 = vpack.c.b16 %v8421, %v8419
    %v8484 = vpack.c.b16 %v8424, %v8422
    %v8485 = vpack.c.b16 %v8425, %v8423
    %v8486 = vpack.c.b16 %v8428, %v8426
    %v8487 = vpack.c.b16 %v8429, %v8427
    %v8488 = vpack.c.b16 %v8432, %v8430
    %v8489 = vpack.c.b16 %v8433, %v8431
    %v8490 = vpack.c.b16 %v8436, %v8434
    %v8491 = vpack.c.b16 %v8437, %v8435
    %v8492 = vpack.c.b16 %v8440, %v8438
    %v8493 = vpack.c.b16 %v8441, %v8439
    %v8494 = vpack.c.b16 %v8444, %v8442
    %v8495 = vpack.c.b16 %v8445, %v8443
    %v8496 = vpack.c.b16 %v8448, %v8446
    %v8497 = vpack.c.b16 %v8449, %v8447
    %v8498 = vpack.c.b16 %v8452, %v8450
    %v8499 = vpack.c.b16 %v8453, %v8451
    %v8500 = vpack.c.b16 %v8456, %v8454
    %v8501 = vpack.c.b16 %v8457, %v8455
    %v8502 = vpack.c.b16 %v8460, %v8458
    %v8503 = vpack.c.b16 %v8461, %v8459
    %v8504 = vpack.c.b16 %v8464, %v8462
    %v8505 = vpack.c.b16 %v8465, %v8463
    %v8506 = vpack.c.b16 %v8468, %v8466
    %v8507 = vpack.c.b16 %v8469, %v8467
    %v8508 = vpack.c.b16 %v8472, %v8470
    %v8509 = vpack.c.b16 %v8473, %v8471
    %v8510 = vpack.c.b16 %v8476, %v8474
    %v8511 = vpack.c.b16 %v8477, %v8475
    %v8512 = vpack.c.b16 %v8480, %v8478
    %v8513 = vpack.c.b16 %v8481, %v8479
    %v8545 = vsel %vm6376, %v8341, 0
    %v8548 = vsel %vm6380, %v8512, 0
    %v8551 = vsel %vm6380, %v8513, 0
    %8553 = vmatprep.subr.bf16.mxu0 %v8497
    %8554 = vmatpush1.bf16.msra.mxu0 %v8496
    %8555 = vmatprep.subr.bf16.mxu0 %v8495
    %8556 = vmatpush1.bf16.msra.mxu0 %v8494
    %8557 = vmatprep.subr.bf16.mxu0 %v8493
    %8558 = vmatpush1.bf16.msra.mxu0 %v8492
    %8559 = vmatprep.subr.bf16.mxu0 %v8491
    %8560 = vmatpush1.bf16.msra.mxu0 %v8490
    %8561 = vmatprep.subr.bf16.mxu0 %v8489
    %8562 = vmatpush1.bf16.msra.mxu0 %v8488
    %8563 = vmatprep.subr.bf16.mxu0 %v8487
    %8564 = vmatpush1.bf16.msra.mxu0 %v8486
    %8565 = vmatprep.subr.bf16.mxu0 %v8485
    %8566 = vmatpush1.bf16.msra.mxu0 %v8484
    %8567 = vmatprep.subr.bf16.mxu0 %v8483
    %8568 = vmatpush1.bf16.msra.mxu0 %v8482
    %8569 = vmatprep.subr.bf16.mxu0 %v8551
    %8570 = vmatpush2.bf16.msra.mxu0 %v8548
    %8571 = vmatprep.subr.bf16.mxu0 %v8511
    %8572 = vmatpush2.bf16.msra.mxu0 %v8510
    %8573 = vmatprep.subr.bf16.mxu0 %v8509
    %8574 = vmatpush2.bf16.msra.mxu0 %v8508
    %8575 = vmatprep.subr.bf16.mxu0 %v8507
    %8576 = vmatpush2.bf16.msra.mxu0 %v8506
    %8577 = vmatprep.subr.bf16.mxu0 %v8505
    %8578 = vmatpush2.bf16.msra.mxu0 %v8504
    %8579 = vmatprep.subr.bf16.mxu0 %v8503
    %8580 = vmatpush2.bf16.msra.mxu0 %v8502
    %8581 = vmatprep.subr.bf16.mxu0 %v8501
    %8582 = vmatpush2.bf16.msra.mxu0 %v8500
    %8583 = vmatprep.subr.bf16.mxu0 %v8499
    %8584 = vmatpush2.bf16.msra.mxu0 %v8498
    %8585 = vmatprep.mubr.bf16.mxu0 %v8545
    %8586 = vmatmul.mubr.bf16.gmra.mxu0 %v8340
    %v8587 = vpop.f32.mrf.mxu0
    %v8588 = vadd.f32 %v8379, %v8587
    %v8589 = vpop.f32.mrf.mxu0
    %v8590 = vadd.f32 %v8383, %v8589
    %v8591 = vpop.f32.mrf.mxu0
    %v8592 = vpop.f32.mrf.mxu0
    %8593 = vdwg.mxu0
    %v8594 = vmax.f32 %v8588, 0.0
    %v8595 = vmax.f32 %v8590, 0.0
    %8597 = vrot.lane.b32.xlu0 %v7531, 65
    %v8598 = vpop.permute.xlu0 %8597
    %8600 = vrot.lane.b32.xlu0 %v7789, 1
    %v8601 = vpop.permute.xlu0 %8600
    %8603 = vrot.lane.b32.xlu0 %v8065, 62
    %v8604 = vpop.permute.xlu0 %8603
    %8606 = vrot.lane.b32.xlu0 %v8319, 126
    %v8607 = vpop.permute.xlu0 %8606
    %v8609 = vsel %vm6167, %v8598, %v8601
    %v8610 = vsel %vm6169, %v8609, %v8604
    %v8611 = vsel %vm3222, %v8604, %v8607
    %v8612 = vpack.c.bf16 %v8610, %v8610
    %v8613 = vpack.c.bf16 %v8611, %v8611
    %s8614 = scalar_lea.vmem [#allocation5], 256
    %v8615 = vld [vmem:[%s8614] sm:$0xff]
    %v8616 = vld [vmem:[%s8614 + $0x8] sm:$0xff]
    %v8617 = vld [vmem:[%s8614 + $0x10] sm:$0xff]
    %v8618 = vld [vmem:[%s8614 + $0x18] sm:$0xff]
    %v8619 = vld [vmem:[%s8614 + $0x20] sm:$0xff]
    %v8620 = vld [vmem:[%s8614 + $0x28] sm:$0xff]
    %v8621 = vld [vmem:[%s8614 + $0x30] sm:$0xff]
    %v8622 = vld [vmem:[%s8614 + $0x38] sm:$0xff]
    %v8623 = vld [vmem:[%s8614 + $0x40] sm:$0xff]
    %v8624 = vld [vmem:[%s8614 + $0x48] sm:$0xff]
    %v8625 = vld [vmem:[%s8614 + $0x50] sm:$0xff]
    %v8626 = vld [vmem:[%s8614 + $0x58] sm:$0xff]
    %v8627 = vld [vmem:[%s8614 + $0x60] sm:$0xff]
    %v8628 = vld [vmem:[%s8614 + $0x68] sm:$0xff]
    %v8629 = vld [vmem:[%s8614 + $0x70] sm:$0xff]
    %v8630 = vld [vmem:[%s8614 + $0x78] sm:$0xff]
    %v8631 = vld [vmem:[%s8614 + $0x80] sm:$0xff]
    %v8632 = vld [vmem:[%s8614 + $0x88] sm:$0xff]
    %v8633 = vld [vmem:[%s8614 + $0x90] sm:$0xff]
    %v8634 = vld [vmem:[%s8614 + $0x98] sm:$0xff]
    %v8635 = vld [vmem:[%s8614 + $0xa0] sm:$0xff]
    %v8636 = vld [vmem:[%s8614 + $0xa8] sm:$0xff]
    %v8637 = vld [vmem:[%s8614 + $0xb0] sm:$0xff]
    %v8638 = vld [vmem:[%s8614 + $0xb8] sm:$0xff]
    %v8639 = vld [vmem:[%s8614 + $0xc0] sm:$0xff]
    %v8640 = vld [vmem:[%s8614 + $0xc8] sm:$0xff]
    %v8641 = vld [vmem:[%s8614 + $0xd0] sm:$0xff]
    %v8642 = vld [vmem:[%s8614 + $0xd8] sm:$0xff]
    %v8643 = vld [vmem:[%s8614 + $0xe0] sm:$0xff]
    %v8644 = vld [vmem:[%s8614 + $0xe8] sm:$0xff]
    %v8645 = vld [vmem:[%s8614 + $0xf0] sm:$0xff]
    %v8646 = vld [vmem:[%s8614 + $0xf8] sm:$0x11]
    %s8647 = scalar_lea.vmem %s9, 2
    %v8648 = vld [vmem:[%s8647] sm:$0x3]
    %v8650 = vlaneseq
    %v8651 = vshrl.u32 %v8650, 7
    %v8652 = vsub.s32 0, %v8651
    %v8653 = vrot.slane %v8648, %v8652
    %v8654 = vlaneseq
    %v8655 = vshrl.u32 %v8654, 7
    %v8656 = vsub.s32 1, %v8655
    %v8657 = vrot.slane %v8648, %v8656
    %v8692 = vunpack.c.l.b16 %v8615
    %v8693 = vunpack.c.h.b16 %v8615
    %v8694 = vunpack.c.l.b16 %v8616
    %v8695 = vunpack.c.h.b16 %v8616
    %v8696 = vunpack.c.l.b16 %v8617
    %v8697 = vunpack.c.h.b16 %v8617
    %v8698 = vunpack.c.l.b16 %v8618
    %v8699 = vunpack.c.h.b16 %v8618
    %v8700 = vunpack.c.l.b16 %v8619
    %v8701 = vunpack.c.h.b16 %v8619
    %v8702 = vunpack.c.l.b16 %v8620
    %v8703 = vunpack.c.h.b16 %v8620
    %v8704 = vunpack.c.l.b16 %v8621
    %v8705 = vunpack.c.h.b16 %v8621
    %v8706 = vunpack.c.l.b16 %v8622
    %v8707 = vunpack.c.h.b16 %v8622
    %v8708 = vunpack.c.l.b16 %v8623
    %v8709 = vunpack.c.h.b16 %v8623
    %v8710 = vunpack.c.l.b16 %v8624
    %v8711 = vunpack.c.h.b16 %v8624
    %v8712 = vunpack.c.l.b16 %v8625
    %v8713 = vunpack.c.h.b16 %v8625
    %v8714 = vunpack.c.l.b16 %v8626
    %v8715 = vunpack.c.h.b16 %v8626
    %v8716 = vunpack.c.l.b16 %v8627
    %v8717 = vunpack.c.h.b16 %v8627
    %v8718 = vunpack.c.l.b16 %v8628
    %v8719 = vunpack.c.h.b16 %v8628
    %v8720 = vunpack.c.l.b16 %v8629
    %v8721 = vunpack.c.h.b16 %v8629
    %v8722 = vunpack.c.l.b16 %v8630
    %v8723 = vunpack.c.h.b16 %v8630
    %v8724 = vunpack.c.l.b16 %v8631
    %v8725 = vunpack.c.h.b16 %v8631
    %v8726 = vunpack.c.l.b16 %v8632
    %v8727 = vunpack.c.h.b16 %v8632
    %v8728 = vunpack.c.l.b16 %v8633
    %v8729 = vunpack.c.h.b16 %v8633
    %v8730 = vunpack.c.l.b16 %v8634
    %v8731 = vunpack.c.h.b16 %v8634
    %v8732 = vunpack.c.l.b16 %v8635
    %v8733 = vunpack.c.h.b16 %v8635
    %v8734 = vunpack.c.l.b16 %v8636
    %v8735 = vunpack.c.h.b16 %v8636
    %v8736 = vunpack.c.l.b16 %v8637
    %v8737 = vunpack.c.h.b16 %v8637
    %v8738 = vunpack.c.l.b16 %v8638
    %v8739 = vunpack.c.h.b16 %v8638
    %v8740 = vunpack.c.l.b16 %v8639
    %v8741 = vunpack.c.h.b16 %v8639
    %v8742 = vunpack.c.l.b16 %v8640
    %v8743 = vunpack.c.h.b16 %v8640
    %v8744 = vunpack.c.l.b16 %v8641
    %v8745 = vunpack.c.h.b16 %v8641
    %v8746 = vunpack.c.l.b16 %v8642
    %v8747 = vunpack.c.h.b16 %v8642
    %v8748 = vunpack.c.l.b16 %v8643
    %v8749 = vunpack.c.h.b16 %v8643
    %v8750 = vunpack.c.l.b16 %v8644
    %v8751 = vunpack.c.h.b16 %v8644
    %v8752 = vunpack.c.l.b16 %v8645
    %v8753 = vunpack.c.h.b16 %v8645
    %v8754 = vunpack.c.l.b16 %v8646
    %v8755 = vunpack.c.h.b16 %v8646
    %v8756 = vpack.c.b16 %v8694, %v8692
    %v8757 = vpack.c.b16 %v8695, %v8693
    %v8758 = vpack.c.b16 %v8698, %v8696
    %v8759 = vpack.c.b16 %v8699, %v8697
    %v8760 = vpack.c.b16 %v8702, %v8700
    %v8761 = vpack.c.b16 %v8703, %v8701
    %v8762 = vpack.c.b16 %v8706, %v8704
    %v8763 = vpack.c.b16 %v8707, %v8705
    %v8764 = vpack.c.b16 %v8710, %v8708
    %v8765 = vpack.c.b16 %v8711, %v8709
    %v8766 = vpack.c.b16 %v8714, %v8712
    %v8767 = vpack.c.b16 %v8715, %v8713
    %v8768 = vpack.c.b16 %v8718, %v8716
    %v8769 = vpack.c.b16 %v8719, %v8717
    %v8770 = vpack.c.b16 %v8722, %v8720
    %v8771 = vpack.c.b16 %v8723, %v8721
    %v8772 = vpack.c.b16 %v8726, %v8724
    %v8773 = vpack.c.b16 %v8727, %v8725
    %v8774 = vpack.c.b16 %v8730, %v8728
    %v8775 = vpack.c.b16 %v8731, %v8729
    %v8776 = vpack.c.b16 %v8734, %v8732
    %v8777 = vpack.c.b16 %v8735, %v8733
    %v8778 = vpack.c.b16 %v8738, %v8736
    %v8779 = vpack.c.b16 %v8739, %v8737
    %v8780 = vpack.c.b16 %v8742, %v8740
    %v8781 = vpack.c.b16 %v8743, %v8741
    %v8782 = vpack.c.b16 %v8746, %v8744
    %v8783 = vpack.c.b16 %v8747, %v8745
    %v8784 = vpack.c.b16 %v8750, %v8748
    %v8785 = vpack.c.b16 %v8751, %v8749
    %v8786 = vpack.c.b16 %v8754, %v8752
    %v8787 = vpack.c.b16 %v8755, %v8753
    %v8819 = vsel %vm6376, %v8613, 0
    %v8822 = vsel %vm6380, %v8786, 0
    %v8825 = vsel %vm6380, %v8787, 0
    %8827 = vmatprep.subr.bf16.mxu0 %v8771
    %8828 = vmatpush1.bf16.msra.mxu0 %v8770
    %8829 = vmatprep.subr.bf16.mxu0 %v8769
    %8830 = vmatpush1.bf16.msra.mxu0 %v8768
    %8831 = vmatprep.subr.bf16.mxu0 %v8767
    %8832 = vmatpush1.bf16.msra.mxu0 %v8766
    %8833 = vmatprep.subr.bf16.mxu0 %v8765
    %8834 = vmatpush1.bf16.msra.mxu0 %v8764
    %8835 = vmatprep.subr.bf16.mxu0 %v8763
    %8836 = vmatpush1.bf16.msra.mxu0 %v8762
    %8837 = vmatprep.subr.bf16.mxu0 %v8761
    %8838 = vmatpush1.bf16.msra.mxu0 %v8760
    %8839 = vmatprep.subr.bf16.mxu0 %v8759
    %8840 = vmatpush1.bf16.msra.mxu0 %v8758
    %8841 = vmatprep.subr.bf16.mxu0 %v8757
    %8842 = vmatpush1.bf16.msra.mxu0 %v8756
    %8843 = vmatprep.subr.bf16.mxu0 %v8825
    %8844 = vmatpush2.bf16.msra.mxu0 %v8822
    %8845 = vmatprep.subr.bf16.mxu0 %v8785
    %8846 = vmatpush2.bf16.msra.mxu0 %v8784
    %8847 = vmatprep.subr.bf16.mxu0 %v8783
    %8848 = vmatpush2.bf16.msra.mxu0 %v8782
    %8849 = vmatprep.subr.bf16.mxu0 %v8781
    %8850 = vmatpush2.bf16.msra.mxu0 %v8780
    %8851 = vmatprep.subr.bf16.mxu0 %v8779
    %8852 = vmatpush2.bf16.msra.mxu0 %v8778
    %8853 = vmatprep.subr.bf16.mxu0 %v8777
    %8854 = vmatpush2.bf16.msra.mxu0 %v8776
    %8855 = vmatprep.subr.bf16.mxu0 %v8775
    %8856 = vmatpush2.bf16.msra.mxu0 %v8774
    %8857 = vmatprep.subr.bf16.mxu0 %v8773
    %8858 = vmatpush2.bf16.msra.mxu0 %v8772
    %8859 = vmatprep.mubr.bf16.mxu0 %v8819
    %8860 = vmatmul.mubr.bf16.gmra.mxu0 %v8612
    %v8861 = vpop.f32.mrf.mxu0
    %v8862 = vadd.f32 %v8653, %v8861
    %v8863 = vpop.f32.mrf.mxu0
    %v8864 = vadd.f32 %v8657, %v8863
    %v8865 = vpop.f32.mrf.mxu0
    %v8866 = vpop.f32.mrf.mxu0
    %8867 = vdwg.mxu0
    %v8868 = vmax.f32 %v8862, 0.0
    %v8869 = vmax.f32 %v8864, 0.0
    %8871 = vrot.lane.b32.xlu0 %v7531, 2
    %v8872 = vpop.permute.xlu0 %8871
    %8873 = vrot.lane.b32.xlu0 %v7533, 2
    %v8874 = vpop.permute.xlu0 %8873
    %v8875 = vsel %vm6709, %v8872, %v8874
    %8878 = vrot.lane.b32.xlu0 %v7789, 66
    %v8879 = vpop.permute.xlu0 %8878
    %8880 = vrot.lane.b32.xlu0 %v7791, 66
    %v8881 = vpop.permute.xlu0 %8880
    %v8882 = vsel %vm6717, %v8879, %v8881
    %8885 = vrot.lane.b32.xlu0 %v8065, 127
    %v8886 = vpop.permute.xlu0 %8885
    %8887 = vrot.lane.b32.xlu0 %v8067, 127
    %v8888 = vpop.permute.xlu0 %8887
    %v8889 = vsel %vm6725, %v8886, %v8888
    %8893 = vrot.lane.b32.xlu0 %v8319, 63
    %v8894 = vpop.permute.xlu0 %8893
    %8895 = vrot.lane.b32.xlu0 %v8321, 63
    %v8896 = vpop.permute.xlu0 %8895
    %v8897 = vsel %vm6167, %v8894, %v8896
    %v8899 = vsel %vm6736, %v8875, %v8882
    %v8900 = vsel %vm6169, %v8899, %v8889
    %v8901 = vsel %vm3964, %v8888, %v8897
    %v8902 = vpack.c.bf16 %v8900, %v8900
    %v8903 = vpack.c.bf16 %v8901, %v8901
    %s8904 = scalar_lea.vmem [#allocation5], 512
    %v8905 = vld [vmem:[%s8904] sm:$0xff]
    %v8906 = vld [vmem:[%s8904 + $0x8] sm:$0xff]
    %v8907 = vld [vmem:[%s8904 + $0x10] sm:$0xff]
    %v8908 = vld [vmem:[%s8904 + $0x18] sm:$0xff]
    %v8909 = vld [vmem:[%s8904 + $0x20] sm:$0xff]
    %v8910 = vld [vmem:[%s8904 + $0x28] sm:$0xff]
    %v8911 = vld [vmem:[%s8904 + $0x30] sm:$0xff]
    %v8912 = vld [vmem:[%s8904 + $0x38] sm:$0xff]
    %v8913 = vld [vmem:[%s8904 + $0x40] sm:$0xff]
    %v8914 = vld [vmem:[%s8904 + $0x48] sm:$0xff]
    %v8915 = vld [vmem:[%s8904 + $0x50] sm:$0xff]
    %v8916 = vld [vmem:[%s8904 + $0x58] sm:$0xff]
    %v8917 = vld [vmem:[%s8904 + $0x60] sm:$0xff]
    %v8918 = vld [vmem:[%s8904 + $0x68] sm:$0xff]
    %v8919 = vld [vmem:[%s8904 + $0x70] sm:$0xff]
    %v8920 = vld [vmem:[%s8904 + $0x78] sm:$0xff]
    %v8921 = vld [vmem:[%s8904 + $0x80] sm:$0xff]
    %v8922 = vld [vmem:[%s8904 + $0x88] sm:$0xff]
    %v8923 = vld [vmem:[%s8904 + $0x90] sm:$0xff]
    %v8924 = vld [vmem:[%s8904 + $0x98] sm:$0xff]
    %v8925 = vld [vmem:[%s8904 + $0xa0] sm:$0xff]
    %v8926 = vld [vmem:[%s8904 + $0xa8] sm:$0xff]
    %v8927 = vld [vmem:[%s8904 + $0xb0] sm:$0xff]
    %v8928 = vld [vmem:[%s8904 + $0xb8] sm:$0xff]
    %v8929 = vld [vmem:[%s8904 + $0xc0] sm:$0xff]
    %v8930 = vld [vmem:[%s8904 + $0xc8] sm:$0xff]
    %v8931 = vld [vmem:[%s8904 + $0xd0] sm:$0xff]
    %v8932 = vld [vmem:[%s8904 + $0xd8] sm:$0xff]
    %v8933 = vld [vmem:[%s8904 + $0xe0] sm:$0xff]
    %v8934 = vld [vmem:[%s8904 + $0xe8] sm:$0xff]
    %v8935 = vld [vmem:[%s8904 + $0xf0] sm:$0xff]
    %v8936 = vld [vmem:[%s8904 + $0xf8] sm:$0x11]
    %s8937 = scalar_lea.vmem %s9, 4
    %v8938 = vld [vmem:[%s8937] sm:$0x3]
    %v8940 = vlaneseq
    %v8941 = vshrl.u32 %v8940, 7
    %v8942 = vsub.s32 0, %v8941
    %v8943 = vrot.slane %v8938, %v8942
    %v8944 = vlaneseq
    %v8945 = vshrl.u32 %v8944, 7
    %v8946 = vsub.s32 1, %v8945
    %v8947 = vrot.slane %v8938, %v8946
    %v8982 = vunpack.c.l.b16 %v8905
    %v8983 = vunpack.c.h.b16 %v8905
    %v8984 = vunpack.c.l.b16 %v8906
    %v8985 = vunpack.c.h.b16 %v8906
    %v8986 = vunpack.c.l.b16 %v8907
    %v8987 = vunpack.c.h.b16 %v8907
    %v8988 = vunpack.c.l.b16 %v8908
    %v8989 = vunpack.c.h.b16 %v8908
    %v8990 = vunpack.c.l.b16 %v8909
    %v8991 = vunpack.c.h.b16 %v8909
    %v8992 = vunpack.c.l.b16 %v8910
    %v8993 = vunpack.c.h.b16 %v8910
    %v8994 = vunpack.c.l.b16 %v8911
    %v8995 = vunpack.c.h.b16 %v8911
    %v8996 = vunpack.c.l.b16 %v8912
    %v8997 = vunpack.c.h.b16 %v8912
    %v8998 = vunpack.c.l.b16 %v8913
    %v8999 = vunpack.c.h.b16 %v8913
    %v9000 = vunpack.c.l.b16 %v8914
    %v9001 = vunpack.c.h.b16 %v8914
    %v9002 = vunpack.c.l.b16 %v8915
    %v9003 = vunpack.c.h.b16 %v8915
    %v9004 = vunpack.c.l.b16 %v8916
    %v9005 = vunpack.c.h.b16 %v8916
    %v9006 = vunpack.c.l.b16 %v8917
    %v9007 = vunpack.c.h.b16 %v8917
    %v9008 = vunpack.c.l.b16 %v8918
    %v9009 = vunpack.c.h.b16 %v8918
    %v9010 = vunpack.c.l.b16 %v8919
    %v9011 = vunpack.c.h.b16 %v8919
    %v9012 = vunpack.c.l.b16 %v8920
    %v9013 = vunpack.c.h.b16 %v8920
    %v9014 = vunpack.c.l.b16 %v8921
    %v9015 = vunpack.c.h.b16 %v8921
    %v9016 = vunpack.c.l.b16 %v8922
    %v9017 = vunpack.c.h.b16 %v8922
    %v9018 = vunpack.c.l.b16 %v8923
    %v9019 = vunpack.c.h.b16 %v8923
    %v9020 = vunpack.c.l.b16 %v8924
    %v9021 = vunpack.c.h.b16 %v8924
    %v9022 = vunpack.c.l.b16 %v8925
    %v9023 = vunpack.c.h.b16 %v8925
    %v9024 = vunpack.c.l.b16 %v8926
    %v9025 = vunpack.c.h.b16 %v8926
    %v9026 = vunpack.c.l.b16 %v8927
    %v9027 = vunpack.c.h.b16 %v8927
    %v9028 = vunpack.c.l.b16 %v8928
    %v9029 = vunpack.c.h.b16 %v8928
    %v9030 = vunpack.c.l.b16 %v8929
    %v9031 = vunpack.c.h.b16 %v8929
    %v9032 = vunpack.c.l.b16 %v8930
    %v9033 = vunpack.c.h.b16 %v8930
    %v9034 = vunpack.c.l.b16 %v8931
    %v9035 = vunpack.c.h.b16 %v8931
    %v9036 = vunpack.c.l.b16 %v8932
    %v9037 = vunpack.c.h.b16 %v8932
    %v9038 = vunpack.c.l.b16 %v8933
    %v9039 = vunpack.c.h.b16 %v8933
    %v9040 = vunpack.c.l.b16 %v8934
    %v9041 = vunpack.c.h.b16 %v8934
    %v9042 = vunpack.c.l.b16 %v8935
    %v9043 = vunpack.c.h.b16 %v8935
    %v9044 = vunpack.c.l.b16 %v8936
    %v9045 = vunpack.c.h.b16 %v8936
    %v9046 = vpack.c.b16 %v8984, %v8982
    %v9047 = vpack.c.b16 %v8985, %v8983
    %v9048 = vpack.c.b16 %v8988, %v8986
    %v9049 = vpack.c.b16 %v8989, %v8987
    %v9050 = vpack.c.b16 %v8992, %v8990
    %v9051 = vpack.c.b16 %v8993, %v8991
    %v9052 = vpack.c.b16 %v8996, %v8994
    %v9053 = vpack.c.b16 %v8997, %v8995
    %v9054 = vpack.c.b16 %v9000, %v8998
    %v9055 = vpack.c.b16 %v9001, %v8999
    %v9056 = vpack.c.b16 %v9004, %v9002
    %v9057 = vpack.c.b16 %v9005, %v9003
    %v9058 = vpack.c.b16 %v9008, %v9006
    %v9059 = vpack.c.b16 %v9009, %v9007
    %v9060 = vpack.c.b16 %v9012, %v9010
    %v9061 = vpack.c.b16 %v9013, %v9011
    %v9062 = vpack.c.b16 %v9016, %v9014
    %v9063 = vpack.c.b16 %v9017, %v9015
    %v9064 = vpack.c.b16 %v9020, %v9018
    %v9065 = vpack.c.b16 %v9021, %v9019
    %v9066 = vpack.c.b16 %v9024, %v9022
    %v9067 = vpack.c.b16 %v9025, %v9023
    %v9068 = vpack.c.b16 %v9028, %v9026
    %v9069 = vpack.c.b16 %v9029, %v9027
    %v9070 = vpack.c.b16 %v9032, %v9030
    %v9071 = vpack.c.b16 %v9033, %v9031
    %v9072 = vpack.c.b16 %v9036, %v9034
    %v9073 = vpack.c.b16 %v9037, %v9035
    %v9074 = vpack.c.b16 %v9040, %v9038
    %v9075 = vpack.c.b16 %v9041, %v9039
    %v9076 = vpack.c.b16 %v9044, %v9042
    %v9077 = vpack.c.b16 %v9045, %v9043
    %v9109 = vsel %vm6376, %v8903, 0
    %v9112 = vsel %vm6380, %v9076, 0
    %v9115 = vsel %vm6380, %v9077, 0
    %9117 = vmatprep.subr.bf16.mxu0 %v9061
    %9118 = vmatpush1.bf16.msra.mxu0 %v9060
    %9119 = vmatprep.subr.bf16.mxu0 %v9059
    %9120 = vmatpush1.bf16.msra.mxu0 %v9058
    %9121 = vmatprep.subr.bf16.mxu0 %v9057
    %9122 = vmatpush1.bf16.msra.mxu0 %v9056
    %9123 = vmatprep.subr.bf16.mxu0 %v9055
    %9124 = vmatpush1.bf16.msra.mxu0 %v9054
    %9125 = vmatprep.subr.bf16.mxu0 %v9053
    %9126 = vmatpush1.bf16.msra.mxu0 %v9052
    %9127 = vmatprep.subr.bf16.mxu0 %v9051
    %9128 = vmatpush1.bf16.msra.mxu0 %v9050
    %9129 = vmatprep.subr.bf16.mxu0 %v9049
    %9130 = vmatpush1.bf16.msra.mxu0 %v9048
    %9131 = vmatprep.subr.bf16.mxu0 %v9047
    %9132 = vmatpush1.bf16.msra.mxu0 %v9046
    %9133 = vmatprep.subr.bf16.mxu0 %v9115
    %9134 = vmatpush2.bf16.msra.mxu0 %v9112
    %9135 = vmatprep.subr.bf16.mxu0 %v9075
    %9136 = vmatpush2.bf16.msra.mxu0 %v9074
    %9137 = vmatprep.subr.bf16.mxu0 %v9073
    %9138 = vmatpush2.bf16.msra.mxu0 %v9072
    %9139 = vmatprep.subr.bf16.mxu0 %v9071
    %9140 = vmatpush2.bf16.msra.mxu0 %v9070
    %9141 = vmatprep.subr.bf16.mxu0 %v9069
    %9142 = vmatpush2.bf16.msra.mxu0 %v9068
    %9143 = vmatprep.subr.bf16.mxu0 %v9067
    %9144 = vmatpush2.bf16.msra.mxu0 %v9066
    %9145 = vmatprep.subr.bf16.mxu0 %v9065
    %9146 = vmatpush2.bf16.msra.mxu0 %v9064
    %9147 = vmatprep.subr.bf16.mxu0 %v9063
    %9148 = vmatpush2.bf16.msra.mxu0 %v9062
    %9149 = vmatprep.mubr.bf16.mxu0 %v9109
    %9150 = vmatmul.mubr.bf16.gmra.mxu0 %v8902
    %v9151 = vpop.f32.mrf.mxu0
    %v9152 = vadd.f32 %v8943, %v9151
    %v9153 = vpop.f32.mrf.mxu0
    %v9154 = vadd.f32 %v8947, %v9153
    %v9155 = vpop.f32.mrf.mxu0
    %v9156 = vpop.f32.mrf.mxu0
    %9157 = vdwg.mxu0
    %v9158 = vmax.f32 %v9152, 0.0
    %v9159 = vmax.f32 %v9154, 0.0
    %9160 = vrot.lane.b32.xlu0 %v7533, 68
    %v9161 = vpop.permute.xlu0 %9160
    %9163 = vrot.lane.b32.xlu0 %v7791, 3
    %v9164 = vpop.permute.xlu0 %9163
    %9166 = vrot.lane.b32.xlu0 %v8067, 65
    %v9167 = vpop.permute.xlu0 %9166
    %v9169 = vsel %vm6736, %v9161, %v9164
    %v9170 = vsel %vm6169, %v9169, %v9167
    %v9171 = vsel %vm3964, %v9167, %v8321
    %v9172 = vpack.c.bf16 %v9170, %v9170
    %v9173 = vpack.c.bf16 %v9171, %v9171
    %s9174 = scalar_lea.vmem [#allocation5], 768
    %v9175 = vld [vmem:[%s9174] sm:$0xff]
    %v9176 = vld [vmem:[%s9174 + $0x8] sm:$0xff]
    %v9177 = vld [vmem:[%s9174 + $0x10] sm:$0xff]
    %v9178 = vld [vmem:[%s9174 + $0x18] sm:$0xff]
    %v9179 = vld [vmem:[%s9174 + $0x20] sm:$0xff]
    %v9180 = vld [vmem:[%s9174 + $0x28] sm:$0xff]
    %v9181 = vld [vmem:[%s9174 + $0x30] sm:$0xff]
    %v9182 = vld [vmem:[%s9174 + $0x38] sm:$0xff]
    %v9183 = vld [vmem:[%s9174 + $0x40] sm:$0xff]
    %v9184 = vld [vmem:[%s9174 + $0x48] sm:$0xff]
    %v9185 = vld [vmem:[%s9174 + $0x50] sm:$0xff]
    %v9186 = vld [vmem:[%s9174 + $0x58] sm:$0xff]
    %v9187 = vld [vmem:[%s9174 + $0x60] sm:$0xff]
    %v9188 = vld [vmem:[%s9174 + $0x68] sm:$0xff]
    %v9189 = vld [vmem:[%s9174 + $0x70] sm:$0xff]
    %v9190 = vld [vmem:[%s9174 + $0x78] sm:$0xff]
    %v9191 = vld [vmem:[%s9174 + $0x80] sm:$0xff]
    %v9192 = vld [vmem:[%s9174 + $0x88] sm:$0xff]
    %v9193 = vld [vmem:[%s9174 + $0x90] sm:$0xff]
    %v9194 = vld [vmem:[%s9174 + $0x98] sm:$0xff]
    %v9195 = vld [vmem:[%s9174 + $0xa0] sm:$0xff]
    %v9196 = vld [vmem:[%s9174 + $0xa8] sm:$0xff]
    %v9197 = vld [vmem:[%s9174 + $0xb0] sm:$0xff]
    %v9198 = vld [vmem:[%s9174 + $0xb8] sm:$0xff]
    %v9199 = vld [vmem:[%s9174 + $0xc0] sm:$0xff]
    %v9200 = vld [vmem:[%s9174 + $0xc8] sm:$0xff]
    %v9201 = vld [vmem:[%s9174 + $0xd0] sm:$0xff]
    %v9202 = vld [vmem:[%s9174 + $0xd8] sm:$0xff]
    %v9203 = vld [vmem:[%s9174 + $0xe0] sm:$0xff]
    %v9204 = vld [vmem:[%s9174 + $0xe8] sm:$0xff]
    %v9205 = vld [vmem:[%s9174 + $0xf0] sm:$0xff]
    %v9206 = vld [vmem:[%s9174 + $0xf8] sm:$0x11]
    %s9207 = scalar_lea.vmem %s9, 6
    %v9208 = vld [vmem:[%s9207] sm:$0x3]
    %v9210 = vlaneseq
    %v9211 = vshrl.u32 %v9210, 7
    %v9212 = vsub.s32 0, %v9211
    %v9213 = vrot.slane %v9208, %v9212
    %v9214 = vlaneseq
    %v9215 = vshrl.u32 %v9214, 7
    %v9216 = vsub.s32 1, %v9215
    %v9217 = vrot.slane %v9208, %v9216
    %v9252 = vunpack.c.l.b16 %v9175
    %v9253 = vunpack.c.h.b16 %v9175
    %v9254 = vunpack.c.l.b16 %v9176
    %v9255 = vunpack.c.h.b16 %v9176
    %v9256 = vunpack.c.l.b16 %v9177
    %v9257 = vunpack.c.h.b16 %v9177
    %v9258 = vunpack.c.l.b16 %v9178
    %v9259 = vunpack.c.h.b16 %v9178
    %v9260 = vunpack.c.l.b16 %v9179
    %v9261 = vunpack.c.h.b16 %v9179
    %v9262 = vunpack.c.l.b16 %v9180
    %v9263 = vunpack.c.h.b16 %v9180
    %v9264 = vunpack.c.l.b16 %v9181
    %v9265 = vunpack.c.h.b16 %v9181
    %v9266 = vunpack.c.l.b16 %v9182
    %v9267 = vunpack.c.h.b16 %v9182
    %v9268 = vunpack.c.l.b16 %v9183
    %v9269 = vunpack.c.h.b16 %v9183
    %v9270 = vunpack.c.l.b16 %v9184
    %v9271 = vunpack.c.h.b16 %v9184
    %v9272 = vunpack.c.l.b16 %v9185
    %v9273 = vunpack.c.h.b16 %v9185
    %v9274 = vunpack.c.l.b16 %v9186
    %v9275 = vunpack.c.h.b16 %v9186
    %v9276 = vunpack.c.l.b16 %v9187
    %v9277 = vunpack.c.h.b16 %v9187
    %v9278 = vunpack.c.l.b16 %v9188
    %v9279 = vunpack.c.h.b16 %v9188
    %v9280 = vunpack.c.l.b16 %v9189
    %v9281 = vunpack.c.h.b16 %v9189
    %v9282 = vunpack.c.l.b16 %v9190
    %v9283 = vunpack.c.h.b16 %v9190
    %v9284 = vunpack.c.l.b16 %v9191
    %v9285 = vunpack.c.h.b16 %v9191
    %v9286 = vunpack.c.l.b16 %v9192
    %v9287 = vunpack.c.h.b16 %v9192
    %v9288 = vunpack.c.l.b16 %v9193
    %v9289 = vunpack.c.h.b16 %v9193
    %v9290 = vunpack.c.l.b16 %v9194
    %v9291 = vunpack.c.h.b16 %v9194
    %v9292 = vunpack.c.l.b16 %v9195
    %v9293 = vunpack.c.h.b16 %v9195
    %v9294 = vunpack.c.l.b16 %v9196
    %v9295 = vunpack.c.h.b16 %v9196
    %v9296 = vunpack.c.l.b16 %v9197
    %v9297 = vunpack.c.h.b16 %v9197
    %v9298 = vunpack.c.l.b16 %v9198
    %v9299 = vunpack.c.h.b16 %v9198
    %v9300 = vunpack.c.l.b16 %v9199
    %v9301 = vunpack.c.h.b16 %v9199
    %v9302 = vunpack.c.l.b16 %v9200
    %v9303 = vunpack.c.h.b16 %v9200
    %v9304 = vunpack.c.l.b16 %v9201
    %v9305 = vunpack.c.h.b16 %v9201
    %v9306 = vunpack.c.l.b16 %v9202
    %v9307 = vunpack.c.h.b16 %v9202
    %v9308 = vunpack.c.l.b16 %v9203
    %v9309 = vunpack.c.h.b16 %v9203
    %v9310 = vunpack.c.l.b16 %v9204
    %v9311 = vunpack.c.h.b16 %v9204
    %v9312 = vunpack.c.l.b16 %v9205
    %v9313 = vunpack.c.h.b16 %v9205
    %v9314 = vunpack.c.l.b16 %v9206
    %v9315 = vunpack.c.h.b16 %v9206
    %v9316 = vpack.c.b16 %v9254, %v9252
    %v9317 = vpack.c.b16 %v9255, %v9253
    %v9318 = vpack.c.b16 %v9258, %v9256
    %v9319 = vpack.c.b16 %v9259, %v9257
    %v9320 = vpack.c.b16 %v9262, %v9260
    %v9321 = vpack.c.b16 %v9263, %v9261
    %v9322 = vpack.c.b16 %v9266, %v9264
    %v9323 = vpack.c.b16 %v9267, %v9265
    %v9324 = vpack.c.b16 %v9270, %v9268
    %v9325 = vpack.c.b16 %v9271, %v9269
    %v9326 = vpack.c.b16 %v9274, %v9272
    %v9327 = vpack.c.b16 %v9275, %v9273
    %v9328 = vpack.c.b16 %v9278, %v9276
    %v9329 = vpack.c.b16 %v9279, %v9277
    %v9330 = vpack.c.b16 %v9282, %v9280
    %v9331 = vpack.c.b16 %v9283, %v9281
    %v9332 = vpack.c.b16 %v9286, %v9284
    %v9333 = vpack.c.b16 %v9287, %v9285
    %v9334 = vpack.c.b16 %v9290, %v9288
    %v9335 = vpack.c.b16 %v9291, %v9289
    %v9336 = vpack.c.b16 %v9294, %v9292
    %v9337 = vpack.c.b16 %v9295, %v9293
    %v9338 = vpack.c.b16 %v9298, %v9296
    %v9339 = vpack.c.b16 %v9299, %v9297
    %v9340 = vpack.c.b16 %v9302, %v9300
    %v9341 = vpack.c.b16 %v9303, %v9301
    %v9342 = vpack.c.b16 %v9306, %v9304
    %v9343 = vpack.c.b16 %v9307, %v9305
    %v9344 = vpack.c.b16 %v9310, %v9308
    %v9345 = vpack.c.b16 %v9311, %v9309
    %v9346 = vpack.c.b16 %v9314, %v9312
    %v9347 = vpack.c.b16 %v9315, %v9313
    %v9379 = vsel %vm6376, %v9173, 0
    %v9382 = vsel %vm6380, %v9346, 0
    %v9385 = vsel %vm6380, %v9347, 0
    %9387 = vmatprep.subr.bf16.mxu0 %v9331
    %9388 = vmatpush1.bf16.msra.mxu0 %v9330
    %9389 = vmatprep.subr.bf16.mxu0 %v9329
    %9390 = vmatpush1.bf16.msra.mxu0 %v9328
    %9391 = vmatprep.subr.bf16.mxu0 %v9327
    %9392 = vmatpush1.bf16.msra.mxu0 %v9326
    %9393 = vmatprep.subr.bf16.mxu0 %v9325
    %9394 = vmatpush1.bf16.msra.mxu0 %v9324
    %9395 = vmatprep.subr.bf16.mxu0 %v9323
    %9396 = vmatpush1.bf16.msra.mxu0 %v9322
    %9397 = vmatprep.subr.bf16.mxu0 %v9321
    %9398 = vmatpush1.bf16.msra.mxu0 %v9320
    %9399 = vmatprep.subr.bf16.mxu0 %v9319
    %9400 = vmatpush1.bf16.msra.mxu0 %v9318
    %9401 = vmatprep.subr.bf16.mxu0 %v9317
    %9402 = vmatpush1.bf16.msra.mxu0 %v9316
    %9403 = vmatprep.subr.bf16.mxu0 %v9385
    %9404 = vmatpush2.bf16.msra.mxu0 %v9382
    %9405 = vmatprep.subr.bf16.mxu0 %v9345
    %9406 = vmatpush2.bf16.msra.mxu0 %v9344
    %9407 = vmatprep.subr.bf16.mxu0 %v9343
    %9408 = vmatpush2.bf16.msra.mxu0 %v9342
    %9409 = vmatprep.subr.bf16.mxu0 %v9341
    %9410 = vmatpush2.bf16.msra.mxu0 %v9340
    %9411 = vmatprep.subr.bf16.mxu0 %v9339
    %9412 = vmatpush2.bf16.msra.mxu0 %v9338
    %9413 = vmatprep.subr.bf16.mxu0 %v9337
    %9414 = vmatpush2.bf16.msra.mxu0 %v9336
    %9415 = vmatprep.subr.bf16.mxu0 %v9335
    %9416 = vmatpush2.bf16.msra.mxu0 %v9334
    %9417 = vmatprep.subr.bf16.mxu0 %v9333
    %9418 = vmatpush2.bf16.msra.mxu0 %v9332
    %9419 = vmatprep.mubr.bf16.mxu0 %v9379
    %9420 = vmatmul.mubr.bf16.gmra.mxu0 %v9172
    %v9421 = vpop.f32.mrf.mxu0
    %v9422 = vadd.f32 %v9213, %v9421
    %v9423 = vpop.f32.mrf.mxu0
    %v9424 = vadd.f32 %v9217, %v9423
    %v9425 = vpop.f32.mrf.mxu0
    %v9426 = vpop.f32.mrf.mxu0
    %9427 = vdwg.mxu0
    %v9428 = vmax.f32 %v9422, 0.0
    %v9429 = vmax.f32 %v9424, 0.0
    %9431 = vrot.lane.b32.xlu0 %v8868, 63
    %v9432 = vpop.permute.xlu0 %9431
    %9435 = vrot.lane.b32.xlu0 %v9158, 126
    %v9436 = vpop.permute.xlu0 %9435
    %9439 = vrot.lane.b32.xlu0 %v9428, 60
    %v9440 = vpop.permute.xlu0 %9439
    %v9442 = vsel %vm6167, %v8594, %v9432
    %v9443 = vsel %vm7292, %v9442, %v9436
    %v9444 = vsel %vm3222, %v9436, %v9440
    %v9445 = vld [vmem:[%s10] sm:$0xff]
    %v9446 = vld [vmem:[%s10 + $0x8] sm:$0xff]
    %v9447 = vld [vmem:[%s10 + $0x10] sm:$0xff]
    %v9448 = vld [vmem:[%s10 + $0x18] sm:$0xff]
    %v9449 = vld [vmem:[%s10 + $0x20] sm:$0xff]
    %v9450 = vld [vmem:[%s10 + $0x28] sm:$0xff]
    %v9451 = vld [vmem:[%s10 + $0x30] sm:$0xff]
    %v9452 = vld [vmem:[%s10 + $0x38] sm:$0xff]
    %v9453 = vld [vmem:[%s10 + $0x40] sm:$0xff]
    %v9454 = vld [vmem:[%s10 + $0x48] sm:$0xff]
    %v9455 = vld [vmem:[%s10 + $0x50] sm:$0xff]
    %v9456 = vld [vmem:[%s10 + $0x58] sm:$0xff]
    %v9457 = vld [vmem:[%s10 + $0x60] sm:$0xff]
    %v9458 = vld [vmem:[%s10 + $0x68] sm:$0xff]
    %v9459 = vld [vmem:[%s10 + $0x70] sm:$0xff]
    %v9460 = vld [vmem:[%s10 + $0x78] sm:$0xff]
    %v9461 = vld [vmem:[%s10 + $0x80] sm:$0xff]
    %v9462 = vld [vmem:[%s10 + $0x88] sm:$0xff]
    %v9463 = vld [vmem:[%s10 + $0x90] sm:$0xff]
    %v9464 = vld [vmem:[%s10 + $0x98] sm:$0xff]
    %v9465 = vld [vmem:[%s10 + $0xa0] sm:$0xff]
    %v9466 = vld [vmem:[%s10 + $0xa8] sm:$0xff]
    %v9467 = vld [vmem:[%s10 + $0xb0] sm:$0xff]
    %v9468 = vld [vmem:[%s10 + $0xb8] sm:$0xff]
    %v9469 = vld [vmem:[%s10 + $0xc0] sm:$0xff]
    %v9470 = vld [vmem:[%s10 + $0xc8] sm:$0xff]
    %v9471 = vld [vmem:[%s10 + $0xd0] sm:$0xff]
    %v9472 = vld [vmem:[%s10 + $0xd8] sm:$0xff]
    %v9473 = vld [vmem:[%s10 + $0xe0] sm:$0xff]
    %v9474 = vld [vmem:[%s10 + $0xe8] sm:$0xff]
    %v9475 = vld [vmem:[%s10 + $0xf0] sm:$0xff]
    %v9476 = vld [vmem:[%s10 + $0xf8] sm:$0x3]
    %v9478 = vsel %vm6376, %v9444, 0
    %vm9480 = vcmask 1041408
    %v9482 = vsel %vm9480, %v9476, 0
    %9484 = vmatprep.subr.mxu0 0.0
    %9485 = vmatpush1.msra.mxu0 %v9460
    %9486 = vmatprep.subr.mxu0 0.0
    %9487 = vmatpush1.msra.mxu0 %v9459
    %9488 = vmatprep.subr.mxu0 0.0
    %9489 = vmatpush1.msra.mxu0 %v9458
    %9490 = vmatprep.subr.mxu0 0.0
    %9491 = vmatpush1.msra.mxu0 %v9457
    %9492 = vmatprep.subr.mxu0 0.0
    %9493 = vmatpush1.msra.mxu0 %v9456
    %9494 = vmatprep.subr.mxu0 0.0
    %9495 = vmatpush1.msra.mxu0 %v9455
    %9496 = vmatprep.subr.mxu0 0.0
    %9497 = vmatpush1.msra.mxu0 %v9454
    %9498 = vmatprep.subr.mxu0 0.0
    %9499 = vmatpush1.msra.mxu0 %v9453
    %9500 = vmatprep.subr.mxu0 0.0
    %9501 = vmatpush1.msra.mxu0 %v9452
    %9502 = vmatprep.subr.mxu0 0.0
    %9503 = vmatpush1.msra.mxu0 %v9451
    %9504 = vmatprep.subr.mxu0 0.0
    %9505 = vmatpush1.msra.mxu0 %v9450
    %9506 = vmatprep.subr.mxu0 0.0
    %9507 = vmatpush1.msra.mxu0 %v9449
    %9508 = vmatprep.subr.mxu0 0.0
    %9509 = vmatpush1.msra.mxu0 %v9448
    %9510 = vmatprep.subr.mxu0 0.0
    %9511 = vmatpush1.msra.mxu0 %v9447
    %9512 = vmatprep.subr.mxu0 0.0
    %9513 = vmatpush1.msra.mxu0 %v9446
    %9514 = vmatprep.subr.mxu0 0.0
    %9515 = vmatpush1.msra.mxu0 %v9445
    %9516 = vmatprep.subr.mxu0 0.0
    %9517 = vmatpush2.msra.mxu0 %v9482
    %9518 = vmatprep.subr.mxu0 0.0
    %9519 = vmatpush2.msra.mxu0 %v9475
    %9520 = vmatprep.subr.mxu0 0.0
    %9521 = vmatpush2.msra.mxu0 %v9474
    %9522 = vmatprep.subr.mxu0 0.0
    %9523 = vmatpush2.msra.mxu0 %v9473
    %9524 = vmatprep.subr.mxu0 0.0
    %9525 = vmatpush2.msra.mxu0 %v9472
    %9526 = vmatprep.subr.mxu0 0.0
    %9527 = vmatpush2.msra.mxu0 %v9471
    %9528 = vmatprep.subr.mxu0 0.0
    %9529 = vmatpush2.msra.mxu0 %v9470
    %9530 = vmatprep.subr.mxu0 0.0
    %9531 = vmatpush2.msra.mxu0 %v9469
    %9532 = vmatprep.subr.mxu0 0.0
    %9533 = vmatpush2.msra.mxu0 %v9468
    %9534 = vmatprep.subr.mxu0 0.0
    %9535 = vmatpush2.msra.mxu0 %v9467
    %9536 = vmatprep.subr.mxu0 0.0
    %9537 = vmatpush2.msra.mxu0 %v9466
    %9538 = vmatprep.subr.mxu0 0.0
    %9539 = vmatpush2.msra.mxu0 %v9465
    %9540 = vmatprep.subr.mxu0 0.0
    %9541 = vmatpush2.msra.mxu0 %v9464
    %9542 = vmatprep.subr.mxu0 0.0
    %9543 = vmatpush2.msra.mxu0 %v9463
    %9544 = vmatprep.subr.mxu0 0.0
    %9545 = vmatpush2.msra.mxu0 %v9462
    %9546 = vmatprep.subr.mxu0 0.0
    %9547 = vmatpush2.msra.mxu0 %v9461
    %9548 = vmatprep.mubr.f32.mxu0 %v9478
    %9549 = vmatmul.mubr.f32.gmra.mxu0 %v9443
    %v9550 = vpop.f32.mrf.mxu0
    %v9551 = vadd.f32 0.0, %v9550
    %v9552 = vpop.f32.mrf.mxu0
    %9553 = vdwg.mxu0
    %9555 = vrot.lane.b32.xlu0 %v8594, 65
    %v9556 = vpop.permute.xlu0 %9555
    %9558 = vrot.lane.b32.xlu0 %v8868, 127
    %v9559 = vpop.permute.xlu0 %9558
    %9561 = vrot.lane.b32.xlu0 %v9158, 62
    %v9562 = vpop.permute.xlu0 %9561
    %9564 = vrot.lane.b32.xlu0 %v9428, 125
    %v9565 = vpop.permute.xlu0 %9564
    %v9567 = vsel %vm6736, %v9556, %v9559
    %v9568 = vsel %vm7549, %v9567, %v9562
    %v9569 = vsel %vm3964, %v9562, %v9565
    %s9570 = scalar_lea.vmem %s10, 256
    %v9571 = vld [vmem:[%s9570] sm:$0xff]
    %v9572 = vld [vmem:[%s9570 + $0x8] sm:$0xff]
    %v9573 = vld [vmem:[%s9570 + $0x10] sm:$0xff]
    %v9574 = vld [vmem:[%s9570 + $0x18] sm:$0xff]
    %v9575 = vld [vmem:[%s9570 + $0x20] sm:$0xff]
    %v9576 = vld [vmem:[%s9570 + $0x28] sm:$0xff]
    %v9577 = vld [vmem:[%s9570 + $0x30] sm:$0xff]
    %v9578 = vld [vmem:[%s9570 + $0x38] sm:$0xff]
    %v9579 = vld [vmem:[%s9570 + $0x40] sm:$0xff]
    %v9580 = vld [vmem:[%s9570 + $0x48] sm:$0xff]
    %v9581 = vld [vmem:[%s9570 + $0x50] sm:$0xff]
    %v9582 = vld [vmem:[%s9570 + $0x58] sm:$0xff]
    %v9583 = vld [vmem:[%s9570 + $0x60] sm:$0xff]
    %v9584 = vld [vmem:[%s9570 + $0x68] sm:$0xff]
    %v9585 = vld [vmem:[%s9570 + $0x70] sm:$0xff]
    %v9586 = vld [vmem:[%s9570 + $0x78] sm:$0xff]
    %v9587 = vld [vmem:[%s9570 + $0x80] sm:$0xff]
    %v9588 = vld [vmem:[%s9570 + $0x88] sm:$0xff]
    %v9589 = vld [vmem:[%s9570 + $0x90] sm:$0xff]
    %v9590 = vld [vmem:[%s9570 + $0x98] sm:$0xff]
    %v9591 = vld [vmem:[%s9570 + $0xa0] sm:$0xff]
    %v9592 = vld [vmem:[%s9570 + $0xa8] sm:$0xff]
    %v9593 = vld [vmem:[%s9570 + $0xb0] sm:$0xff]
    %v9594 = vld [vmem:[%s9570 + $0xb8] sm:$0xff]
    %v9595 = vld [vmem:[%s9570 + $0xc0] sm:$0xff]
    %v9596 = vld [vmem:[%s9570 + $0xc8] sm:$0xff]
    %v9597 = vld [vmem:[%s9570 + $0xd0] sm:$0xff]
    %v9598 = vld [vmem:[%s9570 + $0xd8] sm:$0xff]
    %v9599 = vld [vmem:[%s9570 + $0xe0] sm:$0xff]
    %v9600 = vld [vmem:[%s9570 + $0xe8] sm:$0xff]
    %v9601 = vld [vmem:[%s9570 + $0xf0] sm:$0xff]
    %v9602 = vld [vmem:[%s9570 + $0xf8] sm:$0x3]
    %v9604 = vsel %vm6376, %v9569, 0
    %v9607 = vsel %vm9480, %v9602, 0
    %9609 = vmatprep.subr.mxu0 0.0
    %9610 = vmatpush1.msra.mxu0 %v9586
    %9611 = vmatprep.subr.mxu0 0.0
    %9612 = vmatpush1.msra.mxu0 %v9585
    %9613 = vmatprep.subr.mxu0 0.0
    %9614 = vmatpush1.msra.mxu0 %v9584
    %9615 = vmatprep.subr.mxu0 0.0
    %9616 = vmatpush1.msra.mxu0 %v9583
    %9617 = vmatprep.subr.mxu0 0.0
    %9618 = vmatpush1.msra.mxu0 %v9582
    %9619 = vmatprep.subr.mxu0 0.0
    %9620 = vmatpush1.msra.mxu0 %v9581
    %9621 = vmatprep.subr.mxu0 0.0
    %9622 = vmatpush1.msra.mxu0 %v9580
    %9623 = vmatprep.subr.mxu0 0.0
    %9624 = vmatpush1.msra.mxu0 %v9579
    %9625 = vmatprep.subr.mxu0 0.0
    %9626 = vmatpush1.msra.mxu0 %v9578
    %9627 = vmatprep.subr.mxu0 0.0
    %9628 = vmatpush1.msra.mxu0 %v9577
    %9629 = vmatprep.subr.mxu0 0.0
    %9630 = vmatpush1.msra.mxu0 %v9576
    %9631 = vmatprep.subr.mxu0 0.0
    %9632 = vmatpush1.msra.mxu0 %v9575
    %9633 = vmatprep.subr.mxu0 0.0
    %9634 = vmatpush1.msra.mxu0 %v9574
    %9635 = vmatprep.subr.mxu0 0.0
    %9636 = vmatpush1.msra.mxu0 %v9573
    %9637 = vmatprep.subr.mxu0 0.0
    %9638 = vmatpush1.msra.mxu0 %v9572
    %9639 = vmatprep.subr.mxu0 0.0
    %9640 = vmatpush1.msra.mxu0 %v9571
    %9641 = vmatprep.subr.mxu0 0.0
    %9642 = vmatpush2.msra.mxu0 %v9607
    %9643 = vmatprep.subr.mxu0 0.0
    %9644 = vmatpush2.msra.mxu0 %v9601
    %9645 = vmatprep.subr.mxu0 0.0
    %9646 = vmatpush2.msra.mxu0 %v9600
    %9647 = vmatprep.subr.mxu0 0.0
    %9648 = vmatpush2.msra.mxu0 %v9599
    %9649 = vmatprep.subr.mxu0 0.0
    %9650 = vmatpush2.msra.mxu0 %v9598
    %9651 = vmatprep.subr.mxu0 0.0
    %9652 = vmatpush2.msra.mxu0 %v9597
    %9653 = vmatprep.subr.mxu0 0.0
    %9654 = vmatpush2.msra.mxu0 %v9596
    %9655 = vmatprep.subr.mxu0 0.0
    %9656 = vmatpush2.msra.mxu0 %v9595
    %9657 = vmatprep.subr.mxu0 0.0
    %9658 = vmatpush2.msra.mxu0 %v9594
    %9659 = vmatprep.subr.mxu0 0.0
    %9660 = vmatpush2.msra.mxu0 %v9593
    %9661 = vmatprep.subr.mxu0 0.0
    %9662 = vmatpush2.msra.mxu0 %v9592
    %9663 = vmatprep.subr.mxu0 0.0
    %9664 = vmatpush2.msra.mxu0 %v9591
    %9665 = vmatprep.subr.mxu0 0.0
    %9666 = vmatpush2.msra.mxu0 %v9590
    %9667 = vmatprep.subr.mxu0 0.0
    %9668 = vmatpush2.msra.mxu0 %v9589
    %9669 = vmatprep.subr.mxu0 0.0
    %9670 = vmatpush2.msra.mxu0 %v9588
    %9671 = vmatprep.subr.mxu0 0.0
    %9672 = vmatpush2.msra.mxu0 %v9587
    %9673 = vmatprep.mubr.f32.mxu0 %v9604
    %9674 = vmatmul.mubr.f32.gmra.mxu0 %v9568
    %v9675 = vpop.f32.mrf.mxu0
    %v9676 = vadd.f32 0.0, %v9675
    %v9677 = vpop.f32.mrf.mxu0
    %9678 = vdwg.mxu0
    %9680 = vrot.lane.b32.xlu0 %v8594, 3
    %v9681 = vpop.permute.xlu0 %9680
    %9682 = vrot.lane.b32.xlu0 %v8595, 3
    %v9683 = vpop.permute.xlu0 %9682
    %vm9684 = vcmask 23552
    %v9685 = vsel %vm9684, %v9681, %v9683
    %9688 = vrot.lane.b32.xlu0 %v8868, 66
    %v9689 = vpop.permute.xlu0 %9688
    %9690 = vrot.lane.b32.xlu0 %v8869, 66
    %v9691 = vpop.permute.xlu0 %9690
    %v9692 = vsel %vm6717, %v9689, %v9691
    %9695 = vrot.lane.b32.xlu0 %v9158, 1
    %v9696 = vpop.permute.xlu0 %9695
    %9697 = vrot.lane.b32.xlu0 %v9159, 1
    %v9698 = vpop.permute.xlu0 %9697
    %vm9699 = vcmask 7168
    %v9700 = vsel %vm9699, %v9696, %v9698
    %9704 = vrot.lane.b32.xlu0 %v9428, 63
    %v9705 = vpop.permute.xlu0 %9704
    %9706 = vrot.lane.b32.xlu0 %v9429, 63
    %v9707 = vpop.permute.xlu0 %9706
    %v9708 = vsel %vm6167, %v9705, %v9707
    %v9710 = vsel %vm6167, %v9685, %v9692
    %v9711 = vsel %vm7292, %v9710, %v9696
    %v9712 = vsel %vm3222, %v9700, %v9708
    %s9713 = scalar_lea.vmem %s10, 512
    %v9714 = vld [vmem:[%s9713] sm:$0xff]
    %v9715 = vld [vmem:[%s9713 + $0x8] sm:$0xff]
    %v9716 = vld [vmem:[%s9713 + $0x10] sm:$0xff]
    %v9717 = vld [vmem:[%s9713 + $0x18] sm:$0xff]
    %v9718 = vld [vmem:[%s9713 + $0x20] sm:$0xff]
    %v9719 = vld [vmem:[%s9713 + $0x28] sm:$0xff]
    %v9720 = vld [vmem:[%s9713 + $0x30] sm:$0xff]
    %v9721 = vld [vmem:[%s9713 + $0x38] sm:$0xff]
    %v9722 = vld [vmem:[%s9713 + $0x40] sm:$0xff]
    %v9723 = vld [vmem:[%s9713 + $0x48] sm:$0xff]
    %v9724 = vld [vmem:[%s9713 + $0x50] sm:$0xff]
    %v9725 = vld [vmem:[%s9713 + $0x58] sm:$0xff]
    %v9726 = vld [vmem:[%s9713 + $0x60] sm:$0xff]
    %v9727 = vld [vmem:[%s9713 + $0x68] sm:$0xff]
    %v9728 = vld [vmem:[%s9713 + $0x70] sm:$0xff]
    %v9729 = vld [vmem:[%s9713 + $0x78] sm:$0xff]
    %v9730 = vld [vmem:[%s9713 + $0x80] sm:$0xff]
    %v9731 = vld [vmem:[%s9713 + $0x88] sm:$0xff]
    %v9732 = vld [vmem:[%s9713 + $0x90] sm:$0xff]
    %v9733 = vld [vmem:[%s9713 + $0x98] sm:$0xff]
    %v9734 = vld [vmem:[%s9713 + $0xa0] sm:$0xff]
    %v9735 = vld [vmem:[%s9713 + $0xa8] sm:$0xff]
    %v9736 = vld [vmem:[%s9713 + $0xb0] sm:$0xff]
    %v9737 = vld [vmem:[%s9713 + $0xb8] sm:$0xff]
    %v9738 = vld [vmem:[%s9713 + $0xc0] sm:$0xff]
    %v9739 = vld [vmem:[%s9713 + $0xc8] sm:$0xff]
    %v9740 = vld [vmem:[%s9713 + $0xd0] sm:$0xff]
    %v9741 = vld [vmem:[%s9713 + $0xd8] sm:$0xff]
    %v9742 = vld [vmem:[%s9713 + $0xe0] sm:$0xff]
    %v9743 = vld [vmem:[%s9713 + $0xe8] sm:$0xff]
    %v9744 = vld [vmem:[%s9713 + $0xf0] sm:$0xff]
    %v9745 = vld [vmem:[%s9713 + $0xf8] sm:$0x3]
    %v9747 = vsel %vm6376, %v9712, 0
    %v9750 = vsel %vm9480, %v9745, 0
    %9752 = vmatprep.subr.mxu0 0.0
    %9753 = vmatpush1.msra.mxu0 %v9729
    %9754 = vmatprep.subr.mxu0 0.0
    %9755 = vmatpush1.msra.mxu0 %v9728
    %9756 = vmatprep.subr.mxu0 0.0
    %9757 = vmatpush1.msra.mxu0 %v9727
    %9758 = vmatprep.subr.mxu0 0.0
    %9759 = vmatpush1.msra.mxu0 %v9726
    %9760 = vmatprep.subr.mxu0 0.0
    %9761 = vmatpush1.msra.mxu0 %v9725
    %9762 = vmatprep.subr.mxu0 0.0
    %9763 = vmatpush1.msra.mxu0 %v9724
    %9764 = vmatprep.subr.mxu0 0.0
    %9765 = vmatpush1.msra.mxu0 %v9723
    %9766 = vmatprep.subr.mxu0 0.0
    %9767 = vmatpush1.msra.mxu0 %v9722
    %9768 = vmatprep.subr.mxu0 0.0
    %9769 = vmatpush1.msra.mxu0 %v9721
    %9770 = vmatprep.subr.mxu0 0.0
    %9771 = vmatpush1.msra.mxu0 %v9720
    %9772 = vmatprep.subr.mxu0 0.0
    %9773 = vmatpush1.msra.mxu0 %v9719
    %9774 = vmatprep.subr.mxu0 0.0
    %9775 = vmatpush1.msra.mxu0 %v9718
    %9776 = vmatprep.subr.mxu0 0.0
    %9777 = vmatpush1.msra.mxu0 %v9717
    %9778 = vmatprep.subr.mxu0 0.0
    %9779 = vmatpush1.msra.mxu0 %v9716
    %9780 = vmatprep.subr.mxu0 0.0
    %9781 = vmatpush1.msra.mxu0 %v9715
    %9782 = vmatprep.subr.mxu0 0.0
    %9783 = vmatpush1.msra.mxu0 %v9714
    %9784 = vmatprep.subr.mxu0 0.0
    %9785 = vmatpush2.msra.mxu0 %v9750
    %9786 = vmatprep.subr.mxu0 0.0
    %9787 = vmatpush2.msra.mxu0 %v9744
    %9788 = vmatprep.subr.mxu0 0.0
    %9789 = vmatpush2.msra.mxu0 %v9743
    %9790 = vmatprep.subr.mxu0 0.0
    %9791 = vmatpush2.msra.mxu0 %v9742
    %9792 = vmatprep.subr.mxu0 0.0
    %9793 = vmatpush2.msra.mxu0 %v9741
    %9794 = vmatprep.subr.mxu0 0.0
    %9795 = vmatpush2.msra.mxu0 %v9740
    %9796 = vmatprep.subr.mxu0 0.0
    %9797 = vmatpush2.msra.mxu0 %v9739
    %9798 = vmatprep.subr.mxu0 0.0
    %9799 = vmatpush2.msra.mxu0 %v9738
    %9800 = vmatprep.subr.mxu0 0.0
    %9801 = vmatpush2.msra.mxu0 %v9737
    %9802 = vmatprep.subr.mxu0 0.0
    %9803 = vmatpush2.msra.mxu0 %v9736
    %9804 = vmatprep.subr.mxu0 0.0
    %9805 = vmatpush2.msra.mxu0 %v9735
    %9806 = vmatprep.subr.mxu0 0.0
    %9807 = vmatpush2.msra.mxu0 %v9734
    %9808 = vmatprep.subr.mxu0 0.0
    %9809 = vmatpush2.msra.mxu0 %v9733
    %9810 = vmatprep.subr.mxu0 0.0
    %9811 = vmatpush2.msra.mxu0 %v9732
    %9812 = vmatprep.subr.mxu0 0.0
    %9813 = vmatpush2.msra.mxu0 %v9731
    %9814 = vmatprep.subr.mxu0 0.0
    %9815 = vmatpush2.msra.mxu0 %v9730
    %9816 = vmatprep.mubr.f32.mxu0 %v9747
    %9817 = vmatmul.mubr.f32.gmra.mxu0 %v9711
    %v9818 = vpop.f32.mrf.mxu0
    %v9819 = vadd.f32 0.0, %v9818
    %v9820 = vpop.f32.mrf.mxu0
    %9821 = vdwg.mxu0
    %9822 = vrot.lane.b32.xlu0 %v8595, 68
    %v9823 = vpop.permute.xlu0 %9822
    %9825 = vrot.lane.b32.xlu0 %v8869, 2
    %v9826 = vpop.permute.xlu0 %9825
    %9828 = vrot.lane.b32.xlu0 %v9159, 65
    %v9829 = vpop.permute.xlu0 %9828
    %v9831 = vsel %vm6736, %v9823, %v9826
    %v9832 = vsel %vm7549, %v9831, %v9829
    %v9833 = vsel %vm3964, %v9829, %v9429
    %s9834 = scalar_lea.vmem %s10, 768
    %v9835 = vld [vmem:[%s9834] sm:$0xff]
    %v9836 = vld [vmem:[%s9834 + $0x8] sm:$0xff]
    %v9837 = vld [vmem:[%s9834 + $0x10] sm:$0xff]
    %v9838 = vld [vmem:[%s9834 + $0x18] sm:$0xff]
    %v9839 = vld [vmem:[%s9834 + $0x20] sm:$0xff]
    %v9840 = vld [vmem:[%s9834 + $0x28] sm:$0xff]
    %v9841 = vld [vmem:[%s9834 + $0x30] sm:$0xff]
    %v9842 = vld [vmem:[%s9834 + $0x38] sm:$0xff]
    %v9843 = vld [vmem:[%s9834 + $0x40] sm:$0xff]
    %v9844 = vld [vmem:[%s9834 + $0x48] sm:$0xff]
    %v9845 = vld [vmem:[%s9834 + $0x50] sm:$0xff]
    %v9846 = vld [vmem:[%s9834 + $0x58] sm:$0xff]
    %v9847 = vld [vmem:[%s9834 + $0x60] sm:$0xff]
    %v9848 = vld [vmem:[%s9834 + $0x68] sm:$0xff]
    %v9849 = vld [vmem:[%s9834 + $0x70] sm:$0xff]
    %v9850 = vld [vmem:[%s9834 + $0x78] sm:$0xff]
    %v9851 = vld [vmem:[%s9834 + $0x80] sm:$0xff]
    %v9852 = vld [vmem:[%s9834 + $0x88] sm:$0xff]
    %v9853 = vld [vmem:[%s9834 + $0x90] sm:$0xff]
    %v9854 = vld [vmem:[%s9834 + $0x98] sm:$0xff]
    %v9855 = vld [vmem:[%s9834 + $0xa0] sm:$0xff]
    %v9856 = vld [vmem:[%s9834 + $0xa8] sm:$0xff]
    %v9857 = vld [vmem:[%s9834 + $0xb0] sm:$0xff]
    %v9858 = vld [vmem:[%s9834 + $0xb8] sm:$0xff]
    %v9859 = vld [vmem:[%s9834 + $0xc0] sm:$0xff]
    %v9860 = vld [vmem:[%s9834 + $0xc8] sm:$0xff]
    %v9861 = vld [vmem:[%s9834 + $0xd0] sm:$0xff]
    %v9862 = vld [vmem:[%s9834 + $0xd8] sm:$0xff]
    %v9863 = vld [vmem:[%s9834 + $0xe0] sm:$0xff]
    %v9864 = vld [vmem:[%s9834 + $0xe8] sm:$0xff]
    %v9865 = vld [vmem:[%s9834 + $0xf0] sm:$0xff]
    %v9866 = vld [vmem:[%s9834 + $0xf8] sm:$0x3]
    %v9868 = vsel %vm6376, %v9833, 0
    %v9871 = vsel %vm9480, %v9866, 0
    %9873 = vmatprep.subr.mxu0 0.0
    %9874 = vmatpush1.msra.mxu0 %v9850
    %9875 = vmatprep.subr.mxu0 0.0
    %9876 = vmatpush1.msra.mxu0 %v9849
    %9877 = vmatprep.subr.mxu0 0.0
    %9878 = vmatpush1.msra.mxu0 %v9848
    %9879 = vmatprep.subr.mxu0 0.0
    %9880 = vmatpush1.msra.mxu0 %v9847
    %9881 = vmatprep.subr.mxu0 0.0
    %9882 = vmatpush1.msra.mxu0 %v9846
    %9883 = vmatprep.subr.mxu0 0.0
    %9884 = vmatpush1.msra.mxu0 %v9845
    %9885 = vmatprep.subr.mxu0 0.0
    %9886 = vmatpush1.msra.mxu0 %v9844
    %9887 = vmatprep.subr.mxu0 0.0
    %9888 = vmatpush1.msra.mxu0 %v9843
    %9889 = vmatprep.subr.mxu0 0.0
    %9890 = vmatpush1.msra.mxu0 %v9842
    %9891 = vmatprep.subr.mxu0 0.0
    %9892 = vmatpush1.msra.mxu0 %v9841
    %9893 = vmatprep.subr.mxu0 0.0
    %9894 = vmatpush1.msra.mxu0 %v9840
    %9895 = vmatprep.subr.mxu0 0.0
    %9896 = vmatpush1.msra.mxu0 %v9839
    %9897 = vmatprep.subr.mxu0 0.0
    %9898 = vmatpush1.msra.mxu0 %v9838
    %9899 = vmatprep.subr.mxu0 0.0
    %9900 = vmatpush1.msra.mxu0 %v9837
    %9901 = vmatprep.subr.mxu0 0.0
    %9902 = vmatpush1.msra.mxu0 %v9836
    %9903 = vmatprep.subr.mxu0 0.0
    %9904 = vmatpush1.msra.mxu0 %v9835
    %9905 = vmatprep.subr.mxu0 0.0
    %9906 = vmatpush2.msra.mxu0 %v9871
    %9907 = vmatprep.subr.mxu0 0.0
    %9908 = vmatpush2.msra.mxu0 %v9865
    %9909 = vmatprep.subr.mxu0 0.0
    %9910 = vmatpush2.msra.mxu0 %v9864
    %9911 = vmatprep.subr.mxu0 0.0
    %9912 = vmatpush2.msra.mxu0 %v9863
    %9913 = vmatprep.subr.mxu0 0.0
    %9914 = vmatpush2.msra.mxu0 %v9862
    %9915 = vmatprep.subr.mxu0 0.0
    %9916 = vmatpush2.msra.mxu0 %v9861
    %9917 = vmatprep.subr.mxu0 0.0
    %9918 = vmatpush2.msra.mxu0 %v9860
    %9919 = vmatprep.subr.mxu0 0.0
    %9920 = vmatpush2.msra.mxu0 %v9859
    %9921 = vmatprep.subr.mxu0 0.0
    %9922 = vmatpush2.msra.mxu0 %v9858
    %9923 = vmatprep.subr.mxu0 0.0
    %9924 = vmatpush2.msra.mxu0 %v9857
    %9925 = vmatprep.subr.mxu0 0.0
    %9926 = vmatpush2.msra.mxu0 %v9856
    %9927 = vmatprep.subr.mxu0 0.0
    %9928 = vmatpush2.msra.mxu0 %v9855
    %9929 = vmatprep.subr.mxu0 0.0
    %9930 = vmatpush2.msra.mxu0 %v9854
    %9931 = vmatprep.subr.mxu0 0.0
    %9932 = vmatpush2.msra.mxu0 %v9853
    %9933 = vmatprep.subr.mxu0 0.0
    %9934 = vmatpush2.msra.mxu0 %v9852
    %9935 = vmatprep.subr.mxu0 0.0
    %9936 = vmatpush2.msra.mxu0 %v9851
    %9937 = vmatprep.mubr.f32.mxu0 %v9868
    %9938 = vmatmul.mubr.f32.gmra.mxu0 %v9832
    %v9939 = vpop.f32.mrf.mxu0
    %v9940 = vadd.f32 0.0, %v9939
    %v9941 = vpop.f32.mrf.mxu0
    %9942 = vdwg.mxu0
    %9944 = vrot.lane.b32.xlu0 %v9676, 7
    %v9945 = vpop.permute.xlu0 %9944
    %9948 = vrot.lane.b32.xlu0 %v9819, 13
    %v9949 = vpop.permute.xlu0 %9948
    %9952 = vrot.lane.b32.xlu0 %v9940, 19
    %v9953 = vpop.permute.xlu0 %9952
    %vm9955 = vcmask 56320
    %v9956 = vsel %vm9955, %v9551, %v9945
    %vm9957 = vcmask 105472
    %v9958 = vsel %vm9957, %v9956, %v9949
    %vm9959 = vcmask 154624
    %v9960 = vsel %vm9959, %v9958, %v9953
    %v9961 = vld [vmem:[%s11] sm:$0xff]
    %v9962 = vld [vmem:[%s11 + $0x8] sm:$0xff]
    %v9963 = vld [vmem:[%s11 + $0x10] sm:$0xff]
    %v9964 = vld [vmem:[%s11 + $0x18] sm:$0x1]
    %v9965 = vld [vmem:[%s12] sm:$0x1]
    %v9967 = vlaneseq
    %v9968 = vshrl.u32 %v9967, 7
    %v9969 = vsub.s32 0, %v9968
    %v9970 = vrot.slane %v9965, %v9969
    %vm9972 = vcmask 203776
    %v9974 = vsel %vm9972, %v9960, 0
    %vm9976 = vcmask 1040384
    %v9978 = vsel %vm9976, %v9964, 0
    %9980 = vmatprep.subr.mxu0 0.0
    %9981 = vmatpush1.msra.mxu0 0.0
    %9982 = vmatprep.subr.mxu0 0.0
    %9983 = vmatpush1.msra.mxu0 0.0
    %9984 = vmatprep.subr.mxu0 0.0
    %9985 = vmatpush1.msra.mxu0 0.0
    %9986 = vmatprep.subr.mxu0 0.0
    %9987 = vmatpush1.msra.mxu0 0.0
    %9988 = vmatprep.subr.mxu0 0.0
    %9989 = vmatpush1.msra.mxu0 0.0
    %9990 = vmatprep.subr.mxu0 0.0
    %9991 = vmatpush1.msra.mxu0 0.0
    %9992 = vmatprep.subr.mxu0 0.0
    %9993 = vmatpush1.msra.mxu0 0.0
    %9994 = vmatprep.subr.mxu0 0.0
    %9995 = vmatpush1.msra.mxu0 0.0
    %9996 = vmatprep.subr.mxu0 0.0
    %9997 = vmatpush1.msra.mxu0 0.0
    %9998 = vmatprep.subr.mxu0 0.0
    %9999 = vmatpush1.msra.mxu0 0.0
    %10000 = vmatprep.subr.mxu0 0.0
    %10001 = vmatpush1.msra.mxu0 0.0
    %10002 = vmatprep.subr.mxu0 0.0
    %10003 = vmatpush1.msra.mxu0 0.0
    %10004 = vmatprep.subr.mxu0 0.0
    %10005 = vmatpush1.msra.mxu0 %v9978
    %10006 = vmatprep.subr.mxu0 0.0
    %10007 = vmatpush1.msra.mxu0 %v9963
    %10008 = vmatprep.subr.mxu0 0.0
    %10009 = vmatpush1.msra.mxu0 %v9962
    %10010 = vmatprep.subr.mxu0 0.0
    %10011 = vmatpush1.msra.mxu0 %v9961
    %10012 = vmatprep.subr.mxu0 0.0
    %10013 = vmatpush2.msra.mxu0 0.0
    %10014 = vmatprep.subr.mxu0 0.0
    %10015 = vmatpush2.msra.mxu0 0.0
    %10016 = vmatprep.subr.mxu0 0.0
    %10017 = vmatpush2.msra.mxu0 0.0
    %10018 = vmatprep.subr.mxu0 0.0
    %10019 = vmatpush2.msra.mxu0 0.0
    %10020 = vmatprep.subr.mxu0 0.0
    %10021 = vmatpush2.msra.mxu0 0.0
    %10022 = vmatprep.subr.mxu0 0.0
    %10023 = vmatpush2.msra.mxu0 0.0
    %10024 = vmatprep.subr.mxu0 0.0
    %10025 = vmatpush2.msra.mxu0 0.0
    %10026 = vmatprep.subr.mxu0 0.0
    %10027 = vmatpush2.msra.mxu0 0.0
    %10028 = vmatprep.subr.mxu0 0.0
    %10029 = vmatpush2.msra.mxu0 0.0
    %10030 = vmatprep.subr.mxu0 0.0
    %10031 = vmatpush2.msra.mxu0 0.0
    %10032 = vmatprep.subr.mxu0 0.0
    %10033 = vmatpush2.msra.mxu0 0.0
    %10034 = vmatprep.subr.mxu0 0.0
    %10035 = vmatpush2.msra.mxu0 0.0
    %10036 = vmatprep.subr.mxu0 0.0
    %10037 = vmatpush2.msra.mxu0 0.0
    %10038 = vmatprep.subr.mxu0 0.0
    %10039 = vmatpush2.msra.mxu0 0.0
    %10040 = vmatprep.subr.mxu0 0.0
    %10041 = vmatpush2.msra.mxu0 0.0
    %10042 = vmatprep.subr.mxu0 0.0
    %10043 = vmatpush2.msra.mxu0 0.0
    %10044 = vmatprep.mubr.f32.mxu0 0.0
    %10045 = vmatmul.mubr.f32.gmra.mxu0 %v9974
    %v10046 = vpop.f32.mrf.mxu0
    %v10047 = vadd.f32 %v9970, %v10046
    %v10048 = vpop.f32.mrf.mxu0
    %10049 = vdwg.mxu0
    %v10050 = vmax.f32 %v10047, 0.0
    %10052 = vrot.lane.b32.xlu0 %v9551, 121
    %v10053 = vpop.permute.xlu0 %10052
    %10055 = vrot.lane.b32.xlu0 %v9819, 7
    %v10056 = vpop.permute.xlu0 %10055
    %10058 = vrot.lane.b32.xlu0 %v9940, 13
    %v10059 = vpop.permute.xlu0 %10058
    %vm10061 = vcmask 48128
    %v10062 = vsel %vm10061, %v10053, %v9676
    %v10063 = vsel %vm9957, %v10062, %v10056
    %v10064 = vsel %vm9959, %v10063, %v10059
    %s10065 = scalar_lea.vmem %s11, 32
    %v10066 = vld [vmem:[%s10065] sm:$0xff]
    %v10067 = vld [vmem:[%s10065 + $0x8] sm:$0xff]
    %v10068 = vld [vmem:[%s10065 + $0x10] sm:$0xff]
    %v10069 = vld [vmem:[%s10065 + $0x18] sm:$0x1]
    %s10070 = scalar_lea.vmem %s12, 1
    %v10071 = vld [vmem:[%s10070] sm:$0x1]
    %v10073 = vlaneseq
    %v10074 = vshrl.u32 %v10073, 7
    %v10075 = vsub.s32 0, %v10074
    %v10076 = vrot.slane %v10071, %v10075
    %v10079 = vsel %vm9972, %v10064, 0
    %v10082 = vsel %vm9976, %v10069, 0
    %10084 = vmatprep.subr.mxu0 0.0
    %10085 = vmatpush1.msra.mxu0 0.0
    %10086 = vmatprep.subr.mxu0 0.0
    %10087 = vmatpush1.msra.mxu0 0.0
    %10088 = vmatprep.subr.mxu0 0.0
    %10089 = vmatpush1.msra.mxu0 0.0
    %10090 = vmatprep.subr.mxu0 0.0
    %10091 = vmatpush1.msra.mxu0 0.0
    %10092 = vmatprep.subr.mxu0 0.0
    %10093 = vmatpush1.msra.mxu0 0.0
    %10094 = vmatprep.subr.mxu0 0.0
    %10095 = vmatpush1.msra.mxu0 0.0
    %10096 = vmatprep.subr.mxu0 0.0
    %10097 = vmatpush1.msra.mxu0 0.0
    %10098 = vmatprep.subr.mxu0 0.0
    %10099 = vmatpush1.msra.mxu0 0.0
    %10100 = vmatprep.subr.mxu0 0.0
    %10101 = vmatpush1.msra.mxu0 0.0
    %10102 = vmatprep.subr.mxu0 0.0
    %10103 = vmatpush1.msra.mxu0 0.0
    %10104 = vmatprep.subr.mxu0 0.0
    %10105 = vmatpush1.msra.mxu0 0.0
    %10106 = vmatprep.subr.mxu0 0.0
    %10107 = vmatpush1.msra.mxu0 0.0
    %10108 = vmatprep.subr.mxu0 0.0
    %10109 = vmatpush1.msra.mxu0 %v10082
    %10110 = vmatprep.subr.mxu0 0.0
    %10111 = vmatpush1.msra.mxu0 %v10068
    %10112 = vmatprep.subr.mxu0 0.0
    %10113 = vmatpush1.msra.mxu0 %v10067
    %10114 = vmatprep.subr.mxu0 0.0
    %10115 = vmatpush1.msra.mxu0 %v10066
    %10116 = vmatprep.subr.mxu0 0.0
    %10117 = vmatpush2.msra.mxu0 0.0
    %10118 = vmatprep.subr.mxu0 0.0
    %10119 = vmatpush2.msra.mxu0 0.0
    %10120 = vmatprep.subr.mxu0 0.0
    %10121 = vmatpush2.msra.mxu0 0.0
    %10122 = vmatprep.subr.mxu0 0.0
    %10123 = vmatpush2.msra.mxu0 0.0
    %10124 = vmatprep.subr.mxu0 0.0
    %10125 = vmatpush2.msra.mxu0 0.0
    %10126 = vmatprep.subr.mxu0 0.0
    %10127 = vmatpush2.msra.mxu0 0.0
    %10128 = vmatprep.subr.mxu0 0.0
    %10129 = vmatpush2.msra.mxu0 0.0
    %10130 = vmatprep.subr.mxu0 0.0
    %10131 = vmatpush2.msra.mxu0 0.0
    %10132 = vmatprep.subr.mxu0 0.0
    %10133 = vmatpush2.msra.mxu0 0.0
    %10134 = vmatprep.subr.mxu0 0.0
    %10135 = vmatpush2.msra.mxu0 0.0
    %10136 = vmatprep.subr.mxu0 0.0
    %10137 = vmatpush2.msra.mxu0 0.0
    %10138 = vmatprep.subr.mxu0 0.0
    %10139 = vmatpush2.msra.mxu0 0.0
    %10140 = vmatprep.subr.mxu0 0.0
    %10141 = vmatpush2.msra.mxu0 0.0
    %10142 = vmatprep.subr.mxu0 0.0
    %10143 = vmatpush2.msra.mxu0 0.0
    %10144 = vmatprep.subr.mxu0 0.0
    %10145 = vmatpush2.msra.mxu0 0.0
    %10146 = vmatprep.subr.mxu0 0.0
    %10147 = vmatpush2.msra.mxu0 0.0
    %10148 = vmatprep.mubr.f32.mxu0 0.0
    %10149 = vmatmul.mubr.f32.gmra.mxu0 %v10079
    %v10150 = vpop.f32.mrf.mxu0
    %v10151 = vadd.f32 %v10076, %v10150
    %v10152 = vpop.f32.mrf.mxu0
    %10153 = vdwg.mxu0
    %v10154 = vmax.f32 %v10151, 0.0
    %10155 = vrot.lane.b32.xlu0 %v9551, 115
    %v10156 = vpop.permute.xlu0 %10155
    %10158 = vrot.lane.b32.xlu0 %v9676, 121
    %v10159 = vpop.permute.xlu0 %10158
    %10161 = vrot.lane.b32.xlu0 %v9940, 7
    %v10162 = vpop.permute.xlu0 %10161
    %v10164 = vsel %vm10061, %v10156, %v10159
    %v10165 = vsel %vm2055, %v10164, %v9819
    %v10166 = vsel %vm9959, %v10165, %v10162
    %s10167 = scalar_lea.vmem %s11, 64
    %v10168 = vld [vmem:[%s10167] sm:$0xff]
    %v10169 = vld [vmem:[%s10167 + $0x8] sm:$0xff]
    %v10170 = vld [vmem:[%s10167 + $0x10] sm:$0xff]
    %v10171 = vld [vmem:[%s10167 + $0x18] sm:$0x1]
    %s10172 = scalar_lea.vmem %s12, 2
    %v10173 = vld [vmem:[%s10172] sm:$0x1]
    %v10175 = vlaneseq
    %v10176 = vshrl.u32 %v10175, 7
    %v10177 = vsub.s32 0, %v10176
    %v10178 = vrot.slane %v10173, %v10177
    %v10181 = vsel %vm9972, %v10166, 0
    %v10184 = vsel %vm9976, %v10171, 0
    %10186 = vmatprep.subr.mxu0 0.0
    %10187 = vmatpush1.msra.mxu0 0.0
    %10188 = vmatprep.subr.mxu0 0.0
    %10189 = vmatpush1.msra.mxu0 0.0
    %10190 = vmatprep.subr.mxu0 0.0
    %10191 = vmatpush1.msra.mxu0 0.0
    %10192 = vmatprep.subr.mxu0 0.0
    %10193 = vmatpush1.msra.mxu0 0.0
    %10194 = vmatprep.subr.mxu0 0.0
    %10195 = vmatpush1.msra.mxu0 0.0
    %10196 = vmatprep.subr.mxu0 0.0
    %10197 = vmatpush1.msra.mxu0 0.0
    %10198 = vmatprep.subr.mxu0 0.0
    %10199 = vmatpush1.msra.mxu0 0.0
    %10200 = vmatprep.subr.mxu0 0.0
    %10201 = vmatpush1.msra.mxu0 0.0
    %10202 = vmatprep.subr.mxu0 0.0
    %10203 = vmatpush1.msra.mxu0 0.0
    %10204 = vmatprep.subr.mxu0 0.0
    %10205 = vmatpush1.msra.mxu0 0.0
    %10206 = vmatprep.subr.mxu0 0.0
    %10207 = vmatpush1.msra.mxu0 0.0
    %10208 = vmatprep.subr.mxu0 0.0
    %10209 = vmatpush1.msra.mxu0 0.0
    %10210 = vmatprep.subr.mxu0 0.0
    %10211 = vmatpush1.msra.mxu0 %v10184
    %10212 = vmatprep.subr.mxu0 0.0
    %10213 = vmatpush1.msra.mxu0 %v10170
    %10214 = vmatprep.subr.mxu0 0.0
    %10215 = vmatpush1.msra.mxu0 %v10169
    %10216 = vmatprep.subr.mxu0 0.0
    %10217 = vmatpush1.msra.mxu0 %v10168
    %10218 = vmatprep.subr.mxu0 0.0
    %10219 = vmatpush2.msra.mxu0 0.0
    %10220 = vmatprep.subr.mxu0 0.0
    %10221 = vmatpush2.msra.mxu0 0.0
    %10222 = vmatprep.subr.mxu0 0.0
    %10223 = vmatpush2.msra.mxu0 0.0
    %10224 = vmatprep.subr.mxu0 0.0
    %10225 = vmatpush2.msra.mxu0 0.0
    %10226 = vmatprep.subr.mxu0 0.0
    %10227 = vmatpush2.msra.mxu0 0.0
    %10228 = vmatprep.subr.mxu0 0.0
    %10229 = vmatpush2.msra.mxu0 0.0
    %10230 = vmatprep.subr.mxu0 0.0
    %10231 = vmatpush2.msra.mxu0 0.0
    %10232 = vmatprep.subr.mxu0 0.0
    %10233 = vmatpush2.msra.mxu0 0.0
    %10234 = vmatprep.subr.mxu0 0.0
    %10235 = vmatpush2.msra.mxu0 0.0
    %10236 = vmatprep.subr.mxu0 0.0
    %10237 = vmatpush2.msra.mxu0 0.0
    %10238 = vmatprep.subr.mxu0 0.0
    %10239 = vmatpush2.msra.mxu0 0.0
    %10240 = vmatprep.subr.mxu0 0.0
    %10241 = vmatpush2.msra.mxu0 0.0
    %10242 = vmatprep.subr.mxu0 0.0
    %10243 = vmatpush2.msra.mxu0 0.0
    %10244 = vmatprep.subr.mxu0 0.0
    %10245 = vmatpush2.msra.mxu0 0.0
    %10246 = vmatprep.subr.mxu0 0.0
    %10247 = vmatpush2.msra.mxu0 0.0
    %10248 = vmatprep.subr.mxu0 0.0
    %10249 = vmatpush2.msra.mxu0 0.0
    %10250 = vmatprep.mubr.f32.mxu0 0.0
    %10251 = vmatmul.mubr.f32.gmra.mxu0 %v10181
    %v10252 = vpop.f32.mrf.mxu0
    %v10253 = vadd.f32 %v10178, %v10252
    %v10254 = vpop.f32.mrf.mxu0
    %10255 = vdwg.mxu0
    %v10256 = vmax.f32 %v10253, 0.0
    %10257 = vrot.lane.b32.xlu0 %v9551, 109
    %v10258 = vpop.permute.xlu0 %10257
    %10260 = vrot.lane.b32.xlu0 %v9676, 115
    %v10261 = vpop.permute.xlu0 %10260
    %10263 = vrot.lane.b32.xlu0 %v9819, 121
    %v10264 = vpop.permute.xlu0 %10263
    %v10266 = vsel %vm10061, %v10258, %v10261
    %v10267 = vsel %vm2055, %v10266, %v10264
    %vm10268 = vcmask 146432
    %v10269 = vsel %vm10268, %v10267, %v9940
    %s10270 = scalar_lea.vmem %s11, 96
    %v10271 = vld [vmem:[%s10270] sm:$0xff]
    %v10272 = vld [vmem:[%s10270 + $0x8] sm:$0xff]
    %v10273 = vld [vmem:[%s10270 + $0x10] sm:$0xff]
    %v10274 = vld [vmem:[%s10270 + $0x18] sm:$0x1]
    %s10275 = scalar_lea.vmem %s12, 3
    %v10276 = vld [vmem:[%s10275] sm:$0x1]
    %v10278 = vlaneseq
    %v10279 = vshrl.u32 %v10278, 7
    %v10280 = vsub.s32 0, %v10279
    %v10281 = vrot.slane %v10276, %v10280
    %v10284 = vsel %vm9972, %v10269, 0
    %v10287 = vsel %vm9976, %v10274, 0
    %10289 = vmatprep.subr.mxu0 0.0
    %10290 = vmatpush1.msra.mxu0 0.0
    %10291 = vmatprep.subr.mxu0 0.0
    %10292 = vmatpush1.msra.mxu0 0.0
    %10293 = vmatprep.subr.mxu0 0.0
    %10294 = vmatpush1.msra.mxu0 0.0
    %10295 = vmatprep.subr.mxu0 0.0
    %10296 = vmatpush1.msra.mxu0 0.0
    %10297 = vmatprep.subr.mxu0 0.0
    %10298 = vmatpush1.msra.mxu0 0.0
    %10299 = vmatprep.subr.mxu0 0.0
    %10300 = vmatpush1.msra.mxu0 0.0
    %10301 = vmatprep.subr.mxu0 0.0
    %10302 = vmatpush1.msra.mxu0 0.0
    %10303 = vmatprep.subr.mxu0 0.0
    %10304 = vmatpush1.msra.mxu0 0.0
    %10305 = vmatprep.subr.mxu0 0.0
    %10306 = vmatpush1.msra.mxu0 0.0
    %10307 = vmatprep.subr.mxu0 0.0
    %10308 = vmatpush1.msra.mxu0 0.0
    %10309 = vmatprep.subr.mxu0 0.0
    %10310 = vmatpush1.msra.mxu0 0.0
    %10311 = vmatprep.subr.mxu0 0.0
    %10312 = vmatpush1.msra.mxu0 0.0
    %10313 = vmatprep.subr.mxu0 0.0
    %10314 = vmatpush1.msra.mxu0 %v10287
    %10315 = vmatprep.subr.mxu0 0.0
    %10316 = vmatpush1.msra.mxu0 %v10273
    %10317 = vmatprep.subr.mxu0 0.0
    %10318 = vmatpush1.msra.mxu0 %v10272
    %10319 = vmatprep.subr.mxu0 0.0
    %10320 = vmatpush1.msra.mxu0 %v10271
    %10321 = vmatprep.subr.mxu0 0.0
    %10322 = vmatpush2.msra.mxu0 0.0
    %10323 = vmatprep.subr.mxu0 0.0
    %10324 = vmatpush2.msra.mxu0 0.0
    %10325 = vmatprep.subr.mxu0 0.0
    %10326 = vmatpush2.msra.mxu0 0.0
    %10327 = vmatprep.subr.mxu0 0.0
    %10328 = vmatpush2.msra.mxu0 0.0
    %10329 = vmatprep.subr.mxu0 0.0
    %10330 = vmatpush2.msra.mxu0 0.0
    %10331 = vmatprep.subr.mxu0 0.0
    %10332 = vmatpush2.msra.mxu0 0.0
    %10333 = vmatprep.subr.mxu0 0.0
    %10334 = vmatpush2.msra.mxu0 0.0
    %10335 = vmatprep.subr.mxu0 0.0
    %10336 = vmatpush2.msra.mxu0 0.0
    %10337 = vmatprep.subr.mxu0 0.0
    %10338 = vmatpush2.msra.mxu0 0.0
    %10339 = vmatprep.subr.mxu0 0.0
    %10340 = vmatpush2.msra.mxu0 0.0
    %10341 = vmatprep.subr.mxu0 0.0
    %10342 = vmatpush2.msra.mxu0 0.0
    %10343 = vmatprep.subr.mxu0 0.0
    %10344 = vmatpush2.msra.mxu0 0.0
    %10345 = vmatprep.subr.mxu0 0.0
    %10346 = vmatpush2.msra.mxu0 0.0
    %10347 = vmatprep.subr.mxu0 0.0
    %10348 = vmatpush2.msra.mxu0 0.0
    %10349 = vmatprep.subr.mxu0 0.0
    %10350 = vmatpush2.msra.mxu0 0.0
    %10351 = vmatprep.subr.mxu0 0.0
    %10352 = vmatpush2.msra.mxu0 0.0
    %10353 = vmatprep.mubr.f32.mxu0 0.0
    %10354 = vmatmul.mubr.f32.gmra.mxu0 %v10284
    %v10355 = vpop.f32.mrf.mxu0
    %v10356 = vadd.f32 %v10281, %v10355
    %v10357 = vpop.f32.mrf.mxu0
    %10358 = vdwg.mxu0
    %v10359 = vmax.f32 %v10356, 0.0
    %10361 = vrot.lane.b32.xlu0 %v10154, 25
    %v10362 = vpop.permute.xlu0 %10361
    %10365 = vrot.lane.b32.xlu0 %v10256, 50
    %v10366 = vpop.permute.xlu0 %10365
    %10369 = vrot.lane.b32.xlu0 %v10359, 75
    %v10370 = vpop.permute.xlu0 %10369
    %v10372 = vsel %vm9972, %v10050, %v10362
    %v10373 = vsel %vm3974, %v10372, %v10366
    %vm10374 = vcmask 613376
    %v10375 = vsel %vm10374, %v10373, %v10370
    %v10376 = vld [vmem:[%s13] sm:$0xff]
    %v10377 = vld [vmem:[%s13 + $0x8] sm:$0xff]
    %v10378 = vld [vmem:[%s13 + $0x10] sm:$0xff]
    %v10379 = vld [vmem:[%s13 + $0x18] sm:$0xff]
    %v10380 = vld [vmem:[%s13 + $0x20] sm:$0xff]
    %v10381 = vld [vmem:[%s13 + $0x28] sm:$0xff]
    %v10382 = vld [vmem:[%s13 + $0x30] sm:$0xff]
    %v10383 = vld [vmem:[%s13 + $0x38] sm:$0xff]
    %v10384 = vld [vmem:[%s13 + $0x40] sm:$0xff]
    %v10385 = vld [vmem:[%s13 + $0x48] sm:$0xff]
    %v10386 = vld [vmem:[%s13 + $0x50] sm:$0xff]
    %v10387 = vld [vmem:[%s13 + $0x58] sm:$0xff]
    %v10388 = vld [vmem:[%s13 + $0x60] sm:$0xf]
    %v10389 = vld [vmem:[%s14] sm:$0x1]
    %v10391 = vlaneseq
    %v10392 = vshrl.u32 %v10391, 7
    %v10393 = vsub.s32 0, %v10392
    %v10394 = vrot.slane %v10389, %v10393
    %vm10396 = vcmask 818176
    %v10398 = vsel %vm10396, %v10375, 0
    %vm10400 = vcmask 1043456
    %v10402 = vsel %vm10400, %v10388, 0
    %10404 = vmatprep.subr.mxu0 0.0
    %10405 = vmatpush1.msra.mxu0 0.0
    %10406 = vmatprep.subr.mxu0 0.0
    %10407 = vmatpush1.msra.mxu0 0.0
    %10408 = vmatprep.subr.mxu0 0.0
    %10409 = vmatpush1.msra.mxu0 0.0
    %10410 = vmatprep.subr.mxu0 0.0
    %10411 = vmatpush1.msra.mxu0 %v10402
    %10412 = vmatprep.subr.mxu0 0.0
    %10413 = vmatpush1.msra.mxu0 %v10387
    %10414 = vmatprep.subr.mxu0 0.0
    %10415 = vmatpush1.msra.mxu0 %v10386
    %10416 = vmatprep.subr.mxu0 0.0
    %10417 = vmatpush1.msra.mxu0 %v10385
    %10418 = vmatprep.subr.mxu0 0.0
    %10419 = vmatpush1.msra.mxu0 %v10384
    %10420 = vmatprep.subr.mxu0 0.0
    %10421 = vmatpush1.msra.mxu0 %v10383
    %10422 = vmatprep.subr.mxu0 0.0
    %10423 = vmatpush1.msra.mxu0 %v10382
    %10424 = vmatprep.subr.mxu0 0.0
    %10425 = vmatpush1.msra.mxu0 %v10381
    %10426 = vmatprep.subr.mxu0 0.0
    %10427 = vmatpush1.msra.mxu0 %v10380
    %10428 = vmatprep.subr.mxu0 0.0
    %10429 = vmatpush1.msra.mxu0 %v10379
    %10430 = vmatprep.subr.mxu0 0.0
    %10431 = vmatpush1.msra.mxu0 %v10378
    %10432 = vmatprep.subr.mxu0 0.0
    %10433 = vmatpush1.msra.mxu0 %v10377
    %10434 = vmatprep.subr.mxu0 0.0
    %10435 = vmatpush1.msra.mxu0 %v10376
    %10436 = vmatprep.subr.mxu0 0.0
    %10437 = vmatpush2.msra.mxu0 0.0
    %10438 = vmatprep.subr.mxu0 0.0
    %10439 = vmatpush2.msra.mxu0 0.0
    %10440 = vmatprep.subr.mxu0 0.0
    %10441 = vmatpush2.msra.mxu0 0.0
    %10442 = vmatprep.subr.mxu0 0.0
    %10443 = vmatpush2.msra.mxu0 0.0
    %10444 = vmatprep.subr.mxu0 0.0
    %10445 = vmatpush2.msra.mxu0 0.0
    %10446 = vmatprep.subr.mxu0 0.0
    %10447 = vmatpush2.msra.mxu0 0.0
    %10448 = vmatprep.subr.mxu0 0.0
    %10449 = vmatpush2.msra.mxu0 0.0
    %10450 = vmatprep.subr.mxu0 0.0
    %10451 = vmatpush2.msra.mxu0 0.0
    %10452 = vmatprep.subr.mxu0 0.0
    %10453 = vmatpush2.msra.mxu0 0.0
    %10454 = vmatprep.subr.mxu0 0.0
    %10455 = vmatpush2.msra.mxu0 0.0
    %10456 = vmatprep.subr.mxu0 0.0
    %10457 = vmatpush2.msra.mxu0 0.0
    %10458 = vmatprep.subr.mxu0 0.0
    %10459 = vmatpush2.msra.mxu0 0.0
    %10460 = vmatprep.subr.mxu0 0.0
    %10461 = vmatpush2.msra.mxu0 0.0
    %10462 = vmatprep.subr.mxu0 0.0
    %10463 = vmatpush2.msra.mxu0 0.0
    %10464 = vmatprep.subr.mxu0 0.0
    %10465 = vmatpush2.msra.mxu0 0.0
    %10466 = vmatprep.subr.mxu0 0.0
    %10467 = vmatpush2.msra.mxu0 0.0
    %10468 = vmatprep.mubr.f32.mxu0 0.0
    %10469 = vmatmul.mubr.f32.gmra.mxu0 %v10398
    %v10470 = vpop.f32.mrf.mxu0
    %v10471 = vadd.f32 %v10394, %v10470
    %v10472 = vpop.f32.mrf.mxu0
    %10473 = vdwg.mxu0
    %vm10474 = vcmask 91136
    %10475 = vst.msk [vmem:[#allocation7] sm:$0x3] %vm10474, %v10471
    // Predicated region
    $region182: #{tpu_custom_call.1} parent=1 // pred_check
      _
    $region183: #{tpu_custom_call.1} parent=1 // pred_check_branch
      %10477 = sbr.rel (0) target = $region185
    $region184: #{tpu_custom_call.1} parent=1 // pred_region
      %s10479 = ssub.s32 32, 32
      %10480 = vsyncadd [#allocation8], %s10479
      %s10482 = sshll.u32 [#allocation7], 4
      %s10483 = int_to_ptr.vmem [resolvable:$true] %s10482
      %10485 = dma.vmem_to_hbm [thread:$0]  %s10483, 32, %s15, [#allocation8]
    $region185: #{tpu_custom_call.1} parent=1 // pred_fallthru
      _
    // Predicated region
    $region186: #{tpu_custom_call.1} parent=1 // pred_check
      _
    $region187: #{tpu_custom_call.1} parent=1 // pred_check_branch
      %10487 = sbr.rel (0) target = $region189
    $region188: #{tpu_custom_call.1} parent=1 // pred_region
      %10488 = dma.done [#allocation8], 32
    $region189: #{tpu_custom_call.1} parent=1 // pred_fallthru
      _
    %10489 = vsyncpa [#allocation8], 1
  %10490 = vsyncmov [#allocation6]
  %s10491 = vpop.sfrf %10490
  %p10492 = scmp.eq.s32.totalorder %s10491, 0
  %p10493 = pneg %p10492
  %10495 = shalt.err (%p10493)
  %s10496 = scalar_lea.sflag [#allocation6], 1
  %10497 = vsyncmov %s10496
  %s10498 = vpop.sfrf %10497
  %p10499 = scmp.eq.s32.totalorder %s10498, 0
  %p10500 = pneg %p10499
  %10502 = shalt.err (%p10500)
  %s10503 = scalar_lea.sflag [#allocation6], 2
  %10504 = vsyncmov %s10503
  %s10505 = vpop.sfrf %10504
  %p10506 = scmp.eq.s32.totalorder %s10505, 0
  %p10507 = pneg %p10506
  %10509 = shalt.err (%p10507)
  %s10510 = scalar_lea.sflag [#allocation6], 3
  %10511 = vsyncmov %s10510
  %s10512 = vpop.sfrf %10511
  %p10513 = scmp.eq.s32.totalorder %s10512, 0
  %p10514 = pneg %p10513
  %10516 = shalt.err (%p10514)

</llo_original>
